<compile_context>
chip_gen: v6e
topology: v6e:2x2x1
jax: 0.10.0
libtpu: 0.0.40
codegen_flags: <defaults>
</compile_context>

<pallas_src>
import functools

import jax
import jax.numpy as jnp
from jax import lax
from jax.experimental import pallas as pl
from jax.experimental.pallas import tpu as pltpu

# Make the XLA reference f32 matmuls use the same (full f32) precision class
# as the in-kernel MXU matmuls so the correctness comparison is meaningful.
jax.config.update("jax_default_matmul_precision", "highest")


# ---------------------------------------------------------------------------
# Generation-aware VMEM budgeting
# ---------------------------------------------------------------------------
@functools.lru_cache(maxsize=1)
def _vmem_limit_bytes():
    """Scoped-VMEM limit: ~3/4 of physical VMEM, capped at 100 MiB.
    v5e/v6e (128 MiB physical) -> 96 MiB; v7x (64 MiB) -> 48 MiB."""
    cap = None
    try:
        info_fn = getattr(pltpu, "get_tpu_info", None)
        if info_fn is not None:
            cap = getattr(info_fn(), "vmem_capacity_bytes", None)
    except Exception:
        cap = None
    if not cap:
        cap = 64 * 1024 * 1024          # conservative default (v7x floor)
    return int(min(100 * 1024 * 1024, cap * 3 // 4))


def _tile_budget_bytes():
    # leave ~30% of the scoped limit for compiler-internal scratch / slack
    return int(_vmem_limit_bytes() * 0.7)


_TILE_CANDIDATES = (1024, 512, 384, 256, 128, 64, 32, 16, 8)


def _pick_node_tile(n, per_row_bytes, fixed_bytes, budget):
    """Largest node tile t (multiple of 8 dividing n) whose double-buffered
    working set (fixed + t*per_row) fits `budget`; falls back to the smallest
    multiple-of-8 divisor, else the full (unaligned) n."""
    for t in _TILE_CANDIDATES:
        if t <= n and n % t == 0 and fixed_bytes + t * per_row_bytes <= budget:
            return t
    for t in (8, 16, 32, 64, 128):
        if t <= n and n % t == 0:
            return t
    return n


# ---------------------------------------------------------------------------
# Stage 1: GraphConv   y = F.normalize((adj @ h) @ W + b, p=2, dim=-1) [+ReLU]
# ---------------------------------------------------------------------------
def _graph_conv_kernel(adj_ref, h_ref, w_ref, b_ref, o_ref, *, relu):
    a = adj_ref[...]                               # [tn, N]  (wrapper-cast dtype)
    # In-kernel cast of the resident (N, Din) activation block: ~1/tn of the
    # MXU work, and avoids an extra full-activation HBM round trip that a
    # wrapper-side cast of each layer's BN output would add.
    h = h_ref[...].astype(a.dtype)                 # [N, Din]
    y = jnp.dot(a, h, preferred_element_type=jnp.float32)      # MXU, f32 acc
    y = jnp.dot(y.astype(w_ref.dtype), w_ref[...],
                preferred_element_type=jnp.float32)            # [tn, Dout]
    y = y + b_ref[...]
    # F.normalize(y, 2, -1) == y * rsqrt(max(sum(y^2), eps^2)): one EUP rsqrt.
    ssq = jnp.sum(y * y, axis=-1, keepdims=True)
    y = y * lax.rsqrt(jnp.maximum(ssq, 1e-24))
    if relu:
        y = jnp.maximum(y, 0.0)
    o_ref[...] = y


def graph_conv(adj, h, W, b, *, relu):
    B, N, Din = h.shape
    Dout = W.shape[1]
    budget = _tile_budget_bytes()
    fixed = 2 * N * Din * h.dtype.itemsize + 2 * Din * Dout * W.dtype.itemsize
    per_row = 2 * N * adj.dtype.itemsize + 2 * Dout * 4
    tn = _pick_node_tile(N, per_row, fixed, budget)
    kernel = functools.partial(_graph_conv_kernel, relu=relu)
    return pl.pallas_call(
        kernel,
        out_shape=jax.ShapeDtypeStruct((B, N, Dout), jnp.float32),
        grid=(B, N // tn),
        in_specs=[
            # adj row-block: the only large operand, streamed & pipelined.
            pl.BlockSpec((None, tn, N), lambda bi, ni: (bi, ni, 0)),
            pl.BlockSpec((None, N, Din), lambda bi, ni: (bi, 0, 0)),
            pl.BlockSpec((Din, Dout), lambda bi, ni: (0, 0)),
            pl.BlockSpec((1, Dout), lambda bi, ni: (0, 0)),
        ],
        out_specs=pl.BlockSpec((None, tn, Dout), lambda bi, ni: (bi, ni, 0)),
        compiler_params=pltpu.CompilerParams(
            dimension_semantics=("parallel", "parallel"),
            vmem_limit_bytes=_vmem_limit_bytes()),
    )(adj, h, W, b.reshape(1, Dout))


# ---------------------------------------------------------------------------
# Stage 2: nn.BatchNorm1d(num_nodes) in training mode on [B, N, D]
#   fresh module each call => batch statistics (biased var), weight=1, bias=0,
#   eps=1e-5, statistics per node index over (batch, feature).
# ---------------------------------------------------------------------------
def _batch_norm_kernel(h_ref, o_ref, *, inv_bd):
    h = h_ref[...]                                            # [B, tn, D]
    mean = jnp.sum(jnp.sum(h, axis=2, keepdims=True),
                   axis=0, keepdims=True) * inv_bd            # [1, tn, 1]
    d = h - mean
    var = jnp.sum(jnp.sum(d * d, axis=2, keepdims=True),      # two-pass var:
                  axis=0, keepdims=True) * inv_bd             # no cancellation
    o_ref[...] = d * lax.rsqrt(var + 1e-5)


def batch_norm_nodes(h):
    B, N, D = h.shape
    # block (B, tn, D) is held as 2 input + 2 output buffers = 16*B*tn*D bytes
    tn = _pick_node_tile(N, 16 * B * D, 0, _tile_budget_bytes())
    kernel = functools.partial(_batch_norm_kernel, inv_bd=1.0 / (B * D))
    return pl.pallas_call(
        kernel,
        out_shape=jax.ShapeDtypeStruct((B, N, D), jnp.float32),
        grid=(N // tn,),
        in_specs=[pl.BlockSpec((B, tn, D), lambda ni: (0, ni, 0))],
        out_specs=pl.BlockSpec((B, tn, D), lambda ni: (0, ni, 0)),
        compiler_params=pltpu.CompilerParams(
            dimension_semantics=("parallel",),
            vmem_limit_bytes=_vmem_limit_bytes()),
    )(h)


# ---------------------------------------------------------------------------
# Stage 3: embedding mask + global_sort_pool(K) + linear head, node-tiled with
# a running top-K carry.  Per-layer head weights Wpr_l are host-rearranged so
#   M[i, k*L + j] = sum_l (h_l[i] @ Wpr_l)[k*L + j] = sum_d emb[i,d]*Wp[k*Dtot+d, j]
# and y = bp + sum_k M[sel_k, k*L:(k+1)*L]  (== gather-then-matmul).
# ---------------------------------------------------------------------------
_BIG_IDX = 2 ** 30


def _sortk_head_kernel(*args, num_layers, K, label_dim, tn):
    nn_ref = args[0]                                    # SMEM [B] int32
    h_refs = args[1:1 + num_layers]                     # per-layer [tn, D_l]
    w_refs = args[1 + num_layers:1 + 2 * num_layers]    # per-layer [D_l, K*L]
    bp_ref = args[1 + 2 * num_layers]                   # [1, L]
    o_ref = args[2 + 2 * num_layers]                    # [1, L]
    ts_ref, ti_ref, tm_ref = args[3 + 2 * num_layers:]  # running top-K carry

    b = pl.program_id(0)
    ni = pl.program_id(1)
    KL = K * label_dim
    big = jnp.int32(_BIG_IDX)

    @pl.when(ni == 0)
    def _():
        ts_ref[...] = jnp.full((K, 1), -jnp.inf, jnp.float32)
        ti_ref[...] = big + lax.broadcasted_iota(jnp.int32, (K, 1), 0)
        tm_ref[...] = jnp.zeros((K, KL), jnp.float32)

    gidx = ni * tn + lax.broadcasted_iota(jnp.int32, (tn, 1), 0)  # global ids
    valid = (gidx < nn_ref[b]).astype(jnp.float32)                # emb mask

    # Head matmul applied to every node row, accumulated per layer (no concat)
    m = jnp.zeros((tn, KL), jnp.float32)
    h_last = None
    for h_ref, w_ref in zip(h_refs, w_refs):
        hv = h_ref[...]
        m = m + jnp.dot(hv, w_ref[...], preferred_element_type=jnp.float32)
        h_last = hv
    m = m * valid
    d_last = h_last.shape[-1]
    s = h_last[:, d_last - 1:d_last] * valid         # sort scores = emb[..., -1]

    # tile-local top-K: K rounds of (max score, first index) == stable argsort
    loc_s, loc_i, loc_m = [], [], []
    for _ in range(K):
        mmax = jnp.max(s, axis=0, keepdims=True)                        # [1,1]
        first = jnp.min(jnp.where(s == mmax, gidx, big),
                        axis=0, keepdims=True)                          # [1,1]
        sel = gidx == first
        loc_s.append(mmax)
        loc_i.append(first)
        loc_m.append(jnp.sum(jnp.where(sel, m, 0.0), axis=0,
                             keepdims=True))                            # [1,KL]
        s = jnp.where(sel, -jnp.inf, s)

    # merge with the running top-K.  All candidate indices are distinct and
    # earlier tiles always carry smaller node indices, so the
    # (max score, min index on tie) rule reproduces the stable global sort.
    cand_s = jnp.concatenate([ts_ref[...]] + loc_s, axis=0)             # [2K,1]
    cand_i = jnp.concatenate([ti_ref[...]] + loc_i, axis=0)             # [2K,1]
    cand_m = jnp.concatenate([tm_ref[...]] + loc_m, axis=0)             # [2K,KL]
    rows = lax.broadcasted_iota(jnp.int32, (2 * K, 1), 0)
    imax = jnp.int32(2 ** 31 - 1)

    new_s, new_i, new_m = [], [], []
    for _ in range(K):
        mmax = jnp.max(cand_s, axis=0, keepdims=True)
        besti = jnp.min(jnp.where(cand_s == mmax, cand_i, imax),
                        axis=0, keepdims=True)
        selrow = jnp.min(jnp.where((cand_s == mmax) & (cand_i == besti),
                                   rows, 2 * K), axis=0, keepdims=True)
        sel = rows == selrow
        new_s.append(mmax)
        new_i.append(besti)
        new_m.append(jnp.sum(jnp.where(sel, cand_m, 0.0), axis=0,
                             keepdims=True))
        cand_s = jnp.where(sel, -jnp.inf, cand_s)

    ts_ref[...] = jnp.concatenate(new_s, axis=0)
    ti_ref[...] = jnp.concatenate(new_i, axis=0)
    tm_ref[...] = jnp.concatenate(new_m, axis=0)

    @pl.when(ni == pl.num_programs(1) - 1)
    def _():
        tm = tm_ref[...]
        y = bp_ref[...]                                                 # [1, L]
        for k in range(K):
            y = y + tm[k:k + 1, k * label_dim:(k + 1) * label_dim]
        o_ref[...] = y


def sortk_pool_head(layer_outs, Wp, bp, num_nodes, K, *, node_tile=None):
    B, N = layer_outs[0].shape[:2]
    layer_dims = [h.shape[2] for h in layer_outs]
    Dtot = sum(layer_dims)
    label_dim = bp.shape[-1]
    KL = K * label_dim
    assert Wp.shape[0] == K * Dtot

    # Per-layer row blocks of the head weight, rearranged on the host so that
    #   Wpr_l[d, k*L + j] == Wp[k*Dtot + off_l + d, j]
    Wp3 = Wp.reshape(K, Dtot, label_dim)
    wprs, off = [], 0
    for D_l in layer_dims:
        wl = Wp3[:, off:off + D_l, :]                         # [K, D_l, L]
        wprs.append(jnp.transpose(wl, (1, 0, 2)).reshape(D_l, KL))
        off += D_l

    if node_tile is None:
        fixed = 2 * Dtot * KL * 4 + 8 * KL * 4
        node_tile = _pick_node_tile(N, 8 * Dtot, fixed, _tile_budget_bytes())
    tn = node_tile
    assert tn >= K, "node tile must hold at least K rows"
    # TODO(synk): torch_geometric.global_sort_pool zero-pads when N < K; not handled.

    num_layers = len(layer_outs)
    kernel = functools.partial(_sortk_head_kernel, num_layers=num_layers,
                               K=K, label_dim=label_dim, tn=tn)

    in_specs = (
        [pl.BlockSpec((None, tn, D_l), lambda b, ni, nn: (b, ni, 0))
         for D_l in layer_dims]
        + [pl.BlockSpec((D_l, KL), lambda b, ni, nn: (0, 0))
           for D_l in layer_dims]
        + [pl.BlockSpec((1, label_dim), lambda b, ni, nn: (0, 0))]
    )

    out = pl.pallas_call(
        kernel,
        out_shape=jax.ShapeDtypeStruct((B, 1, label_dim), jnp.float32),
        grid_spec=pltpu.PrefetchScalarGridSpec(
            num_scalar_prefetch=1,
            grid=(B, N // tn),
            in_specs=in_specs,
            out_specs=pl.BlockSpec((None, 1, label_dim),
                                   lambda b, ni, nn: (b, 0, 0)),
            scratch_shapes=[pltpu.VMEM((K, 1), jnp.float32),
                            pltpu.VMEM((K, 1), jnp.int32),
                            pltpu.VMEM((K, KL), jnp.float32)]),
        compiler_params=pltpu.CompilerParams(
            dimension_semantics=("parallel", "arbitrary"),
            vmem_limit_bytes=_vmem_limit_bytes()),
    )(num_nodes, *layer_outs, *wprs, bp.reshape(1, label_dim))
    return out.reshape(B, label_dim)


# ---------------------------------------------------------------------------
# Encoder wrapper
# ---------------------------------------------------------------------------
@functools.partial(jax.jit,
                   static_argnames=("K", "bn", "bf16_matmul", "head_node_tile"))
def gcn_sortk_pool_encoder(x, adj, params, batch_num_nodes=None, K=3, bn=True,
                           bf16_matmul=True, head_node_tile=None):
    B, N, _ = x.shape
    convs = params['convs']
    cdtype = jnp.bfloat16 if bf16_matmul else jnp.float32

    # Cast the dominant operands ONCE on the XLA side:
    #   * adj (B*N^2, re-read by every conv layer) -> halves the dominant DMA
    #   * conv weights -> bf16 feature-transform matmuls, f32 accumulation
    adj_c = adj.astype(cdtype)
    h = x.astype(cdtype)
    convs_c = [(W.astype(cdtype), b) for (W, b) in convs]

    if batch_num_nodes is None:
        num_nodes = jnp.full((B,), N, jnp.int32)
    else:
        num_nodes = batch_num_nodes.astype(jnp.int32)

    # conv_first -> ReLU -> BN, conv_block* -> ReLU -> BN, conv_last
    # (dropout p=0.0 in the module defaults -> omitted)
    h = graph_conv(adj_c, h, convs_c[0][0], convs_c[0][1], relu=True)
    if bn:
        h = batch_norm_nodes(h)
    layer_outs = [h]
    for (W, b) in convs_c[1:-1]:
        h = graph_conv(adj_c, h, W, b, relu=True)
        if bn:
            h = batch_norm_nodes(h)
        layer_outs.append(h)
    h = graph_conv(adj_c, h, convs_c[-1][0], convs_c[-1][1], relu=False)
    layer_outs.append(h)

    # sort-K pooling + linear head directly on the per-layer outputs
    # (no [B, N, Dtot] concat round trip through HBM)
    return sortk_pool_head(layer_outs, params['pred_W'], params['pred_b'],
                           num_nodes, K, node_tile=head_node_tile)


# ---------------------------------------------------------------------------
# Deterministic parameter initialization (shapes from the module __init__)
# ---------------------------------------------------------------------------
def init_params(key, input_dim, hidden_dim, embedding_dim, label_dim,
                num_layers, K=3):
    dims = ([(input_dim, hidden_dim)]
            + [(hidden_dim, hidden_dim)] * (num_layers - 2)
            + [(hidden_dim, embedding_dim)])
    keys = jax.random.split(key, len(dims) + 1)
    gain = float(jnp.sqrt(2.0))                        # calculate_gain('relu')
    convs = []
    for k, (din, dout) in zip(keys[:-1], dims):
        bound = gain * float(jnp.sqrt(6.0 / (din + dout)))   # xavier_uniform
        W = jax.random.uniform(k, (din, dout), jnp.float32, -bound, bound)
        b = jnp.zeros((dout,), jnp.float32)                  # init.constant 0
        convs.append((W, b))
    pred_in = (hidden_dim * (num_layers - 1) + embedding_dim) * K
    kw, kb = jax.random.split(keys[-1])
    bound = 1.0 / float(jnp.sqrt(pred_in))
    Wp = jax.random.uniform(kw, (pred_in, label_dim), jnp.float32,
                            -bound, bound)
    bp = jax.random.uniform(kb, (label_dim,), jnp.float32, -bound, bound)
    return {'convs': convs, 'pred_W': Wp, 'pred_b': bp}


# ---------------------------------------------------------------------------
# Pure-JAX reference (module semantics; bf16_matmul mirrors the kernel's
# bf16-input / f32-accumulation fast path for apples-to-apples comparison)
# ---------------------------------------------------------------------------
def reference_forward(x, adj, params, batch_num_nodes=None, K=3, bn=True,
                      bf16_matmul=False):
    B, N, _ = x.shape
    cdt = jnp.bfloat16 if bf16_matmul else jnp.float32
    if batch_num_nodes is not None:
        mask = (jnp.arange(N)[None, :] <
                batch_num_nodes[:, None]).astype(jnp.float32)[:, :, None]
    else:
        mask = jnp.ones((B, N, 1), jnp.float32)
    adj_c = adj.astype(cdt)

    def gconv(h, W, b):
        y = jnp.einsum('bnm,bmd->bnd', adj_c, h.astype(cdt),
                       preferred_element_type=jnp.float32)
        y = jnp.einsum('bnd,de->bne', y.astype(cdt), W.astype(cdt),
                       preferred_element_type=jnp.float32) + b[None, None, :]
        nrm = jnp.sqrt(jnp.sum(y * y, axis=2, keepdims=True))
        return y / jnp.maximum(nrm, 1e-12)

    def apply_bn(h):
        m = jnp.mean(h, axis=(0, 2), keepdims=True)
        v = jnp.mean((h - m) ** 2, axis=(0, 2), keepdims=True)
        return (h - m) / jnp.sqrt(v + 1e-5)

    convs = params['convs']
    h = jnp.maximum(gconv(x, *convs[0]), 0.0)
    if bn:
        h = apply_bn(h)
    xs = [h]
    for (W, b) in convs[1:-1]:
        h = jnp.maximum(gconv(h, W, b), 0.0)
        if bn:
            h = apply_bn(h)
        xs.append(h)
    h = gconv(h, *convs[-1])
    xs.append(h)
    emb = jnp.concatenate(xs, axis=2) * mask

    scores = emb[:, :, -1]
    order = jnp.argsort(-scores, axis=1)[:, :K]          # stable: ties->low idx
    rows = jnp.take_along_axis(emb, order[:, :, None], axis=1)    # [B, K, Dtot]
    pooled = rows.reshape(B, -1)
    return pooled @ params['pred_W'] + params['pred_b']


# ---------------------------------------------------------------------------
if __name__ == "__main__":
    key = jax.random.PRNGKey(0)
    B, N = 2, 16
    input_dim, hidden_dim, embedding_dim = 8, 16, 16
    label_dim, num_layers, K = 4, 3, 3

    kx, ka, kp = jax.random.split(key, 3)
    x = jax.random.normal(kx, (B, N, input_dim), jnp.float32)
    a = jax.random.uniform(ka, (B, N, N), jnp.float32)
    adj = (a + jnp.transpose(a, (0, 2, 1))) * 0.5          # dense symmetric adj
    batch_num_nodes = jnp.array([16, 12], dtype=jnp.int32)

    params = init_params(kp, input_dim, hidden_dim, embedding_dim,
                         label_dim, num_layers, K=K)

    # Exact-f32 path; head node tile forced to 8 so the streaming top-K merge
    # across multiple node tiles is exercised.
    y32 = jax.block_until_ready(
        gcn_sortk_pool_encoder(x, adj, params, batch_num_nodes=batch_num_nodes,
                               K=K, bf16_matmul=False, head_node_tile=8))
    ref32 = reference_forward(x, adj, params, batch_num_nodes=batch_num_nodes,
                              K=K, bf16_matmul=False)
    assert y32.shape == (B, label_dim)
    assert jnp.allclose(y32, ref32, atol=5e-3, rtol=5e-3), (y32, ref32)

    # bf16-MXU fast path (wrapper-cast adj / x / W, f32 accumulation),
    # single-tile head path (adaptive node tile).
    y16 = jax.block_until_ready(
        gcn_sortk_pool_encoder(x, adj, params, batch_num_nodes=batch_num_nodes,
                               K=K, bf16_matmul=True))
    ref16 = reference_forward(x, adj, params, batch_num_nodes=batch_num_nodes,
                              K=K, bf16_matmul=True)
    assert jnp.allclose(y16, ref16, atol=2e-2, rtol=2e-2), (y16, ref16)

    print("KERNEL_OK")
</pallas_src>

<mosaic_0001>
module attributes {stable_mosaic.version = 11 : i64} {
  func.func @_graph_conv_kernel(%arg0: i32, %arg1: i32, %arg2: memref<1x16x16xf32, #tpu.memory_space<vmem>>, %arg3: memref<1x16x8xf32, #tpu.memory_space<vmem>>, %arg4: memref<8x16xf32, #tpu.memory_space<vmem>>, %arg5: memref<1x16xf32, #tpu.memory_space<vmem>>, %arg6: memref<1x16x16xf32, #tpu.memory_space<vmem>>) attributes {dimension_semantics = [#tpu.dimension_semantics<parallel>, #tpu.dimension_semantics<parallel>], iteration_bounds = array<i64: 2, 1>, scalar_prefetch = 0 : i64, scratch_operands = 0 : i64, tpu.core_type = #tpu.core_type<tc>, window_params = [{transform_indices = @transform_0, window_bounds = array<i64: 1, 16, 16>}, {transform_indices = @transform_1, window_bounds = array<i64: 1, 16, 8>}, {pipeline_mode = #tpu.pipeline_mode<synchronous>, transform_indices = @transform_2, window_bounds = array<i64: 8, 16>}, {pipeline_mode = #tpu.pipeline_mode<synchronous>, transform_indices = @transform_3, window_bounds = array<i64: 1, 16>}, {transform_indices = @transform_4, window_bounds = array<i64: 1, 16, 16>}]} {
    %c0 = arith.constant 0 : index
    %c0_0 = arith.constant 0 : index
    %c0_1 = arith.constant 0 : index
    %0 = vector.load %arg2[%c0, %c0_0, %c0_1] : memref<1x16x16xf32, #tpu.memory_space<vmem>>, vector<1x16x16xf32>
    %1 = vector.shape_cast %0 : vector<1x16x16xf32> to vector<16x16xf32>
    %c0_2 = arith.constant 0 : index
    %c0_3 = arith.constant 0 : index
    %c0_4 = arith.constant 0 : index
    %2 = vector.load %arg3[%c0_2, %c0_3, %c0_4] : memref<1x16x8xf32, #tpu.memory_space<vmem>>, vector<1x16x8xf32>
    %3 = vector.shape_cast %2 : vector<1x16x8xf32> to vector<16x8xf32>
    %cst = arith.constant dense<0.000000e+00> : vector<16x8xf32>
    %4 = tpu.matmul %1, %3, %cst {dimension_numbers = #tpu.dot_dimension_numbers<[1], [0], [0], [1], [0, 0, 1, 1], [], []>, precision = #tpu.contract_precision<fp32>} : vector<16x16xf32>, vector<16x8xf32>, vector<16x8xf32> -> vector<16x8xf32>
    %c0_5 = arith.constant 0 : index
    %c0_6 = arith.constant 0 : index
    %5 = vector.load %arg4[%c0_5, %c0_6] : memref<8x16xf32, #tpu.memory_space<vmem>>, vector<8x16xf32>
    %cst_7 = arith.constant dense<0.000000e+00> : vector<16x16xf32>
    %6 = tpu.matmul %4, %5, %cst_7 {dimension_numbers = #tpu.dot_dimension_numbers<[1], [0], [0], [1], [0, 0, 1, 1], [], []>, precision = #tpu.contract_precision<fp32>} : vector<16x8xf32>, vector<8x16xf32>, vector<16x16xf32> -> vector<16x16xf32>
    %c0_8 = arith.constant 0 : index
    %c0_9 = arith.constant 0 : index
    %7 = vector.load %arg5[%c0_8, %c0_9] : memref<1x16xf32, #tpu.memory_space<vmem>>, vector<1x16xf32>
    %8 = vector.broadcast %7 : vector<1x16xf32> to vector<16x16xf32>
    %9 = arith.addf %6, %8 : vector<16x16xf32>
    %10 = arith.mulf %9, %9 : vector<16x16xf32>
    %cst_10 = arith.constant dense<0.000000e+00> : vector<16xf32>
    %11 = vector.multi_reduction <add>, %10, %cst_10 [1] : vector<16x16xf32> to vector<16xf32>
    %12 = vector.shape_cast %11 : vector<16xf32> to vector<16x1xf32>
    %cst_11 = arith.constant 1.000000e-24 : f32
    %13 = vector.broadcast %cst_11 : f32 to vector<16x1xf32>
    %14 = arith.maximumf %12, %13 : vector<16x1xf32>
    %15 = math.rsqrt %14 : vector<16x1xf32>
    %16 = vector.broadcast %15 : vector<16x1xf32> to vector<16x16xf32>
    %17 = arith.mulf %9, %16 : vector<16x16xf32>
    %cst_12 = arith.constant 0.000000e+00 : f32
    %18 = vector.broadcast %cst_12 : f32 to vector<16x16xf32>
    %19 = arith.maximumf %17, %18 : vector<16x16xf32>
    %c0_13 = arith.constant 0 : index
    %c0_14 = arith.constant 0 : index
    %c0_15 = arith.constant 0 : index
    %20 = vector.load %arg6[%c0_13, %c0_14, %c0_15] : memref<1x16x16xf32, #tpu.memory_space<vmem>>, vector<1x16x16xf32>
    %21 = vector.shape_cast %20 : vector<1x16x16xf32> to vector<16x16xf32>
    %22 = vector.shape_cast %19 : vector<16x16xf32> to vector<1x16x16xf32>
    tpu.vector_store %arg6[%c0_13, %c0_14, %c0_15], %22 {strides = array<i32>} : memref<1x16x16xf32, #tpu.memory_space<vmem>>, vector<1x16x16xf32>,
    return
  }
  func.func @transform_0(%arg0: i32, %arg1: i32) -> (i32, i32, i32) {
    %c0_i32 = arith.constant 0 : i32
    %c0_i32_0 = arith.constant 0 : i32
    return %arg0, %arg1, %c0_i32 : i32, i32, i32
  }
  func.func @transform_1(%arg0: i32, %arg1: i32) -> (i32, i32, i32) {
    %c0_i32 = arith.constant 0 : i32
    %c0_i32_0 = arith.constant 0 : i32
    %c0_i32_1 = arith.constant 0 : i32
    return %arg0, %c0_i32, %c0_i32_0 : i32, i32, i32
  }
  func.func @transform_2(%arg0: i32, %arg1: i32) -> (i32, i32) {
    %c0_i32 = arith.constant 0 : i32
    %c0_i32_0 = arith.constant 0 : i32
    %c0_i32_1 = arith.constant 0 : i32
    return %c0_i32, %c0_i32_0 : i32, i32
  }
  func.func @transform_3(%arg0: i32, %arg1: i32) -> (i32, i32) {
    %c0_i32 = arith.constant 0 : i32
    %c0_i32_0 = arith.constant 0 : i32
    %c0_i32_1 = arith.constant 0 : i32
    return %c0_i32, %c0_i32_0 : i32, i32
  }
  func.func @transform_4(%arg0: i32, %arg1: i32) -> (i32, i32, i32) {
    %c0_i32 = arith.constant 0 : i32
    %c0_i32_0 = arith.constant 0 : i32
    return %arg0, %arg1, %c0_i32 : i32, i32, i32
  }
}

module attributes {stable_mosaic.version = 11 : i64} {
  func.func @_batch_norm_kernel(%arg0: i32, %arg1: memref<2x16x16xf32, #tpu.memory_space<vmem>>, %arg2: memref<2x16x16xf32, #tpu.memory_space<vmem>>) attributes {dimension_semantics = [#tpu.dimension_semantics<parallel>], iteration_bounds = array<i64: 1>, scalar_prefetch = 0 : i64, scratch_operands = 0 : i64, tpu.core_type = #tpu.core_type<tc>, window_params = [{transform_indices = @transform_0, window_bounds = array<i64: 2, 16, 16>}, {transform_indices = @transform_1, window_bounds = array<i64: 2, 16, 16>}]} {
    %c0 = arith.constant 0 : index
    %c0_0 = arith.constant 0 : index
    %c0_1 = arith.constant 0 : index
    %0 = vector.load %arg1[%c0, %c0_0, %c0_1] : memref<2x16x16xf32, #tpu.memory_space<vmem>>, vector<2x16x16xf32>
    %cst = arith.constant dense<0.000000e+00> : vector<2x16xf32>
    %1 = vector.multi_reduction <add>, %0, %cst [2] : vector<2x16x16xf32> to vector<2x16xf32>
    %2 = vector.shape_cast %1 : vector<2x16xf32> to vector<2x16x1xf32>
    %cst_2 = arith.constant dense<0.000000e+00> : vector<16x1xf32>
    %3 = vector.multi_reduction <add>, %2, %cst_2 [0] : vector<2x16x1xf32> to vector<16x1xf32>
    %4 = vector.shape_cast %3 : vector<16x1xf32> to vector<1x16x1xf32>
    %cst_3 = arith.constant 3.125000e-02 : f32
    %5 = vector.broadcast %cst_3 : f32 to vector<1x16x1xf32>
    %6 = arith.mulf %4, %5 : vector<1x16x1xf32>
    %7 = vector.broadcast %6 : vector<1x16x1xf32> to vector<2x16x16xf32>
    %8 = arith.subf %0, %7 : vector<2x16x16xf32>
    %9 = arith.mulf %8, %8 : vector<2x16x16xf32>
    %cst_4 = arith.constant dense<0.000000e+00> : vector<2x16xf32>
    %10 = vector.multi_reduction <add>, %9, %cst_4 [2] : vector<2x16x16xf32> to vector<2x16xf32>
    %11 = vector.shape_cast %10 : vector<2x16xf32> to vector<2x16x1xf32>
    %cst_5 = arith.constant dense<0.000000e+00> : vector<16x1xf32>
    %12 = vector.multi_reduction <add>, %11, %cst_5 [0] : vector<2x16x1xf32> to vector<16x1xf32>
    %13 = vector.shape_cast %12 : vector<16x1xf32> to vector<1x16x1xf32>
    %cst_6 = arith.constant 3.125000e-02 : f32
    %14 = vector.broadcast %cst_6 : f32 to vector<1x16x1xf32>
    %15 = arith.mulf %13, %14 : vector<1x16x1xf32>
    %cst_7 = arith.constant 9.99999974E-6 : f32
    %16 = vector.broadcast %cst_7 : f32 to vector<1x16x1xf32>
    %17 = arith.addf %15, %16 : vector<1x16x1xf32>
    %18 = math.rsqrt %17 : vector<1x16x1xf32>
    %19 = vector.broadcast %18 : vector<1x16x1xf32> to vector<2x16x16xf32>
    %20 = arith.mulf %8, %19 : vector<2x16x16xf32>
    %c0_8 = arith.constant 0 : index
    %c0_9 = arith.constant 0 : index
    %c0_10 = arith.constant 0 : index
    %21 = vector.load %arg2[%c0_8, %c0_9, %c0_10] : memref<2x16x16xf32, #tpu.memory_space<vmem>>, vector<2x16x16xf32>
    tpu.vector_store %arg2[%c0_8, %c0_9, %c0_10], %20 {strides = array<i32>} : memref<2x16x16xf32, #tpu.memory_space<vmem>>, vector<2x16x16xf32>,
    return
  }
  func.func @transform_0(%arg0: i32) -> (i32, i32, i32) {
    %c0_i32 = arith.constant 0 : i32
    %c0_i32_0 = arith.constant 0 : i32
    %c0_i32_1 = arith.constant 0 : i32
    return %c0_i32, %arg0, %c0_i32_0 : i32, i32, i32
  }
  func.func @transform_1(%arg0: i32) -> (i32, i32, i32) {
    %c0_i32 = arith.constant 0 : i32
    %c0_i32_0 = arith.constant 0 : i32
    %c0_i32_1 = arith.constant 0 : i32
    return %c0_i32, %arg0, %c0_i32_0 : i32, i32, i32
  }
}

module attributes {stable_mosaic.version = 11 : i64} {
  func.func @_graph_conv_kernel(%arg0: i32, %arg1: i32, %arg2: memref<1x16x16xf32, #tpu.memory_space<vmem>>, %arg3: memref<1x16x16xf32, #tpu.memory_space<vmem>>, %arg4: memref<16x16xf32, #tpu.memory_space<vmem>>, %arg5: memref<1x16xf32, #tpu.memory_space<vmem>>, %arg6: memref<1x16x16xf32, #tpu.memory_space<vmem>>) attributes {dimension_semantics = [#tpu.dimension_semantics<parallel>, #tpu.dimension_semantics<parallel>], iteration_bounds = array<i64: 2, 1>, scalar_prefetch = 0 : i64, scratch_operands = 0 : i64, tpu.core_type = #tpu.core_type<tc>, window_params = [{transform_indices = @transform_0, window_bounds = array<i64: 1, 16, 16>}, {transform_indices = @transform_1, window_bounds = array<i64: 1, 16, 16>}, {pipeline_mode = #tpu.pipeline_mode<synchronous>, transform_indices = @transform_2, window_bounds = array<i64: 16, 16>}, {pipeline_mode = #tpu.pipeline_mode<synchronous>, transform_indices = @transform_3, window_bounds = array<i64: 1, 16>}, {transform_indices = @transform_4, window_bounds = array<i64: 1, 16, 16>}]} {
    %c0 = arith.constant 0 : index
    %c0_0 = arith.constant 0 : index
    %c0_1 = arith.constant 0 : index
    %0 = vector.load %arg2[%c0, %c0_0, %c0_1] : memref<1x16x16xf32, #tpu.memory_space<vmem>>, vector<1x16x16xf32>
    %1 = vector.shape_cast %0 : vector<1x16x16xf32> to vector<16x16xf32>
    %c0_2 = arith.constant 0 : index
    %c0_3 = arith.constant 0 : index
    %c0_4 = arith.constant 0 : index
    %2 = vector.load %arg3[%c0_2, %c0_3, %c0_4] : memref<1x16x16xf32, #tpu.memory_space<vmem>>, vector<1x16x16xf32>
    %3 = vector.shape_cast %2 : vector<1x16x16xf32> to vector<16x16xf32>
    %cst = arith.constant dense<0.000000e+00> : vector<16x16xf32>
    %4 = tpu.matmul %1, %3, %cst {dimension_numbers = #tpu.dot_dimension_numbers<[1], [0], [0], [1], [0, 0, 1, 1], [], []>, precision = #tpu.contract_precision<fp32>} : vector<16x16xf32>, vector<16x16xf32>, vector<16x16xf32> -> vector<16x16xf32>
    %c0_5 = arith.constant 0 : index
    %c0_6 = arith.constant 0 : index
    %5 = vector.load %arg4[%c0_5, %c0_6] : memref<16x16xf32, #tpu.memory_space<vmem>>, vector<16x16xf32>
    %cst_7 = arith.constant dense<0.000000e+00> : vector<16x16xf32>
    %6 = tpu.matmul %4, %5, %cst_7 {dimension_numbers = #tpu.dot_dimension_numbers<[1], [0], [0], [1], [0, 0, 1, 1], [], []>, precision = #tpu.contract_precision<fp32>} : vector<16x16xf32>, vector<16x16xf32>, vector<16x16xf32> -> vector<16x16xf32>
    %c0_8 = arith.constant 0 : index
    %c0_9 = arith.constant 0 : index
    %7 = vector.load %arg5[%c0_8, %c0_9] : memref<1x16xf32, #tpu.memory_space<vmem>>, vector<1x16xf32>
    %8 = vector.broadcast %7 : vector<1x16xf32> to vector<16x16xf32>
    %9 = arith.addf %6, %8 : vector<16x16xf32>
    %10 = arith.mulf %9, %9 : vector<16x16xf32>
    %cst_10 = arith.constant dense<0.000000e+00> : vector<16xf32>
    %11 = vector.multi_reduction <add>, %10, %cst_10 [1] : vector<16x16xf32> to vector<16xf32>
    %12 = vector.shape_cast %11 : vector<16xf32> to vector<16x1xf32>
    %cst_11 = arith.constant 1.000000e-24 : f32
    %13 = vector.broadcast %cst_11 : f32 to vector<16x1xf32>
    %14 = arith.maximumf %12, %13 : vector<16x1xf32>
    %15 = math.rsqrt %14 : vector<16x1xf32>
    %16 = vector.broadcast %15 : vector<16x1xf32> to vector<16x16xf32>
    %17 = arith.mulf %9, %16 : vector<16x16xf32>
    %c0_12 = arith.constant 0 : index
    %c0_13 = arith.constant 0 : index
    %c0_14 = arith.constant 0 : index
    %18 = vector.load %arg6[%c0_12, %c0_13, %c0_14] : memref<1x16x16xf32, #tpu.memory_space<vmem>>, vector<1x16x16xf32>
    %19 = vector.shape_cast %18 : vector<1x16x16xf32> to vector<16x16xf32>
    %20 = vector.shape_cast %17 : vector<16x16xf32> to vector<1x16x16xf32>
    tpu.vector_store %arg6[%c0_12, %c0_13, %c0_14], %20 {strides = array<i32>} : memref<1x16x16xf32, #tpu.memory_space<vmem>>, vector<1x16x16xf32>,
    return
  }
  func.func @transform_0(%arg0: i32, %arg1: i32) -> (i32, i32, i32) {
    %c0_i32 = arith.constant 0 : i32
    %c0_i32_0 = arith.constant 0 : i32
    return %arg0, %arg1, %c0_i32 : i32, i32, i32
  }
  func.func @transform_1(%arg0: i32, %arg1: i32) -> (i32, i32, i32) {
    %c0_i32 = arith.constant 0 : i32
    %c0_i32_0 = arith.constant 0 : i32
    %c0_i32_1 = arith.constant 0 : i32
    return %arg0, %c0_i32, %c0_i32_0 : i32, i32, i32
  }
  func.func @transform_2(%arg0: i32, %arg1: i32) -> (i32, i32) {
    %c0_i32 = arith.constant 0 : i32
    %c0_i32_0 = arith.constant 0 : i32
    %c0_i32_1 = arith.constant 0 : i32
    return %c0_i32, %c0_i32_0 : i32, i32
  }
  func.func @transform_3(%arg0: i32, %arg1: i32) -> (i32, i32) {
    %c0_i32 = arith.constant 0 : i32
    %c0_i32_0 = arith.constant 0 : i32
    %c0_i32_1 = arith.constant 0 : i32
    return %c0_i32, %c0_i32_0 : i32, i32
  }
  func.func @transform_4(%arg0: i32, %arg1: i32) -> (i32, i32, i32) {
    %c0_i32 = arith.constant 0 : i32
    %c0_i32_0 = arith.constant 0 : i32
    return %arg0, %arg1, %c0_i32 : i32, i32, i32
  }
}

module attributes {stable_mosaic.version = 11 : i64} {
  func.func @_graph_conv_kernel(%arg0: i32, %arg1: i32, %arg2: memref<1x16x16xf32, #tpu.memory_space<vmem>>, %arg3: memref<1x16x16xf32, #tpu.memory_space<vmem>>, %arg4: memref<16x16xf32, #tpu.memory_space<vmem>>, %arg5: memref<1x16xf32, #tpu.memory_space<vmem>>, %arg6: memref<1x16x16xf32, #tpu.memory_space<vmem>>) attributes {dimension_semantics = [#tpu.dimension_semantics<parallel>, #tpu.dimension_semantics<parallel>], iteration_bounds = array<i64: 2, 1>, scalar_prefetch = 0 : i64, scratch_operands = 0 : i64, tpu.core_type = #tpu.core_type<tc>, window_params = [{transform_indices = @transform_0, window_bounds = array<i64: 1, 16, 16>}, {transform_indices = @transform_1, window_bounds = array<i64: 1, 16, 16>}, {pipeline_mode = #tpu.pipeline_mode<synchronous>, transform_indices = @transform_2, window_bounds = array<i64: 16, 16>}, {pipeline_mode = #tpu.pipeline_mode<synchronous>, transform_indices = @transform_3, window_bounds = array<i64: 1, 16>}, {transform_indices = @transform_4, window_bounds = array<i64: 1, 16, 16>}]} {
    %c0 = arith.constant 0 : index
    %c0_0 = arith.constant 0 : index
    %c0_1 = arith.constant 0 : index
    %0 = vector.load %arg2[%c0, %c0_0, %c0_1] : memref<1x16x16xf32, #tpu.memory_space<vmem>>, vector<1x16x16xf32>
    %1 = vector.shape_cast %0 : vector<1x16x16xf32> to vector<16x16xf32>
    %c0_2 = arith.constant 0 : index
    %c0_3 = arith.constant 0 : index
    %c0_4 = arith.constant 0 : index
    %2 = vector.load %arg3[%c0_2, %c0_3, %c0_4] : memref<1x16x16xf32, #tpu.memory_space<vmem>>, vector<1x16x16xf32>
    %3 = vector.shape_cast %2 : vector<1x16x16xf32> to vector<16x16xf32>
    %cst = arith.constant dense<0.000000e+00> : vector<16x16xf32>
    %4 = tpu.matmul %1, %3, %cst {dimension_numbers = #tpu.dot_dimension_numbers<[1], [0], [0], [1], [0, 0, 1, 1], [], []>, precision = #tpu.contract_precision<fp32>} : vector<16x16xf32>, vector<16x16xf32>, vector<16x16xf32> -> vector<16x16xf32>
    %c0_5 = arith.constant 0 : index
    %c0_6 = arith.constant 0 : index
    %5 = vector.load %arg4[%c0_5, %c0_6] : memref<16x16xf32, #tpu.memory_space<vmem>>, vector<16x16xf32>
    %cst_7 = arith.constant dense<0.000000e+00> : vector<16x16xf32>
    %6 = tpu.matmul %4, %5, %cst_7 {dimension_numbers = #tpu.dot_dimension_numbers<[1], [0], [0], [1], [0, 0, 1, 1], [], []>, precision = #tpu.contract_precision<fp32>} : vector<16x16xf32>, vector<16x16xf32>, vector<16x16xf32> -> vector<16x16xf32>
    %c0_8 = arith.constant 0 : index
    %c0_9 = arith.constant 0 : index
    %7 = vector.load %arg5[%c0_8, %c0_9] : memref<1x16xf32, #tpu.memory_space<vmem>>, vector<1x16xf32>
    %8 = vector.broadcast %7 : vector<1x16xf32> to vector<16x16xf32>
    %9 = arith.addf %6, %8 : vector<16x16xf32>
    %10 = arith.mulf %9, %9 : vector<16x16xf32>
    %cst_10 = arith.constant dense<0.000000e+00> : vector<16xf32>
    %11 = vector.multi_reduction <add>, %10, %cst_10 [1] : vector<16x16xf32> to vector<16xf32>
    %12 = vector.shape_cast %11 : vector<16xf32> to vector<16x1xf32>
    %cst_11 = arith.constant 1.000000e-24 : f32
    %13 = vector.broadcast %cst_11 : f32 to vector<16x1xf32>
    %14 = arith.maximumf %12, %13 : vector<16x1xf32>
    %15 = math.rsqrt %14 : vector<16x1xf32>
    %16 = vector.broadcast %15 : vector<16x1xf32> to vector<16x16xf32>
    %17 = arith.mulf %9, %16 : vector<16x16xf32>
    %cst_12 = arith.constant 0.000000e+00 : f32
    %18 = vector.broadcast %cst_12 : f32 to vector<16x16xf32>
    %19 = arith.maximumf %17, %18 : vector<16x16xf32>
    %c0_13 = arith.constant 0 : index
    %c0_14 = arith.constant 0 : index
    %c0_15 = arith.constant 0 : index
    %20 = vector.load %arg6[%c0_13, %c0_14, %c0_15] : memref<1x16x16xf32, #tpu.memory_space<vmem>>, vector<1x16x16xf32>
    %21 = vector.shape_cast %20 : vector<1x16x16xf32> to vector<16x16xf32>
    %22 = vector.shape_cast %19 : vector<16x16xf32> to vector<1x16x16xf32>
    tpu.vector_store %arg6[%c0_13, %c0_14, %c0_15], %22 {strides = array<i32>} : memref<1x16x16xf32, #tpu.memory_space<vmem>>, vector<1x16x16xf32>,
    return
  }
  func.func @transform_0(%arg0: i32, %arg1: i32) -> (i32, i32, i32) {
    %c0_i32 = arith.constant 0 : i32
    %c0_i32_0 = arith.constant 0 : i32
    return %arg0, %arg1, %c0_i32 : i32, i32, i32
  }
  func.func @transform_1(%arg0: i32, %arg1: i32) -> (i32, i32, i32) {
    %c0_i32 = arith.constant 0 : i32
    %c0_i32_0 = arith.constant 0 : i32
    %c0_i32_1 = arith.constant 0 : i32
    return %arg0, %c0_i32, %c0_i32_0 : i32, i32, i32
  }
  func.func @transform_2(%arg0: i32, %arg1: i32) -> (i32, i32) {
    %c0_i32 = arith.constant 0 : i32
    %c0_i32_0 = arith.constant 0 : i32
    %c0_i32_1 = arith.constant 0 : i32
    return %c0_i32, %c0_i32_0 : i32, i32
  }
  func.func @transform_3(%arg0: i32, %arg1: i32) -> (i32, i32) {
    %c0_i32 = arith.constant 0 : i32
    %c0_i32_0 = arith.constant 0 : i32
    %c0_i32_1 = arith.constant 0 : i32
    return %c0_i32, %c0_i32_0 : i32, i32
  }
  func.func @transform_4(%arg0: i32, %arg1: i32) -> (i32, i32, i32) {
    %c0_i32 = arith.constant 0 : i32
    %c0_i32_0 = arith.constant 0 : i32
    return %arg0, %arg1, %c0_i32 : i32, i32, i32
  }
}

module attributes {stable_mosaic.version = 11 : i64} {
  func.func @_sortk_head_kernel(%arg0: i32, %arg1: i32, %arg2: memref<2xi32, #tpu.memory_space<smem>>, %arg3: memref<1x8x16xf32, #tpu.memory_space<vmem>>, %arg4: memref<1x8x16xf32, #tpu.memory_space<vmem>>, %arg5: memref<1x8x16xf32, #tpu.memory_space<vmem>>, %arg6: memref<16x12xf32, #tpu.memory_space<vmem>>, %arg7: memref<16x12xf32, #tpu.memory_space<vmem>>, %arg8: memref<16x12xf32, #tpu.memory_space<vmem>>, %arg9: memref<1x4xf32, #tpu.memory_space<vmem>>, %arg10: memref<1x1x4xf32, #tpu.memory_space<vmem>>, %arg11: memref<3x1xf32, #tpu.memory_space<vmem>>, %arg12: memref<3x1xi32, #tpu.memory_space<vmem>>, %arg13: memref<3x12xf32, #tpu.memory_space<vmem>>) attributes {dimension_semantics = [#tpu.dimension_semantics<parallel>, #tpu.dimension_semantics<arbitrary>], iteration_bounds = array<i64: 2, 2>, scalar_prefetch = 1 : i64, scratch_operands = 3 : i64, tpu.core_type = #tpu.core_type<tc>, window_params = [{transform_indices = @transform_0, window_bounds = array<i64: 1, 8, 16>}, {transform_indices = @transform_1, window_bounds = array<i64: 1, 8, 16>}, {transform_indices = @transform_2, window_bounds = array<i64: 1, 8, 16>}, {pipeline_mode = #tpu.pipeline_mode<synchronous>, transform_indices = @transform_3, window_bounds = array<i64: 16, 12>}, {pipeline_mode = #tpu.pipeline_mode<synchronous>, transform_indices = @transform_4, window_bounds = array<i64: 16, 12>}, {pipeline_mode = #tpu.pipeline_mode<synchronous>, transform_indices = @transform_5, window_bounds = array<i64: 16, 12>}, {pipeline_mode = #tpu.pipeline_mode<synchronous>, transform_indices = @transform_6, window_bounds = array<i64: 1, 4>}, {transform_indices = @transform_7, window_bounds = array<i64: 1, 1, 4>}]} {
    %c0_i32 = arith.constant 0 : i32
    %0 = arith.cmpi eq, %arg1, %c0_i32 : i32
    %1 = arith.extui %0 : i1 to i32
    %c1073741824_i32 = arith.constant 1073741824 : i32
    %c0_i32_0 = arith.constant 0 : i32
    %2 = arith.cmpi ne, %1, %c0_i32_0 : i32
    scf.if %2 {
      %cst_69 = arith.constant 0xFF800000 : f32
      %180 = vector.broadcast %cst_69 : f32 to vector<3x1xf32>
      %c0_70 = arith.constant 0 : index
      %c0_71 = arith.constant 0 : index
      %181 = vector.load %arg11[%c0_70, %c0_71] : memref<3x1xf32, #tpu.memory_space<vmem>>, vector<3x1xf32>
      tpu.vector_store %arg11[%c0_70, %c0_71], %180 {strides = array<i32>} : memref<3x1xf32, #tpu.memory_space<vmem>>, vector<3x1xf32>,
      %182 = tpu.iota {dimensions = array<i32: 0>} : vector<3x1xi32>
      %183 = vector.broadcast %c1073741824_i32 : i32 to vector<3x1xi32>
      %184 = arith.addi %183, %182 : vector<3x1xi32>
      %c0_72 = arith.constant 0 : index
      %c0_73 = arith.constant 0 : index
      %185 = vector.load %arg12[%c0_72, %c0_73] : memref<3x1xi32, #tpu.memory_space<vmem>>, vector<3x1xi32>
      tpu.vector_store %arg12[%c0_72, %c0_73], %184 {strides = array<i32>} : memref<3x1xi32, #tpu.memory_space<vmem>>, vector<3x1xi32>,
      %cst_74 = arith.constant 0.000000e+00 : f32
      %186 = vector.broadcast %cst_74 : f32 to vector<3x12xf32>
      %c0_75 = arith.constant 0 : index
      %c0_76 = arith.constant 0 : index
      %187 = vector.load %arg13[%c0_75, %c0_76] : memref<3x12xf32, #tpu.memory_space<vmem>>, vector<3x12xf32>
      tpu.vector_store %arg13[%c0_75, %c0_76], %186 {strides = array<i32>} : memref<3x12xf32, #tpu.memory_space<vmem>>, vector<3x12xf32>,
    } else {
    }
    %c8_i32 = arith.constant 8 : i32
    %3 = arith.muli %arg1, %c8_i32 : i32
    %4 = tpu.iota {dimensions = array<i32: 0>} : vector<8x1xi32>
    %5 = vector.broadcast %3 : i32 to vector<8x1xi32>
    %6 = arith.addi %5, %4 : vector<8x1xi32>
    %7 = arith.index_cast %arg0 : i32 to index
    %8 = memref.load %arg2[%7] : memref<2xi32, #tpu.memory_space<smem>>
    %9 = vector.broadcast %8 : i32 to vector<8x1xi32>
    %10 = arith.cmpi slt, %6, %9 : vector<8x1xi32>
    %11 = arith.extui %10 : vector<8x1xi1> to vector<8x1xi32>
    %12 = arith.sitofp %11 : vector<8x1xi32> to vector<8x1xf32>
    %cst = arith.constant 0.000000e+00 : f32
    %13 = vector.broadcast %cst : f32 to vector<8x12xf32>
    %c0 = arith.constant 0 : index
    %c0_1 = arith.constant 0 : index
    %c0_2 = arith.constant 0 : index
    %14 = vector.load %arg3[%c0, %c0_1, %c0_2] : memref<1x8x16xf32, #tpu.memory_space<vmem>>, vector<1x8x16xf32>
    %15 = vector.shape_cast %14 : vector<1x8x16xf32> to vector<8x16xf32>
    %c0_3 = arith.constant 0 : index
    %c0_4 = arith.constant 0 : index
    %16 = vector.load %arg6[%c0_3, %c0_4] : memref<16x12xf32, #tpu.memory_space<vmem>>, vector<16x12xf32>
    %cst_5 = arith.constant dense<0.000000e+00> : vector<8x12xf32>
    %17 = tpu.matmul %15, %16, %cst_5 {dimension_numbers = #tpu.dot_dimension_numbers<[1], [0], [0], [1], [0, 0, 1, 1], [], []>, precision = #tpu.contract_precision<fp32>} : vector<8x16xf32>, vector<16x12xf32>, vector<8x12xf32> -> vector<8x12xf32>
    %18 = arith.addf %13, %17 : vector<8x12xf32>
    %c0_6 = arith.constant 0 : index
    %c0_7 = arith.constant 0 : index
    %c0_8 = arith.constant 0 : index
    %19 = vector.load %arg4[%c0_6, %c0_7, %c0_8] : memref<1x8x16xf32, #tpu.memory_space<vmem>>, vector<1x8x16xf32>
    %20 = vector.shape_cast %19 : vector<1x8x16xf32> to vector<8x16xf32>
    %c0_9 = arith.constant 0 : index
    %c0_10 = arith.constant 0 : index
    %21 = vector.load %arg7[%c0_9, %c0_10] : memref<16x12xf32, #tpu.memory_space<vmem>>, vector<16x12xf32>
    %cst_11 = arith.constant dense<0.000000e+00> : vector<8x12xf32>
    %22 = tpu.matmul %20, %21, %cst_11 {dimension_numbers = #tpu.dot_dimension_numbers<[1], [0], [0], [1], [0, 0, 1, 1], [], []>, precision = #tpu.contract_precision<fp32>} : vector<8x16xf32>, vector<16x12xf32>, vector<8x12xf32> -> vector<8x12xf32>
    %23 = arith.addf %18, %22 : vector<8x12xf32>
    %c0_12 = arith.constant 0 : index
    %c0_13 = arith.constant 0 : index
    %c0_14 = arith.constant 0 : index
    %24 = vector.load %arg5[%c0_12, %c0_13, %c0_14] : memref<1x8x16xf32, #tpu.memory_space<vmem>>, vector<1x8x16xf32>
    %25 = vector.shape_cast %24 : vector<1x8x16xf32> to vector<8x16xf32>
    %c0_15 = arith.constant 0 : index
    %c0_16 = arith.constant 0 : index
    %26 = vector.load %arg8[%c0_15, %c0_16] : memref<16x12xf32, #tpu.memory_space<vmem>>, vector<16x12xf32>
    %cst_17 = arith.constant dense<0.000000e+00> : vector<8x12xf32>
    %27 = tpu.matmul %25, %26, %cst_17 {dimension_numbers = #tpu.dot_dimension_numbers<[1], [0], [0], [1], [0, 0, 1, 1], [], []>, precision = #tpu.contract_precision<fp32>} : vector<8x16xf32>, vector<16x12xf32>, vector<8x12xf32> -> vector<8x12xf32>
    %28 = arith.addf %23, %27 : vector<8x12xf32>
    %29 = vector.broadcast %12 : vector<8x1xf32> to vector<8x12xf32>
    %30 = arith.mulf %28, %29 : vector<8x12xf32>
    %31 = vector.extract_strided_slice %25 {offsets = [0, 15], sizes = [8, 1], strides = [1, 1]} : vector<8x16xf32> to vector<8x1xf32>
    %32 = arith.mulf %31, %12 : vector<8x1xf32>
    %cst_18 = arith.constant dense<0xFF800000> : vector<1xf32>
    %33 = vector.multi_reduction <maximumf>, %32, %cst_18 [0] : vector<8x1xf32> to vector<1xf32>
    %34 = vector.shape_cast %33 : vector<1xf32> to vector<1x1xf32>
    %35 = vector.broadcast %34 : vector<1x1xf32> to vector<8x1xf32>
    %36 = arith.cmpf oeq, %32, %35 : vector<8x1xf32>
    %c1073741824_i32_19 = arith.constant 1073741824 : i32
    %37 = vector.broadcast %c1073741824_i32_19 : i32 to vector<8x1xi32>
    %38 = arith.select %36, %6, %37 : vector<8x1xi1>, vector<8x1xi32>
    %cst_20 = arith.constant dense<2147483647> : vector<1xi32>
    %39 = vector.multi_reduction <minsi>, %38, %cst_20 [0] : vector<8x1xi32> to vector<1xi32>
    %40 = vector.shape_cast %39 : vector<1xi32> to vector<1x1xi32>
    %41 = vector.broadcast %40 : vector<1x1xi32> to vector<8x1xi32>
    %42 = arith.cmpi eq, %6, %41 : vector<8x1xi32>
    %cst_21 = arith.constant 0.000000e+00 : f32
    %43 = vector.shape_cast %42 : vector<8x1xi1> to vector<8x1xi1>
    %44 = vector.broadcast %43 : vector<8x1xi1> to vector<8x12xi1>
    %45 = vector.broadcast %cst_21 : f32 to vector<8x12xf32>
    %46 = arith.select %44, %30, %45 : vector<8x12xi1>, vector<8x12xf32>
    %cst_22 = arith.constant dense<0.000000e+00> : vector<12xf32>
    %47 = vector.multi_reduction <add>, %46, %cst_22 [0] : vector<8x12xf32> to vector<12xf32>
    %48 = vector.shape_cast %47 : vector<12xf32> to vector<1x12xf32>
    %cst_23 = arith.constant 0xFF800000 : f32
    %49 = vector.broadcast %cst_23 : f32 to vector<8x1xf32>
    %50 = arith.select %42, %49, %32 : vector<8x1xi1>, vector<8x1xf32>
    %cst_24 = arith.constant dense<0xFF800000> : vector<1xf32>
    %51 = vector.multi_reduction <maximumf>, %50, %cst_24 [0] : vector<8x1xf32> to vector<1xf32>
    %52 = vector.shape_cast %51 : vector<1xf32> to vector<1x1xf32>
    %53 = vector.broadcast %52 : vector<1x1xf32> to vector<8x1xf32>
    %54 = arith.cmpf oeq, %50, %53 : vector<8x1xf32>
    %c1073741824_i32_25 = arith.constant 1073741824 : i32
    %55 = vector.broadcast %c1073741824_i32_25 : i32 to vector<8x1xi32>
    %56 = arith.select %54, %6, %55 : vector<8x1xi1>, vector<8x1xi32>
    %cst_26 = arith.constant dense<2147483647> : vector<1xi32>
    %57 = vector.multi_reduction <minsi>, %56, %cst_26 [0] : vector<8x1xi32> to vector<1xi32>
    %58 = vector.shape_cast %57 : vector<1xi32> to vector<1x1xi32>
    %59 = vector.broadcast %58 : vector<1x1xi32> to vector<8x1xi32>
    %60 = arith.cmpi eq, %6, %59 : vector<8x1xi32>
    %cst_27 = arith.constant 0.000000e+00 : f32
    %61 = vector.shape_cast %60 : vector<8x1xi1> to vector<8x1xi1>
    %62 = vector.broadcast %61 : vector<8x1xi1> to vector<8x12xi1>
    %63 = vector.broadcast %cst_27 : f32 to vector<8x12xf32>
    %64 = arith.select %62, %30, %63 : vector<8x12xi1>, vector<8x12xf32>
    %cst_28 = arith.constant dense<0.000000e+00> : vector<12xf32>
    %65 = vector.multi_reduction <add>, %64, %cst_28 [0] : vector<8x12xf32> to vector<12xf32>
    %66 = vector.shape_cast %65 : vector<12xf32> to vector<1x12xf32>
    %cst_29 = arith.constant 0xFF800000 : f32
    %67 = vector.broadcast %cst_29 : f32 to vector<8x1xf32>
    %68 = arith.select %60, %67, %50 : vector<8x1xi1>, vector<8x1xf32>
    %cst_30 = arith.constant dense<0xFF800000> : vector<1xf32>
    %69 = vector.multi_reduction <maximumf>, %68, %cst_30 [0] : vector<8x1xf32> to vector<1xf32>
    %70 = vector.shape_cast %69 : vector<1xf32> to vector<1x1xf32>
    %71 = vector.broadcast %70 : vector<1x1xf32> to vector<8x1xf32>
    %72 = arith.cmpf oeq, %68, %71 : vector<8x1xf32>
    %c1073741824_i32_31 = arith.constant 1073741824 : i32
    %73 = vector.broadcast %c1073741824_i32_31 : i32 to vector<8x1xi32>
    %74 = arith.select %72, %6, %73 : vector<8x1xi1>, vector<8x1xi32>
    %cst_32 = arith.constant dense<2147483647> : vector<1xi32>
    %75 = vector.multi_reduction <minsi>, %74, %cst_32 [0] : vector<8x1xi32> to vector<1xi32>
    %76 = vector.shape_cast %75 : vector<1xi32> to vector<1x1xi32>
    %77 = vector.broadcast %76 : vector<1x1xi32> to vector<8x1xi32>
    %78 = arith.cmpi eq, %6, %77 : vector<8x1xi32>
    %cst_33 = arith.constant 0.000000e+00 : f32
    %79 = vector.shape_cast %78 : vector<8x1xi1> to vector<8x1xi1>
    %80 = vector.broadcast %79 : vector<8x1xi1> to vector<8x12xi1>
    %81 = vector.broadcast %cst_33 : f32 to vector<8x12xf32>
    %82 = arith.select %80, %30, %81 : vector<8x12xi1>, vector<8x12xf32>
    %cst_34 = arith.constant dense<0.000000e+00> : vector<12xf32>
    %83 = vector.multi_reduction <add>, %82, %cst_34 [0] : vector<8x12xf32> to vector<12xf32>
    %84 = vector.shape_cast %83 : vector<12xf32> to vector<1x12xf32>
    %c0_35 = arith.constant 0 : index
    %c0_36 = arith.constant 0 : index
    %85 = vector.load %arg11[%c0_35, %c0_36] : memref<3x1xf32, #tpu.memory_space<vmem>>, vector<3x1xf32>
    %86 = tpu.concatenate %85, %34, %52, %70 in 0 : vector<3x1xf32>, vector<1x1xf32>, vector<1x1xf32>, vector<1x1xf32> -> vector<6x1xf32>
    %c0_37 = arith.constant 0 : index
    %c0_38 = arith.constant 0 : index
    %87 = vector.load %arg12[%c0_37, %c0_38] : memref<3x1xi32, #tpu.memory_space<vmem>>, vector<3x1xi32>
    %88 = tpu.concatenate %87, %40, %58, %76 in 0 : vector<3x1xi32>, vector<1x1xi32>, vector<1x1xi32>, vector<1x1xi32> -> vector<6x1xi32>
    %c0_39 = arith.constant 0 : index
    %c0_40 = arith.constant 0 : index
    %89 = vector.load %arg13[%c0_39, %c0_40] : memref<3x12xf32, #tpu.memory_space<vmem>>, vector<3x12xf32>
    %90 = tpu.concatenate %89, %48, %66, %84 in 0 : vector<3x12xf32>, vector<1x12xf32>, vector<1x12xf32>, vector<1x12xf32> -> vector<6x12xf32>
    %91 = tpu.iota {dimensions = array<i32: 0>} : vector<6x1xi32>
    %cst_41 = arith.constant dense<0xFF800000> : vector<1xf32>
    %92 = vector.multi_reduction <maximumf>, %86, %cst_41 [0] : vector<6x1xf32> to vector<1xf32>
    %93 = vector.shape_cast %92 : vector<1xf32> to vector<1x1xf32>
    %94 = vector.broadcast %93 : vector<1x1xf32> to vector<6x1xf32>
    %95 = arith.cmpf oeq, %86, %94 : vector<6x1xf32>
    %c2147483647_i32 = arith.constant 2147483647 : i32
    %96 = vector.broadcast %c2147483647_i32 : i32 to vector<6x1xi32>
    %97 = arith.select %95, %88, %96 : vector<6x1xi1>, vector<6x1xi32>
    %cst_42 = arith.constant dense<2147483647> : vector<1xi32>
    %98 = vector.multi_reduction <minsi>, %97, %cst_42 [0] : vector<6x1xi32> to vector<1xi32>
    %99 = vector.shape_cast %98 : vector<1xi32> to vector<1x1xi32>
    %100 = vector.broadcast %93 : vector<1x1xf32> to vector<6x1xf32>
    %101 = arith.cmpf oeq, %86, %100 : vector<6x1xf32>
    %102 = vector.broadcast %99 : vector<1x1xi32> to vector<6x1xi32>
    %103 = arith.cmpi eq, %88, %102 : vector<6x1xi32>
    %104 = arith.andi %101, %103 : vector<6x1xi1>
    %c6_i32 = arith.constant 6 : i32
    %105 = vector.broadcast %c6_i32 : i32 to vector<6x1xi32>
    %106 = arith.select %104, %91, %105 : vector<6x1xi1>, vector<6x1xi32>
    %cst_43 = arith.constant dense<2147483647> : vector<1xi32>
    %107 = vector.multi_reduction <minsi>, %106, %cst_43 [0] : vector<6x1xi32> to vector<1xi32>
    %108 = vector.shape_cast %107 : vector<1xi32> to vector<1x1xi32>
    %109 = vector.broadcast %108 : vector<1x1xi32> to vector<6x1xi32>
    %110 = arith.cmpi eq, %91, %109 : vector<6x1xi32>
    %cst_44 = arith.constant 0.000000e+00 : f32
    %111 = vector.shape_cast %110 : vector<6x1xi1> to vector<6x1xi1>
    %112 = vector.broadcast %111 : vector<6x1xi1> to vector<6x12xi1>
    %113 = vector.broadcast %cst_44 : f32 to vector<6x12xf32>
    %114 = arith.select %112, %90, %113 : vector<6x12xi1>, vector<6x12xf32>
    %cst_45 = arith.constant dense<0.000000e+00> : vector<12xf32>
    %115 = vector.multi_reduction <add>, %114, %cst_45 [0] : vector<6x12xf32> to vector<12xf32>
    %116 = vector.shape_cast %115 : vector<12xf32> to vector<1x12xf32>
    %cst_46 = arith.constant 0xFF800000 : f32
    %117 = vector.broadcast %cst_46 : f32 to vector<6x1xf32>
    %118 = arith.select %110, %117, %86 : vector<6x1xi1>, vector<6x1xf32>
    %cst_47 = arith.constant dense<0xFF800000> : vector<1xf32>
    %119 = vector.multi_reduction <maximumf>, %118, %cst_47 [0] : vector<6x1xf32> to vector<1xf32>
    %120 = vector.shape_cast %119 : vector<1xf32> to vector<1x1xf32>
    %121 = vector.broadcast %120 : vector<1x1xf32> to vector<6x1xf32>
    %122 = arith.cmpf oeq, %118, %121 : vector<6x1xf32>
    %c2147483647_i32_48 = arith.constant 2147483647 : i32
    %123 = vector.broadcast %c2147483647_i32_48 : i32 to vector<6x1xi32>
    %124 = arith.select %122, %88, %123 : vector<6x1xi1>, vector<6x1xi32>
    %cst_49 = arith.constant dense<2147483647> : vector<1xi32>
    %125 = vector.multi_reduction <minsi>, %124, %cst_49 [0] : vector<6x1xi32> to vector<1xi32>
    %126 = vector.shape_cast %125 : vector<1xi32> to vector<1x1xi32>
    %127 = vector.broadcast %120 : vector<1x1xf32> to vector<6x1xf32>
    %128 = arith.cmpf oeq, %118, %127 : vector<6x1xf32>
    %129 = vector.broadcast %126 : vector<1x1xi32> to vector<6x1xi32>
    %130 = arith.cmpi eq, %88, %129 : vector<6x1xi32>
    %131 = arith.andi %128, %130 : vector<6x1xi1>
    %c6_i32_50 = arith.constant 6 : i32
    %132 = vector.broadcast %c6_i32_50 : i32 to vector<6x1xi32>
    %133 = arith.select %131, %91, %132 : vector<6x1xi1>, vector<6x1xi32>
    %cst_51 = arith.constant dense<2147483647> : vector<1xi32>
    %134 = vector.multi_reduction <minsi>, %133, %cst_51 [0] : vector<6x1xi32> to vector<1xi32>
    %135 = vector.shape_cast %134 : vector<1xi32> to vector<1x1xi32>
    %136 = vector.broadcast %135 : vector<1x1xi32> to vector<6x1xi32>
    %137 = arith.cmpi eq, %91, %136 : vector<6x1xi32>
    %cst_52 = arith.constant 0.000000e+00 : f32
    %138 = vector.shape_cast %137 : vector<6x1xi1> to vector<6x1xi1>
    %139 = vector.broadcast %138 : vector<6x1xi1> to vector<6x12xi1>
    %140 = vector.broadcast %cst_52 : f32 to vector<6x12xf32>
    %141 = arith.select %139, %90, %140 : vector<6x12xi1>, vector<6x12xf32>
    %cst_53 = arith.constant dense<0.000000e+00> : vector<12xf32>
    %142 = vector.multi_reduction <add>, %141, %cst_53 [0] : vector<6x12xf32> to vector<12xf32>
    %143 = vector.shape_cast %142 : vector<12xf32> to vector<1x12xf32>
    %cst_54 = arith.constant 0xFF800000 : f32
    %144 = vector.broadcast %cst_54 : f32 to vector<6x1xf32>
    %145 = arith.select %137, %144, %118 : vector<6x1xi1>, vector<6x1xf32>
    %cst_55 = arith.constant dense<0xFF800000> : vector<1xf32>
    %146 = vector.multi_reduction <maximumf>, %145, %cst_55 [0] : vector<6x1xf32> to vector<1xf32>
    %147 = vector.shape_cast %146 : vector<1xf32> to vector<1x1xf32>
    %148 = vector.broadcast %147 : vector<1x1xf32> to vector<6x1xf32>
    %149 = arith.cmpf oeq, %145, %148 : vector<6x1xf32>
    %c2147483647_i32_56 = arith.constant 2147483647 : i32
    %150 = vector.broadcast %c2147483647_i32_56 : i32 to vector<6x1xi32>
    %151 = arith.select %149, %88, %150 : vector<6x1xi1>, vector<6x1xi32>
    %cst_57 = arith.constant dense<2147483647> : vector<1xi32>
    %152 = vector.multi_reduction <minsi>, %151, %cst_57 [0] : vector<6x1xi32> to vector<1xi32>
    %153 = vector.shape_cast %152 : vector<1xi32> to vector<1x1xi32>
    %154 = vector.broadcast %147 : vector<1x1xf32> to vector<6x1xf32>
    %155 = arith.cmpf oeq, %145, %154 : vector<6x1xf32>
    %156 = vector.broadcast %153 : vector<1x1xi32> to vector<6x1xi32>
    %157 = arith.cmpi eq, %88, %156 : vector<6x1xi32>
    %158 = arith.andi %155, %157 : vector<6x1xi1>
    %c6_i32_58 = arith.constant 6 : i32
    %159 = vector.broadcast %c6_i32_58 : i32 to vector<6x1xi32>
    %160 = arith.select %158, %91, %159 : vector<6x1xi1>, vector<6x1xi32>
    %cst_59 = arith.constant dense<2147483647> : vector<1xi32>
    %161 = vector.multi_reduction <minsi>, %160, %cst_59 [0] : vector<6x1xi32> to vector<1xi32>
    %162 = vector.shape_cast %161 : vector<1xi32> to vector<1x1xi32>
    %163 = vector.broadcast %162 : vector<1x1xi32> to vector<6x1xi32>
    %164 = arith.cmpi eq, %91, %163 : vector<6x1xi32>
    %cst_60 = arith.constant 0.000000e+00 : f32
    %165 = vector.shape_cast %164 : vector<6x1xi1> to vector<6x1xi1>
    %166 = vector.broadcast %165 : vector<6x1xi1> to vector<6x12xi1>
    %167 = vector.broadcast %cst_60 : f32 to vector<6x12xf32>
    %168 = arith.select %166, %90, %167 : vector<6x12xi1>, vector<6x12xf32>
    %cst_61 = arith.constant dense<0.000000e+00> : vector<12xf32>
    %169 = vector.multi_reduction <add>, %168, %cst_61 [0] : vector<6x12xf32> to vector<12xf32>
    %170 = vector.shape_cast %169 : vector<12xf32> to vector<1x12xf32>
    %171 = tpu.concatenate %93, %120, %147 in 0 : vector<1x1xf32>, vector<1x1xf32>, vector<1x1xf32> -> vector<3x1xf32>
    %c0_62 = arith.constant 0 : index
    %c0_63 = arith.constant 0 : index
    %172 = vector.load %arg11[%c0_62, %c0_63] : memref<3x1xf32, #tpu.memory_space<vmem>>, vector<3x1xf32>
    tpu.vector_store %arg11[%c0_62, %c0_63], %171 {strides = array<i32>} : memref<3x1xf32, #tpu.memory_space<vmem>>, vector<3x1xf32>,
    %173 = tpu.concatenate %99, %126, %153 in 0 : vector<1x1xi32>, vector<1x1xi32>, vector<1x1xi32> -> vector<3x1xi32>
    %c0_64 = arith.constant 0 : index
    %c0_65 = arith.constant 0 : index
    %174 = vector.load %arg12[%c0_64, %c0_65] : memref<3x1xi32, #tpu.memory_space<vmem>>, vector<3x1xi32>
    tpu.vector_store %arg12[%c0_64, %c0_65], %173 {strides = array<i32>} : memref<3x1xi32, #tpu.memory_space<vmem>>, vector<3x1xi32>,
    %175 = tpu.concatenate %116, %143, %170 in 0 : vector<1x12xf32>, vector<1x12xf32>, vector<1x12xf32> -> vector<3x12xf32>
    %c0_66 = arith.constant 0 : index
    %c0_67 = arith.constant 0 : index
    %176 = vector.load %arg13[%c0_66, %c0_67] : memref<3x12xf32, #tpu.memory_space<vmem>>, vector<3x12xf32>
    tpu.vector_store %arg13[%c0_66, %c0_67], %175 {strides = array<i32>} : memref<3x12xf32, #tpu.memory_space<vmem>>, vector<3x12xf32>,
    %c1_i32 = arith.constant 1 : i32
    %177 = arith.cmpi eq, %arg1, %c1_i32 : i32
    %178 = arith.extui %177 : i1 to i32
    %c0_i32_68 = arith.constant 0 : i32
    %179 = arith.cmpi ne, %178, %c0_i32_68 : i32
    scf.if %179 {
      %c0_69 = arith.constant 0 : index
      %c0_70 = arith.constant 0 : index
      %180 = vector.load %arg13[%c0_69, %c0_70] : memref<3x12xf32, #tpu.memory_space<vmem>>, vector<3x12xf32>
      %c0_71 = arith.constant 0 : index
      %c0_72 = arith.constant 0 : index
      %181 = vector.load %arg9[%c0_71, %c0_72] : memref<1x4xf32, #tpu.memory_space<vmem>>, vector<1x4xf32>
      %182 = vector.extract_strided_slice %180 {offsets = [0, 0], sizes = [1, 4], strides = [1, 1]} : vector<3x12xf32> to vector<1x4xf32>
      %183 = arith.addf %181, %182 : vector<1x4xf32>
      %184 = vector.extract_strided_slice %180 {offsets = [1, 4], sizes = [1, 4], strides = [1, 1]} : vector<3x12xf32> to vector<1x4xf32>
      %185 = arith.addf %183, %184 : vector<1x4xf32>
      %186 = vector.extract_strided_slice %180 {offsets = [2, 8], sizes = [1, 4], strides = [1, 1]} : vector<3x12xf32> to vector<1x4xf32>
      %187 = arith.addf %185, %186 : vector<1x4xf32>
      %c0_73 = arith.constant 0 : index
      %c0_74 = arith.constant 0 : index
      %c0_75 = arith.constant 0 : index
      %188 = vector.load %arg10[%c0_73, %c0_74, %c0_75] : memref<1x1x4xf32, #tpu.memory_space<vmem>>, vector<1x1x4xf32>
      %189 = vector.shape_cast %188 : vector<1x1x4xf32> to vector<1x4xf32>
      %190 = vector.shape_cast %187 : vector<1x4xf32> to vector<1x1x4xf32>
      tpu.vector_store %arg10[%c0_73, %c0_74, %c0_75], %190 {strides = array<i32>} : memref<1x1x4xf32, #tpu.memory_space<vmem>>, vector<1x1x4xf32>,
    } else {
    }
    return
  }
  func.func @transform_0(%arg0: i32, %arg1: i32, %arg2: memref<2xi32, #tpu.memory_space<smem>>) -> (i32, i32, i32) {
    %c0_i32 = arith.constant 0 : i32
    %c0_i32_0 = arith.constant 0 : i32
    return %arg0, %arg1, %c0_i32 : i32, i32, i32
  }
  func.func @transform_1(%arg0: i32, %arg1: i32, %arg2: memref<2xi32, #tpu.memory_space<smem>>) -> (i32, i32, i32) {
    %c0_i32 = arith.constant 0 : i32
    %c0_i32_0 = arith.constant 0 : i32
    return %arg0, %arg1, %c0_i32 : i32, i32, i32
  }
  func.func @transform_2(%arg0: i32, %arg1: i32, %arg2: memref<2xi32, #tpu.memory_space<smem>>) -> (i32, i32, i32) {
    %c0_i32 = arith.constant 0 : i32
    %c0_i32_0 = arith.constant 0 : i32
    return %arg0, %arg1, %c0_i32 : i32, i32, i32
  }
  func.func @transform_3(%arg0: i32, %arg1: i32, %arg2: memref<2xi32, #tpu.memory_space<smem>>) -> (i32, i32) {
    %c0_i32 = arith.constant 0 : i32
    %c0_i32_0 = arith.constant 0 : i32
    %c0_i32_1 = arith.constant 0 : i32
    return %c0_i32, %c0_i32_0 : i32, i32
  }
  func.func @transform_4(%arg0: i32, %arg1: i32, %arg2: memref<2xi32, #tpu.memory_space<smem>>) -> (i32, i32) {
    %c0_i32 = arith.constant 0 : i32
    %c0_i32_0 = arith.constant 0 : i32
    %c0_i32_1 = arith.constant 0 : i32
    return %c0_i32, %c0_i32_0 : i32, i32
  }
  func.func @transform_5(%arg0: i32, %arg1: i32, %arg2: memref<2xi32, #tpu.memory_space<smem>>) -> (i32, i32) {
    %c0_i32 = arith.constant 0 : i32
    %c0_i32_0 = arith.constant 0 : i32
    %c0_i32_1 = arith.constant 0 : i32
    return %c0_i32, %c0_i32_0 : i32, i32
  }
  func.func @transform_6(%arg0: i32, %arg1: i32, %arg2: memref<2xi32, #tpu.memory_space<smem>>) -> (i32, i32) {
    %c0_i32 = arith.constant 0 : i32
    %c0_i32_0 = arith.constant 0 : i32
    %c0_i32_1 = arith.constant 0 : i32
    return %c0_i32, %c0_i32_0 : i32, i32
  }
  func.func @transform_7(%arg0: i32, %arg1: i32, %arg2: memref<2xi32, #tpu.memory_space<smem>>) -> (i32, i32, i32) {
    %c0_i32 = arith.constant 0 : i32
    %c0_i32_0 = arith.constant 0 : i32
    %c0_i32_1 = arith.constant 0 : i32
    return %arg0, %c0_i32, %c0_i32_0 : i32, i32, i32
  }
}

</mosaic_0001>

<llo_original>
// kernel: gcn_sortk_pool_encoder.7
$region0: #{gcn_sortk_pool_encoder.7}
  #allocation0 [shape = 'u32[]', space=smem, size = 0x4, offset = 0x4, fixed_abs, tag = 'smem constant byte address 0x4 - core index']
  #allocation1 [shape = 'u32[144,128]{1,0:T(1,128)}', space=vmem, size = 0x12000, scoped, tag = 'internal scratch']
  %s0 = inlined_call_operand.vmem [shape: f32[2,16,16], index: 0, kind: input, shape index: {}]
  %s1 = inlined_call_operand.vmem [shape: f32[2,16,16], index: 1, kind: output, shape index: {}]
  %s2 = sld [smem:[#allocation0]]
  $region14: #{gcn_sortk_pool_encoder.7} parent=0
    _
  %s4 = ssub.s32 1, %s2
  %s5 = scalar_select 0, %s4, %s2
  // Predicated region
  $region2: #{gcn_sortk_pool_encoder.7} parent=0 // pred_check
    _
  $region3: #{gcn_sortk_pool_encoder.7} parent=0 // pred_check_branch
    %7 = sbr.rel (0) target = $region5
  $region4: #{gcn_sortk_pool_encoder.7} parent=0 // pred_region
    _
  $region5: #{gcn_sortk_pool_encoder.7} parent=0 // pred_fallthru
    _
  %v8 = vld [vmem:[%s0] sm:$0xff]
  %v9 = vld [vmem:[%s0 + $0x8] sm:$0xff]
  %v10 = vld [vmem:[%s0 + $0x10] sm:$0xff]
  %v11 = vld [vmem:[%s0 + $0x18] sm:$0xff]
  %vm12 = vcmask 130048
  %v13 = vsel %vm12, %v8, 0.0
  %14 = vadd.xlane.f32.xlu0 %v13
  %v15 = vpop.xlane.xlu0 %14
  %v16 = vsel %vm12, %v9, 0.0
  %17 = vadd.xlane.f32.xlu0 %v16
  %v18 = vpop.xlane.xlu0 %17
  %v19 = vsel %vm12, %v10, 0.0
  %20 = vadd.xlane.f32.xlu0 %v19
  %v21 = vpop.xlane.xlu0 %20
  %v22 = vsel %vm12, %v11, 0.0
  %23 = vadd.xlane.f32.xlu0 %v22
  %v24 = vpop.xlane.xlu0 %23
  %v25 = vadd.f32 %v15, %v21
  %v26 = vadd.f32 %v18, %v24
  %v27 = vmul.f32 %v25, 0.03125
  %v28 = vmul.f32 %v26, 0.03125
  %v29 = vsub.f32 %v8, %v27
  %v30 = vsub.f32 %v9, %v28
  %v31 = vsub.f32 %v10, %v27
  %v32 = vsub.f32 %v11, %v28
  %v33 = vmul.f32 %v29, %v29
  %v34 = vmul.f32 %v30, %v30
  %v35 = vmul.f32 %v31, %v31
  %v36 = vmul.f32 %v32, %v32
  %v37 = vsel %vm12, %v33, 0.0
  %38 = vadd.xlane.f32.xlu0 %v37
  %v39 = vpop.xlane.xlu0 %38
  %v40 = vsel %vm12, %v34, 0.0
  %41 = vadd.xlane.f32.xlu0 %v40
  %v42 = vpop.xlane.xlu0 %41
  %v43 = vsel %vm12, %v35, 0.0
  %44 = vadd.xlane.f32.xlu0 %v43
  %v45 = vpop.xlane.xlu0 %44
  %v46 = vsel %vm12, %v36, 0.0
  %47 = vadd.xlane.f32.xlu0 %v46
  %v48 = vpop.xlane.xlu0 %47
  %v49 = vadd.f32 %v39, %v45
  %v50 = vadd.f32 %v42, %v48
  %v51 = vmul.f32 %v49, 0.03125
  %v52 = vmul.f32 %v50, 0.03125
  %v53 = vadd.f32 %v51, 1e-05
  %v54 = vadd.f32 %v52, 1e-05
  %v55 = vrsqrt.pop %v53
  %v56 = vrsqrt.pop %v54
  %v57 = vmul.f32 %v29, %v55
  %v58 = vmul.f32 %v30, %v56
  %v59 = vmul.f32 %v31, %v55
  %v60 = vmul.f32 %v32, %v56
  %61 = vst.msk [vmem:[%s1] sm:$0xff] %vm12, %v57
  %62 = vst.msk [vmem:[%s1 + $0x8] sm:$0xff] %vm12, %v58
  %63 = vst.msk [vmem:[%s1 + $0x10] sm:$0xff] %vm12, %v59
  %64 = vst.msk [vmem:[%s1 + $0x18] sm:$0xff] %vm12, %v60
  // Predicated region
  $region6: #{gcn_sortk_pool_encoder.7} parent=0 // pred_check
    _
  $region7: #{gcn_sortk_pool_encoder.7} parent=0 // pred_check_branch
    %66 = sbr.rel (0) target = $region9
  $region8: #{gcn_sortk_pool_encoder.7} parent=0 // pred_region
    _
  $region9: #{gcn_sortk_pool_encoder.7} parent=0 // pred_fallthru
    _
  // Predicated region
  $region10: #{gcn_sortk_pool_encoder.7} parent=0 // pred_check
    _
  $region11: #{gcn_sortk_pool_encoder.7} parent=0 // pred_check_branch
    %68 = sbr.rel (0) target = $region13
  $region12: #{gcn_sortk_pool_encoder.7} parent=0 // pred_region
    _
  $region13: #{gcn_sortk_pool_encoder.7} parent=0 // pred_fallthru
    _

// kernel: gcn_sortk_pool_encoder.6
$region0: #{gcn_sortk_pool_encoder.6}
  #allocation0 [shape = 'u32[]', space=smem, size = 0x4, offset = 0x4, fixed_abs, tag = 'smem constant byte address 0x4 - core index']
  #allocation1 [shape = 'u32[144,128]{1,0:T(1,128)}', space=vmem, size = 0x12000, scoped, tag = 'internal scratch']
  %s0 = inlined_call_operand.vmem [shape: f32[2,16,16], index: 0, kind: input, shape index: {}]
  %s1 = inlined_call_operand.vmem [shape: f32[2,16,8], index: 1, kind: input, shape index: {}]
  %s2 = inlined_call_operand.vmem [shape: f32[8,16], index: 2, kind: input, shape index: {}]
  %s3 = inlined_call_operand.vmem [shape: f32[1,16], index: 3, kind: input, shape index: {}]
  %s4 = inlined_call_operand.vmem [shape: f32[2,16,16], index: 4, kind: output, shape index: {}]
  %s5 = sld [smem:[#allocation0]]
  $region49: #{gcn_sortk_pool_encoder.6} parent=0
    _
  %s7 = ssub.s32 1, %s5
  %s8 = scalar_select 0, %s7, %s5
  loop: start=0, step=1, limit=4
  $region2: #{gcn_sortk_pool_encoder.6} parent=0 // loop_pre_header
    _
  $region3: #{gcn_sortk_pool_encoder.6} parent=0 // loop_header
    %s10 = sphi 0, %s14
    %p11 = scmp.ge.s32.totalorder %s10, 4
    %s17 = sphi 0, %s29
    %s18 = sphi 0, %s25
    %s19 = sphi 0, %s17
    %s20 = sphi 0, %s18
    %s21 = sphi 0, %s19
    %s22 = sphi 0, %s20
    %s34 = sphi 0, %s36
    %s37 = sphi 0, %s34
    %s38 = sphi 0, %s37
    %s54 = sphi 0, %s38
    %s60 = sphi 0, %s62
    %s63 = sphi 0, %s60
    %s64 = sphi 0, %s63
    %s80 = sphi 0, %s64
    %s84 = sphi 0, %s84
    %s86 = sphi 0, %s84
    %s87 = sphi 0, %s86
    %s101 = sphi 0, %s87
    %s105 = sphi 0, %s105
    %s107 = sphi 0, %s105
    %s108 = sphi 0, %s107
    %s122 = sphi 0, %s108
    %s130 = sphi 0, %s132
    %s133 = sphi 0, %s130
    %s134 = sphi 0, %s133
    %s150 = sphi 0, %s134
  $region4: #{gcn_sortk_pool_encoder.6} parent=0 // loop_header_branch
    %13 = sbr.rel (%p11) target = $region8
  $region5: #{gcn_sortk_pool_encoder.6} parent=0 // loop_body
    %s15 = ssub.s32 %s10, 1
    %s16 = ssub.s32 %s10, 2
    %s23 = sadd.s32 1, %s18
    %p24 = scmp.ge.s32.totalorder %s23, 1
    %s25 = scalar_select %p24, 0, %s23
    %s26 = sadd.s32 1, %s17
    %s27 = scalar_select %p24, %s26, %s17
    %p28 = scmp.ge.s32.totalorder %s27, 2
    %s29 = scalar_select %p28, 0, %s27
    %s30 = ssub.s32 %s17, %s29
    %s31 = ssub.s32 %s18, %s25
    %s32 = sor.u32 %s30, %s31
    %p33 = scmp.eq.s32.totalorder %s32, 0
    %s35 = sadd.s32 %s34, 1
    %s36 = scalar_select %p33, %s34, %s35
    %p39 = pneg %p33
    %p40 = scmp.eq.s32.totalorder %s10, 1
    %p41 = por %p39, %p40
    %p42 = scmp.ne.s32.totalorder %s34, %s37
    %p43 = scmp.eq.s32.totalorder %s10, 0
    %p44 = por %p42, %p43
    %p45 = scmp.ne.s32.totalorder %s34, %s37
    %p46 = scmp.eq.s32.totalorder %s15, 1
    %p47 = por %p45, %p46
    %p48 = scmp.ne.s32.totalorder %s37, %s38
    %p49 = scmp.eq.s32.totalorder %s15, 0
    %p50 = por %p48, %p49
    %p51 = scmp.ne.s32.totalorder %s37, %s38
    %p52 = scmp.eq.s32.totalorder %s16, 1
    %p53 = por %p51, %p52
    %p55 = scmp.ne.s32.totalorder %s38, %s54
    %p56 = scmp.eq.s32.totalorder %s16, 0
    %p57 = por %p55, %p56
    %s58 = ssub.s32 %s17, %s29
    %p59 = scmp.eq.s32.totalorder %s58, 0
    %s61 = sadd.s32 %s60, 1
    %s62 = scalar_select %p59, %s60, %s61
    %p65 = pneg %p59
    %p66 = scmp.eq.s32.totalorder %s10, 1
    %p67 = por %p65, %p66
    %p68 = scmp.ne.s32.totalorder %s60, %s63
    %p69 = scmp.eq.s32.totalorder %s10, 0
    %p70 = por %p68, %p69
    %p71 = scmp.ne.s32.totalorder %s60, %s63
    %p72 = scmp.eq.s32.totalorder %s15, 1
    %p73 = por %p71, %p72
    %p74 = scmp.ne.s32.totalorder %s63, %s64
    %p75 = scmp.eq.s32.totalorder %s15, 0
    %p76 = por %p74, %p75
    %p77 = scmp.ne.s32.totalorder %s63, %s64
    %p78 = scmp.eq.s32.totalorder %s16, 1
    %p79 = por %p77, %p78
    %p81 = scmp.ne.s32.totalorder %s64, %s80
    %p82 = scmp.eq.s32.totalorder %s16, 0
    %p83 = por %p81, %p82
    %s85 = sadd.s32 %s84, 1
    %p88 = scmp.eq.s32.totalorder %s10, 1
    %p89 = scmp.ne.s32.totalorder %s84, %s86
    %p90 = scmp.eq.s32.totalorder %s10, 0
    %p91 = por %p89, %p90
    %p92 = scmp.ne.s32.totalorder %s84, %s86
    %p93 = scmp.eq.s32.totalorder %s15, 1
    %p94 = por %p92, %p93
    %p95 = scmp.ne.s32.totalorder %s86, %s87
    %p96 = scmp.eq.s32.totalorder %s15, 0
    %p97 = por %p95, %p96
    %p98 = scmp.ne.s32.totalorder %s86, %s87
    %p99 = scmp.eq.s32.totalorder %s16, 1
    %p100 = por %p98, %p99
    %p102 = scmp.ne.s32.totalorder %s87, %s101
    %p103 = scmp.eq.s32.totalorder %s16, 0
    %p104 = por %p102, %p103
    %s106 = sadd.s32 %s105, 1
    %p109 = scmp.eq.s32.totalorder %s10, 1
    %p110 = scmp.ne.s32.totalorder %s105, %s107
    %p111 = scmp.eq.s32.totalorder %s10, 0
    %p112 = por %p110, %p111
    %p113 = scmp.ne.s32.totalorder %s105, %s107
    %p114 = scmp.eq.s32.totalorder %s15, 1
    %p115 = por %p113, %p114
    %p116 = scmp.ne.s32.totalorder %s107, %s108
    %p117 = scmp.eq.s32.totalorder %s15, 0
    %p118 = por %p116, %p117
    %p119 = scmp.ne.s32.totalorder %s107, %s108
    %p120 = scmp.eq.s32.totalorder %s16, 1
    %p121 = por %p119, %p120
    %p123 = scmp.ne.s32.totalorder %s108, %s122
    %p124 = scmp.eq.s32.totalorder %s16, 0
    %p125 = por %p123, %p124
    %s126 = ssub.s32 %s17, %s29
    %s127 = ssub.s32 %s18, %s25
    %s128 = sor.u32 %s126, %s127
    %p129 = scmp.eq.s32.totalorder %s128, 0
    %s131 = sadd.s32 %s130, 1
    %s132 = scalar_select %p129, %s130, %s131
    %p135 = pneg %p129
    %p136 = scmp.eq.s32.totalorder %s10, 1
    %p137 = por %p135, %p136
    %p138 = scmp.ne.s32.totalorder %s130, %s133
    %p139 = scmp.eq.s32.totalorder %s10, 0
    %p140 = por %p138, %p139
    %p141 = scmp.ne.s32.totalorder %s130, %s133
    %p142 = scmp.eq.s32.totalorder %s15, 1
    %p143 = por %p141, %p142
    %p144 = scmp.ne.s32.totalorder %s133, %s134
    %p145 = scmp.eq.s32.totalorder %s15, 0
    %p146 = por %p144, %p145
    %p147 = scmp.ne.s32.totalorder %s133, %s134
    %p148 = scmp.eq.s32.totalorder %s16, 1
    %p149 = por %p147, %p148
    %p151 = scmp.ne.s32.totalorder %s134, %s150
    %p152 = scmp.eq.s32.totalorder %s16, 0
    %p153 = por %p151, %p152
    %p154 = scmp.le.s32.totalorder 1, %s10
    %p155 = scmp.lt.s32.totalorder %s10, 3
    %p156 = pnand %p154, %p155
    %p157 = pneg %p156
    // Predicated region
    $region9: #{gcn_sortk_pool_encoder.6} parent=5 // pred_check
      _
    $region10: #{gcn_sortk_pool_encoder.6} parent=5 // pred_check_branch
      %159 = sbr.rel (%p156) target = $region12
    $region11: #{gcn_sortk_pool_encoder.6} parent=5 // pred_region
      %s160 = ssub.s32 %s10, 1
      // Predicated region
      $region13: #{gcn_sortk_pool_encoder.6} parent=11 // pred_check
        %p161 = pneg %p97
      $region14: #{gcn_sortk_pool_encoder.6} parent=11 // pred_check_branch
        %163 = sbr.rel (%p161) target = $region16
      $region15: #{gcn_sortk_pool_encoder.6} parent=11 // pred_region
        _
      $region16: #{gcn_sortk_pool_encoder.6} parent=11 // pred_fallthru
        _
      // Predicated region
      $region17: #{gcn_sortk_pool_encoder.6} parent=11 // pred_check
        %p164 = pneg %p118
      $region18: #{gcn_sortk_pool_encoder.6} parent=11 // pred_check_branch
        %166 = sbr.rel (%p164) target = $region20
      $region19: #{gcn_sortk_pool_encoder.6} parent=11 // pred_region
        _
      $region20: #{gcn_sortk_pool_encoder.6} parent=11 // pred_fallthru
        _
    $region12: #{gcn_sortk_pool_encoder.6} parent=5 // pred_fallthru
      _
    %p167 = scmp.lt.s32.totalorder %s10, 2
    // Predicated region
    $region21: #{gcn_sortk_pool_encoder.6} parent=5 // pred_check
      %p168 = pneg %p167
    $region22: #{gcn_sortk_pool_encoder.6} parent=5 // pred_check_branch
      %170 = sbr.rel (%p168) target = $region24
    $region23: #{gcn_sortk_pool_encoder.6} parent=5 // pred_region
      // Predicated region
      $region25: #{gcn_sortk_pool_encoder.6} parent=23 // pred_check
        %p171 = pneg %p44
      $region26: #{gcn_sortk_pool_encoder.6} parent=23 // pred_check_branch
        %173 = sbr.rel (%p171) target = $region28
      $region27: #{gcn_sortk_pool_encoder.6} parent=23 // pred_region
        %s174 = smul.u32 2, %s18
        %p175 = scmp.lt.s32.totalorder %s17, 1
        %s176 = scalar_select %p175, %s17, 1
        %p177 = scmp.lt.s32.totalorder %s174, 1
        %s178 = scalar_select %p177, %s174, 1
        %s179 = smul.addr %s176, 2
        %s180 = sadd.s32 %s178, %s179
        %s181 = smul.addr %s180, 8
        %s182 = scalar_lea.vmem %s0, %s181
        %s183 = smul.u32 2, %s18
      $region28: #{gcn_sortk_pool_encoder.6} parent=23 // pred_fallthru
        _
      // Predicated region
      $region29: #{gcn_sortk_pool_encoder.6} parent=23 // pred_check
        %p184 = pneg %p70
      $region30: #{gcn_sortk_pool_encoder.6} parent=23 // pred_check_branch
        %186 = sbr.rel (%p184) target = $region32
      $region31: #{gcn_sortk_pool_encoder.6} parent=23 // pred_region
        %p187 = scmp.lt.s32.totalorder %s17, 1
        %s188 = scalar_select %p187, %s17, 1
        %s189 = smul.addr %s188, 2
        %s190 = smul.addr %s189, 8
        %s191 = scalar_lea.vmem %s1, %s190
      $region32: #{gcn_sortk_pool_encoder.6} parent=23 // pred_fallthru
        _
    $region24: #{gcn_sortk_pool_encoder.6} parent=5 // pred_fallthru
      _
    %p192 = scmp.le.s32.totalorder 1, %s10
    %p193 = scmp.lt.s32.totalorder %s10, 3
    %p194 = pnand %p192, %p193
    %p195 = pneg %p194
    // Predicated region
    $region33: #{gcn_sortk_pool_encoder.6} parent=5 // pred_check
      _
    $region34: #{gcn_sortk_pool_encoder.6} parent=5 // pred_check_branch
      %197 = sbr.rel (%p194) target = $region36
    $region35: #{gcn_sortk_pool_encoder.6} parent=5 // pred_region
      %s198 = ssub.s32 %s10, 1
      %s199 = smul.u32 2, %s20
      %p200 = scmp.lt.s32.totalorder %s19, 1
      %s201 = scalar_select %p200, %s19, 1
      %p202 = scmp.lt.s32.totalorder %s199, 1
      %s203 = scalar_select %p202, %s199, 1
      %s204 = smul.addr %s201, 2
      %s205 = sadd.s32 %s203, %s204
      %s206 = smul.addr %s205, 8
      %s207 = scalar_lea.vmem %s0, %s206
      %p208 = pneg %p50
      %p209 = pneg %p47
      %p210 = scmp.lt.s32.totalorder %s19, 1
      %s211 = scalar_select %p210, %s19, 1
      %s212 = smul.addr %s211, 2
      %s213 = smul.addr %s212, 8
      %s214 = scalar_lea.vmem %s1, %s213
      %p215 = pneg %p76
      %p216 = pneg %p73
      %p217 = pneg %p97
      %p218 = pneg %p94
      %p219 = pneg %p118
      %p220 = pneg %p115
      %p221 = pneg %p146
      %p222 = pneg %p143
      %s223 = smul.u32 2, %s20
      %p224 = scmp.lt.s32.totalorder %s19, 1
      %s225 = scalar_select %p224, %s19, 1
      %p226 = scmp.lt.s32.totalorder %s223, 1
      %s227 = scalar_select %p226, %s223, 1
      %s228 = smul.addr %s225, 2
      %s229 = sadd.s32 %s227, %s228
      %s230 = smul.addr %s229, 8
      %s231 = scalar_lea.vmem %s4, %s230
      %s232 = smul.u32 2, %s20
      %p233 = scmp.lt.s32.totalorder %s19, 1
      %s234 = scalar_select %p233, %s19, 1
      %p235 = scmp.lt.s32.totalorder %s232, 1
      %s236 = scalar_select %p235, %s232, 1
      %s237 = smul.addr %s234, 2
      %s238 = sadd.s32 %s236, %s237
      %s239 = smul.addr %s238, 8
      %s240 = scalar_lea.vmem %s0, %s239
      %s241 = smul.u32 2, %s20
      %p242 = scmp.lt.s32.totalorder %s19, 1
      %s243 = scalar_select %p242, %s19, 1
      %s244 = smul.addr %s243, 2
      %s245 = smul.addr %s244, 8
      %s246 = scalar_lea.vmem %s1, %s245
      %s247 = smul.u32 2, %s20
      %p248 = scmp.lt.s32.totalorder %s19, 1
      %s249 = scalar_select %p248, %s19, 1
      %p250 = scmp.lt.s32.totalorder %s247, 1
      %s251 = scalar_select %p250, %s247, 1
      %s252 = smul.addr %s249, 2
      %s253 = sadd.s32 %s251, %s252
      %s254 = smul.addr %s253, 8
      %s255 = scalar_lea.vmem %s4, %s254
      %s256 = smul.u32 2, %s20
      %v257 = vld [vmem:[%s240] sm:$0xff]
      %v258 = vld [vmem:[%s240 + $0x8] sm:$0xff]
      %v259 = vld [vmem:[%s246] sm:$0xff]
      %v260 = vld [vmem:[%s246 + $0x8] sm:$0xff]
      %vm261 = vcmask 130048
      %v263 = vsel %vm261, %v257, 0
      %v266 = vsel %vm261, %v258, 0
      %268 = vmatprep.subr.mxu0 0.0
      %269 = vmatpush1.msra.mxu0 0.0
      %270 = vmatprep.subr.mxu0 0.0
      %271 = vmatpush1.msra.mxu0 0.0
      %272 = vmatprep.subr.mxu0 0.0
      %273 = vmatpush1.msra.mxu0 0.0
      %274 = vmatprep.subr.mxu0 0.0
      %275 = vmatpush1.msra.mxu0 0.0
      %276 = vmatprep.subr.mxu0 0.0
      %277 = vmatpush1.msra.mxu0 0.0
      %278 = vmatprep.subr.mxu0 0.0
      %279 = vmatpush1.msra.mxu0 0.0
      %280 = vmatprep.subr.mxu0 0.0
      %281 = vmatpush1.msra.mxu0 0.0
      %282 = vmatprep.subr.mxu0 0.0
      %283 = vmatpush1.msra.mxu0 0.0
      %284 = vmatprep.subr.mxu0 0.0
      %285 = vmatpush1.msra.mxu0 0.0
      %286 = vmatprep.subr.mxu0 0.0
      %287 = vmatpush1.msra.mxu0 0.0
      %288 = vmatprep.subr.mxu0 0.0
      %289 = vmatpush1.msra.mxu0 0.0
      %290 = vmatprep.subr.mxu0 0.0
      %291 = vmatpush1.msra.mxu0 0.0
      %292 = vmatprep.subr.mxu0 0.0
      %293 = vmatpush1.msra.mxu0 0.0
      %294 = vmatprep.subr.mxu0 0.0
      %295 = vmatpush1.msra.mxu0 0.0
      %296 = vmatprep.subr.mxu0 0.0
      %v297 = vand.u32 %v260, 4294901760
      %298 = vmatpush1.msra.mxu0 %v297
      %299 = vmatprep.subr.mxu0 0.0
      %v300 = vand.u32 %v259, 4294901760
      %301 = vmatpush1.msra.mxu0 %v300
      %302 = vmatprep.subr.mxu0 0.0
      %303 = vmatpush2.msra.mxu0 0.0
      %304 = vmatprep.subr.mxu0 0.0
      %305 = vmatpush2.msra.mxu0 0.0
      %306 = vmatprep.subr.mxu0 0.0
      %307 = vmatpush2.msra.mxu0 0.0
      %308 = vmatprep.subr.mxu0 0.0
      %309 = vmatpush2.msra.mxu0 0.0
      %310 = vmatprep.subr.mxu0 0.0
      %311 = vmatpush2.msra.mxu0 0.0
      %312 = vmatprep.subr.mxu0 0.0
      %313 = vmatpush2.msra.mxu0 0.0
      %314 = vmatprep.subr.mxu0 0.0
      %315 = vmatpush2.msra.mxu0 0.0
      %316 = vmatprep.subr.mxu0 0.0
      %317 = vmatpush2.msra.mxu0 0.0
      %318 = vmatprep.subr.mxu0 0.0
      %319 = vmatpush2.msra.mxu0 0.0
      %320 = vmatprep.subr.mxu0 0.0
      %321 = vmatpush2.msra.mxu0 0.0
      %322 = vmatprep.subr.mxu0 0.0
      %323 = vmatpush2.msra.mxu0 0.0
      %324 = vmatprep.subr.mxu0 0.0
      %325 = vmatpush2.msra.mxu0 0.0
      %326 = vmatprep.subr.mxu0 0.0
      %327 = vmatpush2.msra.mxu0 0.0
      %328 = vmatprep.subr.mxu0 0.0
      %329 = vmatpush2.msra.mxu0 0.0
      %330 = vmatprep.subr.mxu0 0.0
      %331 = vmatpush2.msra.mxu0 0.0
      %332 = vmatprep.subr.mxu0 0.0
      %333 = vmatpush2.msra.mxu0 0.0
      %334 = vmatprep.mubr.f32.mxu0 0.0
      %v335 = vand.u32 %v263, 4294901760
      %v336 = vsub.f32 %v263, %v335
      %v337 = vand.u32 %v336, 4294901760
      %v338 = vsub.f32 %v336, %v337
      %v339 = vand.u32 %v338, 4294901760
      %340 = vmatmul.mubr.f32.gmra.mxu0 %v339
      %v341 = vpop.f32.mrf.mxu0
      %v342 = vadd.f32 0.0, %v341
      %v343 = vpop.f32.mrf.mxu0
      %344 = vmatprep.mubr.f32.mxu0 0.0
      %v345 = vand.u32 %v266, 4294901760
      %v346 = vsub.f32 %v266, %v345
      %v347 = vand.u32 %v346, 4294901760
      %v348 = vsub.f32 %v346, %v347
      %v349 = vand.u32 %v348, 4294901760
      %350 = vmatmul.mubr.f32.gmra.mxu0 %v349
      %v351 = vpop.f32.mrf.mxu0
      %v352 = vadd.f32 0.0, %v351
      %v353 = vpop.f32.mrf.mxu0
      %354 = vdwg.mxu0
      %355 = vmatprep.subr.mxu0 0.0
      %356 = vmatpush1.msra.mxu0 0.0
      %357 = vmatprep.subr.mxu0 0.0
      %358 = vmatpush1.msra.mxu0 0.0
      %359 = vmatprep.subr.mxu0 0.0
      %360 = vmatpush1.msra.mxu0 0.0
      %361 = vmatprep.subr.mxu0 0.0
      %362 = vmatpush1.msra.mxu0 0.0
      %363 = vmatprep.subr.mxu0 0.0
      %364 = vmatpush1.msra.mxu0 0.0
      %365 = vmatprep.subr.mxu0 0.0
      %366 = vmatpush1.msra.mxu0 0.0
      %367 = vmatprep.subr.mxu0 0.0
      %368 = vmatpush1.msra.mxu0 0.0
      %369 = vmatprep.subr.mxu0 0.0
      %370 = vmatpush1.msra.mxu0 0.0
      %371 = vmatprep.subr.mxu0 0.0
      %372 = vmatpush1.msra.mxu0 0.0
      %373 = vmatprep.subr.mxu0 0.0
      %374 = vmatpush1.msra.mxu0 0.0
      %375 = vmatprep.subr.mxu0 0.0
      %376 = vmatpush1.msra.mxu0 0.0
      %377 = vmatprep.subr.mxu0 0.0
      %378 = vmatpush1.msra.mxu0 0.0
      %379 = vmatprep.subr.mxu0 0.0
      %380 = vmatpush1.msra.mxu0 0.0
      %381 = vmatprep.subr.mxu0 0.0
      %382 = vmatpush1.msra.mxu0 0.0
      %383 = vmatprep.subr.mxu0 0.0
      %v384 = vand.u32 %v260, 4294901760
      %v385 = vsub.f32 %v260, %v384
      %v386 = vand.u32 %v385, 4294901760
      %v387 = vsub.f32 %v385, %v386
      %v388 = vand.u32 %v387, 4294901760
      %389 = vmatpush1.msra.mxu0 %v388
      %390 = vmatprep.subr.mxu0 0.0
      %v391 = vand.u32 %v259, 4294901760
      %v392 = vsub.f32 %v259, %v391
      %v393 = vand.u32 %v392, 4294901760
      %v394 = vsub.f32 %v392, %v393
      %v395 = vand.u32 %v394, 4294901760
      %396 = vmatpush1.msra.mxu0 %v395
      %397 = vmatprep.subr.mxu0 0.0
      %398 = vmatpush2.msra.mxu0 0.0
      %399 = vmatprep.subr.mxu0 0.0
      %400 = vmatpush2.msra.mxu0 0.0
      %401 = vmatprep.subr.mxu0 0.0
      %402 = vmatpush2.msra.mxu0 0.0
      %403 = vmatprep.subr.mxu0 0.0
      %404 = vmatpush2.msra.mxu0 0.0
      %405 = vmatprep.subr.mxu0 0.0
      %406 = vmatpush2.msra.mxu0 0.0
      %407 = vmatprep.subr.mxu0 0.0
      %408 = vmatpush2.msra.mxu0 0.0
      %409 = vmatprep.subr.mxu0 0.0
      %410 = vmatpush2.msra.mxu0 0.0
      %411 = vmatprep.subr.mxu0 0.0
      %412 = vmatpush2.msra.mxu0 0.0
      %413 = vmatprep.subr.mxu0 0.0
      %414 = vmatpush2.msra.mxu0 0.0
      %415 = vmatprep.subr.mxu0 0.0
      %416 = vmatpush2.msra.mxu0 0.0
      %417 = vmatprep.subr.mxu0 0.0
      %418 = vmatpush2.msra.mxu0 0.0
      %419 = vmatprep.subr.mxu0 0.0
      %420 = vmatpush2.msra.mxu0 0.0
      %421 = vmatprep.subr.mxu0 0.0
      %422 = vmatpush2.msra.mxu0 0.0
      %423 = vmatprep.subr.mxu0 0.0
      %424 = vmatpush2.msra.mxu0 0.0
      %425 = vmatprep.subr.mxu0 0.0
      %426 = vmatpush2.msra.mxu0 0.0
      %427 = vmatprep.subr.mxu0 0.0
      %428 = vmatpush2.msra.mxu0 0.0
      %429 = vmatprep.mubr.f32.mxu0 0.0
      %v430 = vand.u32 %v263, 4294901760
      %431 = vmatmul.mubr.f32.gmra.mxu0 %v430
      %v432 = vpop.f32.mrf.mxu0
      %v433 = vadd.f32 %v342, %v432
      %v434 = vpop.f32.mrf.mxu0
      %435 = vmatprep.mubr.f32.mxu0 0.0
      %v436 = vand.u32 %v266, 4294901760
      %437 = vmatmul.mubr.f32.gmra.mxu0 %v436
      %v438 = vpop.f32.mrf.mxu0
      %v439 = vadd.f32 %v352, %v438
      %v440 = vpop.f32.mrf.mxu0
      %441 = vdwg.mxu0
      %442 = vmatprep.subr.mxu0 0.0
      %443 = vmatpush1.msra.mxu0 0.0
      %444 = vmatprep.subr.mxu0 0.0
      %445 = vmatpush1.msra.mxu0 0.0
      %446 = vmatprep.subr.mxu0 0.0
      %447 = vmatpush1.msra.mxu0 0.0
      %448 = vmatprep.subr.mxu0 0.0
      %449 = vmatpush1.msra.mxu0 0.0
      %450 = vmatprep.subr.mxu0 0.0
      %451 = vmatpush1.msra.mxu0 0.0
      %452 = vmatprep.subr.mxu0 0.0
      %453 = vmatpush1.msra.mxu0 0.0
      %454 = vmatprep.subr.mxu0 0.0
      %455 = vmatpush1.msra.mxu0 0.0
      %456 = vmatprep.subr.mxu0 0.0
      %457 = vmatpush1.msra.mxu0 0.0
      %458 = vmatprep.subr.mxu0 0.0
      %459 = vmatpush1.msra.mxu0 0.0
      %460 = vmatprep.subr.mxu0 0.0
      %461 = vmatpush1.msra.mxu0 0.0
      %462 = vmatprep.subr.mxu0 0.0
      %463 = vmatpush1.msra.mxu0 0.0
      %464 = vmatprep.subr.mxu0 0.0
      %465 = vmatpush1.msra.mxu0 0.0
      %466 = vmatprep.subr.mxu0 0.0
      %467 = vmatpush1.msra.mxu0 0.0
      %468 = vmatprep.subr.mxu0 0.0
      %469 = vmatpush1.msra.mxu0 0.0
      %470 = vmatprep.subr.mxu0 0.0
      %v471 = vand.u32 %v260, 4294901760
      %v472 = vsub.f32 %v260, %v471
      %473 = vmatpush1.msra.mxu0 %v472
      %474 = vmatprep.subr.mxu0 0.0
      %v475 = vand.u32 %v259, 4294901760
      %v476 = vsub.f32 %v259, %v475
      %477 = vmatpush1.msra.mxu0 %v476
      %478 = vmatprep.subr.mxu0 0.0
      %479 = vmatpush2.msra.mxu0 0.0
      %480 = vmatprep.subr.mxu0 0.0
      %481 = vmatpush2.msra.mxu0 0.0
      %482 = vmatprep.subr.mxu0 0.0
      %483 = vmatpush2.msra.mxu0 0.0
      %484 = vmatprep.subr.mxu0 0.0
      %485 = vmatpush2.msra.mxu0 0.0
      %486 = vmatprep.subr.mxu0 0.0
      %487 = vmatpush2.msra.mxu0 0.0
      %488 = vmatprep.subr.mxu0 0.0
      %489 = vmatpush2.msra.mxu0 0.0
      %490 = vmatprep.subr.mxu0 0.0
      %491 = vmatpush2.msra.mxu0 0.0
      %492 = vmatprep.subr.mxu0 0.0
      %493 = vmatpush2.msra.mxu0 0.0
      %494 = vmatprep.subr.mxu0 0.0
      %495 = vmatpush2.msra.mxu0 0.0
      %496 = vmatprep.subr.mxu0 0.0
      %497 = vmatpush2.msra.mxu0 0.0
      %498 = vmatprep.subr.mxu0 0.0
      %499 = vmatpush2.msra.mxu0 0.0
      %500 = vmatprep.subr.mxu0 0.0
      %501 = vmatpush2.msra.mxu0 0.0
      %502 = vmatprep.subr.mxu0 0.0
      %503 = vmatpush2.msra.mxu0 0.0
      %504 = vmatprep.subr.mxu0 0.0
      %505 = vmatpush2.msra.mxu0 0.0
      %506 = vmatprep.subr.mxu0 0.0
      %507 = vmatpush2.msra.mxu0 0.0
      %508 = vmatprep.subr.mxu0 0.0
      %509 = vmatpush2.msra.mxu0 0.0
      %510 = vmatprep.mubr.f32.mxu0 0.0
      %v511 = vand.u32 %v263, 4294901760
      %v512 = vsub.f32 %v263, %v511
      %513 = vmatmul.mubr.f32.gmra.mxu0 %v512
      %v514 = vpop.f32.mrf.mxu0
      %v515 = vadd.f32 %v433, %v514
      %v516 = vpop.f32.mrf.mxu0
      %517 = vmatprep.mubr.f32.mxu0 0.0
      %v518 = vand.u32 %v266, 4294901760
      %v519 = vsub.f32 %v266, %v518
      %520 = vmatmul.mubr.f32.gmra.mxu0 %v519
      %v521 = vpop.f32.mrf.mxu0
      %v522 = vadd.f32 %v439, %v521
      %v523 = vpop.f32.mrf.mxu0
      %524 = vdwg.mxu0
      %525 = vmatprep.subr.mxu0 0.0
      %526 = vmatpush1.msra.mxu0 0.0
      %527 = vmatprep.subr.mxu0 0.0
      %528 = vmatpush1.msra.mxu0 0.0
      %529 = vmatprep.subr.mxu0 0.0
      %530 = vmatpush1.msra.mxu0 0.0
      %531 = vmatprep.subr.mxu0 0.0
      %532 = vmatpush1.msra.mxu0 0.0
      %533 = vmatprep.subr.mxu0 0.0
      %534 = vmatpush1.msra.mxu0 0.0
      %535 = vmatprep.subr.mxu0 0.0
      %536 = vmatpush1.msra.mxu0 0.0
      %537 = vmatprep.subr.mxu0 0.0
      %538 = vmatpush1.msra.mxu0 0.0
      %539 = vmatprep.subr.mxu0 0.0
      %540 = vmatpush1.msra.mxu0 0.0
      %541 = vmatprep.subr.mxu0 0.0
      %542 = vmatpush1.msra.mxu0 0.0
      %543 = vmatprep.subr.mxu0 0.0
      %544 = vmatpush1.msra.mxu0 0.0
      %545 = vmatprep.subr.mxu0 0.0
      %546 = vmatpush1.msra.mxu0 0.0
      %547 = vmatprep.subr.mxu0 0.0
      %548 = vmatpush1.msra.mxu0 0.0
      %549 = vmatprep.subr.mxu0 0.0
      %550 = vmatpush1.msra.mxu0 0.0
      %551 = vmatprep.subr.mxu0 0.0
      %552 = vmatpush1.msra.mxu0 0.0
      %553 = vmatprep.subr.mxu0 0.0
      %v554 = vand.u32 %v260, 4294901760
      %555 = vmatpush1.msra.mxu0 %v554
      %556 = vmatprep.subr.mxu0 0.0
      %v557 = vand.u32 %v259, 4294901760
      %558 = vmatpush1.msra.mxu0 %v557
      %559 = vmatprep.subr.mxu0 0.0
      %560 = vmatpush2.msra.mxu0 0.0
      %561 = vmatprep.subr.mxu0 0.0
      %562 = vmatpush2.msra.mxu0 0.0
      %563 = vmatprep.subr.mxu0 0.0
      %564 = vmatpush2.msra.mxu0 0.0
      %565 = vmatprep.subr.mxu0 0.0
      %566 = vmatpush2.msra.mxu0 0.0
      %567 = vmatprep.subr.mxu0 0.0
      %568 = vmatpush2.msra.mxu0 0.0
      %569 = vmatprep.subr.mxu0 0.0
      %570 = vmatpush2.msra.mxu0 0.0
      %571 = vmatprep.subr.mxu0 0.0
      %572 = vmatpush2.msra.mxu0 0.0
      %573 = vmatprep.subr.mxu0 0.0
      %574 = vmatpush2.msra.mxu0 0.0
      %575 = vmatprep.subr.mxu0 0.0
      %576 = vmatpush2.msra.mxu0 0.0
      %577 = vmatprep.subr.mxu0 0.0
      %578 = vmatpush2.msra.mxu0 0.0
      %579 = vmatprep.subr.mxu0 0.0
      %580 = vmatpush2.msra.mxu0 0.0
      %581 = vmatprep.subr.mxu0 0.0
      %582 = vmatpush2.msra.mxu0 0.0
      %583 = vmatprep.subr.mxu0 0.0
      %584 = vmatpush2.msra.mxu0 0.0
      %585 = vmatprep.subr.mxu0 0.0
      %586 = vmatpush2.msra.mxu0 0.0
      %587 = vmatprep.subr.mxu0 0.0
      %588 = vmatpush2.msra.mxu0 0.0
      %589 = vmatprep.subr.mxu0 0.0
      %590 = vmatpush2.msra.mxu0 0.0
      %591 = vmatprep.mubr.f32.mxu0 0.0
      %v592 = vand.u32 %v263, 4294901760
      %v593 = vsub.f32 %v263, %v592
      %v594 = vand.u32 %v593, 4294901760
      %595 = vmatmul.mubr.f32.gmra.mxu0 %v594
      %v596 = vpop.f32.mrf.mxu0
      %v597 = vadd.f32 %v515, %v596
      %v598 = vpop.f32.mrf.mxu0
      %599 = vmatprep.mubr.f32.mxu0 0.0
      %v600 = vand.u32 %v266, 4294901760
      %v601 = vsub.f32 %v266, %v600
      %v602 = vand.u32 %v601, 4294901760
      %603 = vmatmul.mubr.f32.gmra.mxu0 %v602
      %v604 = vpop.f32.mrf.mxu0
      %v605 = vadd.f32 %v522, %v604
      %v606 = vpop.f32.mrf.mxu0
      %607 = vdwg.mxu0
      %608 = vmatprep.subr.mxu0 0.0
      %609 = vmatpush1.msra.mxu0 0.0
      %610 = vmatprep.subr.mxu0 0.0
      %611 = vmatpush1.msra.mxu0 0.0
      %612 = vmatprep.subr.mxu0 0.0
      %613 = vmatpush1.msra.mxu0 0.0
      %614 = vmatprep.subr.mxu0 0.0
      %615 = vmatpush1.msra.mxu0 0.0
      %616 = vmatprep.subr.mxu0 0.0
      %617 = vmatpush1.msra.mxu0 0.0
      %618 = vmatprep.subr.mxu0 0.0
      %619 = vmatpush1.msra.mxu0 0.0
      %620 = vmatprep.subr.mxu0 0.0
      %621 = vmatpush1.msra.mxu0 0.0
      %622 = vmatprep.subr.mxu0 0.0
      %623 = vmatpush1.msra.mxu0 0.0
      %624 = vmatprep.subr.mxu0 0.0
      %625 = vmatpush1.msra.mxu0 0.0
      %626 = vmatprep.subr.mxu0 0.0
      %627 = vmatpush1.msra.mxu0 0.0
      %628 = vmatprep.subr.mxu0 0.0
      %629 = vmatpush1.msra.mxu0 0.0
      %630 = vmatprep.subr.mxu0 0.0
      %631 = vmatpush1.msra.mxu0 0.0
      %632 = vmatprep.subr.mxu0 0.0
      %633 = vmatpush1.msra.mxu0 0.0
      %634 = vmatprep.subr.mxu0 0.0
      %635 = vmatpush1.msra.mxu0 0.0
      %636 = vmatprep.subr.mxu0 0.0
      %v637 = vand.u32 %v260, 4294901760
      %v638 = vsub.f32 %v260, %v637
      %v639 = vand.u32 %v638, 4294901760
      %640 = vmatpush1.msra.mxu0 %v639
      %641 = vmatprep.subr.mxu0 0.0
      %v642 = vand.u32 %v259, 4294901760
      %v643 = vsub.f32 %v259, %v642
      %v644 = vand.u32 %v643, 4294901760
      %645 = vmatpush1.msra.mxu0 %v644
      %646 = vmatprep.subr.mxu0 0.0
      %647 = vmatpush2.msra.mxu0 0.0
      %648 = vmatprep.subr.mxu0 0.0
      %649 = vmatpush2.msra.mxu0 0.0
      %650 = vmatprep.subr.mxu0 0.0
      %651 = vmatpush2.msra.mxu0 0.0
      %652 = vmatprep.subr.mxu0 0.0
      %653 = vmatpush2.msra.mxu0 0.0
      %654 = vmatprep.subr.mxu0 0.0
      %655 = vmatpush2.msra.mxu0 0.0
      %656 = vmatprep.subr.mxu0 0.0
      %657 = vmatpush2.msra.mxu0 0.0
      %658 = vmatprep.subr.mxu0 0.0
      %659 = vmatpush2.msra.mxu0 0.0
      %660 = vmatprep.subr.mxu0 0.0
      %661 = vmatpush2.msra.mxu0 0.0
      %662 = vmatprep.subr.mxu0 0.0
      %663 = vmatpush2.msra.mxu0 0.0
      %664 = vmatprep.subr.mxu0 0.0
      %665 = vmatpush2.msra.mxu0 0.0
      %666 = vmatprep.subr.mxu0 0.0
      %667 = vmatpush2.msra.mxu0 0.0
      %668 = vmatprep.subr.mxu0 0.0
      %669 = vmatpush2.msra.mxu0 0.0
      %670 = vmatprep.subr.mxu0 0.0
      %671 = vmatpush2.msra.mxu0 0.0
      %672 = vmatprep.subr.mxu0 0.0
      %673 = vmatpush2.msra.mxu0 0.0
      %674 = vmatprep.subr.mxu0 0.0
      %675 = vmatpush2.msra.mxu0 0.0
      %676 = vmatprep.subr.mxu0 0.0
      %677 = vmatpush2.msra.mxu0 0.0
      %678 = vmatprep.mubr.f32.mxu0 0.0
      %v679 = vand.u32 %v263, 4294901760
      %680 = vmatmul.mubr.f32.gmra.mxu0 %v679
      %v681 = vpop.f32.mrf.mxu0
      %v682 = vadd.f32 %v597, %v681
      %v683 = vpop.f32.mrf.mxu0
      %684 = vmatprep.mubr.f32.mxu0 0.0
      %v685 = vand.u32 %v266, 4294901760
      %686 = vmatmul.mubr.f32.gmra.mxu0 %v685
      %v687 = vpop.f32.mrf.mxu0
      %v688 = vadd.f32 %v605, %v687
      %v689 = vpop.f32.mrf.mxu0
      %690 = vdwg.mxu0
      %691 = vmatprep.subr.mxu0 0.0
      %692 = vmatpush1.msra.mxu0 0.0
      %693 = vmatprep.subr.mxu0 0.0
      %694 = vmatpush1.msra.mxu0 0.0
      %695 = vmatprep.subr.mxu0 0.0
      %696 = vmatpush1.msra.mxu0 0.0
      %697 = vmatprep.subr.mxu0 0.0
      %698 = vmatpush1.msra.mxu0 0.0
      %699 = vmatprep.subr.mxu0 0.0
      %700 = vmatpush1.msra.mxu0 0.0
      %701 = vmatprep.subr.mxu0 0.0
      %702 = vmatpush1.msra.mxu0 0.0
      %703 = vmatprep.subr.mxu0 0.0
      %704 = vmatpush1.msra.mxu0 0.0
      %705 = vmatprep.subr.mxu0 0.0
      %706 = vmatpush1.msra.mxu0 0.0
      %707 = vmatprep.subr.mxu0 0.0
      %708 = vmatpush1.msra.mxu0 0.0
      %709 = vmatprep.subr.mxu0 0.0
      %710 = vmatpush1.msra.mxu0 0.0
      %711 = vmatprep.subr.mxu0 0.0
      %712 = vmatpush1.msra.mxu0 0.0
      %713 = vmatprep.subr.mxu0 0.0
      %714 = vmatpush1.msra.mxu0 0.0
      %715 = vmatprep.subr.mxu0 0.0
      %716 = vmatpush1.msra.mxu0 0.0
      %717 = vmatprep.subr.mxu0 0.0
      %718 = vmatpush1.msra.mxu0 0.0
      %719 = vmatprep.subr.mxu0 0.0
      %v720 = vand.u32 %v260, 4294901760
      %721 = vmatpush1.msra.mxu0 %v720
      %722 = vmatprep.subr.mxu0 0.0
      %v723 = vand.u32 %v259, 4294901760
      %724 = vmatpush1.msra.mxu0 %v723
      %725 = vmatprep.subr.mxu0 0.0
      %726 = vmatpush2.msra.mxu0 0.0
      %727 = vmatprep.subr.mxu0 0.0
      %728 = vmatpush2.msra.mxu0 0.0
      %729 = vmatprep.subr.mxu0 0.0
      %730 = vmatpush2.msra.mxu0 0.0
      %731 = vmatprep.subr.mxu0 0.0
      %732 = vmatpush2.msra.mxu0 0.0
      %733 = vmatprep.subr.mxu0 0.0
      %734 = vmatpush2.msra.mxu0 0.0
      %735 = vmatprep.subr.mxu0 0.0
      %736 = vmatpush2.msra.mxu0 0.0
      %737 = vmatprep.subr.mxu0 0.0
      %738 = vmatpush2.msra.mxu0 0.0
      %739 = vmatprep.subr.mxu0 0.0
      %740 = vmatpush2.msra.mxu0 0.0
      %741 = vmatprep.subr.mxu0 0.0
      %742 = vmatpush2.msra.mxu0 0.0
      %743 = vmatprep.subr.mxu0 0.0
      %744 = vmatpush2.msra.mxu0 0.0
      %745 = vmatprep.subr.mxu0 0.0
      %746 = vmatpush2.msra.mxu0 0.0
      %747 = vmatprep.subr.mxu0 0.0
      %748 = vmatpush2.msra.mxu0 0.0
      %749 = vmatprep.subr.mxu0 0.0
      %750 = vmatpush2.msra.mxu0 0.0
      %751 = vmatprep.subr.mxu0 0.0
      %752 = vmatpush2.msra.mxu0 0.0
      %753 = vmatprep.subr.mxu0 0.0
      %754 = vmatpush2.msra.mxu0 0.0
      %755 = vmatprep.subr.mxu0 0.0
      %756 = vmatpush2.msra.mxu0 0.0
      %757 = vmatprep.mubr.f32.mxu0 0.0
      %v758 = vand.u32 %v263, 4294901760
      %759 = vmatmul.mubr.f32.gmra.mxu0 %v758
      %v760 = vpop.f32.mrf.mxu0
      %v761 = vadd.f32 %v682, %v760
      %v762 = vpop.f32.mrf.mxu0
      %763 = vmatprep.mubr.f32.mxu0 0.0
      %v764 = vand.u32 %v266, 4294901760
      %765 = vmatmul.mubr.f32.gmra.mxu0 %v764
      %v766 = vpop.f32.mrf.mxu0
      %v767 = vadd.f32 %v688, %v766
      %v768 = vpop.f32.mrf.mxu0
      %769 = vdwg.mxu0
      %v770 = vld [vmem:[%s2] sm:$0xff]
      %v771 = vld [vmem:[%s3] sm:$0x1]
      %v773 = vlaneseq
      %v774 = vshrl.u32 %v773, 7
      %v775 = vsub.s32 0, %v774
      %v776 = vrot.slane %v771, %v775
      %vm778 = vcmask 64512
      %v780 = vsel %vm778, %v761, 0
      %v783 = vsel %vm778, %v767, 0
      %785 = vmatprep.subr.mxu0 0.0
      %786 = vmatpush1.msra.mxu0 0.0
      %787 = vmatprep.subr.mxu0 0.0
      %788 = vmatpush1.msra.mxu0 0.0
      %789 = vmatprep.subr.mxu0 0.0
      %790 = vmatpush1.msra.mxu0 0.0
      %791 = vmatprep.subr.mxu0 0.0
      %792 = vmatpush1.msra.mxu0 0.0
      %793 = vmatprep.subr.mxu0 0.0
      %794 = vmatpush1.msra.mxu0 0.0
      %795 = vmatprep.subr.mxu0 0.0
      %796 = vmatpush1.msra.mxu0 0.0
      %797 = vmatprep.subr.mxu0 0.0
      %798 = vmatpush1.msra.mxu0 0.0
      %799 = vmatprep.subr.mxu0 0.0
      %800 = vmatpush1.msra.mxu0 0.0
      %801 = vmatprep.subr.mxu0 0.0
      %802 = vmatpush1.msra.mxu0 0.0
      %803 = vmatprep.subr.mxu0 0.0
      %804 = vmatpush1.msra.mxu0 0.0
      %805 = vmatprep.subr.mxu0 0.0
      %806 = vmatpush1.msra.mxu0 0.0
      %807 = vmatprep.subr.mxu0 0.0
      %808 = vmatpush1.msra.mxu0 0.0
      %809 = vmatprep.subr.mxu0 0.0
      %810 = vmatpush1.msra.mxu0 0.0
      %811 = vmatprep.subr.mxu0 0.0
      %812 = vmatpush1.msra.mxu0 0.0
      %813 = vmatprep.subr.mxu0 0.0
      %814 = vmatpush1.msra.mxu0 0.0
      %815 = vmatprep.subr.mxu0 0.0
      %v816 = vand.u32 %v770, 4294901760
      %817 = vmatpush1.msra.mxu0 %v816
      %818 = vmatprep.subr.mxu0 0.0
      %819 = vmatpush2.msra.mxu0 0.0
      %820 = vmatprep.subr.mxu0 0.0
      %821 = vmatpush2.msra.mxu0 0.0
      %822 = vmatprep.subr.mxu0 0.0
      %823 = vmatpush2.msra.mxu0 0.0
      %824 = vmatprep.subr.mxu0 0.0
      %825 = vmatpush2.msra.mxu0 0.0
      %826 = vmatprep.subr.mxu0 0.0
      %827 = vmatpush2.msra.mxu0 0.0
      %828 = vmatprep.subr.mxu0 0.0
      %829 = vmatpush2.msra.mxu0 0.0
      %830 = vmatprep.subr.mxu0 0.0
      %831 = vmatpush2.msra.mxu0 0.0
      %832 = vmatprep.subr.mxu0 0.0
      %833 = vmatpush2.msra.mxu0 0.0
      %834 = vmatprep.subr.mxu0 0.0
      %835 = vmatpush2.msra.mxu0 0.0
      %836 = vmatprep.subr.mxu0 0.0
      %837 = vmatpush2.msra.mxu0 0.0
      %838 = vmatprep.subr.mxu0 0.0
      %839 = vmatpush2.msra.mxu0 0.0
      %840 = vmatprep.subr.mxu0 0.0
      %841 = vmatpush2.msra.mxu0 0.0
      %842 = vmatprep.subr.mxu0 0.0
      %843 = vmatpush2.msra.mxu0 0.0
      %844 = vmatprep.subr.mxu0 0.0
      %845 = vmatpush2.msra.mxu0 0.0
      %846 = vmatprep.subr.mxu0 0.0
      %847 = vmatpush2.msra.mxu0 0.0
      %848 = vmatprep.subr.mxu0 0.0
      %849 = vmatpush2.msra.mxu0 0.0
      %850 = vmatprep.mubr.f32.mxu0 0.0
      %v851 = vand.u32 %v780, 4294901760
      %v852 = vsub.f32 %v780, %v851
      %v853 = vand.u32 %v852, 4294901760
      %v854 = vsub.f32 %v852, %v853
      %v855 = vand.u32 %v854, 4294901760
      %856 = vmatmul.mubr.f32.gmra.mxu0 %v855
      %v857 = vpop.f32.mrf.mxu0
      %v858 = vadd.f32 %v776, %v857
      %v859 = vpop.f32.mrf.mxu0
      %860 = vmatprep.mubr.f32.mxu0 0.0
      %v861 = vand.u32 %v783, 4294901760
      %v862 = vsub.f32 %v783, %v861
      %v863 = vand.u32 %v862, 4294901760
      %v864 = vsub.f32 %v862, %v863
      %v865 = vand.u32 %v864, 4294901760
      %866 = vmatmul.mubr.f32.gmra.mxu0 %v865
      %v867 = vpop.f32.mrf.mxu0
      %v868 = vadd.f32 %v776, %v867
      %v869 = vpop.f32.mrf.mxu0
      %870 = vdwg.mxu0
      %871 = vmatprep.subr.mxu0 0.0
      %872 = vmatpush1.msra.mxu0 0.0
      %873 = vmatprep.subr.mxu0 0.0
      %874 = vmatpush1.msra.mxu0 0.0
      %875 = vmatprep.subr.mxu0 0.0
      %876 = vmatpush1.msra.mxu0 0.0
      %877 = vmatprep.subr.mxu0 0.0
      %878 = vmatpush1.msra.mxu0 0.0
      %879 = vmatprep.subr.mxu0 0.0
      %880 = vmatpush1.msra.mxu0 0.0
      %881 = vmatprep.subr.mxu0 0.0
      %882 = vmatpush1.msra.mxu0 0.0
      %883 = vmatprep.subr.mxu0 0.0
      %884 = vmatpush1.msra.mxu0 0.0
      %885 = vmatprep.subr.mxu0 0.0
      %886 = vmatpush1.msra.mxu0 0.0
      %887 = vmatprep.subr.mxu0 0.0
      %888 = vmatpush1.msra.mxu0 0.0
      %889 = vmatprep.subr.mxu0 0.0
      %890 = vmatpush1.msra.mxu0 0.0
      %891 = vmatprep.subr.mxu0 0.0
      %892 = vmatpush1.msra.mxu0 0.0
      %893 = vmatprep.subr.mxu0 0.0
      %894 = vmatpush1.msra.mxu0 0.0
      %895 = vmatprep.subr.mxu0 0.0
      %896 = vmatpush1.msra.mxu0 0.0
      %897 = vmatprep.subr.mxu0 0.0
      %898 = vmatpush1.msra.mxu0 0.0
      %899 = vmatprep.subr.mxu0 0.0
      %900 = vmatpush1.msra.mxu0 0.0
      %901 = vmatprep.subr.mxu0 0.0
      %v902 = vand.u32 %v770, 4294901760
      %v903 = vsub.f32 %v770, %v902
      %v904 = vand.u32 %v903, 4294901760
      %v905 = vsub.f32 %v903, %v904
      %v906 = vand.u32 %v905, 4294901760
      %907 = vmatpush1.msra.mxu0 %v906
      %908 = vmatprep.subr.mxu0 0.0
      %909 = vmatpush2.msra.mxu0 0.0
      %910 = vmatprep.subr.mxu0 0.0
      %911 = vmatpush2.msra.mxu0 0.0
      %912 = vmatprep.subr.mxu0 0.0
      %913 = vmatpush2.msra.mxu0 0.0
      %914 = vmatprep.subr.mxu0 0.0
      %915 = vmatpush2.msra.mxu0 0.0
      %916 = vmatprep.subr.mxu0 0.0
      %917 = vmatpush2.msra.mxu0 0.0
      %918 = vmatprep.subr.mxu0 0.0
      %919 = vmatpush2.msra.mxu0 0.0
      %920 = vmatprep.subr.mxu0 0.0
      %921 = vmatpush2.msra.mxu0 0.0
      %922 = vmatprep.subr.mxu0 0.0
      %923 = vmatpush2.msra.mxu0 0.0
      %924 = vmatprep.subr.mxu0 0.0
      %925 = vmatpush2.msra.mxu0 0.0
      %926 = vmatprep.subr.mxu0 0.0
      %927 = vmatpush2.msra.mxu0 0.0
      %928 = vmatprep.subr.mxu0 0.0
      %929 = vmatpush2.msra.mxu0 0.0
      %930 = vmatprep.subr.mxu0 0.0
      %931 = vmatpush2.msra.mxu0 0.0
      %932 = vmatprep.subr.mxu0 0.0
      %933 = vmatpush2.msra.mxu0 0.0
      %934 = vmatprep.subr.mxu0 0.0
      %935 = vmatpush2.msra.mxu0 0.0
      %936 = vmatprep.subr.mxu0 0.0
      %937 = vmatpush2.msra.mxu0 0.0
      %938 = vmatprep.subr.mxu0 0.0
      %939 = vmatpush2.msra.mxu0 0.0
      %940 = vmatprep.mubr.f32.mxu0 0.0
      %v941 = vand.u32 %v780, 4294901760
      %942 = vmatmul.mubr.f32.gmra.mxu0 %v941
      %v943 = vpop.f32.mrf.mxu0
      %v944 = vadd.f32 %v858, %v943
      %v945 = vpop.f32.mrf.mxu0
      %946 = vmatprep.mubr.f32.mxu0 0.0
      %v947 = vand.u32 %v783, 4294901760
      %948 = vmatmul.mubr.f32.gmra.mxu0 %v947
      %v949 = vpop.f32.mrf.mxu0
      %v950 = vadd.f32 %v868, %v949
      %v951 = vpop.f32.mrf.mxu0
      %952 = vdwg.mxu0
      %953 = vmatprep.subr.mxu0 0.0
      %954 = vmatpush1.msra.mxu0 0.0
      %955 = vmatprep.subr.mxu0 0.0
      %956 = vmatpush1.msra.mxu0 0.0
      %957 = vmatprep.subr.mxu0 0.0
      %958 = vmatpush1.msra.mxu0 0.0
      %959 = vmatprep.subr.mxu0 0.0
      %960 = vmatpush1.msra.mxu0 0.0
      %961 = vmatprep.subr.mxu0 0.0
      %962 = vmatpush1.msra.mxu0 0.0
      %963 = vmatprep.subr.mxu0 0.0
      %964 = vmatpush1.msra.mxu0 0.0
      %965 = vmatprep.subr.mxu0 0.0
      %966 = vmatpush1.msra.mxu0 0.0
      %967 = vmatprep.subr.mxu0 0.0
      %968 = vmatpush1.msra.mxu0 0.0
      %969 = vmatprep.subr.mxu0 0.0
      %970 = vmatpush1.msra.mxu0 0.0
      %971 = vmatprep.subr.mxu0 0.0
      %972 = vmatpush1.msra.mxu0 0.0
      %973 = vmatprep.subr.mxu0 0.0
      %974 = vmatpush1.msra.mxu0 0.0
      %975 = vmatprep.subr.mxu0 0.0
      %976 = vmatpush1.msra.mxu0 0.0
      %977 = vmatprep.subr.mxu0 0.0
      %978 = vmatpush1.msra.mxu0 0.0
      %979 = vmatprep.subr.mxu0 0.0
      %980 = vmatpush1.msra.mxu0 0.0
      %981 = vmatprep.subr.mxu0 0.0
      %982 = vmatpush1.msra.mxu0 0.0
      %983 = vmatprep.subr.mxu0 0.0
      %v984 = vand.u32 %v770, 4294901760
      %v985 = vsub.f32 %v770, %v984
      %986 = vmatpush1.msra.mxu0 %v985
      %987 = vmatprep.subr.mxu0 0.0
      %988 = vmatpush2.msra.mxu0 0.0
      %989 = vmatprep.subr.mxu0 0.0
      %990 = vmatpush2.msra.mxu0 0.0
      %991 = vmatprep.subr.mxu0 0.0
      %992 = vmatpush2.msra.mxu0 0.0
      %993 = vmatprep.subr.mxu0 0.0
      %994 = vmatpush2.msra.mxu0 0.0
      %995 = vmatprep.subr.mxu0 0.0
      %996 = vmatpush2.msra.mxu0 0.0
      %997 = vmatprep.subr.mxu0 0.0
      %998 = vmatpush2.msra.mxu0 0.0
      %999 = vmatprep.subr.mxu0 0.0
      %1000 = vmatpush2.msra.mxu0 0.0
      %1001 = vmatprep.subr.mxu0 0.0
      %1002 = vmatpush2.msra.mxu0 0.0
      %1003 = vmatprep.subr.mxu0 0.0
      %1004 = vmatpush2.msra.mxu0 0.0
      %1005 = vmatprep.subr.mxu0 0.0
      %1006 = vmatpush2.msra.mxu0 0.0
      %1007 = vmatprep.subr.mxu0 0.0
      %1008 = vmatpush2.msra.mxu0 0.0
      %1009 = vmatprep.subr.mxu0 0.0
      %1010 = vmatpush2.msra.mxu0 0.0
      %1011 = vmatprep.subr.mxu0 0.0
      %1012 = vmatpush2.msra.mxu0 0.0
      %1013 = vmatprep.subr.mxu0 0.0
      %1014 = vmatpush2.msra.mxu0 0.0
      %1015 = vmatprep.subr.mxu0 0.0
      %1016 = vmatpush2.msra.mxu0 0.0
      %1017 = vmatprep.subr.mxu0 0.0
      %1018 = vmatpush2.msra.mxu0 0.0
      %1019 = vmatprep.mubr.f32.mxu0 0.0
      %v1020 = vand.u32 %v780, 4294901760
      %v1021 = vsub.f32 %v780, %v1020
      %1022 = vmatmul.mubr.f32.gmra.mxu0 %v1021
      %v1023 = vpop.f32.mrf.mxu0
      %v1024 = vadd.f32 %v944, %v1023
      %v1025 = vpop.f32.mrf.mxu0
      %1026 = vmatprep.mubr.f32.mxu0 0.0
      %v1027 = vand.u32 %v783, 4294901760
      %v1028 = vsub.f32 %v783, %v1027
      %1029 = vmatmul.mubr.f32.gmra.mxu0 %v1028
      %v1030 = vpop.f32.mrf.mxu0
      %v1031 = vadd.f32 %v950, %v1030
      %v1032 = vpop.f32.mrf.mxu0
      %1033 = vdwg.mxu0
      %1034 = vmatprep.subr.mxu0 0.0
      %1035 = vmatpush1.msra.mxu0 0.0
      %1036 = vmatprep.subr.mxu0 0.0
      %1037 = vmatpush1.msra.mxu0 0.0
      %1038 = vmatprep.subr.mxu0 0.0
      %1039 = vmatpush1.msra.mxu0 0.0
      %1040 = vmatprep.subr.mxu0 0.0
      %1041 = vmatpush1.msra.mxu0 0.0
      %1042 = vmatprep.subr.mxu0 0.0
      %1043 = vmatpush1.msra.mxu0 0.0
      %1044 = vmatprep.subr.mxu0 0.0
      %1045 = vmatpush1.msra.mxu0 0.0
      %1046 = vmatprep.subr.mxu0 0.0
      %1047 = vmatpush1.msra.mxu0 0.0
      %1048 = vmatprep.subr.mxu0 0.0
      %1049 = vmatpush1.msra.mxu0 0.0
      %1050 = vmatprep.subr.mxu0 0.0
      %1051 = vmatpush1.msra.mxu0 0.0
      %1052 = vmatprep.subr.mxu0 0.0
      %1053 = vmatpush1.msra.mxu0 0.0
      %1054 = vmatprep.subr.mxu0 0.0
      %1055 = vmatpush1.msra.mxu0 0.0
      %1056 = vmatprep.subr.mxu0 0.0
      %1057 = vmatpush1.msra.mxu0 0.0
      %1058 = vmatprep.subr.mxu0 0.0
      %1059 = vmatpush1.msra.mxu0 0.0
      %1060 = vmatprep.subr.mxu0 0.0
      %1061 = vmatpush1.msra.mxu0 0.0
      %1062 = vmatprep.subr.mxu0 0.0
      %1063 = vmatpush1.msra.mxu0 0.0
      %1064 = vmatprep.subr.mxu0 0.0
      %v1065 = vand.u32 %v770, 4294901760
      %1066 = vmatpush1.msra.mxu0 %v1065
      %1067 = vmatprep.subr.mxu0 0.0
      %1068 = vmatpush2.msra.mxu0 0.0
      %1069 = vmatprep.subr.mxu0 0.0
      %1070 = vmatpush2.msra.mxu0 0.0
      %1071 = vmatprep.subr.mxu0 0.0
      %1072 = vmatpush2.msra.mxu0 0.0
      %1073 = vmatprep.subr.mxu0 0.0
      %1074 = vmatpush2.msra.mxu0 0.0
      %1075 = vmatprep.subr.mxu0 0.0
      %1076 = vmatpush2.msra.mxu0 0.0
      %1077 = vmatprep.subr.mxu0 0.0
      %1078 = vmatpush2.msra.mxu0 0.0
      %1079 = vmatprep.subr.mxu0 0.0
      %1080 = vmatpush2.msra.mxu0 0.0
      %1081 = vmatprep.subr.mxu0 0.0
      %1082 = vmatpush2.msra.mxu0 0.0
      %1083 = vmatprep.subr.mxu0 0.0
      %1084 = vmatpush2.msra.mxu0 0.0
      %1085 = vmatprep.subr.mxu0 0.0
      %1086 = vmatpush2.msra.mxu0 0.0
      %1087 = vmatprep.subr.mxu0 0.0
      %1088 = vmatpush2.msra.mxu0 0.0
      %1089 = vmatprep.subr.mxu0 0.0
      %1090 = vmatpush2.msra.mxu0 0.0
      %1091 = vmatprep.subr.mxu0 0.0
      %1092 = vmatpush2.msra.mxu0 0.0
      %1093 = vmatprep.subr.mxu0 0.0
      %1094 = vmatpush2.msra.mxu0 0.0
      %1095 = vmatprep.subr.mxu0 0.0
      %1096 = vmatpush2.msra.mxu0 0.0
      %1097 = vmatprep.subr.mxu0 0.0
      %1098 = vmatpush2.msra.mxu0 0.0
      %1099 = vmatprep.mubr.f32.mxu0 0.0
      %v1100 = vand.u32 %v780, 4294901760
      %v1101 = vsub.f32 %v780, %v1100
      %v1102 = vand.u32 %v1101, 4294901760
      %1103 = vmatmul.mubr.f32.gmra.mxu0 %v1102
      %v1104 = vpop.f32.mrf.mxu0
      %v1105 = vadd.f32 %v1024, %v1104
      %v1106 = vpop.f32.mrf.mxu0
      %1107 = vmatprep.mubr.f32.mxu0 0.0
      %v1108 = vand.u32 %v783, 4294901760
      %v1109 = vsub.f32 %v783, %v1108
      %v1110 = vand.u32 %v1109, 4294901760
      %1111 = vmatmul.mubr.f32.gmra.mxu0 %v1110
      %v1112 = vpop.f32.mrf.mxu0
      %v1113 = vadd.f32 %v1031, %v1112
      %v1114 = vpop.f32.mrf.mxu0
      %1115 = vdwg.mxu0
      %1116 = vmatprep.subr.mxu0 0.0
      %1117 = vmatpush1.msra.mxu0 0.0
      %1118 = vmatprep.subr.mxu0 0.0
      %1119 = vmatpush1.msra.mxu0 0.0
      %1120 = vmatprep.subr.mxu0 0.0
      %1121 = vmatpush1.msra.mxu0 0.0
      %1122 = vmatprep.subr.mxu0 0.0
      %1123 = vmatpush1.msra.mxu0 0.0
      %1124 = vmatprep.subr.mxu0 0.0
      %1125 = vmatpush1.msra.mxu0 0.0
      %1126 = vmatprep.subr.mxu0 0.0
      %1127 = vmatpush1.msra.mxu0 0.0
      %1128 = vmatprep.subr.mxu0 0.0
      %1129 = vmatpush1.msra.mxu0 0.0
      %1130 = vmatprep.subr.mxu0 0.0
      %1131 = vmatpush1.msra.mxu0 0.0
      %1132 = vmatprep.subr.mxu0 0.0
      %1133 = vmatpush1.msra.mxu0 0.0
      %1134 = vmatprep.subr.mxu0 0.0
      %1135 = vmatpush1.msra.mxu0 0.0
      %1136 = vmatprep.subr.mxu0 0.0
      %1137 = vmatpush1.msra.mxu0 0.0
      %1138 = vmatprep.subr.mxu0 0.0
      %1139 = vmatpush1.msra.mxu0 0.0
      %1140 = vmatprep.subr.mxu0 0.0
      %1141 = vmatpush1.msra.mxu0 0.0
      %1142 = vmatprep.subr.mxu0 0.0
      %1143 = vmatpush1.msra.mxu0 0.0
      %1144 = vmatprep.subr.mxu0 0.0
      %1145 = vmatpush1.msra.mxu0 0.0
      %1146 = vmatprep.subr.mxu0 0.0
      %v1147 = vand.u32 %v770, 4294901760
      %v1148 = vsub.f32 %v770, %v1147
      %v1149 = vand.u32 %v1148, 4294901760
      %1150 = vmatpush1.msra.mxu0 %v1149
      %1151 = vmatprep.subr.mxu0 0.0
      %1152 = vmatpush2.msra.mxu0 0.0
      %1153 = vmatprep.subr.mxu0 0.0
      %1154 = vmatpush2.msra.mxu0 0.0
      %1155 = vmatprep.subr.mxu0 0.0
      %1156 = vmatpush2.msra.mxu0 0.0
      %1157 = vmatprep.subr.mxu0 0.0
      %1158 = vmatpush2.msra.mxu0 0.0
      %1159 = vmatprep.subr.mxu0 0.0
      %1160 = vmatpush2.msra.mxu0 0.0
      %1161 = vmatprep.subr.mxu0 0.0
      %1162 = vmatpush2.msra.mxu0 0.0
      %1163 = vmatprep.subr.mxu0 0.0
      %1164 = vmatpush2.msra.mxu0 0.0
      %1165 = vmatprep.subr.mxu0 0.0
      %1166 = vmatpush2.msra.mxu0 0.0
      %1167 = vmatprep.subr.mxu0 0.0
      %1168 = vmatpush2.msra.mxu0 0.0
      %1169 = vmatprep.subr.mxu0 0.0
      %1170 = vmatpush2.msra.mxu0 0.0
      %1171 = vmatprep.subr.mxu0 0.0
      %1172 = vmatpush2.msra.mxu0 0.0
      %1173 = vmatprep.subr.mxu0 0.0
      %1174 = vmatpush2.msra.mxu0 0.0
      %1175 = vmatprep.subr.mxu0 0.0
      %1176 = vmatpush2.msra.mxu0 0.0
      %1177 = vmatprep.subr.mxu0 0.0
      %1178 = vmatpush2.msra.mxu0 0.0
      %1179 = vmatprep.subr.mxu0 0.0
      %1180 = vmatpush2.msra.mxu0 0.0
      %1181 = vmatprep.subr.mxu0 0.0
      %1182 = vmatpush2.msra.mxu0 0.0
      %1183 = vmatprep.mubr.f32.mxu0 0.0
      %v1184 = vand.u32 %v780, 4294901760
      %1185 = vmatmul.mubr.f32.gmra.mxu0 %v1184
      %v1186 = vpop.f32.mrf.mxu0
      %v1187 = vadd.f32 %v1105, %v1186
      %v1188 = vpop.f32.mrf.mxu0
      %1189 = vmatprep.mubr.f32.mxu0 0.0
      %v1190 = vand.u32 %v783, 4294901760
      %1191 = vmatmul.mubr.f32.gmra.mxu0 %v1190
      %v1192 = vpop.f32.mrf.mxu0
      %v1193 = vadd.f32 %v1113, %v1192
      %v1194 = vpop.f32.mrf.mxu0
      %1195 = vdwg.mxu0
      %1196 = vmatprep.subr.mxu0 0.0
      %1197 = vmatpush1.msra.mxu0 0.0
      %1198 = vmatprep.subr.mxu0 0.0
      %1199 = vmatpush1.msra.mxu0 0.0
      %1200 = vmatprep.subr.mxu0 0.0
      %1201 = vmatpush1.msra.mxu0 0.0
      %1202 = vmatprep.subr.mxu0 0.0
      %1203 = vmatpush1.msra.mxu0 0.0
      %1204 = vmatprep.subr.mxu0 0.0
      %1205 = vmatpush1.msra.mxu0 0.0
      %1206 = vmatprep.subr.mxu0 0.0
      %1207 = vmatpush1.msra.mxu0 0.0
      %1208 = vmatprep.subr.mxu0 0.0
      %1209 = vmatpush1.msra.mxu0 0.0
      %1210 = vmatprep.subr.mxu0 0.0
      %1211 = vmatpush1.msra.mxu0 0.0
      %1212 = vmatprep.subr.mxu0 0.0
      %1213 = vmatpush1.msra.mxu0 0.0
      %1214 = vmatprep.subr.mxu0 0.0
      %1215 = vmatpush1.msra.mxu0 0.0
      %1216 = vmatprep.subr.mxu0 0.0
      %1217 = vmatpush1.msra.mxu0 0.0
      %1218 = vmatprep.subr.mxu0 0.0
      %1219 = vmatpush1.msra.mxu0 0.0
      %1220 = vmatprep.subr.mxu0 0.0
      %1221 = vmatpush1.msra.mxu0 0.0
      %1222 = vmatprep.subr.mxu0 0.0
      %1223 = vmatpush1.msra.mxu0 0.0
      %1224 = vmatprep.subr.mxu0 0.0
      %1225 = vmatpush1.msra.mxu0 0.0
      %1226 = vmatprep.subr.mxu0 0.0
      %v1227 = vand.u32 %v770, 4294901760
      %1228 = vmatpush1.msra.mxu0 %v1227
      %1229 = vmatprep.subr.mxu0 0.0
      %1230 = vmatpush2.msra.mxu0 0.0
      %1231 = vmatprep.subr.mxu0 0.0
      %1232 = vmatpush2.msra.mxu0 0.0
      %1233 = vmatprep.subr.mxu0 0.0
      %1234 = vmatpush2.msra.mxu0 0.0
      %1235 = vmatprep.subr.mxu0 0.0
      %1236 = vmatpush2.msra.mxu0 0.0
      %1237 = vmatprep.subr.mxu0 0.0
      %1238 = vmatpush2.msra.mxu0 0.0
      %1239 = vmatprep.subr.mxu0 0.0
      %1240 = vmatpush2.msra.mxu0 0.0
      %1241 = vmatprep.subr.mxu0 0.0
      %1242 = vmatpush2.msra.mxu0 0.0
      %1243 = vmatprep.subr.mxu0 0.0
      %1244 = vmatpush2.msra.mxu0 0.0
      %1245 = vmatprep.subr.mxu0 0.0
      %1246 = vmatpush2.msra.mxu0 0.0
      %1247 = vmatprep.subr.mxu0 0.0
      %1248 = vmatpush2.msra.mxu0 0.0
      %1249 = vmatprep.subr.mxu0 0.0
      %1250 = vmatpush2.msra.mxu0 0.0
      %1251 = vmatprep.subr.mxu0 0.0
      %1252 = vmatpush2.msra.mxu0 0.0
      %1253 = vmatprep.subr.mxu0 0.0
      %1254 = vmatpush2.msra.mxu0 0.0
      %1255 = vmatprep.subr.mxu0 0.0
      %1256 = vmatpush2.msra.mxu0 0.0
      %1257 = vmatprep.subr.mxu0 0.0
      %1258 = vmatpush2.msra.mxu0 0.0
      %1259 = vmatprep.subr.mxu0 0.0
      %1260 = vmatpush2.msra.mxu0 0.0
      %1261 = vmatprep.mubr.f32.mxu0 0.0
      %v1262 = vand.u32 %v780, 4294901760
      %1263 = vmatmul.mubr.f32.gmra.mxu0 %v1262
      %v1264 = vpop.f32.mrf.mxu0
      %v1265 = vadd.f32 %v1187, %v1264
      %v1266 = vpop.f32.mrf.mxu0
      %1267 = vmatprep.mubr.f32.mxu0 0.0
      %v1268 = vand.u32 %v783, 4294901760
      %1269 = vmatmul.mubr.f32.gmra.mxu0 %v1268
      %v1270 = vpop.f32.mrf.mxu0
      %v1271 = vadd.f32 %v1193, %v1270
      %v1272 = vpop.f32.mrf.mxu0
      %1273 = vdwg.mxu0
      %v1274 = vmul.f32 %v1265, %v1265
      %v1275 = vmul.f32 %v1271, %v1271
      %v1276 = vsel %vm261, %v1274, 0.0
      %1277 = vadd.xlane.f32.xlu0 %v1276
      %v1278 = vpop.xlane.xlu0 %1277
      %v1279 = vsel %vm261, %v1275, 0.0
      %1280 = vadd.xlane.f32.xlu0 %v1279
      %v1281 = vpop.xlane.xlu0 %1280
      %v1282 = vmax.f32 %v1278, 1e-24
      %v1283 = vmax.f32 %v1281, 1e-24
      %v1284 = vrsqrt.pop %v1282
      %v1285 = vrsqrt.pop %v1283
      %v1286 = vmul.f32 %v1265, %v1284
      %v1287 = vmul.f32 %v1271, %v1285
      %v1288 = vmax.f32 %v1286, 0.0
      %v1289 = vmax.f32 %v1287, 0.0
      %1290 = vst.msk [vmem:[%s255] sm:$0xff] %vm261, %v1288
      %1291 = vst.msk [vmem:[%s255 + $0x8] sm:$0xff] %vm261, %v1289
      %s1292 = smul.u32 2, %s20
      %p1293 = scmp.lt.s32.totalorder %s19, 1
      %s1294 = scalar_select %p1293, %s19, 1
      %p1295 = scmp.lt.s32.totalorder %s1292, 1
      %s1296 = scalar_select %p1295, %s1292, 1
      %s1297 = smul.addr %s1294, 2
      %s1298 = sadd.s32 %s1296, %s1297
      %s1299 = smul.addr %s1298, 8
      %s1300 = scalar_lea.vmem %s4, %s1299
      // Predicated region
      $region37: #{gcn_sortk_pool_encoder.6} parent=35 // pred_check
        %p1301 = pneg %p143
      $region38: #{gcn_sortk_pool_encoder.6} parent=35 // pred_check_branch
        %1303 = sbr.rel (%p1301) target = $region40
      $region39: #{gcn_sortk_pool_encoder.6} parent=35 // pred_region
        %s1304 = smul.u32 2, %s20
      $region40: #{gcn_sortk_pool_encoder.6} parent=35 // pred_fallthru
        _
    $region36: #{gcn_sortk_pool_encoder.6} parent=5 // pred_fallthru
      _
    %p1305 = scmp.le.s32.totalorder 2, %s10
    // Predicated region
    $region41: #{gcn_sortk_pool_encoder.6} parent=5 // pred_check
      %p1306 = pneg %p1305
    $region42: #{gcn_sortk_pool_encoder.6} parent=5 // pred_check_branch
      %1308 = sbr.rel (%p1306) target = $region44
    $region43: #{gcn_sortk_pool_encoder.6} parent=5 // pred_region
      %s1309 = ssub.s32 %s10, 2
      // Predicated region
      $region45: #{gcn_sortk_pool_encoder.6} parent=43 // pred_check
        %p1310 = pneg %p149
      $region46: #{gcn_sortk_pool_encoder.6} parent=43 // pred_check_branch
        %1312 = sbr.rel (%p1310) target = $region48
      $region47: #{gcn_sortk_pool_encoder.6} parent=43 // pred_region
        %s1313 = smul.u32 2, %s22
        %p1314 = scmp.lt.s32.totalorder %s21, 1
        %s1315 = scalar_select %p1314, %s21, 1
        %p1316 = scmp.lt.s32.totalorder %s1313, 1
        %s1317 = scalar_select %p1316, %s1313, 1
        %s1318 = smul.addr %s1315, 2
        %s1319 = sadd.s32 %s1317, %s1318
        %s1320 = smul.addr %s1319, 8
        %s1321 = scalar_lea.vmem %s4, %s1320
      $region48: #{gcn_sortk_pool_encoder.6} parent=43 // pred_fallthru
        _
    $region44: #{gcn_sortk_pool_encoder.6} parent=5 // pred_fallthru
      _
  $region6: #{gcn_sortk_pool_encoder.6} parent=0 // loop_footer
    %s14 = sadd.s32 1, %s10
  $region7: #{gcn_sortk_pool_encoder.6} parent=0 // loop_footer_branch
    %9 = sbr.rel target = $region3
  $region8: #{gcn_sortk_pool_encoder.6} parent=0 // loop_exit
    _

// kernel: gcn_sortk_pool_encoder.10
$region0: #{gcn_sortk_pool_encoder.10}
  #allocation0 [shape = 'u32[]', space=smem, size = 0x4, offset = 0x4, fixed_abs, tag = 'smem constant byte address 0x4 - core index']
  #allocation1 [shape = 'u32[144,128]{1,0:T(1,128)}', space=vmem, size = 0x12000, scoped, tag = 'internal scratch']
  %s0 = inlined_call_operand.vmem [shape: f32[2,16,16], index: 0, kind: input, shape index: {}]
  %s1 = inlined_call_operand.vmem [shape: f32[2,16,16], index: 1, kind: input, shape index: {}]
  %s2 = inlined_call_operand.vmem [shape: f32[16,16], index: 2, kind: input, shape index: {}]
  %s3 = inlined_call_operand.vmem [shape: f32[1,16], index: 3, kind: input, shape index: {}]
  %s4 = inlined_call_operand.vmem [shape: f32[2,16,16], index: 4, kind: output, shape index: {}]
  %s5 = sld [smem:[#allocation0]]
  $region49: #{gcn_sortk_pool_encoder.10} parent=0
    _
  %s7 = ssub.s32 1, %s5
  %s8 = scalar_select 0, %s7, %s5
  loop: start=0, step=1, limit=4
  $region2: #{gcn_sortk_pool_encoder.10} parent=0 // loop_pre_header
    _
  $region3: #{gcn_sortk_pool_encoder.10} parent=0 // loop_header
    %s10 = sphi 0, %s14
    %p11 = scmp.ge.s32.totalorder %s10, 4
    %s17 = sphi 0, %s29
    %s18 = sphi 0, %s25
    %s19 = sphi 0, %s17
    %s20 = sphi 0, %s18
    %s21 = sphi 0, %s19
    %s22 = sphi 0, %s20
    %s34 = sphi 0, %s36
    %s37 = sphi 0, %s34
    %s38 = sphi 0, %s37
    %s54 = sphi 0, %s38
    %s60 = sphi 0, %s62
    %s63 = sphi 0, %s60
    %s64 = sphi 0, %s63
    %s80 = sphi 0, %s64
    %s84 = sphi 0, %s84
    %s86 = sphi 0, %s84
    %s87 = sphi 0, %s86
    %s101 = sphi 0, %s87
    %s105 = sphi 0, %s105
    %s107 = sphi 0, %s105
    %s108 = sphi 0, %s107
    %s122 = sphi 0, %s108
    %s130 = sphi 0, %s132
    %s133 = sphi 0, %s130
    %s134 = sphi 0, %s133
    %s150 = sphi 0, %s134
  $region4: #{gcn_sortk_pool_encoder.10} parent=0 // loop_header_branch
    %13 = sbr.rel (%p11) target = $region8
  $region5: #{gcn_sortk_pool_encoder.10} parent=0 // loop_body
    %s15 = ssub.s32 %s10, 1
    %s16 = ssub.s32 %s10, 2
    %s23 = sadd.s32 1, %s18
    %p24 = scmp.ge.s32.totalorder %s23, 1
    %s25 = scalar_select %p24, 0, %s23
    %s26 = sadd.s32 1, %s17
    %s27 = scalar_select %p24, %s26, %s17
    %p28 = scmp.ge.s32.totalorder %s27, 2
    %s29 = scalar_select %p28, 0, %s27
    %s30 = ssub.s32 %s17, %s29
    %s31 = ssub.s32 %s18, %s25
    %s32 = sor.u32 %s30, %s31
    %p33 = scmp.eq.s32.totalorder %s32, 0
    %s35 = sadd.s32 %s34, 1
    %s36 = scalar_select %p33, %s34, %s35
    %p39 = pneg %p33
    %p40 = scmp.eq.s32.totalorder %s10, 1
    %p41 = por %p39, %p40
    %p42 = scmp.ne.s32.totalorder %s34, %s37
    %p43 = scmp.eq.s32.totalorder %s10, 0
    %p44 = por %p42, %p43
    %p45 = scmp.ne.s32.totalorder %s34, %s37
    %p46 = scmp.eq.s32.totalorder %s15, 1
    %p47 = por %p45, %p46
    %p48 = scmp.ne.s32.totalorder %s37, %s38
    %p49 = scmp.eq.s32.totalorder %s15, 0
    %p50 = por %p48, %p49
    %p51 = scmp.ne.s32.totalorder %s37, %s38
    %p52 = scmp.eq.s32.totalorder %s16, 1
    %p53 = por %p51, %p52
    %p55 = scmp.ne.s32.totalorder %s38, %s54
    %p56 = scmp.eq.s32.totalorder %s16, 0
    %p57 = por %p55, %p56
    %s58 = ssub.s32 %s17, %s29
    %p59 = scmp.eq.s32.totalorder %s58, 0
    %s61 = sadd.s32 %s60, 1
    %s62 = scalar_select %p59, %s60, %s61
    %p65 = pneg %p59
    %p66 = scmp.eq.s32.totalorder %s10, 1
    %p67 = por %p65, %p66
    %p68 = scmp.ne.s32.totalorder %s60, %s63
    %p69 = scmp.eq.s32.totalorder %s10, 0
    %p70 = por %p68, %p69
    %p71 = scmp.ne.s32.totalorder %s60, %s63
    %p72 = scmp.eq.s32.totalorder %s15, 1
    %p73 = por %p71, %p72
    %p74 = scmp.ne.s32.totalorder %s63, %s64
    %p75 = scmp.eq.s32.totalorder %s15, 0
    %p76 = por %p74, %p75
    %p77 = scmp.ne.s32.totalorder %s63, %s64
    %p78 = scmp.eq.s32.totalorder %s16, 1
    %p79 = por %p77, %p78
    %p81 = scmp.ne.s32.totalorder %s64, %s80
    %p82 = scmp.eq.s32.totalorder %s16, 0
    %p83 = por %p81, %p82
    %s85 = sadd.s32 %s84, 1
    %p88 = scmp.eq.s32.totalorder %s10, 1
    %p89 = scmp.ne.s32.totalorder %s84, %s86
    %p90 = scmp.eq.s32.totalorder %s10, 0
    %p91 = por %p89, %p90
    %p92 = scmp.ne.s32.totalorder %s84, %s86
    %p93 = scmp.eq.s32.totalorder %s15, 1
    %p94 = por %p92, %p93
    %p95 = scmp.ne.s32.totalorder %s86, %s87
    %p96 = scmp.eq.s32.totalorder %s15, 0
    %p97 = por %p95, %p96
    %p98 = scmp.ne.s32.totalorder %s86, %s87
    %p99 = scmp.eq.s32.totalorder %s16, 1
    %p100 = por %p98, %p99
    %p102 = scmp.ne.s32.totalorder %s87, %s101
    %p103 = scmp.eq.s32.totalorder %s16, 0
    %p104 = por %p102, %p103
    %s106 = sadd.s32 %s105, 1
    %p109 = scmp.eq.s32.totalorder %s10, 1
    %p110 = scmp.ne.s32.totalorder %s105, %s107
    %p111 = scmp.eq.s32.totalorder %s10, 0
    %p112 = por %p110, %p111
    %p113 = scmp.ne.s32.totalorder %s105, %s107
    %p114 = scmp.eq.s32.totalorder %s15, 1
    %p115 = por %p113, %p114
    %p116 = scmp.ne.s32.totalorder %s107, %s108
    %p117 = scmp.eq.s32.totalorder %s15, 0
    %p118 = por %p116, %p117
    %p119 = scmp.ne.s32.totalorder %s107, %s108
    %p120 = scmp.eq.s32.totalorder %s16, 1
    %p121 = por %p119, %p120
    %p123 = scmp.ne.s32.totalorder %s108, %s122
    %p124 = scmp.eq.s32.totalorder %s16, 0
    %p125 = por %p123, %p124
    %s126 = ssub.s32 %s17, %s29
    %s127 = ssub.s32 %s18, %s25
    %s128 = sor.u32 %s126, %s127
    %p129 = scmp.eq.s32.totalorder %s128, 0
    %s131 = sadd.s32 %s130, 1
    %s132 = scalar_select %p129, %s130, %s131
    %p135 = pneg %p129
    %p136 = scmp.eq.s32.totalorder %s10, 1
    %p137 = por %p135, %p136
    %p138 = scmp.ne.s32.totalorder %s130, %s133
    %p139 = scmp.eq.s32.totalorder %s10, 0
    %p140 = por %p138, %p139
    %p141 = scmp.ne.s32.totalorder %s130, %s133
    %p142 = scmp.eq.s32.totalorder %s15, 1
    %p143 = por %p141, %p142
    %p144 = scmp.ne.s32.totalorder %s133, %s134
    %p145 = scmp.eq.s32.totalorder %s15, 0
    %p146 = por %p144, %p145
    %p147 = scmp.ne.s32.totalorder %s133, %s134
    %p148 = scmp.eq.s32.totalorder %s16, 1
    %p149 = por %p147, %p148
    %p151 = scmp.ne.s32.totalorder %s134, %s150
    %p152 = scmp.eq.s32.totalorder %s16, 0
    %p153 = por %p151, %p152
    %p154 = scmp.le.s32.totalorder 1, %s10
    %p155 = scmp.lt.s32.totalorder %s10, 3
    %p156 = pnand %p154, %p155
    %p157 = pneg %p156
    // Predicated region
    $region9: #{gcn_sortk_pool_encoder.10} parent=5 // pred_check
      _
    $region10: #{gcn_sortk_pool_encoder.10} parent=5 // pred_check_branch
      %159 = sbr.rel (%p156) target = $region12
    $region11: #{gcn_sortk_pool_encoder.10} parent=5 // pred_region
      %s160 = ssub.s32 %s10, 1
      // Predicated region
      $region13: #{gcn_sortk_pool_encoder.10} parent=11 // pred_check
        %p161 = pneg %p97
      $region14: #{gcn_sortk_pool_encoder.10} parent=11 // pred_check_branch
        %163 = sbr.rel (%p161) target = $region16
      $region15: #{gcn_sortk_pool_encoder.10} parent=11 // pred_region
        _
      $region16: #{gcn_sortk_pool_encoder.10} parent=11 // pred_fallthru
        _
      // Predicated region
      $region17: #{gcn_sortk_pool_encoder.10} parent=11 // pred_check
        %p164 = pneg %p118
      $region18: #{gcn_sortk_pool_encoder.10} parent=11 // pred_check_branch
        %166 = sbr.rel (%p164) target = $region20
      $region19: #{gcn_sortk_pool_encoder.10} parent=11 // pred_region
        _
      $region20: #{gcn_sortk_pool_encoder.10} parent=11 // pred_fallthru
        _
    $region12: #{gcn_sortk_pool_encoder.10} parent=5 // pred_fallthru
      _
    %p167 = scmp.lt.s32.totalorder %s10, 2
    // Predicated region
    $region21: #{gcn_sortk_pool_encoder.10} parent=5 // pred_check
      %p168 = pneg %p167
    $region22: #{gcn_sortk_pool_encoder.10} parent=5 // pred_check_branch
      %170 = sbr.rel (%p168) target = $region24
    $region23: #{gcn_sortk_pool_encoder.10} parent=5 // pred_region
      // Predicated region
      $region25: #{gcn_sortk_pool_encoder.10} parent=23 // pred_check
        %p171 = pneg %p44
      $region26: #{gcn_sortk_pool_encoder.10} parent=23 // pred_check_branch
        %173 = sbr.rel (%p171) target = $region28
      $region27: #{gcn_sortk_pool_encoder.10} parent=23 // pred_region
        %s174 = smul.u32 2, %s18
        %p175 = scmp.lt.s32.totalorder %s17, 1
        %s176 = scalar_select %p175, %s17, 1
        %p177 = scmp.lt.s32.totalorder %s174, 1
        %s178 = scalar_select %p177, %s174, 1
        %s179 = smul.addr %s176, 2
        %s180 = sadd.s32 %s178, %s179
        %s181 = smul.addr %s180, 8
        %s182 = scalar_lea.vmem %s0, %s181
        %s183 = smul.u32 2, %s18
      $region28: #{gcn_sortk_pool_encoder.10} parent=23 // pred_fallthru
        _
      // Predicated region
      $region29: #{gcn_sortk_pool_encoder.10} parent=23 // pred_check
        %p184 = pneg %p70
      $region30: #{gcn_sortk_pool_encoder.10} parent=23 // pred_check_branch
        %186 = sbr.rel (%p184) target = $region32
      $region31: #{gcn_sortk_pool_encoder.10} parent=23 // pred_region
        %p187 = scmp.lt.s32.totalorder %s17, 1
        %s188 = scalar_select %p187, %s17, 1
        %s189 = smul.addr %s188, 2
        %s190 = smul.addr %s189, 8
        %s191 = scalar_lea.vmem %s1, %s190
      $region32: #{gcn_sortk_pool_encoder.10} parent=23 // pred_fallthru
        _
    $region24: #{gcn_sortk_pool_encoder.10} parent=5 // pred_fallthru
      _
    %p192 = scmp.le.s32.totalorder 1, %s10
    %p193 = scmp.lt.s32.totalorder %s10, 3
    %p194 = pnand %p192, %p193
    %p195 = pneg %p194
    // Predicated region
    $region33: #{gcn_sortk_pool_encoder.10} parent=5 // pred_check
      _
    $region34: #{gcn_sortk_pool_encoder.10} parent=5 // pred_check_branch
      %197 = sbr.rel (%p194) target = $region36
    $region35: #{gcn_sortk_pool_encoder.10} parent=5 // pred_region
      %s198 = ssub.s32 %s10, 1
      %s199 = smul.u32 2, %s20
      %p200 = scmp.lt.s32.totalorder %s19, 1
      %s201 = scalar_select %p200, %s19, 1
      %p202 = scmp.lt.s32.totalorder %s199, 1
      %s203 = scalar_select %p202, %s199, 1
      %s204 = smul.addr %s201, 2
      %s205 = sadd.s32 %s203, %s204
      %s206 = smul.addr %s205, 8
      %s207 = scalar_lea.vmem %s0, %s206
      %p208 = pneg %p50
      %p209 = pneg %p47
      %p210 = scmp.lt.s32.totalorder %s19, 1
      %s211 = scalar_select %p210, %s19, 1
      %s212 = smul.addr %s211, 2
      %s213 = smul.addr %s212, 8
      %s214 = scalar_lea.vmem %s1, %s213
      %p215 = pneg %p76
      %p216 = pneg %p73
      %p217 = pneg %p97
      %p218 = pneg %p94
      %p219 = pneg %p118
      %p220 = pneg %p115
      %p221 = pneg %p146
      %p222 = pneg %p143
      %s223 = smul.u32 2, %s20
      %p224 = scmp.lt.s32.totalorder %s19, 1
      %s225 = scalar_select %p224, %s19, 1
      %p226 = scmp.lt.s32.totalorder %s223, 1
      %s227 = scalar_select %p226, %s223, 1
      %s228 = smul.addr %s225, 2
      %s229 = sadd.s32 %s227, %s228
      %s230 = smul.addr %s229, 8
      %s231 = scalar_lea.vmem %s4, %s230
      %s232 = smul.u32 2, %s20
      %p233 = scmp.lt.s32.totalorder %s19, 1
      %s234 = scalar_select %p233, %s19, 1
      %p235 = scmp.lt.s32.totalorder %s232, 1
      %s236 = scalar_select %p235, %s232, 1
      %s237 = smul.addr %s234, 2
      %s238 = sadd.s32 %s236, %s237
      %s239 = smul.addr %s238, 8
      %s240 = scalar_lea.vmem %s0, %s239
      %s241 = smul.u32 2, %s20
      %p242 = scmp.lt.s32.totalorder %s19, 1
      %s243 = scalar_select %p242, %s19, 1
      %s244 = smul.addr %s243, 2
      %s245 = smul.addr %s244, 8
      %s246 = scalar_lea.vmem %s1, %s245
      %s247 = smul.u32 2, %s20
      %p248 = scmp.lt.s32.totalorder %s19, 1
      %s249 = scalar_select %p248, %s19, 1
      %p250 = scmp.lt.s32.totalorder %s247, 1
      %s251 = scalar_select %p250, %s247, 1
      %s252 = smul.addr %s249, 2
      %s253 = sadd.s32 %s251, %s252
      %s254 = smul.addr %s253, 8
      %s255 = scalar_lea.vmem %s4, %s254
      %s256 = smul.u32 2, %s20
      %v257 = vld [vmem:[%s240] sm:$0xff]
      %v258 = vld [vmem:[%s240 + $0x8] sm:$0xff]
      %v259 = vld [vmem:[%s246] sm:$0xff]
      %v260 = vld [vmem:[%s246 + $0x8] sm:$0xff]
      %vm261 = vcmask 130048
      %v263 = vsel %vm261, %v257, 0
      %v266 = vsel %vm261, %v258, 0
      %268 = vmatprep.subr.mxu0 0.0
      %269 = vmatpush1.msra.mxu0 0.0
      %270 = vmatprep.subr.mxu0 0.0
      %271 = vmatpush1.msra.mxu0 0.0
      %272 = vmatprep.subr.mxu0 0.0
      %273 = vmatpush1.msra.mxu0 0.0
      %274 = vmatprep.subr.mxu0 0.0
      %275 = vmatpush1.msra.mxu0 0.0
      %276 = vmatprep.subr.mxu0 0.0
      %277 = vmatpush1.msra.mxu0 0.0
      %278 = vmatprep.subr.mxu0 0.0
      %279 = vmatpush1.msra.mxu0 0.0
      %280 = vmatprep.subr.mxu0 0.0
      %281 = vmatpush1.msra.mxu0 0.0
      %282 = vmatprep.subr.mxu0 0.0
      %283 = vmatpush1.msra.mxu0 0.0
      %284 = vmatprep.subr.mxu0 0.0
      %285 = vmatpush1.msra.mxu0 0.0
      %286 = vmatprep.subr.mxu0 0.0
      %287 = vmatpush1.msra.mxu0 0.0
      %288 = vmatprep.subr.mxu0 0.0
      %289 = vmatpush1.msra.mxu0 0.0
      %290 = vmatprep.subr.mxu0 0.0
      %291 = vmatpush1.msra.mxu0 0.0
      %292 = vmatprep.subr.mxu0 0.0
      %293 = vmatpush1.msra.mxu0 0.0
      %294 = vmatprep.subr.mxu0 0.0
      %295 = vmatpush1.msra.mxu0 0.0
      %296 = vmatprep.subr.mxu0 0.0
      %v297 = vand.u32 %v260, 4294901760
      %298 = vmatpush1.msra.mxu0 %v297
      %299 = vmatprep.subr.mxu0 0.0
      %v300 = vand.u32 %v259, 4294901760
      %301 = vmatpush1.msra.mxu0 %v300
      %302 = vmatprep.subr.mxu0 0.0
      %303 = vmatpush2.msra.mxu0 0.0
      %304 = vmatprep.subr.mxu0 0.0
      %305 = vmatpush2.msra.mxu0 0.0
      %306 = vmatprep.subr.mxu0 0.0
      %307 = vmatpush2.msra.mxu0 0.0
      %308 = vmatprep.subr.mxu0 0.0
      %309 = vmatpush2.msra.mxu0 0.0
      %310 = vmatprep.subr.mxu0 0.0
      %311 = vmatpush2.msra.mxu0 0.0
      %312 = vmatprep.subr.mxu0 0.0
      %313 = vmatpush2.msra.mxu0 0.0
      %314 = vmatprep.subr.mxu0 0.0
      %315 = vmatpush2.msra.mxu0 0.0
      %316 = vmatprep.subr.mxu0 0.0
      %317 = vmatpush2.msra.mxu0 0.0
      %318 = vmatprep.subr.mxu0 0.0
      %319 = vmatpush2.msra.mxu0 0.0
      %320 = vmatprep.subr.mxu0 0.0
      %321 = vmatpush2.msra.mxu0 0.0
      %322 = vmatprep.subr.mxu0 0.0
      %323 = vmatpush2.msra.mxu0 0.0
      %324 = vmatprep.subr.mxu0 0.0
      %325 = vmatpush2.msra.mxu0 0.0
      %326 = vmatprep.subr.mxu0 0.0
      %327 = vmatpush2.msra.mxu0 0.0
      %328 = vmatprep.subr.mxu0 0.0
      %329 = vmatpush2.msra.mxu0 0.0
      %330 = vmatprep.subr.mxu0 0.0
      %331 = vmatpush2.msra.mxu0 0.0
      %332 = vmatprep.subr.mxu0 0.0
      %333 = vmatpush2.msra.mxu0 0.0
      %334 = vmatprep.mubr.f32.mxu0 0.0
      %v335 = vand.u32 %v263, 4294901760
      %v336 = vsub.f32 %v263, %v335
      %v337 = vand.u32 %v336, 4294901760
      %v338 = vsub.f32 %v336, %v337
      %v339 = vand.u32 %v338, 4294901760
      %340 = vmatmul.mubr.f32.gmra.mxu0 %v339
      %v341 = vpop.f32.mrf.mxu0
      %v342 = vadd.f32 0.0, %v341
      %v343 = vpop.f32.mrf.mxu0
      %344 = vmatprep.mubr.f32.mxu0 0.0
      %v345 = vand.u32 %v266, 4294901760
      %v346 = vsub.f32 %v266, %v345
      %v347 = vand.u32 %v346, 4294901760
      %v348 = vsub.f32 %v346, %v347
      %v349 = vand.u32 %v348, 4294901760
      %350 = vmatmul.mubr.f32.gmra.mxu0 %v349
      %v351 = vpop.f32.mrf.mxu0
      %v352 = vadd.f32 0.0, %v351
      %v353 = vpop.f32.mrf.mxu0
      %354 = vdwg.mxu0
      %355 = vmatprep.subr.mxu0 0.0
      %356 = vmatpush1.msra.mxu0 0.0
      %357 = vmatprep.subr.mxu0 0.0
      %358 = vmatpush1.msra.mxu0 0.0
      %359 = vmatprep.subr.mxu0 0.0
      %360 = vmatpush1.msra.mxu0 0.0
      %361 = vmatprep.subr.mxu0 0.0
      %362 = vmatpush1.msra.mxu0 0.0
      %363 = vmatprep.subr.mxu0 0.0
      %364 = vmatpush1.msra.mxu0 0.0
      %365 = vmatprep.subr.mxu0 0.0
      %366 = vmatpush1.msra.mxu0 0.0
      %367 = vmatprep.subr.mxu0 0.0
      %368 = vmatpush1.msra.mxu0 0.0
      %369 = vmatprep.subr.mxu0 0.0
      %370 = vmatpush1.msra.mxu0 0.0
      %371 = vmatprep.subr.mxu0 0.0
      %372 = vmatpush1.msra.mxu0 0.0
      %373 = vmatprep.subr.mxu0 0.0
      %374 = vmatpush1.msra.mxu0 0.0
      %375 = vmatprep.subr.mxu0 0.0
      %376 = vmatpush1.msra.mxu0 0.0
      %377 = vmatprep.subr.mxu0 0.0
      %378 = vmatpush1.msra.mxu0 0.0
      %379 = vmatprep.subr.mxu0 0.0
      %380 = vmatpush1.msra.mxu0 0.0
      %381 = vmatprep.subr.mxu0 0.0
      %382 = vmatpush1.msra.mxu0 0.0
      %383 = vmatprep.subr.mxu0 0.0
      %v384 = vand.u32 %v260, 4294901760
      %v385 = vsub.f32 %v260, %v384
      %v386 = vand.u32 %v385, 4294901760
      %v387 = vsub.f32 %v385, %v386
      %v388 = vand.u32 %v387, 4294901760
      %389 = vmatpush1.msra.mxu0 %v388
      %390 = vmatprep.subr.mxu0 0.0
      %v391 = vand.u32 %v259, 4294901760
      %v392 = vsub.f32 %v259, %v391
      %v393 = vand.u32 %v392, 4294901760
      %v394 = vsub.f32 %v392, %v393
      %v395 = vand.u32 %v394, 4294901760
      %396 = vmatpush1.msra.mxu0 %v395
      %397 = vmatprep.subr.mxu0 0.0
      %398 = vmatpush2.msra.mxu0 0.0
      %399 = vmatprep.subr.mxu0 0.0
      %400 = vmatpush2.msra.mxu0 0.0
      %401 = vmatprep.subr.mxu0 0.0
      %402 = vmatpush2.msra.mxu0 0.0
      %403 = vmatprep.subr.mxu0 0.0
      %404 = vmatpush2.msra.mxu0 0.0
      %405 = vmatprep.subr.mxu0 0.0
      %406 = vmatpush2.msra.mxu0 0.0
      %407 = vmatprep.subr.mxu0 0.0
      %408 = vmatpush2.msra.mxu0 0.0
      %409 = vmatprep.subr.mxu0 0.0
      %410 = vmatpush2.msra.mxu0 0.0
      %411 = vmatprep.subr.mxu0 0.0
      %412 = vmatpush2.msra.mxu0 0.0
      %413 = vmatprep.subr.mxu0 0.0
      %414 = vmatpush2.msra.mxu0 0.0
      %415 = vmatprep.subr.mxu0 0.0
      %416 = vmatpush2.msra.mxu0 0.0
      %417 = vmatprep.subr.mxu0 0.0
      %418 = vmatpush2.msra.mxu0 0.0
      %419 = vmatprep.subr.mxu0 0.0
      %420 = vmatpush2.msra.mxu0 0.0
      %421 = vmatprep.subr.mxu0 0.0
      %422 = vmatpush2.msra.mxu0 0.0
      %423 = vmatprep.subr.mxu0 0.0
      %424 = vmatpush2.msra.mxu0 0.0
      %425 = vmatprep.subr.mxu0 0.0
      %426 = vmatpush2.msra.mxu0 0.0
      %427 = vmatprep.subr.mxu0 0.0
      %428 = vmatpush2.msra.mxu0 0.0
      %429 = vmatprep.mubr.f32.mxu0 0.0
      %v430 = vand.u32 %v263, 4294901760
      %431 = vmatmul.mubr.f32.gmra.mxu0 %v430
      %v432 = vpop.f32.mrf.mxu0
      %v433 = vadd.f32 %v342, %v432
      %v434 = vpop.f32.mrf.mxu0
      %435 = vmatprep.mubr.f32.mxu0 0.0
      %v436 = vand.u32 %v266, 4294901760
      %437 = vmatmul.mubr.f32.gmra.mxu0 %v436
      %v438 = vpop.f32.mrf.mxu0
      %v439 = vadd.f32 %v352, %v438
      %v440 = vpop.f32.mrf.mxu0
      %441 = vdwg.mxu0
      %442 = vmatprep.subr.mxu0 0.0
      %443 = vmatpush1.msra.mxu0 0.0
      %444 = vmatprep.subr.mxu0 0.0
      %445 = vmatpush1.msra.mxu0 0.0
      %446 = vmatprep.subr.mxu0 0.0
      %447 = vmatpush1.msra.mxu0 0.0
      %448 = vmatprep.subr.mxu0 0.0
      %449 = vmatpush1.msra.mxu0 0.0
      %450 = vmatprep.subr.mxu0 0.0
      %451 = vmatpush1.msra.mxu0 0.0
      %452 = vmatprep.subr.mxu0 0.0
      %453 = vmatpush1.msra.mxu0 0.0
      %454 = vmatprep.subr.mxu0 0.0
      %455 = vmatpush1.msra.mxu0 0.0
      %456 = vmatprep.subr.mxu0 0.0
      %457 = vmatpush1.msra.mxu0 0.0
      %458 = vmatprep.subr.mxu0 0.0
      %459 = vmatpush1.msra.mxu0 0.0
      %460 = vmatprep.subr.mxu0 0.0
      %461 = vmatpush1.msra.mxu0 0.0
      %462 = vmatprep.subr.mxu0 0.0
      %463 = vmatpush1.msra.mxu0 0.0
      %464 = vmatprep.subr.mxu0 0.0
      %465 = vmatpush1.msra.mxu0 0.0
      %466 = vmatprep.subr.mxu0 0.0
      %467 = vmatpush1.msra.mxu0 0.0
      %468 = vmatprep.subr.mxu0 0.0
      %469 = vmatpush1.msra.mxu0 0.0
      %470 = vmatprep.subr.mxu0 0.0
      %v471 = vand.u32 %v260, 4294901760
      %v472 = vsub.f32 %v260, %v471
      %473 = vmatpush1.msra.mxu0 %v472
      %474 = vmatprep.subr.mxu0 0.0
      %v475 = vand.u32 %v259, 4294901760
      %v476 = vsub.f32 %v259, %v475
      %477 = vmatpush1.msra.mxu0 %v476
      %478 = vmatprep.subr.mxu0 0.0
      %479 = vmatpush2.msra.mxu0 0.0
      %480 = vmatprep.subr.mxu0 0.0
      %481 = vmatpush2.msra.mxu0 0.0
      %482 = vmatprep.subr.mxu0 0.0
      %483 = vmatpush2.msra.mxu0 0.0
      %484 = vmatprep.subr.mxu0 0.0
      %485 = vmatpush2.msra.mxu0 0.0
      %486 = vmatprep.subr.mxu0 0.0
      %487 = vmatpush2.msra.mxu0 0.0
      %488 = vmatprep.subr.mxu0 0.0
      %489 = vmatpush2.msra.mxu0 0.0
      %490 = vmatprep.subr.mxu0 0.0
      %491 = vmatpush2.msra.mxu0 0.0
      %492 = vmatprep.subr.mxu0 0.0
      %493 = vmatpush2.msra.mxu0 0.0
      %494 = vmatprep.subr.mxu0 0.0
      %495 = vmatpush2.msra.mxu0 0.0
      %496 = vmatprep.subr.mxu0 0.0
      %497 = vmatpush2.msra.mxu0 0.0
      %498 = vmatprep.subr.mxu0 0.0
      %499 = vmatpush2.msra.mxu0 0.0
      %500 = vmatprep.subr.mxu0 0.0
      %501 = vmatpush2.msra.mxu0 0.0
      %502 = vmatprep.subr.mxu0 0.0
      %503 = vmatpush2.msra.mxu0 0.0
      %504 = vmatprep.subr.mxu0 0.0
      %505 = vmatpush2.msra.mxu0 0.0
      %506 = vmatprep.subr.mxu0 0.0
      %507 = vmatpush2.msra.mxu0 0.0
      %508 = vmatprep.subr.mxu0 0.0
      %509 = vmatpush2.msra.mxu0 0.0
      %510 = vmatprep.mubr.f32.mxu0 0.0
      %v511 = vand.u32 %v263, 4294901760
      %v512 = vsub.f32 %v263, %v511
      %513 = vmatmul.mubr.f32.gmra.mxu0 %v512
      %v514 = vpop.f32.mrf.mxu0
      %v515 = vadd.f32 %v433, %v514
      %v516 = vpop.f32.mrf.mxu0
      %517 = vmatprep.mubr.f32.mxu0 0.0
      %v518 = vand.u32 %v266, 4294901760
      %v519 = vsub.f32 %v266, %v518
      %520 = vmatmul.mubr.f32.gmra.mxu0 %v519
      %v521 = vpop.f32.mrf.mxu0
      %v522 = vadd.f32 %v439, %v521
      %v523 = vpop.f32.mrf.mxu0
      %524 = vdwg.mxu0
      %525 = vmatprep.subr.mxu0 0.0
      %526 = vmatpush1.msra.mxu0 0.0
      %527 = vmatprep.subr.mxu0 0.0
      %528 = vmatpush1.msra.mxu0 0.0
      %529 = vmatprep.subr.mxu0 0.0
      %530 = vmatpush1.msra.mxu0 0.0
      %531 = vmatprep.subr.mxu0 0.0
      %532 = vmatpush1.msra.mxu0 0.0
      %533 = vmatprep.subr.mxu0 0.0
      %534 = vmatpush1.msra.mxu0 0.0
      %535 = vmatprep.subr.mxu0 0.0
      %536 = vmatpush1.msra.mxu0 0.0
      %537 = vmatprep.subr.mxu0 0.0
      %538 = vmatpush1.msra.mxu0 0.0
      %539 = vmatprep.subr.mxu0 0.0
      %540 = vmatpush1.msra.mxu0 0.0
      %541 = vmatprep.subr.mxu0 0.0
      %542 = vmatpush1.msra.mxu0 0.0
      %543 = vmatprep.subr.mxu0 0.0
      %544 = vmatpush1.msra.mxu0 0.0
      %545 = vmatprep.subr.mxu0 0.0
      %546 = vmatpush1.msra.mxu0 0.0
      %547 = vmatprep.subr.mxu0 0.0
      %548 = vmatpush1.msra.mxu0 0.0
      %549 = vmatprep.subr.mxu0 0.0
      %550 = vmatpush1.msra.mxu0 0.0
      %551 = vmatprep.subr.mxu0 0.0
      %552 = vmatpush1.msra.mxu0 0.0
      %553 = vmatprep.subr.mxu0 0.0
      %v554 = vand.u32 %v260, 4294901760
      %555 = vmatpush1.msra.mxu0 %v554
      %556 = vmatprep.subr.mxu0 0.0
      %v557 = vand.u32 %v259, 4294901760
      %558 = vmatpush1.msra.mxu0 %v557
      %559 = vmatprep.subr.mxu0 0.0
      %560 = vmatpush2.msra.mxu0 0.0
      %561 = vmatprep.subr.mxu0 0.0
      %562 = vmatpush2.msra.mxu0 0.0
      %563 = vmatprep.subr.mxu0 0.0
      %564 = vmatpush2.msra.mxu0 0.0
      %565 = vmatprep.subr.mxu0 0.0
      %566 = vmatpush2.msra.mxu0 0.0
      %567 = vmatprep.subr.mxu0 0.0
      %568 = vmatpush2.msra.mxu0 0.0
      %569 = vmatprep.subr.mxu0 0.0
      %570 = vmatpush2.msra.mxu0 0.0
      %571 = vmatprep.subr.mxu0 0.0
      %572 = vmatpush2.msra.mxu0 0.0
      %573 = vmatprep.subr.mxu0 0.0
      %574 = vmatpush2.msra.mxu0 0.0
      %575 = vmatprep.subr.mxu0 0.0
      %576 = vmatpush2.msra.mxu0 0.0
      %577 = vmatprep.subr.mxu0 0.0
      %578 = vmatpush2.msra.mxu0 0.0
      %579 = vmatprep.subr.mxu0 0.0
      %580 = vmatpush2.msra.mxu0 0.0
      %581 = vmatprep.subr.mxu0 0.0
      %582 = vmatpush2.msra.mxu0 0.0
      %583 = vmatprep.subr.mxu0 0.0
      %584 = vmatpush2.msra.mxu0 0.0
      %585 = vmatprep.subr.mxu0 0.0
      %586 = vmatpush2.msra.mxu0 0.0
      %587 = vmatprep.subr.mxu0 0.0
      %588 = vmatpush2.msra.mxu0 0.0
      %589 = vmatprep.subr.mxu0 0.0
      %590 = vmatpush2.msra.mxu0 0.0
      %591 = vmatprep.mubr.f32.mxu0 0.0
      %v592 = vand.u32 %v263, 4294901760
      %v593 = vsub.f32 %v263, %v592
      %v594 = vand.u32 %v593, 4294901760
      %595 = vmatmul.mubr.f32.gmra.mxu0 %v594
      %v596 = vpop.f32.mrf.mxu0
      %v597 = vadd.f32 %v515, %v596
      %v598 = vpop.f32.mrf.mxu0
      %599 = vmatprep.mubr.f32.mxu0 0.0
      %v600 = vand.u32 %v266, 4294901760
      %v601 = vsub.f32 %v266, %v600
      %v602 = vand.u32 %v601, 4294901760
      %603 = vmatmul.mubr.f32.gmra.mxu0 %v602
      %v604 = vpop.f32.mrf.mxu0
      %v605 = vadd.f32 %v522, %v604
      %v606 = vpop.f32.mrf.mxu0
      %607 = vdwg.mxu0
      %608 = vmatprep.subr.mxu0 0.0
      %609 = vmatpush1.msra.mxu0 0.0
      %610 = vmatprep.subr.mxu0 0.0
      %611 = vmatpush1.msra.mxu0 0.0
      %612 = vmatprep.subr.mxu0 0.0
      %613 = vmatpush1.msra.mxu0 0.0
      %614 = vmatprep.subr.mxu0 0.0
      %615 = vmatpush1.msra.mxu0 0.0
      %616 = vmatprep.subr.mxu0 0.0
      %617 = vmatpush1.msra.mxu0 0.0
      %618 = vmatprep.subr.mxu0 0.0
      %619 = vmatpush1.msra.mxu0 0.0
      %620 = vmatprep.subr.mxu0 0.0
      %621 = vmatpush1.msra.mxu0 0.0
      %622 = vmatprep.subr.mxu0 0.0
      %623 = vmatpush1.msra.mxu0 0.0
      %624 = vmatprep.subr.mxu0 0.0
      %625 = vmatpush1.msra.mxu0 0.0
      %626 = vmatprep.subr.mxu0 0.0
      %627 = vmatpush1.msra.mxu0 0.0
      %628 = vmatprep.subr.mxu0 0.0
      %629 = vmatpush1.msra.mxu0 0.0
      %630 = vmatprep.subr.mxu0 0.0
      %631 = vmatpush1.msra.mxu0 0.0
      %632 = vmatprep.subr.mxu0 0.0
      %633 = vmatpush1.msra.mxu0 0.0
      %634 = vmatprep.subr.mxu0 0.0
      %635 = vmatpush1.msra.mxu0 0.0
      %636 = vmatprep.subr.mxu0 0.0
      %v637 = vand.u32 %v260, 4294901760
      %v638 = vsub.f32 %v260, %v637
      %v639 = vand.u32 %v638, 4294901760
      %640 = vmatpush1.msra.mxu0 %v639
      %641 = vmatprep.subr.mxu0 0.0
      %v642 = vand.u32 %v259, 4294901760
      %v643 = vsub.f32 %v259, %v642
      %v644 = vand.u32 %v643, 4294901760
      %645 = vmatpush1.msra.mxu0 %v644
      %646 = vmatprep.subr.mxu0 0.0
      %647 = vmatpush2.msra.mxu0 0.0
      %648 = vmatprep.subr.mxu0 0.0
      %649 = vmatpush2.msra.mxu0 0.0
      %650 = vmatprep.subr.mxu0 0.0
      %651 = vmatpush2.msra.mxu0 0.0
      %652 = vmatprep.subr.mxu0 0.0
      %653 = vmatpush2.msra.mxu0 0.0
      %654 = vmatprep.subr.mxu0 0.0
      %655 = vmatpush2.msra.mxu0 0.0
      %656 = vmatprep.subr.mxu0 0.0
      %657 = vmatpush2.msra.mxu0 0.0
      %658 = vmatprep.subr.mxu0 0.0
      %659 = vmatpush2.msra.mxu0 0.0
      %660 = vmatprep.subr.mxu0 0.0
      %661 = vmatpush2.msra.mxu0 0.0
      %662 = vmatprep.subr.mxu0 0.0
      %663 = vmatpush2.msra.mxu0 0.0
      %664 = vmatprep.subr.mxu0 0.0
      %665 = vmatpush2.msra.mxu0 0.0
      %666 = vmatprep.subr.mxu0 0.0
      %667 = vmatpush2.msra.mxu0 0.0
      %668 = vmatprep.subr.mxu0 0.0
      %669 = vmatpush2.msra.mxu0 0.0
      %670 = vmatprep.subr.mxu0 0.0
      %671 = vmatpush2.msra.mxu0 0.0
      %672 = vmatprep.subr.mxu0 0.0
      %673 = vmatpush2.msra.mxu0 0.0
      %674 = vmatprep.subr.mxu0 0.0
      %675 = vmatpush2.msra.mxu0 0.0
      %676 = vmatprep.subr.mxu0 0.0
      %677 = vmatpush2.msra.mxu0 0.0
      %678 = vmatprep.mubr.f32.mxu0 0.0
      %v679 = vand.u32 %v263, 4294901760
      %680 = vmatmul.mubr.f32.gmra.mxu0 %v679
      %v681 = vpop.f32.mrf.mxu0
      %v682 = vadd.f32 %v597, %v681
      %v683 = vpop.f32.mrf.mxu0
      %684 = vmatprep.mubr.f32.mxu0 0.0
      %v685 = vand.u32 %v266, 4294901760
      %686 = vmatmul.mubr.f32.gmra.mxu0 %v685
      %v687 = vpop.f32.mrf.mxu0
      %v688 = vadd.f32 %v605, %v687
      %v689 = vpop.f32.mrf.mxu0
      %690 = vdwg.mxu0
      %691 = vmatprep.subr.mxu0 0.0
      %692 = vmatpush1.msra.mxu0 0.0
      %693 = vmatprep.subr.mxu0 0.0
      %694 = vmatpush1.msra.mxu0 0.0
      %695 = vmatprep.subr.mxu0 0.0
      %696 = vmatpush1.msra.mxu0 0.0
      %697 = vmatprep.subr.mxu0 0.0
      %698 = vmatpush1.msra.mxu0 0.0
      %699 = vmatprep.subr.mxu0 0.0
      %700 = vmatpush1.msra.mxu0 0.0
      %701 = vmatprep.subr.mxu0 0.0
      %702 = vmatpush1.msra.mxu0 0.0
      %703 = vmatprep.subr.mxu0 0.0
      %704 = vmatpush1.msra.mxu0 0.0
      %705 = vmatprep.subr.mxu0 0.0
      %706 = vmatpush1.msra.mxu0 0.0
      %707 = vmatprep.subr.mxu0 0.0
      %708 = vmatpush1.msra.mxu0 0.0
      %709 = vmatprep.subr.mxu0 0.0
      %710 = vmatpush1.msra.mxu0 0.0
      %711 = vmatprep.subr.mxu0 0.0
      %712 = vmatpush1.msra.mxu0 0.0
      %713 = vmatprep.subr.mxu0 0.0
      %714 = vmatpush1.msra.mxu0 0.0
      %715 = vmatprep.subr.mxu0 0.0
      %716 = vmatpush1.msra.mxu0 0.0
      %717 = vmatprep.subr.mxu0 0.0
      %718 = vmatpush1.msra.mxu0 0.0
      %719 = vmatprep.subr.mxu0 0.0
      %v720 = vand.u32 %v260, 4294901760
      %721 = vmatpush1.msra.mxu0 %v720
      %722 = vmatprep.subr.mxu0 0.0
      %v723 = vand.u32 %v259, 4294901760
      %724 = vmatpush1.msra.mxu0 %v723
      %725 = vmatprep.subr.mxu0 0.0
      %726 = vmatpush2.msra.mxu0 0.0
      %727 = vmatprep.subr.mxu0 0.0
      %728 = vmatpush2.msra.mxu0 0.0
      %729 = vmatprep.subr.mxu0 0.0
      %730 = vmatpush2.msra.mxu0 0.0
      %731 = vmatprep.subr.mxu0 0.0
      %732 = vmatpush2.msra.mxu0 0.0
      %733 = vmatprep.subr.mxu0 0.0
      %734 = vmatpush2.msra.mxu0 0.0
      %735 = vmatprep.subr.mxu0 0.0
      %736 = vmatpush2.msra.mxu0 0.0
      %737 = vmatprep.subr.mxu0 0.0
      %738 = vmatpush2.msra.mxu0 0.0
      %739 = vmatprep.subr.mxu0 0.0
      %740 = vmatpush2.msra.mxu0 0.0
      %741 = vmatprep.subr.mxu0 0.0
      %742 = vmatpush2.msra.mxu0 0.0
      %743 = vmatprep.subr.mxu0 0.0
      %744 = vmatpush2.msra.mxu0 0.0
      %745 = vmatprep.subr.mxu0 0.0
      %746 = vmatpush2.msra.mxu0 0.0
      %747 = vmatprep.subr.mxu0 0.0
      %748 = vmatpush2.msra.mxu0 0.0
      %749 = vmatprep.subr.mxu0 0.0
      %750 = vmatpush2.msra.mxu0 0.0
      %751 = vmatprep.subr.mxu0 0.0
      %752 = vmatpush2.msra.mxu0 0.0
      %753 = vmatprep.subr.mxu0 0.0
      %754 = vmatpush2.msra.mxu0 0.0
      %755 = vmatprep.subr.mxu0 0.0
      %756 = vmatpush2.msra.mxu0 0.0
      %757 = vmatprep.mubr.f32.mxu0 0.0
      %v758 = vand.u32 %v263, 4294901760
      %759 = vmatmul.mubr.f32.gmra.mxu0 %v758
      %v760 = vpop.f32.mrf.mxu0
      %v761 = vadd.f32 %v682, %v760
      %v762 = vpop.f32.mrf.mxu0
      %763 = vmatprep.mubr.f32.mxu0 0.0
      %v764 = vand.u32 %v266, 4294901760
      %765 = vmatmul.mubr.f32.gmra.mxu0 %v764
      %v766 = vpop.f32.mrf.mxu0
      %v767 = vadd.f32 %v688, %v766
      %v768 = vpop.f32.mrf.mxu0
      %769 = vdwg.mxu0
      %v770 = vld [vmem:[%s2] sm:$0xff]
      %v771 = vld [vmem:[%s2 + $0x8] sm:$0xff]
      %v772 = vld [vmem:[%s3] sm:$0x1]
      %v774 = vlaneseq
      %v775 = vshrl.u32 %v774, 7
      %v776 = vsub.s32 0, %v775
      %v777 = vrot.slane %v772, %v776
      %v780 = vsel %vm261, %v761, 0
      %v783 = vsel %vm261, %v767, 0
      %785 = vmatprep.subr.mxu0 0.0
      %786 = vmatpush1.msra.mxu0 0.0
      %787 = vmatprep.subr.mxu0 0.0
      %788 = vmatpush1.msra.mxu0 0.0
      %789 = vmatprep.subr.mxu0 0.0
      %790 = vmatpush1.msra.mxu0 0.0
      %791 = vmatprep.subr.mxu0 0.0
      %792 = vmatpush1.msra.mxu0 0.0
      %793 = vmatprep.subr.mxu0 0.0
      %794 = vmatpush1.msra.mxu0 0.0
      %795 = vmatprep.subr.mxu0 0.0
      %796 = vmatpush1.msra.mxu0 0.0
      %797 = vmatprep.subr.mxu0 0.0
      %798 = vmatpush1.msra.mxu0 0.0
      %799 = vmatprep.subr.mxu0 0.0
      %800 = vmatpush1.msra.mxu0 0.0
      %801 = vmatprep.subr.mxu0 0.0
      %802 = vmatpush1.msra.mxu0 0.0
      %803 = vmatprep.subr.mxu0 0.0
      %804 = vmatpush1.msra.mxu0 0.0
      %805 = vmatprep.subr.mxu0 0.0
      %806 = vmatpush1.msra.mxu0 0.0
      %807 = vmatprep.subr.mxu0 0.0
      %808 = vmatpush1.msra.mxu0 0.0
      %809 = vmatprep.subr.mxu0 0.0
      %810 = vmatpush1.msra.mxu0 0.0
      %811 = vmatprep.subr.mxu0 0.0
      %812 = vmatpush1.msra.mxu0 0.0
      %813 = vmatprep.subr.mxu0 0.0
      %v814 = vand.u32 %v771, 4294901760
      %815 = vmatpush1.msra.mxu0 %v814
      %816 = vmatprep.subr.mxu0 0.0
      %v817 = vand.u32 %v770, 4294901760
      %818 = vmatpush1.msra.mxu0 %v817
      %819 = vmatprep.subr.mxu0 0.0
      %820 = vmatpush2.msra.mxu0 0.0
      %821 = vmatprep.subr.mxu0 0.0
      %822 = vmatpush2.msra.mxu0 0.0
      %823 = vmatprep.subr.mxu0 0.0
      %824 = vmatpush2.msra.mxu0 0.0
      %825 = vmatprep.subr.mxu0 0.0
      %826 = vmatpush2.msra.mxu0 0.0
      %827 = vmatprep.subr.mxu0 0.0
      %828 = vmatpush2.msra.mxu0 0.0
      %829 = vmatprep.subr.mxu0 0.0
      %830 = vmatpush2.msra.mxu0 0.0
      %831 = vmatprep.subr.mxu0 0.0
      %832 = vmatpush2.msra.mxu0 0.0
      %833 = vmatprep.subr.mxu0 0.0
      %834 = vmatpush2.msra.mxu0 0.0
      %835 = vmatprep.subr.mxu0 0.0
      %836 = vmatpush2.msra.mxu0 0.0
      %837 = vmatprep.subr.mxu0 0.0
      %838 = vmatpush2.msra.mxu0 0.0
      %839 = vmatprep.subr.mxu0 0.0
      %840 = vmatpush2.msra.mxu0 0.0
      %841 = vmatprep.subr.mxu0 0.0
      %842 = vmatpush2.msra.mxu0 0.0
      %843 = vmatprep.subr.mxu0 0.0
      %844 = vmatpush2.msra.mxu0 0.0
      %845 = vmatprep.subr.mxu0 0.0
      %846 = vmatpush2.msra.mxu0 0.0
      %847 = vmatprep.subr.mxu0 0.0
      %848 = vmatpush2.msra.mxu0 0.0
      %849 = vmatprep.subr.mxu0 0.0
      %850 = vmatpush2.msra.mxu0 0.0
      %851 = vmatprep.mubr.f32.mxu0 0.0
      %v852 = vand.u32 %v780, 4294901760
      %v853 = vsub.f32 %v780, %v852
      %v854 = vand.u32 %v853, 4294901760
      %v855 = vsub.f32 %v853, %v854
      %v856 = vand.u32 %v855, 4294901760
      %857 = vmatmul.mubr.f32.gmra.mxu0 %v856
      %v858 = vpop.f32.mrf.mxu0
      %v859 = vadd.f32 %v777, %v858
      %v860 = vpop.f32.mrf.mxu0
      %861 = vmatprep.mubr.f32.mxu0 0.0
      %v862 = vand.u32 %v783, 4294901760
      %v863 = vsub.f32 %v783, %v862
      %v864 = vand.u32 %v863, 4294901760
      %v865 = vsub.f32 %v863, %v864
      %v866 = vand.u32 %v865, 4294901760
      %867 = vmatmul.mubr.f32.gmra.mxu0 %v866
      %v868 = vpop.f32.mrf.mxu0
      %v869 = vadd.f32 %v777, %v868
      %v870 = vpop.f32.mrf.mxu0
      %871 = vdwg.mxu0
      %872 = vmatprep.subr.mxu0 0.0
      %873 = vmatpush1.msra.mxu0 0.0
      %874 = vmatprep.subr.mxu0 0.0
      %875 = vmatpush1.msra.mxu0 0.0
      %876 = vmatprep.subr.mxu0 0.0
      %877 = vmatpush1.msra.mxu0 0.0
      %878 = vmatprep.subr.mxu0 0.0
      %879 = vmatpush1.msra.mxu0 0.0
      %880 = vmatprep.subr.mxu0 0.0
      %881 = vmatpush1.msra.mxu0 0.0
      %882 = vmatprep.subr.mxu0 0.0
      %883 = vmatpush1.msra.mxu0 0.0
      %884 = vmatprep.subr.mxu0 0.0
      %885 = vmatpush1.msra.mxu0 0.0
      %886 = vmatprep.subr.mxu0 0.0
      %887 = vmatpush1.msra.mxu0 0.0
      %888 = vmatprep.subr.mxu0 0.0
      %889 = vmatpush1.msra.mxu0 0.0
      %890 = vmatprep.subr.mxu0 0.0
      %891 = vmatpush1.msra.mxu0 0.0
      %892 = vmatprep.subr.mxu0 0.0
      %893 = vmatpush1.msra.mxu0 0.0
      %894 = vmatprep.subr.mxu0 0.0
      %895 = vmatpush1.msra.mxu0 0.0
      %896 = vmatprep.subr.mxu0 0.0
      %897 = vmatpush1.msra.mxu0 0.0
      %898 = vmatprep.subr.mxu0 0.0
      %899 = vmatpush1.msra.mxu0 0.0
      %900 = vmatprep.subr.mxu0 0.0
      %v901 = vand.u32 %v771, 4294901760
      %v902 = vsub.f32 %v771, %v901
      %v903 = vand.u32 %v902, 4294901760
      %v904 = vsub.f32 %v902, %v903
      %v905 = vand.u32 %v904, 4294901760
      %906 = vmatpush1.msra.mxu0 %v905
      %907 = vmatprep.subr.mxu0 0.0
      %v908 = vand.u32 %v770, 4294901760
      %v909 = vsub.f32 %v770, %v908
      %v910 = vand.u32 %v909, 4294901760
      %v911 = vsub.f32 %v909, %v910
      %v912 = vand.u32 %v911, 4294901760
      %913 = vmatpush1.msra.mxu0 %v912
      %914 = vmatprep.subr.mxu0 0.0
      %915 = vmatpush2.msra.mxu0 0.0
      %916 = vmatprep.subr.mxu0 0.0
      %917 = vmatpush2.msra.mxu0 0.0
      %918 = vmatprep.subr.mxu0 0.0
      %919 = vmatpush2.msra.mxu0 0.0
      %920 = vmatprep.subr.mxu0 0.0
      %921 = vmatpush2.msra.mxu0 0.0
      %922 = vmatprep.subr.mxu0 0.0
      %923 = vmatpush2.msra.mxu0 0.0
      %924 = vmatprep.subr.mxu0 0.0
      %925 = vmatpush2.msra.mxu0 0.0
      %926 = vmatprep.subr.mxu0 0.0
      %927 = vmatpush2.msra.mxu0 0.0
      %928 = vmatprep.subr.mxu0 0.0
      %929 = vmatpush2.msra.mxu0 0.0
      %930 = vmatprep.subr.mxu0 0.0
      %931 = vmatpush2.msra.mxu0 0.0
      %932 = vmatprep.subr.mxu0 0.0
      %933 = vmatpush2.msra.mxu0 0.0
      %934 = vmatprep.subr.mxu0 0.0
      %935 = vmatpush2.msra.mxu0 0.0
      %936 = vmatprep.subr.mxu0 0.0
      %937 = vmatpush2.msra.mxu0 0.0
      %938 = vmatprep.subr.mxu0 0.0
      %939 = vmatpush2.msra.mxu0 0.0
      %940 = vmatprep.subr.mxu0 0.0
      %941 = vmatpush2.msra.mxu0 0.0
      %942 = vmatprep.subr.mxu0 0.0
      %943 = vmatpush2.msra.mxu0 0.0
      %944 = vmatprep.subr.mxu0 0.0
      %945 = vmatpush2.msra.mxu0 0.0
      %946 = vmatprep.mubr.f32.mxu0 0.0
      %v947 = vand.u32 %v780, 4294901760
      %948 = vmatmul.mubr.f32.gmra.mxu0 %v947
      %v949 = vpop.f32.mrf.mxu0
      %v950 = vadd.f32 %v859, %v949
      %v951 = vpop.f32.mrf.mxu0
      %952 = vmatprep.mubr.f32.mxu0 0.0
      %v953 = vand.u32 %v783, 4294901760
      %954 = vmatmul.mubr.f32.gmra.mxu0 %v953
      %v955 = vpop.f32.mrf.mxu0
      %v956 = vadd.f32 %v869, %v955
      %v957 = vpop.f32.mrf.mxu0
      %958 = vdwg.mxu0
      %959 = vmatprep.subr.mxu0 0.0
      %960 = vmatpush1.msra.mxu0 0.0
      %961 = vmatprep.subr.mxu0 0.0
      %962 = vmatpush1.msra.mxu0 0.0
      %963 = vmatprep.subr.mxu0 0.0
      %964 = vmatpush1.msra.mxu0 0.0
      %965 = vmatprep.subr.mxu0 0.0
      %966 = vmatpush1.msra.mxu0 0.0
      %967 = vmatprep.subr.mxu0 0.0
      %968 = vmatpush1.msra.mxu0 0.0
      %969 = vmatprep.subr.mxu0 0.0
      %970 = vmatpush1.msra.mxu0 0.0
      %971 = vmatprep.subr.mxu0 0.0
      %972 = vmatpush1.msra.mxu0 0.0
      %973 = vmatprep.subr.mxu0 0.0
      %974 = vmatpush1.msra.mxu0 0.0
      %975 = vmatprep.subr.mxu0 0.0
      %976 = vmatpush1.msra.mxu0 0.0
      %977 = vmatprep.subr.mxu0 0.0
      %978 = vmatpush1.msra.mxu0 0.0
      %979 = vmatprep.subr.mxu0 0.0
      %980 = vmatpush1.msra.mxu0 0.0
      %981 = vmatprep.subr.mxu0 0.0
      %982 = vmatpush1.msra.mxu0 0.0
      %983 = vmatprep.subr.mxu0 0.0
      %984 = vmatpush1.msra.mxu0 0.0
      %985 = vmatprep.subr.mxu0 0.0
      %986 = vmatpush1.msra.mxu0 0.0
      %987 = vmatprep.subr.mxu0 0.0
      %v988 = vand.u32 %v771, 4294901760
      %v989 = vsub.f32 %v771, %v988
      %990 = vmatpush1.msra.mxu0 %v989
      %991 = vmatprep.subr.mxu0 0.0
      %v992 = vand.u32 %v770, 4294901760
      %v993 = vsub.f32 %v770, %v992
      %994 = vmatpush1.msra.mxu0 %v993
      %995 = vmatprep.subr.mxu0 0.0
      %996 = vmatpush2.msra.mxu0 0.0
      %997 = vmatprep.subr.mxu0 0.0
      %998 = vmatpush2.msra.mxu0 0.0
      %999 = vmatprep.subr.mxu0 0.0
      %1000 = vmatpush2.msra.mxu0 0.0
      %1001 = vmatprep.subr.mxu0 0.0
      %1002 = vmatpush2.msra.mxu0 0.0
      %1003 = vmatprep.subr.mxu0 0.0
      %1004 = vmatpush2.msra.mxu0 0.0
      %1005 = vmatprep.subr.mxu0 0.0
      %1006 = vmatpush2.msra.mxu0 0.0
      %1007 = vmatprep.subr.mxu0 0.0
      %1008 = vmatpush2.msra.mxu0 0.0
      %1009 = vmatprep.subr.mxu0 0.0
      %1010 = vmatpush2.msra.mxu0 0.0
      %1011 = vmatprep.subr.mxu0 0.0
      %1012 = vmatpush2.msra.mxu0 0.0
      %1013 = vmatprep.subr.mxu0 0.0
      %1014 = vmatpush2.msra.mxu0 0.0
      %1015 = vmatprep.subr.mxu0 0.0
      %1016 = vmatpush2.msra.mxu0 0.0
      %1017 = vmatprep.subr.mxu0 0.0
      %1018 = vmatpush2.msra.mxu0 0.0
      %1019 = vmatprep.subr.mxu0 0.0
      %1020 = vmatpush2.msra.mxu0 0.0
      %1021 = vmatprep.subr.mxu0 0.0
      %1022 = vmatpush2.msra.mxu0 0.0
      %1023 = vmatprep.subr.mxu0 0.0
      %1024 = vmatpush2.msra.mxu0 0.0
      %1025 = vmatprep.subr.mxu0 0.0
      %1026 = vmatpush2.msra.mxu0 0.0
      %1027 = vmatprep.mubr.f32.mxu0 0.0
      %v1028 = vand.u32 %v780, 4294901760
      %v1029 = vsub.f32 %v780, %v1028
      %1030 = vmatmul.mubr.f32.gmra.mxu0 %v1029
      %v1031 = vpop.f32.mrf.mxu0
      %v1032 = vadd.f32 %v950, %v1031
      %v1033 = vpop.f32.mrf.mxu0
      %1034 = vmatprep.mubr.f32.mxu0 0.0
      %v1035 = vand.u32 %v783, 4294901760
      %v1036 = vsub.f32 %v783, %v1035
      %1037 = vmatmul.mubr.f32.gmra.mxu0 %v1036
      %v1038 = vpop.f32.mrf.mxu0
      %v1039 = vadd.f32 %v956, %v1038
      %v1040 = vpop.f32.mrf.mxu0
      %1041 = vdwg.mxu0
      %1042 = vmatprep.subr.mxu0 0.0
      %1043 = vmatpush1.msra.mxu0 0.0
      %1044 = vmatprep.subr.mxu0 0.0
      %1045 = vmatpush1.msra.mxu0 0.0
      %1046 = vmatprep.subr.mxu0 0.0
      %1047 = vmatpush1.msra.mxu0 0.0
      %1048 = vmatprep.subr.mxu0 0.0
      %1049 = vmatpush1.msra.mxu0 0.0
      %1050 = vmatprep.subr.mxu0 0.0
      %1051 = vmatpush1.msra.mxu0 0.0
      %1052 = vmatprep.subr.mxu0 0.0
      %1053 = vmatpush1.msra.mxu0 0.0
      %1054 = vmatprep.subr.mxu0 0.0
      %1055 = vmatpush1.msra.mxu0 0.0
      %1056 = vmatprep.subr.mxu0 0.0
      %1057 = vmatpush1.msra.mxu0 0.0
      %1058 = vmatprep.subr.mxu0 0.0
      %1059 = vmatpush1.msra.mxu0 0.0
      %1060 = vmatprep.subr.mxu0 0.0
      %1061 = vmatpush1.msra.mxu0 0.0
      %1062 = vmatprep.subr.mxu0 0.0
      %1063 = vmatpush1.msra.mxu0 0.0
      %1064 = vmatprep.subr.mxu0 0.0
      %1065 = vmatpush1.msra.mxu0 0.0
      %1066 = vmatprep.subr.mxu0 0.0
      %1067 = vmatpush1.msra.mxu0 0.0
      %1068 = vmatprep.subr.mxu0 0.0
      %1069 = vmatpush1.msra.mxu0 0.0
      %1070 = vmatprep.subr.mxu0 0.0
      %v1071 = vand.u32 %v771, 4294901760
      %1072 = vmatpush1.msra.mxu0 %v1071
      %1073 = vmatprep.subr.mxu0 0.0
      %v1074 = vand.u32 %v770, 4294901760
      %1075 = vmatpush1.msra.mxu0 %v1074
      %1076 = vmatprep.subr.mxu0 0.0
      %1077 = vmatpush2.msra.mxu0 0.0
      %1078 = vmatprep.subr.mxu0 0.0
      %1079 = vmatpush2.msra.mxu0 0.0
      %1080 = vmatprep.subr.mxu0 0.0
      %1081 = vmatpush2.msra.mxu0 0.0
      %1082 = vmatprep.subr.mxu0 0.0
      %1083 = vmatpush2.msra.mxu0 0.0
      %1084 = vmatprep.subr.mxu0 0.0
      %1085 = vmatpush2.msra.mxu0 0.0
      %1086 = vmatprep.subr.mxu0 0.0
      %1087 = vmatpush2.msra.mxu0 0.0
      %1088 = vmatprep.subr.mxu0 0.0
      %1089 = vmatpush2.msra.mxu0 0.0
      %1090 = vmatprep.subr.mxu0 0.0
      %1091 = vmatpush2.msra.mxu0 0.0
      %1092 = vmatprep.subr.mxu0 0.0
      %1093 = vmatpush2.msra.mxu0 0.0
      %1094 = vmatprep.subr.mxu0 0.0
      %1095 = vmatpush2.msra.mxu0 0.0
      %1096 = vmatprep.subr.mxu0 0.0
      %1097 = vmatpush2.msra.mxu0 0.0
      %1098 = vmatprep.subr.mxu0 0.0
      %1099 = vmatpush2.msra.mxu0 0.0
      %1100 = vmatprep.subr.mxu0 0.0
      %1101 = vmatpush2.msra.mxu0 0.0
      %1102 = vmatprep.subr.mxu0 0.0
      %1103 = vmatpush2.msra.mxu0 0.0
      %1104 = vmatprep.subr.mxu0 0.0
      %1105 = vmatpush2.msra.mxu0 0.0
      %1106 = vmatprep.subr.mxu0 0.0
      %1107 = vmatpush2.msra.mxu0 0.0
      %1108 = vmatprep.mubr.f32.mxu0 0.0
      %v1109 = vand.u32 %v780, 4294901760
      %v1110 = vsub.f32 %v780, %v1109
      %v1111 = vand.u32 %v1110, 4294901760
      %1112 = vmatmul.mubr.f32.gmra.mxu0 %v1111
      %v1113 = vpop.f32.mrf.mxu0
      %v1114 = vadd.f32 %v1032, %v1113
      %v1115 = vpop.f32.mrf.mxu0
      %1116 = vmatprep.mubr.f32.mxu0 0.0
      %v1117 = vand.u32 %v783, 4294901760
      %v1118 = vsub.f32 %v783, %v1117
      %v1119 = vand.u32 %v1118, 4294901760
      %1120 = vmatmul.mubr.f32.gmra.mxu0 %v1119
      %v1121 = vpop.f32.mrf.mxu0
      %v1122 = vadd.f32 %v1039, %v1121
      %v1123 = vpop.f32.mrf.mxu0
      %1124 = vdwg.mxu0
      %1125 = vmatprep.subr.mxu0 0.0
      %1126 = vmatpush1.msra.mxu0 0.0
      %1127 = vmatprep.subr.mxu0 0.0
      %1128 = vmatpush1.msra.mxu0 0.0
      %1129 = vmatprep.subr.mxu0 0.0
      %1130 = vmatpush1.msra.mxu0 0.0
      %1131 = vmatprep.subr.mxu0 0.0
      %1132 = vmatpush1.msra.mxu0 0.0
      %1133 = vmatprep.subr.mxu0 0.0
      %1134 = vmatpush1.msra.mxu0 0.0
      %1135 = vmatprep.subr.mxu0 0.0
      %1136 = vmatpush1.msra.mxu0 0.0
      %1137 = vmatprep.subr.mxu0 0.0
      %1138 = vmatpush1.msra.mxu0 0.0
      %1139 = vmatprep.subr.mxu0 0.0
      %1140 = vmatpush1.msra.mxu0 0.0
      %1141 = vmatprep.subr.mxu0 0.0
      %1142 = vmatpush1.msra.mxu0 0.0
      %1143 = vmatprep.subr.mxu0 0.0
      %1144 = vmatpush1.msra.mxu0 0.0
      %1145 = vmatprep.subr.mxu0 0.0
      %1146 = vmatpush1.msra.mxu0 0.0
      %1147 = vmatprep.subr.mxu0 0.0
      %1148 = vmatpush1.msra.mxu0 0.0
      %1149 = vmatprep.subr.mxu0 0.0
      %1150 = vmatpush1.msra.mxu0 0.0
      %1151 = vmatprep.subr.mxu0 0.0
      %1152 = vmatpush1.msra.mxu0 0.0
      %1153 = vmatprep.subr.mxu0 0.0
      %v1154 = vand.u32 %v771, 4294901760
      %v1155 = vsub.f32 %v771, %v1154
      %v1156 = vand.u32 %v1155, 4294901760
      %1157 = vmatpush1.msra.mxu0 %v1156
      %1158 = vmatprep.subr.mxu0 0.0
      %v1159 = vand.u32 %v770, 4294901760
      %v1160 = vsub.f32 %v770, %v1159
      %v1161 = vand.u32 %v1160, 4294901760
      %1162 = vmatpush1.msra.mxu0 %v1161
      %1163 = vmatprep.subr.mxu0 0.0
      %1164 = vmatpush2.msra.mxu0 0.0
      %1165 = vmatprep.subr.mxu0 0.0
      %1166 = vmatpush2.msra.mxu0 0.0
      %1167 = vmatprep.subr.mxu0 0.0
      %1168 = vmatpush2.msra.mxu0 0.0
      %1169 = vmatprep.subr.mxu0 0.0
      %1170 = vmatpush2.msra.mxu0 0.0
      %1171 = vmatprep.subr.mxu0 0.0
      %1172 = vmatpush2.msra.mxu0 0.0
      %1173 = vmatprep.subr.mxu0 0.0
      %1174 = vmatpush2.msra.mxu0 0.0
      %1175 = vmatprep.subr.mxu0 0.0
      %1176 = vmatpush2.msra.mxu0 0.0
      %1177 = vmatprep.subr.mxu0 0.0
      %1178 = vmatpush2.msra.mxu0 0.0
      %1179 = vmatprep.subr.mxu0 0.0
      %1180 = vmatpush2.msra.mxu0 0.0
      %1181 = vmatprep.subr.mxu0 0.0
      %1182 = vmatpush2.msra.mxu0 0.0
      %1183 = vmatprep.subr.mxu0 0.0
      %1184 = vmatpush2.msra.mxu0 0.0
      %1185 = vmatprep.subr.mxu0 0.0
      %1186 = vmatpush2.msra.mxu0 0.0
      %1187 = vmatprep.subr.mxu0 0.0
      %1188 = vmatpush2.msra.mxu0 0.0
      %1189 = vmatprep.subr.mxu0 0.0
      %1190 = vmatpush2.msra.mxu0 0.0
      %1191 = vmatprep.subr.mxu0 0.0
      %1192 = vmatpush2.msra.mxu0 0.0
      %1193 = vmatprep.subr.mxu0 0.0
      %1194 = vmatpush2.msra.mxu0 0.0
      %1195 = vmatprep.mubr.f32.mxu0 0.0
      %v1196 = vand.u32 %v780, 4294901760
      %1197 = vmatmul.mubr.f32.gmra.mxu0 %v1196
      %v1198 = vpop.f32.mrf.mxu0
      %v1199 = vadd.f32 %v1114, %v1198
      %v1200 = vpop.f32.mrf.mxu0
      %1201 = vmatprep.mubr.f32.mxu0 0.0
      %v1202 = vand.u32 %v783, 4294901760
      %1203 = vmatmul.mubr.f32.gmra.mxu0 %v1202
      %v1204 = vpop.f32.mrf.mxu0
      %v1205 = vadd.f32 %v1122, %v1204
      %v1206 = vpop.f32.mrf.mxu0
      %1207 = vdwg.mxu0
      %1208 = vmatprep.subr.mxu0 0.0
      %1209 = vmatpush1.msra.mxu0 0.0
      %1210 = vmatprep.subr.mxu0 0.0
      %1211 = vmatpush1.msra.mxu0 0.0
      %1212 = vmatprep.subr.mxu0 0.0
      %1213 = vmatpush1.msra.mxu0 0.0
      %1214 = vmatprep.subr.mxu0 0.0
      %1215 = vmatpush1.msra.mxu0 0.0
      %1216 = vmatprep.subr.mxu0 0.0
      %1217 = vmatpush1.msra.mxu0 0.0
      %1218 = vmatprep.subr.mxu0 0.0
      %1219 = vmatpush1.msra.mxu0 0.0
      %1220 = vmatprep.subr.mxu0 0.0
      %1221 = vmatpush1.msra.mxu0 0.0
      %1222 = vmatprep.subr.mxu0 0.0
      %1223 = vmatpush1.msra.mxu0 0.0
      %1224 = vmatprep.subr.mxu0 0.0
      %1225 = vmatpush1.msra.mxu0 0.0
      %1226 = vmatprep.subr.mxu0 0.0
      %1227 = vmatpush1.msra.mxu0 0.0
      %1228 = vmatprep.subr.mxu0 0.0
      %1229 = vmatpush1.msra.mxu0 0.0
      %1230 = vmatprep.subr.mxu0 0.0
      %1231 = vmatpush1.msra.mxu0 0.0
      %1232 = vmatprep.subr.mxu0 0.0
      %1233 = vmatpush1.msra.mxu0 0.0
      %1234 = vmatprep.subr.mxu0 0.0
      %1235 = vmatpush1.msra.mxu0 0.0
      %1236 = vmatprep.subr.mxu0 0.0
      %v1237 = vand.u32 %v771, 4294901760
      %1238 = vmatpush1.msra.mxu0 %v1237
      %1239 = vmatprep.subr.mxu0 0.0
      %v1240 = vand.u32 %v770, 4294901760
      %1241 = vmatpush1.msra.mxu0 %v1240
      %1242 = vmatprep.subr.mxu0 0.0
      %1243 = vmatpush2.msra.mxu0 0.0
      %1244 = vmatprep.subr.mxu0 0.0
      %1245 = vmatpush2.msra.mxu0 0.0
      %1246 = vmatprep.subr.mxu0 0.0
      %1247 = vmatpush2.msra.mxu0 0.0
      %1248 = vmatprep.subr.mxu0 0.0
      %1249 = vmatpush2.msra.mxu0 0.0
      %1250 = vmatprep.subr.mxu0 0.0
      %1251 = vmatpush2.msra.mxu0 0.0
      %1252 = vmatprep.subr.mxu0 0.0
      %1253 = vmatpush2.msra.mxu0 0.0
      %1254 = vmatprep.subr.mxu0 0.0
      %1255 = vmatpush2.msra.mxu0 0.0
      %1256 = vmatprep.subr.mxu0 0.0
      %1257 = vmatpush2.msra.mxu0 0.0
      %1258 = vmatprep.subr.mxu0 0.0
      %1259 = vmatpush2.msra.mxu0 0.0
      %1260 = vmatprep.subr.mxu0 0.0
      %1261 = vmatpush2.msra.mxu0 0.0
      %1262 = vmatprep.subr.mxu0 0.0
      %1263 = vmatpush2.msra.mxu0 0.0
      %1264 = vmatprep.subr.mxu0 0.0
      %1265 = vmatpush2.msra.mxu0 0.0
      %1266 = vmatprep.subr.mxu0 0.0
      %1267 = vmatpush2.msra.mxu0 0.0
      %1268 = vmatprep.subr.mxu0 0.0
      %1269 = vmatpush2.msra.mxu0 0.0
      %1270 = vmatprep.subr.mxu0 0.0
      %1271 = vmatpush2.msra.mxu0 0.0
      %1272 = vmatprep.subr.mxu0 0.0
      %1273 = vmatpush2.msra.mxu0 0.0
      %1274 = vmatprep.mubr.f32.mxu0 0.0
      %v1275 = vand.u32 %v780, 4294901760
      %1276 = vmatmul.mubr.f32.gmra.mxu0 %v1275
      %v1277 = vpop.f32.mrf.mxu0
      %v1278 = vadd.f32 %v1199, %v1277
      %v1279 = vpop.f32.mrf.mxu0
      %1280 = vmatprep.mubr.f32.mxu0 0.0
      %v1281 = vand.u32 %v783, 4294901760
      %1282 = vmatmul.mubr.f32.gmra.mxu0 %v1281
      %v1283 = vpop.f32.mrf.mxu0
      %v1284 = vadd.f32 %v1205, %v1283
      %v1285 = vpop.f32.mrf.mxu0
      %1286 = vdwg.mxu0
      %v1287 = vmul.f32 %v1278, %v1278
      %v1288 = vmul.f32 %v1284, %v1284
      %v1289 = vsel %vm261, %v1287, 0.0
      %1290 = vadd.xlane.f32.xlu0 %v1289
      %v1291 = vpop.xlane.xlu0 %1290
      %v1292 = vsel %vm261, %v1288, 0.0
      %1293 = vadd.xlane.f32.xlu0 %v1292
      %v1294 = vpop.xlane.xlu0 %1293
      %v1295 = vmax.f32 %v1291, 1e-24
      %v1296 = vmax.f32 %v1294, 1e-24
      %v1297 = vrsqrt.pop %v1295
      %v1298 = vrsqrt.pop %v1296
      %v1299 = vmul.f32 %v1278, %v1297
      %v1300 = vmul.f32 %v1284, %v1298
      %1301 = vst.msk [vmem:[%s255] sm:$0xff] %vm261, %v1299
      %1302 = vst.msk [vmem:[%s255 + $0x8] sm:$0xff] %vm261, %v1300
      %s1303 = smul.u32 2, %s20
      %p1304 = scmp.lt.s32.totalorder %s19, 1
      %s1305 = scalar_select %p1304, %s19, 1
      %p1306 = scmp.lt.s32.totalorder %s1303, 1
      %s1307 = scalar_select %p1306, %s1303, 1
      %s1308 = smul.addr %s1305, 2
      %s1309 = sadd.s32 %s1307, %s1308
      %s1310 = smul.addr %s1309, 8
      %s1311 = scalar_lea.vmem %s4, %s1310
      // Predicated region
      $region37: #{gcn_sortk_pool_encoder.10} parent=35 // pred_check
        %p1312 = pneg %p143
      $region38: #{gcn_sortk_pool_encoder.10} parent=35 // pred_check_branch
        %1314 = sbr.rel (%p1312) target = $region40
      $region39: #{gcn_sortk_pool_encoder.10} parent=35 // pred_region
        %s1315 = smul.u32 2, %s20
      $region40: #{gcn_sortk_pool_encoder.10} parent=35 // pred_fallthru
        _
    $region36: #{gcn_sortk_pool_encoder.10} parent=5 // pred_fallthru
      _
    %p1316 = scmp.le.s32.totalorder 2, %s10
    // Predicated region
    $region41: #{gcn_sortk_pool_encoder.10} parent=5 // pred_check
      %p1317 = pneg %p1316
    $region42: #{gcn_sortk_pool_encoder.10} parent=5 // pred_check_branch
      %1319 = sbr.rel (%p1317) target = $region44
    $region43: #{gcn_sortk_pool_encoder.10} parent=5 // pred_region
      %s1320 = ssub.s32 %s10, 2
      // Predicated region
      $region45: #{gcn_sortk_pool_encoder.10} parent=43 // pred_check
        %p1321 = pneg %p149
      $region46: #{gcn_sortk_pool_encoder.10} parent=43 // pred_check_branch
        %1323 = sbr.rel (%p1321) target = $region48
      $region47: #{gcn_sortk_pool_encoder.10} parent=43 // pred_region
        %s1324 = smul.u32 2, %s22
        %p1325 = scmp.lt.s32.totalorder %s21, 1
        %s1326 = scalar_select %p1325, %s21, 1
        %p1327 = scmp.lt.s32.totalorder %s1324, 1
        %s1328 = scalar_select %p1327, %s1324, 1
        %s1329 = smul.addr %s1326, 2
        %s1330 = sadd.s32 %s1328, %s1329
        %s1331 = smul.addr %s1330, 8
        %s1332 = scalar_lea.vmem %s4, %s1331
      $region48: #{gcn_sortk_pool_encoder.10} parent=43 // pred_fallthru
        _
    $region44: #{gcn_sortk_pool_encoder.10} parent=5 // pred_fallthru
      _
  $region6: #{gcn_sortk_pool_encoder.10} parent=0 // loop_footer
    %s14 = sadd.s32 1, %s10
  $region7: #{gcn_sortk_pool_encoder.10} parent=0 // loop_footer_branch
    %9 = sbr.rel target = $region3
  $region8: #{gcn_sortk_pool_encoder.10} parent=0 // loop_exit
    _

// kernel: gcn_sortk_pool_encoder.8
$region0: #{gcn_sortk_pool_encoder.8}
  #allocation0 [shape = 'u32[]', space=smem, size = 0x4, offset = 0x4, fixed_abs, tag = 'smem constant byte address 0x4 - core index']
  #allocation1 [shape = 'u32[144,128]{1,0:T(1,128)}', space=vmem, size = 0x12000, scoped, tag = 'internal scratch']
  %s0 = inlined_call_operand.vmem [shape: f32[2,16,16], index: 0, kind: input, shape index: {}]
  %s1 = inlined_call_operand.vmem [shape: f32[2,16,16], index: 1, kind: input, shape index: {}]
  %s2 = inlined_call_operand.vmem [shape: f32[16,16], index: 2, kind: input, shape index: {}]
  %s3 = inlined_call_operand.vmem [shape: f32[1,16], index: 3, kind: input, shape index: {}]
  %s4 = inlined_call_operand.vmem [shape: f32[2,16,16], index: 4, kind: output, shape index: {}]
  %s5 = sld [smem:[#allocation0]]
  $region49: #{gcn_sortk_pool_encoder.8} parent=0
    _
  %s7 = ssub.s32 1, %s5
  %s8 = scalar_select 0, %s7, %s5
  loop: start=0, step=1, limit=4
  $region2: #{gcn_sortk_pool_encoder.8} parent=0 // loop_pre_header
    _
  $region3: #{gcn_sortk_pool_encoder.8} parent=0 // loop_header
    %s10 = sphi 0, %s14
    %p11 = scmp.ge.s32.totalorder %s10, 4
    %s17 = sphi 0, %s29
    %s18 = sphi 0, %s25
    %s19 = sphi 0, %s17
    %s20 = sphi 0, %s18
    %s21 = sphi 0, %s19
    %s22 = sphi 0, %s20
    %s34 = sphi 0, %s36
    %s37 = sphi 0, %s34
    %s38 = sphi 0, %s37
    %s54 = sphi 0, %s38
    %s60 = sphi 0, %s62
    %s63 = sphi 0, %s60
    %s64 = sphi 0, %s63
    %s80 = sphi 0, %s64
    %s84 = sphi 0, %s84
    %s86 = sphi 0, %s84
    %s87 = sphi 0, %s86
    %s101 = sphi 0, %s87
    %s105 = sphi 0, %s105
    %s107 = sphi 0, %s105
    %s108 = sphi 0, %s107
    %s122 = sphi 0, %s108
    %s130 = sphi 0, %s132
    %s133 = sphi 0, %s130
    %s134 = sphi 0, %s133
    %s150 = sphi 0, %s134
  $region4: #{gcn_sortk_pool_encoder.8} parent=0 // loop_header_branch
    %13 = sbr.rel (%p11) target = $region8
  $region5: #{gcn_sortk_pool_encoder.8} parent=0 // loop_body
    %s15 = ssub.s32 %s10, 1
    %s16 = ssub.s32 %s10, 2
    %s23 = sadd.s32 1, %s18
    %p24 = scmp.ge.s32.totalorder %s23, 1
    %s25 = scalar_select %p24, 0, %s23
    %s26 = sadd.s32 1, %s17
    %s27 = scalar_select %p24, %s26, %s17
    %p28 = scmp.ge.s32.totalorder %s27, 2
    %s29 = scalar_select %p28, 0, %s27
    %s30 = ssub.s32 %s17, %s29
    %s31 = ssub.s32 %s18, %s25
    %s32 = sor.u32 %s30, %s31
    %p33 = scmp.eq.s32.totalorder %s32, 0
    %s35 = sadd.s32 %s34, 1
    %s36 = scalar_select %p33, %s34, %s35
    %p39 = pneg %p33
    %p40 = scmp.eq.s32.totalorder %s10, 1
    %p41 = por %p39, %p40
    %p42 = scmp.ne.s32.totalorder %s34, %s37
    %p43 = scmp.eq.s32.totalorder %s10, 0
    %p44 = por %p42, %p43
    %p45 = scmp.ne.s32.totalorder %s34, %s37
    %p46 = scmp.eq.s32.totalorder %s15, 1
    %p47 = por %p45, %p46
    %p48 = scmp.ne.s32.totalorder %s37, %s38
    %p49 = scmp.eq.s32.totalorder %s15, 0
    %p50 = por %p48, %p49
    %p51 = scmp.ne.s32.totalorder %s37, %s38
    %p52 = scmp.eq.s32.totalorder %s16, 1
    %p53 = por %p51, %p52
    %p55 = scmp.ne.s32.totalorder %s38, %s54
    %p56 = scmp.eq.s32.totalorder %s16, 0
    %p57 = por %p55, %p56
    %s58 = ssub.s32 %s17, %s29
    %p59 = scmp.eq.s32.totalorder %s58, 0
    %s61 = sadd.s32 %s60, 1
    %s62 = scalar_select %p59, %s60, %s61
    %p65 = pneg %p59
    %p66 = scmp.eq.s32.totalorder %s10, 1
    %p67 = por %p65, %p66
    %p68 = scmp.ne.s32.totalorder %s60, %s63
    %p69 = scmp.eq.s32.totalorder %s10, 0
    %p70 = por %p68, %p69
    %p71 = scmp.ne.s32.totalorder %s60, %s63
    %p72 = scmp.eq.s32.totalorder %s15, 1
    %p73 = por %p71, %p72
    %p74 = scmp.ne.s32.totalorder %s63, %s64
    %p75 = scmp.eq.s32.totalorder %s15, 0
    %p76 = por %p74, %p75
    %p77 = scmp.ne.s32.totalorder %s63, %s64
    %p78 = scmp.eq.s32.totalorder %s16, 1
    %p79 = por %p77, %p78
    %p81 = scmp.ne.s32.totalorder %s64, %s80
    %p82 = scmp.eq.s32.totalorder %s16, 0
    %p83 = por %p81, %p82
    %s85 = sadd.s32 %s84, 1
    %p88 = scmp.eq.s32.totalorder %s10, 1
    %p89 = scmp.ne.s32.totalorder %s84, %s86
    %p90 = scmp.eq.s32.totalorder %s10, 0
    %p91 = por %p89, %p90
    %p92 = scmp.ne.s32.totalorder %s84, %s86
    %p93 = scmp.eq.s32.totalorder %s15, 1
    %p94 = por %p92, %p93
    %p95 = scmp.ne.s32.totalorder %s86, %s87
    %p96 = scmp.eq.s32.totalorder %s15, 0
    %p97 = por %p95, %p96
    %p98 = scmp.ne.s32.totalorder %s86, %s87
    %p99 = scmp.eq.s32.totalorder %s16, 1
    %p100 = por %p98, %p99
    %p102 = scmp.ne.s32.totalorder %s87, %s101
    %p103 = scmp.eq.s32.totalorder %s16, 0
    %p104 = por %p102, %p103
    %s106 = sadd.s32 %s105, 1
    %p109 = scmp.eq.s32.totalorder %s10, 1
    %p110 = scmp.ne.s32.totalorder %s105, %s107
    %p111 = scmp.eq.s32.totalorder %s10, 0
    %p112 = por %p110, %p111
    %p113 = scmp.ne.s32.totalorder %s105, %s107
    %p114 = scmp.eq.s32.totalorder %s15, 1
    %p115 = por %p113, %p114
    %p116 = scmp.ne.s32.totalorder %s107, %s108
    %p117 = scmp.eq.s32.totalorder %s15, 0
    %p118 = por %p116, %p117
    %p119 = scmp.ne.s32.totalorder %s107, %s108
    %p120 = scmp.eq.s32.totalorder %s16, 1
    %p121 = por %p119, %p120
    %p123 = scmp.ne.s32.totalorder %s108, %s122
    %p124 = scmp.eq.s32.totalorder %s16, 0
    %p125 = por %p123, %p124
    %s126 = ssub.s32 %s17, %s29
    %s127 = ssub.s32 %s18, %s25
    %s128 = sor.u32 %s126, %s127
    %p129 = scmp.eq.s32.totalorder %s128, 0
    %s131 = sadd.s32 %s130, 1
    %s132 = scalar_select %p129, %s130, %s131
    %p135 = pneg %p129
    %p136 = scmp.eq.s32.totalorder %s10, 1
    %p137 = por %p135, %p136
    %p138 = scmp.ne.s32.totalorder %s130, %s133
    %p139 = scmp.eq.s32.totalorder %s10, 0
    %p140 = por %p138, %p139
    %p141 = scmp.ne.s32.totalorder %s130, %s133
    %p142 = scmp.eq.s32.totalorder %s15, 1
    %p143 = por %p141, %p142
    %p144 = scmp.ne.s32.totalorder %s133, %s134
    %p145 = scmp.eq.s32.totalorder %s15, 0
    %p146 = por %p144, %p145
    %p147 = scmp.ne.s32.totalorder %s133, %s134
    %p148 = scmp.eq.s32.totalorder %s16, 1
    %p149 = por %p147, %p148
    %p151 = scmp.ne.s32.totalorder %s134, %s150
    %p152 = scmp.eq.s32.totalorder %s16, 0
    %p153 = por %p151, %p152
    %p154 = scmp.le.s32.totalorder 1, %s10
    %p155 = scmp.lt.s32.totalorder %s10, 3
    %p156 = pnand %p154, %p155
    %p157 = pneg %p156
    // Predicated region
    $region9: #{gcn_sortk_pool_encoder.8} parent=5 // pred_check
      _
    $region10: #{gcn_sortk_pool_encoder.8} parent=5 // pred_check_branch
      %159 = sbr.rel (%p156) target = $region12
    $region11: #{gcn_sortk_pool_encoder.8} parent=5 // pred_region
      %s160 = ssub.s32 %s10, 1
      // Predicated region
      $region13: #{gcn_sortk_pool_encoder.8} parent=11 // pred_check
        %p161 = pneg %p97
      $region14: #{gcn_sortk_pool_encoder.8} parent=11 // pred_check_branch
        %163 = sbr.rel (%p161) target = $region16
      $region15: #{gcn_sortk_pool_encoder.8} parent=11 // pred_region
        _
      $region16: #{gcn_sortk_pool_encoder.8} parent=11 // pred_fallthru
        _
      // Predicated region
      $region17: #{gcn_sortk_pool_encoder.8} parent=11 // pred_check
        %p164 = pneg %p118
      $region18: #{gcn_sortk_pool_encoder.8} parent=11 // pred_check_branch
        %166 = sbr.rel (%p164) target = $region20
      $region19: #{gcn_sortk_pool_encoder.8} parent=11 // pred_region
        _
      $region20: #{gcn_sortk_pool_encoder.8} parent=11 // pred_fallthru
        _
    $region12: #{gcn_sortk_pool_encoder.8} parent=5 // pred_fallthru
      _
    %p167 = scmp.lt.s32.totalorder %s10, 2
    // Predicated region
    $region21: #{gcn_sortk_pool_encoder.8} parent=5 // pred_check
      %p168 = pneg %p167
    $region22: #{gcn_sortk_pool_encoder.8} parent=5 // pred_check_branch
      %170 = sbr.rel (%p168) target = $region24
    $region23: #{gcn_sortk_pool_encoder.8} parent=5 // pred_region
      // Predicated region
      $region25: #{gcn_sortk_pool_encoder.8} parent=23 // pred_check
        %p171 = pneg %p44
      $region26: #{gcn_sortk_pool_encoder.8} parent=23 // pred_check_branch
        %173 = sbr.rel (%p171) target = $region28
      $region27: #{gcn_sortk_pool_encoder.8} parent=23 // pred_region
        %s174 = smul.u32 2, %s18
        %p175 = scmp.lt.s32.totalorder %s17, 1
        %s176 = scalar_select %p175, %s17, 1
        %p177 = scmp.lt.s32.totalorder %s174, 1
        %s178 = scalar_select %p177, %s174, 1
        %s179 = smul.addr %s176, 2
        %s180 = sadd.s32 %s178, %s179
        %s181 = smul.addr %s180, 8
        %s182 = scalar_lea.vmem %s0, %s181
        %s183 = smul.u32 2, %s18
      $region28: #{gcn_sortk_pool_encoder.8} parent=23 // pred_fallthru
        _
      // Predicated region
      $region29: #{gcn_sortk_pool_encoder.8} parent=23 // pred_check
        %p184 = pneg %p70
      $region30: #{gcn_sortk_pool_encoder.8} parent=23 // pred_check_branch
        %186 = sbr.rel (%p184) target = $region32
      $region31: #{gcn_sortk_pool_encoder.8} parent=23 // pred_region
        %p187 = scmp.lt.s32.totalorder %s17, 1
        %s188 = scalar_select %p187, %s17, 1
        %s189 = smul.addr %s188, 2
        %s190 = smul.addr %s189, 8
        %s191 = scalar_lea.vmem %s1, %s190
      $region32: #{gcn_sortk_pool_encoder.8} parent=23 // pred_fallthru
        _
    $region24: #{gcn_sortk_pool_encoder.8} parent=5 // pred_fallthru
      _
    %p192 = scmp.le.s32.totalorder 1, %s10
    %p193 = scmp.lt.s32.totalorder %s10, 3
    %p194 = pnand %p192, %p193
    %p195 = pneg %p194
    // Predicated region
    $region33: #{gcn_sortk_pool_encoder.8} parent=5 // pred_check
      _
    $region34: #{gcn_sortk_pool_encoder.8} parent=5 // pred_check_branch
      %197 = sbr.rel (%p194) target = $region36
    $region35: #{gcn_sortk_pool_encoder.8} parent=5 // pred_region
      %s198 = ssub.s32 %s10, 1
      %s199 = smul.u32 2, %s20
      %p200 = scmp.lt.s32.totalorder %s19, 1
      %s201 = scalar_select %p200, %s19, 1
      %p202 = scmp.lt.s32.totalorder %s199, 1
      %s203 = scalar_select %p202, %s199, 1
      %s204 = smul.addr %s201, 2
      %s205 = sadd.s32 %s203, %s204
      %s206 = smul.addr %s205, 8
      %s207 = scalar_lea.vmem %s0, %s206
      %p208 = pneg %p50
      %p209 = pneg %p47
      %p210 = scmp.lt.s32.totalorder %s19, 1
      %s211 = scalar_select %p210, %s19, 1
      %s212 = smul.addr %s211, 2
      %s213 = smul.addr %s212, 8
      %s214 = scalar_lea.vmem %s1, %s213
      %p215 = pneg %p76
      %p216 = pneg %p73
      %p217 = pneg %p97
      %p218 = pneg %p94
      %p219 = pneg %p118
      %p220 = pneg %p115
      %p221 = pneg %p146
      %p222 = pneg %p143
      %s223 = smul.u32 2, %s20
      %p224 = scmp.lt.s32.totalorder %s19, 1
      %s225 = scalar_select %p224, %s19, 1
      %p226 = scmp.lt.s32.totalorder %s223, 1
      %s227 = scalar_select %p226, %s223, 1
      %s228 = smul.addr %s225, 2
      %s229 = sadd.s32 %s227, %s228
      %s230 = smul.addr %s229, 8
      %s231 = scalar_lea.vmem %s4, %s230
      %s232 = smul.u32 2, %s20
      %p233 = scmp.lt.s32.totalorder %s19, 1
      %s234 = scalar_select %p233, %s19, 1
      %p235 = scmp.lt.s32.totalorder %s232, 1
      %s236 = scalar_select %p235, %s232, 1
      %s237 = smul.addr %s234, 2
      %s238 = sadd.s32 %s236, %s237
      %s239 = smul.addr %s238, 8
      %s240 = scalar_lea.vmem %s0, %s239
      %s241 = smul.u32 2, %s20
      %p242 = scmp.lt.s32.totalorder %s19, 1
      %s243 = scalar_select %p242, %s19, 1
      %s244 = smul.addr %s243, 2
      %s245 = smul.addr %s244, 8
      %s246 = scalar_lea.vmem %s1, %s245
      %s247 = smul.u32 2, %s20
      %p248 = scmp.lt.s32.totalorder %s19, 1
      %s249 = scalar_select %p248, %s19, 1
      %p250 = scmp.lt.s32.totalorder %s247, 1
      %s251 = scalar_select %p250, %s247, 1
      %s252 = smul.addr %s249, 2
      %s253 = sadd.s32 %s251, %s252
      %s254 = smul.addr %s253, 8
      %s255 = scalar_lea.vmem %s4, %s254
      %s256 = smul.u32 2, %s20
      %v257 = vld [vmem:[%s240] sm:$0xff]
      %v258 = vld [vmem:[%s240 + $0x8] sm:$0xff]
      %v259 = vld [vmem:[%s246] sm:$0xff]
      %v260 = vld [vmem:[%s246 + $0x8] sm:$0xff]
      %vm261 = vcmask 130048
      %v263 = vsel %vm261, %v257, 0
      %v266 = vsel %vm261, %v258, 0
      %268 = vmatprep.subr.mxu0 0.0
      %269 = vmatpush1.msra.mxu0 0.0
      %270 = vmatprep.subr.mxu0 0.0
      %271 = vmatpush1.msra.mxu0 0.0
      %272 = vmatprep.subr.mxu0 0.0
      %273 = vmatpush1.msra.mxu0 0.0
      %274 = vmatprep.subr.mxu0 0.0
      %275 = vmatpush1.msra.mxu0 0.0
      %276 = vmatprep.subr.mxu0 0.0
      %277 = vmatpush1.msra.mxu0 0.0
      %278 = vmatprep.subr.mxu0 0.0
      %279 = vmatpush1.msra.mxu0 0.0
      %280 = vmatprep.subr.mxu0 0.0
      %281 = vmatpush1.msra.mxu0 0.0
      %282 = vmatprep.subr.mxu0 0.0
      %283 = vmatpush1.msra.mxu0 0.0
      %284 = vmatprep.subr.mxu0 0.0
      %285 = vmatpush1.msra.mxu0 0.0
      %286 = vmatprep.subr.mxu0 0.0
      %287 = vmatpush1.msra.mxu0 0.0
      %288 = vmatprep.subr.mxu0 0.0
      %289 = vmatpush1.msra.mxu0 0.0
      %290 = vmatprep.subr.mxu0 0.0
      %291 = vmatpush1.msra.mxu0 0.0
      %292 = vmatprep.subr.mxu0 0.0
      %293 = vmatpush1.msra.mxu0 0.0
      %294 = vmatprep.subr.mxu0 0.0
      %295 = vmatpush1.msra.mxu0 0.0
      %296 = vmatprep.subr.mxu0 0.0
      %v297 = vand.u32 %v260, 4294901760
      %298 = vmatpush1.msra.mxu0 %v297
      %299 = vmatprep.subr.mxu0 0.0
      %v300 = vand.u32 %v259, 4294901760
      %301 = vmatpush1.msra.mxu0 %v300
      %302 = vmatprep.subr.mxu0 0.0
      %303 = vmatpush2.msra.mxu0 0.0
      %304 = vmatprep.subr.mxu0 0.0
      %305 = vmatpush2.msra.mxu0 0.0
      %306 = vmatprep.subr.mxu0 0.0
      %307 = vmatpush2.msra.mxu0 0.0
      %308 = vmatprep.subr.mxu0 0.0
      %309 = vmatpush2.msra.mxu0 0.0
      %310 = vmatprep.subr.mxu0 0.0
      %311 = vmatpush2.msra.mxu0 0.0
      %312 = vmatprep.subr.mxu0 0.0
      %313 = vmatpush2.msra.mxu0 0.0
      %314 = vmatprep.subr.mxu0 0.0
      %315 = vmatpush2.msra.mxu0 0.0
      %316 = vmatprep.subr.mxu0 0.0
      %317 = vmatpush2.msra.mxu0 0.0
      %318 = vmatprep.subr.mxu0 0.0
      %319 = vmatpush2.msra.mxu0 0.0
      %320 = vmatprep.subr.mxu0 0.0
      %321 = vmatpush2.msra.mxu0 0.0
      %322 = vmatprep.subr.mxu0 0.0
      %323 = vmatpush2.msra.mxu0 0.0
      %324 = vmatprep.subr.mxu0 0.0
      %325 = vmatpush2.msra.mxu0 0.0
      %326 = vmatprep.subr.mxu0 0.0
      %327 = vmatpush2.msra.mxu0 0.0
      %328 = vmatprep.subr.mxu0 0.0
      %329 = vmatpush2.msra.mxu0 0.0
      %330 = vmatprep.subr.mxu0 0.0
      %331 = vmatpush2.msra.mxu0 0.0
      %332 = vmatprep.subr.mxu0 0.0
      %333 = vmatpush2.msra.mxu0 0.0
      %334 = vmatprep.mubr.f32.mxu0 0.0
      %v335 = vand.u32 %v263, 4294901760
      %v336 = vsub.f32 %v263, %v335
      %v337 = vand.u32 %v336, 4294901760
      %v338 = vsub.f32 %v336, %v337
      %v339 = vand.u32 %v338, 4294901760
      %340 = vmatmul.mubr.f32.gmra.mxu0 %v339
      %v341 = vpop.f32.mrf.mxu0
      %v342 = vadd.f32 0.0, %v341
      %v343 = vpop.f32.mrf.mxu0
      %344 = vmatprep.mubr.f32.mxu0 0.0
      %v345 = vand.u32 %v266, 4294901760
      %v346 = vsub.f32 %v266, %v345
      %v347 = vand.u32 %v346, 4294901760
      %v348 = vsub.f32 %v346, %v347
      %v349 = vand.u32 %v348, 4294901760
      %350 = vmatmul.mubr.f32.gmra.mxu0 %v349
      %v351 = vpop.f32.mrf.mxu0
      %v352 = vadd.f32 0.0, %v351
      %v353 = vpop.f32.mrf.mxu0
      %354 = vdwg.mxu0
      %355 = vmatprep.subr.mxu0 0.0
      %356 = vmatpush1.msra.mxu0 0.0
      %357 = vmatprep.subr.mxu0 0.0
      %358 = vmatpush1.msra.mxu0 0.0
      %359 = vmatprep.subr.mxu0 0.0
      %360 = vmatpush1.msra.mxu0 0.0
      %361 = vmatprep.subr.mxu0 0.0
      %362 = vmatpush1.msra.mxu0 0.0
      %363 = vmatprep.subr.mxu0 0.0
      %364 = vmatpush1.msra.mxu0 0.0
      %365 = vmatprep.subr.mxu0 0.0
      %366 = vmatpush1.msra.mxu0 0.0
      %367 = vmatprep.subr.mxu0 0.0
      %368 = vmatpush1.msra.mxu0 0.0
      %369 = vmatprep.subr.mxu0 0.0
      %370 = vmatpush1.msra.mxu0 0.0
      %371 = vmatprep.subr.mxu0 0.0
      %372 = vmatpush1.msra.mxu0 0.0
      %373 = vmatprep.subr.mxu0 0.0
      %374 = vmatpush1.msra.mxu0 0.0
      %375 = vmatprep.subr.mxu0 0.0
      %376 = vmatpush1.msra.mxu0 0.0
      %377 = vmatprep.subr.mxu0 0.0
      %378 = vmatpush1.msra.mxu0 0.0
      %379 = vmatprep.subr.mxu0 0.0
      %380 = vmatpush1.msra.mxu0 0.0
      %381 = vmatprep.subr.mxu0 0.0
      %382 = vmatpush1.msra.mxu0 0.0
      %383 = vmatprep.subr.mxu0 0.0
      %v384 = vand.u32 %v260, 4294901760
      %v385 = vsub.f32 %v260, %v384
      %v386 = vand.u32 %v385, 4294901760
      %v387 = vsub.f32 %v385, %v386
      %v388 = vand.u32 %v387, 4294901760
      %389 = vmatpush1.msra.mxu0 %v388
      %390 = vmatprep.subr.mxu0 0.0
      %v391 = vand.u32 %v259, 4294901760
      %v392 = vsub.f32 %v259, %v391
      %v393 = vand.u32 %v392, 4294901760
      %v394 = vsub.f32 %v392, %v393
      %v395 = vand.u32 %v394, 4294901760
      %396 = vmatpush1.msra.mxu0 %v395
      %397 = vmatprep.subr.mxu0 0.0
      %398 = vmatpush2.msra.mxu0 0.0
      %399 = vmatprep.subr.mxu0 0.0
      %400 = vmatpush2.msra.mxu0 0.0
      %401 = vmatprep.subr.mxu0 0.0
      %402 = vmatpush2.msra.mxu0 0.0
      %403 = vmatprep.subr.mxu0 0.0
      %404 = vmatpush2.msra.mxu0 0.0
      %405 = vmatprep.subr.mxu0 0.0
      %406 = vmatpush2.msra.mxu0 0.0
      %407 = vmatprep.subr.mxu0 0.0
      %408 = vmatpush2.msra.mxu0 0.0
      %409 = vmatprep.subr.mxu0 0.0
      %410 = vmatpush2.msra.mxu0 0.0
      %411 = vmatprep.subr.mxu0 0.0
      %412 = vmatpush2.msra.mxu0 0.0
      %413 = vmatprep.subr.mxu0 0.0
      %414 = vmatpush2.msra.mxu0 0.0
      %415 = vmatprep.subr.mxu0 0.0
      %416 = vmatpush2.msra.mxu0 0.0
      %417 = vmatprep.subr.mxu0 0.0
      %418 = vmatpush2.msra.mxu0 0.0
      %419 = vmatprep.subr.mxu0 0.0
      %420 = vmatpush2.msra.mxu0 0.0
      %421 = vmatprep.subr.mxu0 0.0
      %422 = vmatpush2.msra.mxu0 0.0
      %423 = vmatprep.subr.mxu0 0.0
      %424 = vmatpush2.msra.mxu0 0.0
      %425 = vmatprep.subr.mxu0 0.0
      %426 = vmatpush2.msra.mxu0 0.0
      %427 = vmatprep.subr.mxu0 0.0
      %428 = vmatpush2.msra.mxu0 0.0
      %429 = vmatprep.mubr.f32.mxu0 0.0
      %v430 = vand.u32 %v263, 4294901760
      %431 = vmatmul.mubr.f32.gmra.mxu0 %v430
      %v432 = vpop.f32.mrf.mxu0
      %v433 = vadd.f32 %v342, %v432
      %v434 = vpop.f32.mrf.mxu0
      %435 = vmatprep.mubr.f32.mxu0 0.0
      %v436 = vand.u32 %v266, 4294901760
      %437 = vmatmul.mubr.f32.gmra.mxu0 %v436
      %v438 = vpop.f32.mrf.mxu0
      %v439 = vadd.f32 %v352, %v438
      %v440 = vpop.f32.mrf.mxu0
      %441 = vdwg.mxu0
      %442 = vmatprep.subr.mxu0 0.0
      %443 = vmatpush1.msra.mxu0 0.0
      %444 = vmatprep.subr.mxu0 0.0
      %445 = vmatpush1.msra.mxu0 0.0
      %446 = vmatprep.subr.mxu0 0.0
      %447 = vmatpush1.msra.mxu0 0.0
      %448 = vmatprep.subr.mxu0 0.0
      %449 = vmatpush1.msra.mxu0 0.0
      %450 = vmatprep.subr.mxu0 0.0
      %451 = vmatpush1.msra.mxu0 0.0
      %452 = vmatprep.subr.mxu0 0.0
      %453 = vmatpush1.msra.mxu0 0.0
      %454 = vmatprep.subr.mxu0 0.0
      %455 = vmatpush1.msra.mxu0 0.0
      %456 = vmatprep.subr.mxu0 0.0
      %457 = vmatpush1.msra.mxu0 0.0
      %458 = vmatprep.subr.mxu0 0.0
      %459 = vmatpush1.msra.mxu0 0.0
      %460 = vmatprep.subr.mxu0 0.0
      %461 = vmatpush1.msra.mxu0 0.0
      %462 = vmatprep.subr.mxu0 0.0
      %463 = vmatpush1.msra.mxu0 0.0
      %464 = vmatprep.subr.mxu0 0.0
      %465 = vmatpush1.msra.mxu0 0.0
      %466 = vmatprep.subr.mxu0 0.0
      %467 = vmatpush1.msra.mxu0 0.0
      %468 = vmatprep.subr.mxu0 0.0
      %469 = vmatpush1.msra.mxu0 0.0
      %470 = vmatprep.subr.mxu0 0.0
      %v471 = vand.u32 %v260, 4294901760
      %v472 = vsub.f32 %v260, %v471
      %473 = vmatpush1.msra.mxu0 %v472
      %474 = vmatprep.subr.mxu0 0.0
      %v475 = vand.u32 %v259, 4294901760
      %v476 = vsub.f32 %v259, %v475
      %477 = vmatpush1.msra.mxu0 %v476
      %478 = vmatprep.subr.mxu0 0.0
      %479 = vmatpush2.msra.mxu0 0.0
      %480 = vmatprep.subr.mxu0 0.0
      %481 = vmatpush2.msra.mxu0 0.0
      %482 = vmatprep.subr.mxu0 0.0
      %483 = vmatpush2.msra.mxu0 0.0
      %484 = vmatprep.subr.mxu0 0.0
      %485 = vmatpush2.msra.mxu0 0.0
      %486 = vmatprep.subr.mxu0 0.0
      %487 = vmatpush2.msra.mxu0 0.0
      %488 = vmatprep.subr.mxu0 0.0
      %489 = vmatpush2.msra.mxu0 0.0
      %490 = vmatprep.subr.mxu0 0.0
      %491 = vmatpush2.msra.mxu0 0.0
      %492 = vmatprep.subr.mxu0 0.0
      %493 = vmatpush2.msra.mxu0 0.0
      %494 = vmatprep.subr.mxu0 0.0
      %495 = vmatpush2.msra.mxu0 0.0
      %496 = vmatprep.subr.mxu0 0.0
      %497 = vmatpush2.msra.mxu0 0.0
      %498 = vmatprep.subr.mxu0 0.0
      %499 = vmatpush2.msra.mxu0 0.0
      %500 = vmatprep.subr.mxu0 0.0
      %501 = vmatpush2.msra.mxu0 0.0
      %502 = vmatprep.subr.mxu0 0.0
      %503 = vmatpush2.msra.mxu0 0.0
      %504 = vmatprep.subr.mxu0 0.0
      %505 = vmatpush2.msra.mxu0 0.0
      %506 = vmatprep.subr.mxu0 0.0
      %507 = vmatpush2.msra.mxu0 0.0
      %508 = vmatprep.subr.mxu0 0.0
      %509 = vmatpush2.msra.mxu0 0.0
      %510 = vmatprep.mubr.f32.mxu0 0.0
      %v511 = vand.u32 %v263, 4294901760
      %v512 = vsub.f32 %v263, %v511
      %513 = vmatmul.mubr.f32.gmra.mxu0 %v512
      %v514 = vpop.f32.mrf.mxu0
      %v515 = vadd.f32 %v433, %v514
      %v516 = vpop.f32.mrf.mxu0
      %517 = vmatprep.mubr.f32.mxu0 0.0
      %v518 = vand.u32 %v266, 4294901760
      %v519 = vsub.f32 %v266, %v518
      %520 = vmatmul.mubr.f32.gmra.mxu0 %v519
      %v521 = vpop.f32.mrf.mxu0
      %v522 = vadd.f32 %v439, %v521
      %v523 = vpop.f32.mrf.mxu0
      %524 = vdwg.mxu0
      %525 = vmatprep.subr.mxu0 0.0
      %526 = vmatpush1.msra.mxu0 0.0
      %527 = vmatprep.subr.mxu0 0.0
      %528 = vmatpush1.msra.mxu0 0.0
      %529 = vmatprep.subr.mxu0 0.0
      %530 = vmatpush1.msra.mxu0 0.0
      %531 = vmatprep.subr.mxu0 0.0
      %532 = vmatpush1.msra.mxu0 0.0
      %533 = vmatprep.subr.mxu0 0.0
      %534 = vmatpush1.msra.mxu0 0.0
      %535 = vmatprep.subr.mxu0 0.0
      %536 = vmatpush1.msra.mxu0 0.0
      %537 = vmatprep.subr.mxu0 0.0
      %538 = vmatpush1.msra.mxu0 0.0
      %539 = vmatprep.subr.mxu0 0.0
      %540 = vmatpush1.msra.mxu0 0.0
      %541 = vmatprep.subr.mxu0 0.0
      %542 = vmatpush1.msra.mxu0 0.0
      %543 = vmatprep.subr.mxu0 0.0
      %544 = vmatpush1.msra.mxu0 0.0
      %545 = vmatprep.subr.mxu0 0.0
      %546 = vmatpush1.msra.mxu0 0.0
      %547 = vmatprep.subr.mxu0 0.0
      %548 = vmatpush1.msra.mxu0 0.0
      %549 = vmatprep.subr.mxu0 0.0
      %550 = vmatpush1.msra.mxu0 0.0
      %551 = vmatprep.subr.mxu0 0.0
      %552 = vmatpush1.msra.mxu0 0.0
      %553 = vmatprep.subr.mxu0 0.0
      %v554 = vand.u32 %v260, 4294901760
      %555 = vmatpush1.msra.mxu0 %v554
      %556 = vmatprep.subr.mxu0 0.0
      %v557 = vand.u32 %v259, 4294901760
      %558 = vmatpush1.msra.mxu0 %v557
      %559 = vmatprep.subr.mxu0 0.0
      %560 = vmatpush2.msra.mxu0 0.0
      %561 = vmatprep.subr.mxu0 0.0
      %562 = vmatpush2.msra.mxu0 0.0
      %563 = vmatprep.subr.mxu0 0.0
      %564 = vmatpush2.msra.mxu0 0.0
      %565 = vmatprep.subr.mxu0 0.0
      %566 = vmatpush2.msra.mxu0 0.0
      %567 = vmatprep.subr.mxu0 0.0
      %568 = vmatpush2.msra.mxu0 0.0
      %569 = vmatprep.subr.mxu0 0.0
      %570 = vmatpush2.msra.mxu0 0.0
      %571 = vmatprep.subr.mxu0 0.0
      %572 = vmatpush2.msra.mxu0 0.0
      %573 = vmatprep.subr.mxu0 0.0
      %574 = vmatpush2.msra.mxu0 0.0
      %575 = vmatprep.subr.mxu0 0.0
      %576 = vmatpush2.msra.mxu0 0.0
      %577 = vmatprep.subr.mxu0 0.0
      %578 = vmatpush2.msra.mxu0 0.0
      %579 = vmatprep.subr.mxu0 0.0
      %580 = vmatpush2.msra.mxu0 0.0
      %581 = vmatprep.subr.mxu0 0.0
      %582 = vmatpush2.msra.mxu0 0.0
      %583 = vmatprep.subr.mxu0 0.0
      %584 = vmatpush2.msra.mxu0 0.0
      %585 = vmatprep.subr.mxu0 0.0
      %586 = vmatpush2.msra.mxu0 0.0
      %587 = vmatprep.subr.mxu0 0.0
      %588 = vmatpush2.msra.mxu0 0.0
      %589 = vmatprep.subr.mxu0 0.0
      %590 = vmatpush2.msra.mxu0 0.0
      %591 = vmatprep.mubr.f32.mxu0 0.0
      %v592 = vand.u32 %v263, 4294901760
      %v593 = vsub.f32 %v263, %v592
      %v594 = vand.u32 %v593, 4294901760
      %595 = vmatmul.mubr.f32.gmra.mxu0 %v594
      %v596 = vpop.f32.mrf.mxu0
      %v597 = vadd.f32 %v515, %v596
      %v598 = vpop.f32.mrf.mxu0
      %599 = vmatprep.mubr.f32.mxu0 0.0
      %v600 = vand.u32 %v266, 4294901760
      %v601 = vsub.f32 %v266, %v600
      %v602 = vand.u32 %v601, 4294901760
      %603 = vmatmul.mubr.f32.gmra.mxu0 %v602
      %v604 = vpop.f32.mrf.mxu0
      %v605 = vadd.f32 %v522, %v604
      %v606 = vpop.f32.mrf.mxu0
      %607 = vdwg.mxu0
      %608 = vmatprep.subr.mxu0 0.0
      %609 = vmatpush1.msra.mxu0 0.0
      %610 = vmatprep.subr.mxu0 0.0
      %611 = vmatpush1.msra.mxu0 0.0
      %612 = vmatprep.subr.mxu0 0.0
      %613 = vmatpush1.msra.mxu0 0.0
      %614 = vmatprep.subr.mxu0 0.0
      %615 = vmatpush1.msra.mxu0 0.0
      %616 = vmatprep.subr.mxu0 0.0
      %617 = vmatpush1.msra.mxu0 0.0
      %618 = vmatprep.subr.mxu0 0.0
      %619 = vmatpush1.msra.mxu0 0.0
      %620 = vmatprep.subr.mxu0 0.0
      %621 = vmatpush1.msra.mxu0 0.0
      %622 = vmatprep.subr.mxu0 0.0
      %623 = vmatpush1.msra.mxu0 0.0
      %624 = vmatprep.subr.mxu0 0.0
      %625 = vmatpush1.msra.mxu0 0.0
      %626 = vmatprep.subr.mxu0 0.0
      %627 = vmatpush1.msra.mxu0 0.0
      %628 = vmatprep.subr.mxu0 0.0
      %629 = vmatpush1.msra.mxu0 0.0
      %630 = vmatprep.subr.mxu0 0.0
      %631 = vmatpush1.msra.mxu0 0.0
      %632 = vmatprep.subr.mxu0 0.0
      %633 = vmatpush1.msra.mxu0 0.0
      %634 = vmatprep.subr.mxu0 0.0
      %635 = vmatpush1.msra.mxu0 0.0
      %636 = vmatprep.subr.mxu0 0.0
      %v637 = vand.u32 %v260, 4294901760
      %v638 = vsub.f32 %v260, %v637
      %v639 = vand.u32 %v638, 4294901760
      %640 = vmatpush1.msra.mxu0 %v639
      %641 = vmatprep.subr.mxu0 0.0
      %v642 = vand.u32 %v259, 4294901760
      %v643 = vsub.f32 %v259, %v642
      %v644 = vand.u32 %v643, 4294901760
      %645 = vmatpush1.msra.mxu0 %v644
      %646 = vmatprep.subr.mxu0 0.0
      %647 = vmatpush2.msra.mxu0 0.0
      %648 = vmatprep.subr.mxu0 0.0
      %649 = vmatpush2.msra.mxu0 0.0
      %650 = vmatprep.subr.mxu0 0.0
      %651 = vmatpush2.msra.mxu0 0.0
      %652 = vmatprep.subr.mxu0 0.0
      %653 = vmatpush2.msra.mxu0 0.0
      %654 = vmatprep.subr.mxu0 0.0
      %655 = vmatpush2.msra.mxu0 0.0
      %656 = vmatprep.subr.mxu0 0.0
      %657 = vmatpush2.msra.mxu0 0.0
      %658 = vmatprep.subr.mxu0 0.0
      %659 = vmatpush2.msra.mxu0 0.0
      %660 = vmatprep.subr.mxu0 0.0
      %661 = vmatpush2.msra.mxu0 0.0
      %662 = vmatprep.subr.mxu0 0.0
      %663 = vmatpush2.msra.mxu0 0.0
      %664 = vmatprep.subr.mxu0 0.0
      %665 = vmatpush2.msra.mxu0 0.0
      %666 = vmatprep.subr.mxu0 0.0
      %667 = vmatpush2.msra.mxu0 0.0
      %668 = vmatprep.subr.mxu0 0.0
      %669 = vmatpush2.msra.mxu0 0.0
      %670 = vmatprep.subr.mxu0 0.0
      %671 = vmatpush2.msra.mxu0 0.0
      %672 = vmatprep.subr.mxu0 0.0
      %673 = vmatpush2.msra.mxu0 0.0
      %674 = vmatprep.subr.mxu0 0.0
      %675 = vmatpush2.msra.mxu0 0.0
      %676 = vmatprep.subr.mxu0 0.0
      %677 = vmatpush2.msra.mxu0 0.0
      %678 = vmatprep.mubr.f32.mxu0 0.0
      %v679 = vand.u32 %v263, 4294901760
      %680 = vmatmul.mubr.f32.gmra.mxu0 %v679
      %v681 = vpop.f32.mrf.mxu0
      %v682 = vadd.f32 %v597, %v681
      %v683 = vpop.f32.mrf.mxu0
      %684 = vmatprep.mubr.f32.mxu0 0.0
      %v685 = vand.u32 %v266, 4294901760
      %686 = vmatmul.mubr.f32.gmra.mxu0 %v685
      %v687 = vpop.f32.mrf.mxu0
      %v688 = vadd.f32 %v605, %v687
      %v689 = vpop.f32.mrf.mxu0
      %690 = vdwg.mxu0
      %691 = vmatprep.subr.mxu0 0.0
      %692 = vmatpush1.msra.mxu0 0.0
      %693 = vmatprep.subr.mxu0 0.0
      %694 = vmatpush1.msra.mxu0 0.0
      %695 = vmatprep.subr.mxu0 0.0
      %696 = vmatpush1.msra.mxu0 0.0
      %697 = vmatprep.subr.mxu0 0.0
      %698 = vmatpush1.msra.mxu0 0.0
      %699 = vmatprep.subr.mxu0 0.0
      %700 = vmatpush1.msra.mxu0 0.0
      %701 = vmatprep.subr.mxu0 0.0
      %702 = vmatpush1.msra.mxu0 0.0
      %703 = vmatprep.subr.mxu0 0.0
      %704 = vmatpush1.msra.mxu0 0.0
      %705 = vmatprep.subr.mxu0 0.0
      %706 = vmatpush1.msra.mxu0 0.0
      %707 = vmatprep.subr.mxu0 0.0
      %708 = vmatpush1.msra.mxu0 0.0
      %709 = vmatprep.subr.mxu0 0.0
      %710 = vmatpush1.msra.mxu0 0.0
      %711 = vmatprep.subr.mxu0 0.0
      %712 = vmatpush1.msra.mxu0 0.0
      %713 = vmatprep.subr.mxu0 0.0
      %714 = vmatpush1.msra.mxu0 0.0
      %715 = vmatprep.subr.mxu0 0.0
      %716 = vmatpush1.msra.mxu0 0.0
      %717 = vmatprep.subr.mxu0 0.0
      %718 = vmatpush1.msra.mxu0 0.0
      %719 = vmatprep.subr.mxu0 0.0
      %v720 = vand.u32 %v260, 4294901760
      %721 = vmatpush1.msra.mxu0 %v720
      %722 = vmatprep.subr.mxu0 0.0
      %v723 = vand.u32 %v259, 4294901760
      %724 = vmatpush1.msra.mxu0 %v723
      %725 = vmatprep.subr.mxu0 0.0
      %726 = vmatpush2.msra.mxu0 0.0
      %727 = vmatprep.subr.mxu0 0.0
      %728 = vmatpush2.msra.mxu0 0.0
      %729 = vmatprep.subr.mxu0 0.0
      %730 = vmatpush2.msra.mxu0 0.0
      %731 = vmatprep.subr.mxu0 0.0
      %732 = vmatpush2.msra.mxu0 0.0
      %733 = vmatprep.subr.mxu0 0.0
      %734 = vmatpush2.msra.mxu0 0.0
      %735 = vmatprep.subr.mxu0 0.0
      %736 = vmatpush2.msra.mxu0 0.0
      %737 = vmatprep.subr.mxu0 0.0
      %738 = vmatpush2.msra.mxu0 0.0
      %739 = vmatprep.subr.mxu0 0.0
      %740 = vmatpush2.msra.mxu0 0.0
      %741 = vmatprep.subr.mxu0 0.0
      %742 = vmatpush2.msra.mxu0 0.0
      %743 = vmatprep.subr.mxu0 0.0
      %744 = vmatpush2.msra.mxu0 0.0
      %745 = vmatprep.subr.mxu0 0.0
      %746 = vmatpush2.msra.mxu0 0.0
      %747 = vmatprep.subr.mxu0 0.0
      %748 = vmatpush2.msra.mxu0 0.0
      %749 = vmatprep.subr.mxu0 0.0
      %750 = vmatpush2.msra.mxu0 0.0
      %751 = vmatprep.subr.mxu0 0.0
      %752 = vmatpush2.msra.mxu0 0.0
      %753 = vmatprep.subr.mxu0 0.0
      %754 = vmatpush2.msra.mxu0 0.0
      %755 = vmatprep.subr.mxu0 0.0
      %756 = vmatpush2.msra.mxu0 0.0
      %757 = vmatprep.mubr.f32.mxu0 0.0
      %v758 = vand.u32 %v263, 4294901760
      %759 = vmatmul.mubr.f32.gmra.mxu0 %v758
      %v760 = vpop.f32.mrf.mxu0
      %v761 = vadd.f32 %v682, %v760
      %v762 = vpop.f32.mrf.mxu0
      %763 = vmatprep.mubr.f32.mxu0 0.0
      %v764 = vand.u32 %v266, 4294901760
      %765 = vmatmul.mubr.f32.gmra.mxu0 %v764
      %v766 = vpop.f32.mrf.mxu0
      %v767 = vadd.f32 %v688, %v766
      %v768 = vpop.f32.mrf.mxu0
      %769 = vdwg.mxu0
      %v770 = vld [vmem:[%s2] sm:$0xff]
      %v771 = vld [vmem:[%s2 + $0x8] sm:$0xff]
      %v772 = vld [vmem:[%s3] sm:$0x1]
      %v774 = vlaneseq
      %v775 = vshrl.u32 %v774, 7
      %v776 = vsub.s32 0, %v775
      %v777 = vrot.slane %v772, %v776
      %v780 = vsel %vm261, %v761, 0
      %v783 = vsel %vm261, %v767, 0
      %785 = vmatprep.subr.mxu0 0.0
      %786 = vmatpush1.msra.mxu0 0.0
      %787 = vmatprep.subr.mxu0 0.0
      %788 = vmatpush1.msra.mxu0 0.0
      %789 = vmatprep.subr.mxu0 0.0
      %790 = vmatpush1.msra.mxu0 0.0
      %791 = vmatprep.subr.mxu0 0.0
      %792 = vmatpush1.msra.mxu0 0.0
      %793 = vmatprep.subr.mxu0 0.0
      %794 = vmatpush1.msra.mxu0 0.0
      %795 = vmatprep.subr.mxu0 0.0
      %796 = vmatpush1.msra.mxu0 0.0
      %797 = vmatprep.subr.mxu0 0.0
      %798 = vmatpush1.msra.mxu0 0.0
      %799 = vmatprep.subr.mxu0 0.0
      %800 = vmatpush1.msra.mxu0 0.0
      %801 = vmatprep.subr.mxu0 0.0
      %802 = vmatpush1.msra.mxu0 0.0
      %803 = vmatprep.subr.mxu0 0.0
      %804 = vmatpush1.msra.mxu0 0.0
      %805 = vmatprep.subr.mxu0 0.0
      %806 = vmatpush1.msra.mxu0 0.0
      %807 = vmatprep.subr.mxu0 0.0
      %808 = vmatpush1.msra.mxu0 0.0
      %809 = vmatprep.subr.mxu0 0.0
      %810 = vmatpush1.msra.mxu0 0.0
      %811 = vmatprep.subr.mxu0 0.0
      %812 = vmatpush1.msra.mxu0 0.0
      %813 = vmatprep.subr.mxu0 0.0
      %v814 = vand.u32 %v771, 4294901760
      %815 = vmatpush1.msra.mxu0 %v814
      %816 = vmatprep.subr.mxu0 0.0
      %v817 = vand.u32 %v770, 4294901760
      %818 = vmatpush1.msra.mxu0 %v817
      %819 = vmatprep.subr.mxu0 0.0
      %820 = vmatpush2.msra.mxu0 0.0
      %821 = vmatprep.subr.mxu0 0.0
      %822 = vmatpush2.msra.mxu0 0.0
      %823 = vmatprep.subr.mxu0 0.0
      %824 = vmatpush2.msra.mxu0 0.0
      %825 = vmatprep.subr.mxu0 0.0
      %826 = vmatpush2.msra.mxu0 0.0
      %827 = vmatprep.subr.mxu0 0.0
      %828 = vmatpush2.msra.mxu0 0.0
      %829 = vmatprep.subr.mxu0 0.0
      %830 = vmatpush2.msra.mxu0 0.0
      %831 = vmatprep.subr.mxu0 0.0
      %832 = vmatpush2.msra.mxu0 0.0
      %833 = vmatprep.subr.mxu0 0.0
      %834 = vmatpush2.msra.mxu0 0.0
      %835 = vmatprep.subr.mxu0 0.0
      %836 = vmatpush2.msra.mxu0 0.0
      %837 = vmatprep.subr.mxu0 0.0
      %838 = vmatpush2.msra.mxu0 0.0
      %839 = vmatprep.subr.mxu0 0.0
      %840 = vmatpush2.msra.mxu0 0.0
      %841 = vmatprep.subr.mxu0 0.0
      %842 = vmatpush2.msra.mxu0 0.0
      %843 = vmatprep.subr.mxu0 0.0
      %844 = vmatpush2.msra.mxu0 0.0
      %845 = vmatprep.subr.mxu0 0.0
      %846 = vmatpush2.msra.mxu0 0.0
      %847 = vmatprep.subr.mxu0 0.0
      %848 = vmatpush2.msra.mxu0 0.0
      %849 = vmatprep.subr.mxu0 0.0
      %850 = vmatpush2.msra.mxu0 0.0
      %851 = vmatprep.mubr.f32.mxu0 0.0
      %v852 = vand.u32 %v780, 4294901760
      %v853 = vsub.f32 %v780, %v852
      %v854 = vand.u32 %v853, 4294901760
      %v855 = vsub.f32 %v853, %v854
      %v856 = vand.u32 %v855, 4294901760
      %857 = vmatmul.mubr.f32.gmra.mxu0 %v856
      %v858 = vpop.f32.mrf.mxu0
      %v859 = vadd.f32 %v777, %v858
      %v860 = vpop.f32.mrf.mxu0
      %861 = vmatprep.mubr.f32.mxu0 0.0
      %v862 = vand.u32 %v783, 4294901760
      %v863 = vsub.f32 %v783, %v862
      %v864 = vand.u32 %v863, 4294901760
      %v865 = vsub.f32 %v863, %v864
      %v866 = vand.u32 %v865, 4294901760
      %867 = vmatmul.mubr.f32.gmra.mxu0 %v866
      %v868 = vpop.f32.mrf.mxu0
      %v869 = vadd.f32 %v777, %v868
      %v870 = vpop.f32.mrf.mxu0
      %871 = vdwg.mxu0
      %872 = vmatprep.subr.mxu0 0.0
      %873 = vmatpush1.msra.mxu0 0.0
      %874 = vmatprep.subr.mxu0 0.0
      %875 = vmatpush1.msra.mxu0 0.0
      %876 = vmatprep.subr.mxu0 0.0
      %877 = vmatpush1.msra.mxu0 0.0
      %878 = vmatprep.subr.mxu0 0.0
      %879 = vmatpush1.msra.mxu0 0.0
      %880 = vmatprep.subr.mxu0 0.0
      %881 = vmatpush1.msra.mxu0 0.0
      %882 = vmatprep.subr.mxu0 0.0
      %883 = vmatpush1.msra.mxu0 0.0
      %884 = vmatprep.subr.mxu0 0.0
      %885 = vmatpush1.msra.mxu0 0.0
      %886 = vmatprep.subr.mxu0 0.0
      %887 = vmatpush1.msra.mxu0 0.0
      %888 = vmatprep.subr.mxu0 0.0
      %889 = vmatpush1.msra.mxu0 0.0
      %890 = vmatprep.subr.mxu0 0.0
      %891 = vmatpush1.msra.mxu0 0.0
      %892 = vmatprep.subr.mxu0 0.0
      %893 = vmatpush1.msra.mxu0 0.0
      %894 = vmatprep.subr.mxu0 0.0
      %895 = vmatpush1.msra.mxu0 0.0
      %896 = vmatprep.subr.mxu0 0.0
      %897 = vmatpush1.msra.mxu0 0.0
      %898 = vmatprep.subr.mxu0 0.0
      %899 = vmatpush1.msra.mxu0 0.0
      %900 = vmatprep.subr.mxu0 0.0
      %v901 = vand.u32 %v771, 4294901760
      %v902 = vsub.f32 %v771, %v901
      %v903 = vand.u32 %v902, 4294901760
      %v904 = vsub.f32 %v902, %v903
      %v905 = vand.u32 %v904, 4294901760
      %906 = vmatpush1.msra.mxu0 %v905
      %907 = vmatprep.subr.mxu0 0.0
      %v908 = vand.u32 %v770, 4294901760
      %v909 = vsub.f32 %v770, %v908
      %v910 = vand.u32 %v909, 4294901760
      %v911 = vsub.f32 %v909, %v910
      %v912 = vand.u32 %v911, 4294901760
      %913 = vmatpush1.msra.mxu0 %v912
      %914 = vmatprep.subr.mxu0 0.0
      %915 = vmatpush2.msra.mxu0 0.0
      %916 = vmatprep.subr.mxu0 0.0
      %917 = vmatpush2.msra.mxu0 0.0
      %918 = vmatprep.subr.mxu0 0.0
      %919 = vmatpush2.msra.mxu0 0.0
      %920 = vmatprep.subr.mxu0 0.0
      %921 = vmatpush2.msra.mxu0 0.0
      %922 = vmatprep.subr.mxu0 0.0
      %923 = vmatpush2.msra.mxu0 0.0
      %924 = vmatprep.subr.mxu0 0.0
      %925 = vmatpush2.msra.mxu0 0.0
      %926 = vmatprep.subr.mxu0 0.0
      %927 = vmatpush2.msra.mxu0 0.0
      %928 = vmatprep.subr.mxu0 0.0
      %929 = vmatpush2.msra.mxu0 0.0
      %930 = vmatprep.subr.mxu0 0.0
      %931 = vmatpush2.msra.mxu0 0.0
      %932 = vmatprep.subr.mxu0 0.0
      %933 = vmatpush2.msra.mxu0 0.0
      %934 = vmatprep.subr.mxu0 0.0
      %935 = vmatpush2.msra.mxu0 0.0
      %936 = vmatprep.subr.mxu0 0.0
      %937 = vmatpush2.msra.mxu0 0.0
      %938 = vmatprep.subr.mxu0 0.0
      %939 = vmatpush2.msra.mxu0 0.0
      %940 = vmatprep.subr.mxu0 0.0
      %941 = vmatpush2.msra.mxu0 0.0
      %942 = vmatprep.subr.mxu0 0.0
      %943 = vmatpush2.msra.mxu0 0.0
      %944 = vmatprep.subr.mxu0 0.0
      %945 = vmatpush2.msra.mxu0 0.0
      %946 = vmatprep.mubr.f32.mxu0 0.0
      %v947 = vand.u32 %v780, 4294901760
      %948 = vmatmul.mubr.f32.gmra.mxu0 %v947
      %v949 = vpop.f32.mrf.mxu0
      %v950 = vadd.f32 %v859, %v949
      %v951 = vpop.f32.mrf.mxu0
      %952 = vmatprep.mubr.f32.mxu0 0.0
      %v953 = vand.u32 %v783, 4294901760
      %954 = vmatmul.mubr.f32.gmra.mxu0 %v953
      %v955 = vpop.f32.mrf.mxu0
      %v956 = vadd.f32 %v869, %v955
      %v957 = vpop.f32.mrf.mxu0
      %958 = vdwg.mxu0
      %959 = vmatprep.subr.mxu0 0.0
      %960 = vmatpush1.msra.mxu0 0.0
      %961 = vmatprep.subr.mxu0 0.0
      %962 = vmatpush1.msra.mxu0 0.0
      %963 = vmatprep.subr.mxu0 0.0
      %964 = vmatpush1.msra.mxu0 0.0
      %965 = vmatprep.subr.mxu0 0.0
      %966 = vmatpush1.msra.mxu0 0.0
      %967 = vmatprep.subr.mxu0 0.0
      %968 = vmatpush1.msra.mxu0 0.0
      %969 = vmatprep.subr.mxu0 0.0
      %970 = vmatpush1.msra.mxu0 0.0
      %971 = vmatprep.subr.mxu0 0.0
      %972 = vmatpush1.msra.mxu0 0.0
      %973 = vmatprep.subr.mxu0 0.0
      %974 = vmatpush1.msra.mxu0 0.0
      %975 = vmatprep.subr.mxu0 0.0
      %976 = vmatpush1.msra.mxu0 0.0
      %977 = vmatprep.subr.mxu0 0.0
      %978 = vmatpush1.msra.mxu0 0.0
      %979 = vmatprep.subr.mxu0 0.0
      %980 = vmatpush1.msra.mxu0 0.0
      %981 = vmatprep.subr.mxu0 0.0
      %982 = vmatpush1.msra.mxu0 0.0
      %983 = vmatprep.subr.mxu0 0.0
      %984 = vmatpush1.msra.mxu0 0.0
      %985 = vmatprep.subr.mxu0 0.0
      %986 = vmatpush1.msra.mxu0 0.0
      %987 = vmatprep.subr.mxu0 0.0
      %v988 = vand.u32 %v771, 4294901760
      %v989 = vsub.f32 %v771, %v988
      %990 = vmatpush1.msra.mxu0 %v989
      %991 = vmatprep.subr.mxu0 0.0
      %v992 = vand.u32 %v770, 4294901760
      %v993 = vsub.f32 %v770, %v992
      %994 = vmatpush1.msra.mxu0 %v993
      %995 = vmatprep.subr.mxu0 0.0
      %996 = vmatpush2.msra.mxu0 0.0
      %997 = vmatprep.subr.mxu0 0.0
      %998 = vmatpush2.msra.mxu0 0.0
      %999 = vmatprep.subr.mxu0 0.0
      %1000 = vmatpush2.msra.mxu0 0.0
      %1001 = vmatprep.subr.mxu0 0.0
      %1002 = vmatpush2.msra.mxu0 0.0
      %1003 = vmatprep.subr.mxu0 0.0
      %1004 = vmatpush2.msra.mxu0 0.0
      %1005 = vmatprep.subr.mxu0 0.0
      %1006 = vmatpush2.msra.mxu0 0.0
      %1007 = vmatprep.subr.mxu0 0.0
      %1008 = vmatpush2.msra.mxu0 0.0
      %1009 = vmatprep.subr.mxu0 0.0
      %1010 = vmatpush2.msra.mxu0 0.0
      %1011 = vmatprep.subr.mxu0 0.0
      %1012 = vmatpush2.msra.mxu0 0.0
      %1013 = vmatprep.subr.mxu0 0.0
      %1014 = vmatpush2.msra.mxu0 0.0
      %1015 = vmatprep.subr.mxu0 0.0
      %1016 = vmatpush2.msra.mxu0 0.0
      %1017 = vmatprep.subr.mxu0 0.0
      %1018 = vmatpush2.msra.mxu0 0.0
      %1019 = vmatprep.subr.mxu0 0.0
      %1020 = vmatpush2.msra.mxu0 0.0
      %1021 = vmatprep.subr.mxu0 0.0
      %1022 = vmatpush2.msra.mxu0 0.0
      %1023 = vmatprep.subr.mxu0 0.0
      %1024 = vmatpush2.msra.mxu0 0.0
      %1025 = vmatprep.subr.mxu0 0.0
      %1026 = vmatpush2.msra.mxu0 0.0
      %1027 = vmatprep.mubr.f32.mxu0 0.0
      %v1028 = vand.u32 %v780, 4294901760
      %v1029 = vsub.f32 %v780, %v1028
      %1030 = vmatmul.mubr.f32.gmra.mxu0 %v1029
      %v1031 = vpop.f32.mrf.mxu0
      %v1032 = vadd.f32 %v950, %v1031
      %v1033 = vpop.f32.mrf.mxu0
      %1034 = vmatprep.mubr.f32.mxu0 0.0
      %v1035 = vand.u32 %v783, 4294901760
      %v1036 = vsub.f32 %v783, %v1035
      %1037 = vmatmul.mubr.f32.gmra.mxu0 %v1036
      %v1038 = vpop.f32.mrf.mxu0
      %v1039 = vadd.f32 %v956, %v1038
      %v1040 = vpop.f32.mrf.mxu0
      %1041 = vdwg.mxu0
      %1042 = vmatprep.subr.mxu0 0.0
      %1043 = vmatpush1.msra.mxu0 0.0
      %1044 = vmatprep.subr.mxu0 0.0
      %1045 = vmatpush1.msra.mxu0 0.0
      %1046 = vmatprep.subr.mxu0 0.0
      %1047 = vmatpush1.msra.mxu0 0.0
      %1048 = vmatprep.subr.mxu0 0.0
      %1049 = vmatpush1.msra.mxu0 0.0
      %1050 = vmatprep.subr.mxu0 0.0
      %1051 = vmatpush1.msra.mxu0 0.0
      %1052 = vmatprep.subr.mxu0 0.0
      %1053 = vmatpush1.msra.mxu0 0.0
      %1054 = vmatprep.subr.mxu0 0.0
      %1055 = vmatpush1.msra.mxu0 0.0
      %1056 = vmatprep.subr.mxu0 0.0
      %1057 = vmatpush1.msra.mxu0 0.0
      %1058 = vmatprep.subr.mxu0 0.0
      %1059 = vmatpush1.msra.mxu0 0.0
      %1060 = vmatprep.subr.mxu0 0.0
      %1061 = vmatpush1.msra.mxu0 0.0
      %1062 = vmatprep.subr.mxu0 0.0
      %1063 = vmatpush1.msra.mxu0 0.0
      %1064 = vmatprep.subr.mxu0 0.0
      %1065 = vmatpush1.msra.mxu0 0.0
      %1066 = vmatprep.subr.mxu0 0.0
      %1067 = vmatpush1.msra.mxu0 0.0
      %1068 = vmatprep.subr.mxu0 0.0
      %1069 = vmatpush1.msra.mxu0 0.0
      %1070 = vmatprep.subr.mxu0 0.0
      %v1071 = vand.u32 %v771, 4294901760
      %1072 = vmatpush1.msra.mxu0 %v1071
      %1073 = vmatprep.subr.mxu0 0.0
      %v1074 = vand.u32 %v770, 4294901760
      %1075 = vmatpush1.msra.mxu0 %v1074
      %1076 = vmatprep.subr.mxu0 0.0
      %1077 = vmatpush2.msra.mxu0 0.0
      %1078 = vmatprep.subr.mxu0 0.0
      %1079 = vmatpush2.msra.mxu0 0.0
      %1080 = vmatprep.subr.mxu0 0.0
      %1081 = vmatpush2.msra.mxu0 0.0
      %1082 = vmatprep.subr.mxu0 0.0
      %1083 = vmatpush2.msra.mxu0 0.0
      %1084 = vmatprep.subr.mxu0 0.0
      %1085 = vmatpush2.msra.mxu0 0.0
      %1086 = vmatprep.subr.mxu0 0.0
      %1087 = vmatpush2.msra.mxu0 0.0
      %1088 = vmatprep.subr.mxu0 0.0
      %1089 = vmatpush2.msra.mxu0 0.0
      %1090 = vmatprep.subr.mxu0 0.0
      %1091 = vmatpush2.msra.mxu0 0.0
      %1092 = vmatprep.subr.mxu0 0.0
      %1093 = vmatpush2.msra.mxu0 0.0
      %1094 = vmatprep.subr.mxu0 0.0
      %1095 = vmatpush2.msra.mxu0 0.0
      %1096 = vmatprep.subr.mxu0 0.0
      %1097 = vmatpush2.msra.mxu0 0.0
      %1098 = vmatprep.subr.mxu0 0.0
      %1099 = vmatpush2.msra.mxu0 0.0
      %1100 = vmatprep.subr.mxu0 0.0
      %1101 = vmatpush2.msra.mxu0 0.0
      %1102 = vmatprep.subr.mxu0 0.0
      %1103 = vmatpush2.msra.mxu0 0.0
      %1104 = vmatprep.subr.mxu0 0.0
      %1105 = vmatpush2.msra.mxu0 0.0
      %1106 = vmatprep.subr.mxu0 0.0
      %1107 = vmatpush2.msra.mxu0 0.0
      %1108 = vmatprep.mubr.f32.mxu0 0.0
      %v1109 = vand.u32 %v780, 4294901760
      %v1110 = vsub.f32 %v780, %v1109
      %v1111 = vand.u32 %v1110, 4294901760
      %1112 = vmatmul.mubr.f32.gmra.mxu0 %v1111
      %v1113 = vpop.f32.mrf.mxu0
      %v1114 = vadd.f32 %v1032, %v1113
      %v1115 = vpop.f32.mrf.mxu0
      %1116 = vmatprep.mubr.f32.mxu0 0.0
      %v1117 = vand.u32 %v783, 4294901760
      %v1118 = vsub.f32 %v783, %v1117
      %v1119 = vand.u32 %v1118, 4294901760
      %1120 = vmatmul.mubr.f32.gmra.mxu0 %v1119
      %v1121 = vpop.f32.mrf.mxu0
      %v1122 = vadd.f32 %v1039, %v1121
      %v1123 = vpop.f32.mrf.mxu0
      %1124 = vdwg.mxu0
      %1125 = vmatprep.subr.mxu0 0.0
      %1126 = vmatpush1.msra.mxu0 0.0
      %1127 = vmatprep.subr.mxu0 0.0
      %1128 = vmatpush1.msra.mxu0 0.0
      %1129 = vmatprep.subr.mxu0 0.0
      %1130 = vmatpush1.msra.mxu0 0.0
      %1131 = vmatprep.subr.mxu0 0.0
      %1132 = vmatpush1.msra.mxu0 0.0
      %1133 = vmatprep.subr.mxu0 0.0
      %1134 = vmatpush1.msra.mxu0 0.0
      %1135 = vmatprep.subr.mxu0 0.0
      %1136 = vmatpush1.msra.mxu0 0.0
      %1137 = vmatprep.subr.mxu0 0.0
      %1138 = vmatpush1.msra.mxu0 0.0
      %1139 = vmatprep.subr.mxu0 0.0
      %1140 = vmatpush1.msra.mxu0 0.0
      %1141 = vmatprep.subr.mxu0 0.0
      %1142 = vmatpush1.msra.mxu0 0.0
      %1143 = vmatprep.subr.mxu0 0.0
      %1144 = vmatpush1.msra.mxu0 0.0
      %1145 = vmatprep.subr.mxu0 0.0
      %1146 = vmatpush1.msra.mxu0 0.0
      %1147 = vmatprep.subr.mxu0 0.0
      %1148 = vmatpush1.msra.mxu0 0.0
      %1149 = vmatprep.subr.mxu0 0.0
      %1150 = vmatpush1.msra.mxu0 0.0
      %1151 = vmatprep.subr.mxu0 0.0
      %1152 = vmatpush1.msra.mxu0 0.0
      %1153 = vmatprep.subr.mxu0 0.0
      %v1154 = vand.u32 %v771, 4294901760
      %v1155 = vsub.f32 %v771, %v1154
      %v1156 = vand.u32 %v1155, 4294901760
      %1157 = vmatpush1.msra.mxu0 %v1156
      %1158 = vmatprep.subr.mxu0 0.0
      %v1159 = vand.u32 %v770, 4294901760
      %v1160 = vsub.f32 %v770, %v1159
      %v1161 = vand.u32 %v1160, 4294901760
      %1162 = vmatpush1.msra.mxu0 %v1161
      %1163 = vmatprep.subr.mxu0 0.0
      %1164 = vmatpush2.msra.mxu0 0.0
      %1165 = vmatprep.subr.mxu0 0.0
      %1166 = vmatpush2.msra.mxu0 0.0
      %1167 = vmatprep.subr.mxu0 0.0
      %1168 = vmatpush2.msra.mxu0 0.0
      %1169 = vmatprep.subr.mxu0 0.0
      %1170 = vmatpush2.msra.mxu0 0.0
      %1171 = vmatprep.subr.mxu0 0.0
      %1172 = vmatpush2.msra.mxu0 0.0
      %1173 = vmatprep.subr.mxu0 0.0
      %1174 = vmatpush2.msra.mxu0 0.0
      %1175 = vmatprep.subr.mxu0 0.0
      %1176 = vmatpush2.msra.mxu0 0.0
      %1177 = vmatprep.subr.mxu0 0.0
      %1178 = vmatpush2.msra.mxu0 0.0
      %1179 = vmatprep.subr.mxu0 0.0
      %1180 = vmatpush2.msra.mxu0 0.0
      %1181 = vmatprep.subr.mxu0 0.0
      %1182 = vmatpush2.msra.mxu0 0.0
      %1183 = vmatprep.subr.mxu0 0.0
      %1184 = vmatpush2.msra.mxu0 0.0
      %1185 = vmatprep.subr.mxu0 0.0
      %1186 = vmatpush2.msra.mxu0 0.0
      %1187 = vmatprep.subr.mxu0 0.0
      %1188 = vmatpush2.msra.mxu0 0.0
      %1189 = vmatprep.subr.mxu0 0.0
      %1190 = vmatpush2.msra.mxu0 0.0
      %1191 = vmatprep.subr.mxu0 0.0
      %1192 = vmatpush2.msra.mxu0 0.0
      %1193 = vmatprep.subr.mxu0 0.0
      %1194 = vmatpush2.msra.mxu0 0.0
      %1195 = vmatprep.mubr.f32.mxu0 0.0
      %v1196 = vand.u32 %v780, 4294901760
      %1197 = vmatmul.mubr.f32.gmra.mxu0 %v1196
      %v1198 = vpop.f32.mrf.mxu0
      %v1199 = vadd.f32 %v1114, %v1198
      %v1200 = vpop.f32.mrf.mxu0
      %1201 = vmatprep.mubr.f32.mxu0 0.0
      %v1202 = vand.u32 %v783, 4294901760
      %1203 = vmatmul.mubr.f32.gmra.mxu0 %v1202
      %v1204 = vpop.f32.mrf.mxu0
      %v1205 = vadd.f32 %v1122, %v1204
      %v1206 = vpop.f32.mrf.mxu0
      %1207 = vdwg.mxu0
      %1208 = vmatprep.subr.mxu0 0.0
      %1209 = vmatpush1.msra.mxu0 0.0
      %1210 = vmatprep.subr.mxu0 0.0
      %1211 = vmatpush1.msra.mxu0 0.0
      %1212 = vmatprep.subr.mxu0 0.0
      %1213 = vmatpush1.msra.mxu0 0.0
      %1214 = vmatprep.subr.mxu0 0.0
      %1215 = vmatpush1.msra.mxu0 0.0
      %1216 = vmatprep.subr.mxu0 0.0
      %1217 = vmatpush1.msra.mxu0 0.0
      %1218 = vmatprep.subr.mxu0 0.0
      %1219 = vmatpush1.msra.mxu0 0.0
      %1220 = vmatprep.subr.mxu0 0.0
      %1221 = vmatpush1.msra.mxu0 0.0
      %1222 = vmatprep.subr.mxu0 0.0
      %1223 = vmatpush1.msra.mxu0 0.0
      %1224 = vmatprep.subr.mxu0 0.0
      %1225 = vmatpush1.msra.mxu0 0.0
      %1226 = vmatprep.subr.mxu0 0.0
      %1227 = vmatpush1.msra.mxu0 0.0
      %1228 = vmatprep.subr.mxu0 0.0
      %1229 = vmatpush1.msra.mxu0 0.0
      %1230 = vmatprep.subr.mxu0 0.0
      %1231 = vmatpush1.msra.mxu0 0.0
      %1232 = vmatprep.subr.mxu0 0.0
      %1233 = vmatpush1.msra.mxu0 0.0
      %1234 = vmatprep.subr.mxu0 0.0
      %1235 = vmatpush1.msra.mxu0 0.0
      %1236 = vmatprep.subr.mxu0 0.0
      %v1237 = vand.u32 %v771, 4294901760
      %1238 = vmatpush1.msra.mxu0 %v1237
      %1239 = vmatprep.subr.mxu0 0.0
      %v1240 = vand.u32 %v770, 4294901760
      %1241 = vmatpush1.msra.mxu0 %v1240
      %1242 = vmatprep.subr.mxu0 0.0
      %1243 = vmatpush2.msra.mxu0 0.0
      %1244 = vmatprep.subr.mxu0 0.0
      %1245 = vmatpush2.msra.mxu0 0.0
      %1246 = vmatprep.subr.mxu0 0.0
      %1247 = vmatpush2.msra.mxu0 0.0
      %1248 = vmatprep.subr.mxu0 0.0
      %1249 = vmatpush2.msra.mxu0 0.0
      %1250 = vmatprep.subr.mxu0 0.0
      %1251 = vmatpush2.msra.mxu0 0.0
      %1252 = vmatprep.subr.mxu0 0.0
      %1253 = vmatpush2.msra.mxu0 0.0
      %1254 = vmatprep.subr.mxu0 0.0
      %1255 = vmatpush2.msra.mxu0 0.0
      %1256 = vmatprep.subr.mxu0 0.0
      %1257 = vmatpush2.msra.mxu0 0.0
      %1258 = vmatprep.subr.mxu0 0.0
      %1259 = vmatpush2.msra.mxu0 0.0
      %1260 = vmatprep.subr.mxu0 0.0
      %1261 = vmatpush2.msra.mxu0 0.0
      %1262 = vmatprep.subr.mxu0 0.0
      %1263 = vmatpush2.msra.mxu0 0.0
      %1264 = vmatprep.subr.mxu0 0.0
      %1265 = vmatpush2.msra.mxu0 0.0
      %1266 = vmatprep.subr.mxu0 0.0
      %1267 = vmatpush2.msra.mxu0 0.0
      %1268 = vmatprep.subr.mxu0 0.0
      %1269 = vmatpush2.msra.mxu0 0.0
      %1270 = vmatprep.subr.mxu0 0.0
      %1271 = vmatpush2.msra.mxu0 0.0
      %1272 = vmatprep.subr.mxu0 0.0
      %1273 = vmatpush2.msra.mxu0 0.0
      %1274 = vmatprep.mubr.f32.mxu0 0.0
      %v1275 = vand.u32 %v780, 4294901760
      %1276 = vmatmul.mubr.f32.gmra.mxu0 %v1275
      %v1277 = vpop.f32.mrf.mxu0
      %v1278 = vadd.f32 %v1199, %v1277
      %v1279 = vpop.f32.mrf.mxu0
      %1280 = vmatprep.mubr.f32.mxu0 0.0
      %v1281 = vand.u32 %v783, 4294901760
      %1282 = vmatmul.mubr.f32.gmra.mxu0 %v1281
      %v1283 = vpop.f32.mrf.mxu0
      %v1284 = vadd.f32 %v1205, %v1283
      %v1285 = vpop.f32.mrf.mxu0
      %1286 = vdwg.mxu0
      %v1287 = vmul.f32 %v1278, %v1278
      %v1288 = vmul.f32 %v1284, %v1284
      %v1289 = vsel %vm261, %v1287, 0.0
      %1290 = vadd.xlane.f32.xlu0 %v1289
      %v1291 = vpop.xlane.xlu0 %1290
      %v1292 = vsel %vm261, %v1288, 0.0
      %1293 = vadd.xlane.f32.xlu0 %v1292
      %v1294 = vpop.xlane.xlu0 %1293
      %v1295 = vmax.f32 %v1291, 1e-24
      %v1296 = vmax.f32 %v1294, 1e-24
      %v1297 = vrsqrt.pop %v1295
      %v1298 = vrsqrt.pop %v1296
      %v1299 = vmul.f32 %v1278, %v1297
      %v1300 = vmul.f32 %v1284, %v1298
      %v1301 = vmax.f32 %v1299, 0.0
      %v1302 = vmax.f32 %v1300, 0.0
      %1303 = vst.msk [vmem:[%s255] sm:$0xff] %vm261, %v1301
      %1304 = vst.msk [vmem:[%s255 + $0x8] sm:$0xff] %vm261, %v1302
      %s1305 = smul.u32 2, %s20
      %p1306 = scmp.lt.s32.totalorder %s19, 1
      %s1307 = scalar_select %p1306, %s19, 1
      %p1308 = scmp.lt.s32.totalorder %s1305, 1
      %s1309 = scalar_select %p1308, %s1305, 1
      %s1310 = smul.addr %s1307, 2
      %s1311 = sadd.s32 %s1309, %s1310
      %s1312 = smul.addr %s1311, 8
      %s1313 = scalar_lea.vmem %s4, %s1312
      // Predicated region
      $region37: #{gcn_sortk_pool_encoder.8} parent=35 // pred_check
        %p1314 = pneg %p143
      $region38: #{gcn_sortk_pool_encoder.8} parent=35 // pred_check_branch
        %1316 = sbr.rel (%p1314) target = $region40
      $region39: #{gcn_sortk_pool_encoder.8} parent=35 // pred_region
        %s1317 = smul.u32 2, %s20
      $region40: #{gcn_sortk_pool_encoder.8} parent=35 // pred_fallthru
        _
    $region36: #{gcn_sortk_pool_encoder.8} parent=5 // pred_fallthru
      _
    %p1318 = scmp.le.s32.totalorder 2, %s10
    // Predicated region
    $region41: #{gcn_sortk_pool_encoder.8} parent=5 // pred_check
      %p1319 = pneg %p1318
    $region42: #{gcn_sortk_pool_encoder.8} parent=5 // pred_check_branch
      %1321 = sbr.rel (%p1319) target = $region44
    $region43: #{gcn_sortk_pool_encoder.8} parent=5 // pred_region
      %s1322 = ssub.s32 %s10, 2
      // Predicated region
      $region45: #{gcn_sortk_pool_encoder.8} parent=43 // pred_check
        %p1323 = pneg %p149
      $region46: #{gcn_sortk_pool_encoder.8} parent=43 // pred_check_branch
        %1325 = sbr.rel (%p1323) target = $region48
      $region47: #{gcn_sortk_pool_encoder.8} parent=43 // pred_region
        %s1326 = smul.u32 2, %s22
        %p1327 = scmp.lt.s32.totalorder %s21, 1
        %s1328 = scalar_select %p1327, %s21, 1
        %p1329 = scmp.lt.s32.totalorder %s1326, 1
        %s1330 = scalar_select %p1329, %s1326, 1
        %s1331 = smul.addr %s1328, 2
        %s1332 = sadd.s32 %s1330, %s1331
        %s1333 = smul.addr %s1332, 8
        %s1334 = scalar_lea.vmem %s4, %s1333
      $region48: #{gcn_sortk_pool_encoder.8} parent=43 // pred_fallthru
        _
    $region44: #{gcn_sortk_pool_encoder.8} parent=5 // pred_fallthru
      _
  $region6: #{gcn_sortk_pool_encoder.8} parent=0 // loop_footer
    %s14 = sadd.s32 1, %s10
  $region7: #{gcn_sortk_pool_encoder.8} parent=0 // loop_footer_branch
    %9 = sbr.rel target = $region3
  $region8: #{gcn_sortk_pool_encoder.8} parent=0 // loop_exit
    _

// kernel: gcn_sortk_pool_encoder.11
$region0: #{gcn_sortk_pool_encoder.11}
  #allocation0 [shape = 'u32[]', space=smem, size = 0x4, offset = 0x4, fixed_abs, tag = 'smem constant byte address 0x4 - core index']
  #allocation1 [shape = 'u32[144,128]{1,0:T(1,128)}', space=vmem, size = 0x12000, scoped, tag = 'internal scratch']
  #allocation2 [shape = 'f32[3,1]{1,0:T(4,128)}', space=vmem, size = 0x800, scoped, tag = 'scratch operand']
  #allocation3 [shape = 's32[3,1]{1,0:T(4,128)}', space=vmem, size = 0x800, scoped, tag = 'scratch operand']
  #allocation4 [shape = 'f32[3,12]{1,0:T(4,128)}', space=vmem, size = 0x800, scoped, tag = 'scratch operand']
  #allocation5 [shape = 's32[1]{0}', space=sflag, size = 0x4, scoped, tag = 'scoped memory for gcn_sortk_pool_encoder.11']
  #allocation6 [shape = 'u8[512]{0}', space=smem, size = 0x200, scoped, tag = 'prefetched SMEM operand 0']
  %s0 = inlined_call_operand.vmem [shape: s32[2], index: 0, kind: input, shape index: {}]
  %s1 = inlined_call_operand.vmem [shape: f32[2,16,16], index: 1, kind: input, shape index: {}]
  %s2 = inlined_call_operand.vmem [shape: f32[2,16,16], index: 2, kind: input, shape index: {}]
  %s3 = inlined_call_operand.vmem [shape: f32[2,16,16], index: 3, kind: input, shape index: {}]
  %s4 = inlined_call_operand.vmem [shape: f32[16,12], index: 4, kind: input, shape index: {}]
  %s5 = inlined_call_operand.vmem [shape: f32[16,12], index: 5, kind: input, shape index: {}]
  %s6 = inlined_call_operand.vmem [shape: f32[16,12], index: 6, kind: input, shape index: {}]
  %s7 = inlined_call_operand.vmem [shape: f32[1,4], index: 7, kind: input, shape index: {}]
  %s8 = inlined_call_operand.hbm [shape: f32[2,1,4], index: 8, kind: output, shape index: {}]
  %s9 = sld [smem:[#allocation0]]
  $region69: #{gcn_sortk_pool_encoder.11} parent=0
    _
  %s11 = ssub.s32 1, %s9
  %s12 = scalar_select 0, %s11, %s9
  %s13 = sshll.u32 %s0, 4
  %s14 = int_to_ptr.vmem [resolvable:$true] %s13
  %16 = dma.vmem_to_smem %s14, 16, [#allocation6], [#allocation5]
  %17 = dma.done [#allocation5], 16
  %18 = sfence
  $region1: #{gcn_sortk_pool_encoder.11} parent=0
    #allocation7 [shape = 'u8[1024]{0}', space=vmem, size = 0x400, scoped, tag = 'output window, operand 0']
    #allocation8 [shape = 's32[2]{0}', space=sflag, size = 0x8, scoped, tag = 'scoped memory for gcn_sortk_pool_encoder.11']
    %19 = vsyncpa [#allocation8], 0
    %s20 = scalar_lea.sflag [#allocation8], 1
    %21 = vsyncpa %s20, 0
    loop: start=0, step=1, limit=6
    $region2: #{gcn_sortk_pool_encoder.11} parent=1 // loop_pre_header
      _
    $region3: #{gcn_sortk_pool_encoder.11} parent=1 // loop_header
      %s23 = sphi 0, %s27
      %p24 = scmp.ge.s32.totalorder %s23, 6
      %s30 = sphi 0, %s42
      %s31 = sphi 0, %s38
      %s32 = sphi 0, %s30
      %s33 = sphi 0, %s31
      %s34 = sphi 0, %s32
      %s35 = sphi 0, %s33
      %s47 = sphi 0, %s49
      %s50 = sphi 0, %s47
      %s51 = sphi 0, %s50
      %s67 = sphi 0, %s51
      %s75 = sphi 0, %s77
      %s78 = sphi 0, %s75
      %s79 = sphi 0, %s78
      %s95 = sphi 0, %s79
      %s103 = sphi 0, %s105
      %s106 = sphi 0, %s103
      %s107 = sphi 0, %s106
      %s123 = sphi 0, %s107
      %s127 = sphi 0, %s127
      %s129 = sphi 0, %s127
      %s130 = sphi 0, %s129
      %s144 = sphi 0, %s130
      %s148 = sphi 0, %s148
      %s150 = sphi 0, %s148
      %s151 = sphi 0, %s150
      %s165 = sphi 0, %s151
      %s169 = sphi 0, %s169
      %s171 = sphi 0, %s169
      %s172 = sphi 0, %s171
      %s186 = sphi 0, %s172
      %s190 = sphi 0, %s190
      %s192 = sphi 0, %s190
      %s193 = sphi 0, %s192
      %s207 = sphi 0, %s193
      %s213 = sphi 0, %s215
      %s216 = sphi 0, %s213
      %s217 = sphi 0, %s216
      %s233 = sphi 0, %s217
    $region4: #{gcn_sortk_pool_encoder.11} parent=1 // loop_header_branch
      %26 = sbr.rel (%p24) target = $region8
    $region5: #{gcn_sortk_pool_encoder.11} parent=1 // loop_body
      %s28 = ssub.s32 %s23, 1
      %s29 = ssub.s32 %s23, 2
      %s36 = sadd.s32 1, %s31
      %p37 = scmp.ge.s32.totalorder %s36, 2
      %s38 = scalar_select %p37, 0, %s36
      %s39 = sadd.s32 1, %s30
      %s40 = scalar_select %p37, %s39, %s30
      %p41 = scmp.ge.s32.totalorder %s40, 2
      %s42 = scalar_select %p41, 0, %s40
      %s43 = ssub.s32 %s30, %s42
      %s44 = ssub.s32 %s31, %s38
      %s45 = sor.u32 %s43, %s44
      %p46 = scmp.eq.s32.totalorder %s45, 0
      %s48 = sadd.s32 %s47, 1
      %s49 = scalar_select %p46, %s47, %s48
      %p52 = pneg %p46
      %p53 = scmp.eq.s32.totalorder %s23, 3
      %p54 = por %p52, %p53
      %p55 = scmp.ne.s32.totalorder %s47, %s50
      %p56 = scmp.eq.s32.totalorder %s23, 0
      %p57 = por %p55, %p56
      %p58 = scmp.ne.s32.totalorder %s47, %s50
      %p59 = scmp.eq.s32.totalorder %s28, 3
      %p60 = por %p58, %p59
      %p61 = scmp.ne.s32.totalorder %s50, %s51
      %p62 = scmp.eq.s32.totalorder %s28, 0
      %p63 = por %p61, %p62
      %p64 = scmp.ne.s32.totalorder %s50, %s51
      %p65 = scmp.eq.s32.totalorder %s29, 3
      %p66 = por %p64, %p65
      %p68 = scmp.ne.s32.totalorder %s51, %s67
      %p69 = scmp.eq.s32.totalorder %s29, 0
      %p70 = por %p68, %p69
      %s71 = ssub.s32 %s30, %s42
      %s72 = ssub.s32 %s31, %s38
      %s73 = sor.u32 %s71, %s72
      %p74 = scmp.eq.s32.totalorder %s73, 0
      %s76 = sadd.s32 %s75, 1
      %s77 = scalar_select %p74, %s75, %s76
      %p80 = pneg %p74
      %p81 = scmp.eq.s32.totalorder %s23, 3
      %p82 = por %p80, %p81
      %p83 = scmp.ne.s32.totalorder %s75, %s78
      %p84 = scmp.eq.s32.totalorder %s23, 0
      %p85 = por %p83, %p84
      %p86 = scmp.ne.s32.totalorder %s75, %s78
      %p87 = scmp.eq.s32.totalorder %s28, 3
      %p88 = por %p86, %p87
      %p89 = scmp.ne.s32.totalorder %s78, %s79
      %p90 = scmp.eq.s32.totalorder %s28, 0
      %p91 = por %p89, %p90
      %p92 = scmp.ne.s32.totalorder %s78, %s79
      %p93 = scmp.eq.s32.totalorder %s29, 3
      %p94 = por %p92, %p93
      %p96 = scmp.ne.s32.totalorder %s79, %s95
      %p97 = scmp.eq.s32.totalorder %s29, 0
      %p98 = por %p96, %p97
      %s99 = ssub.s32 %s30, %s42
      %s100 = ssub.s32 %s31, %s38
      %s101 = sor.u32 %s99, %s100
      %p102 = scmp.eq.s32.totalorder %s101, 0
      %s104 = sadd.s32 %s103, 1
      %s105 = scalar_select %p102, %s103, %s104
      %p108 = pneg %p102
      %p109 = scmp.eq.s32.totalorder %s23, 3
      %p110 = por %p108, %p109
      %p111 = scmp.ne.s32.totalorder %s103, %s106
      %p112 = scmp.eq.s32.totalorder %s23, 0
      %p113 = por %p111, %p112
      %p114 = scmp.ne.s32.totalorder %s103, %s106
      %p115 = scmp.eq.s32.totalorder %s28, 3
      %p116 = por %p114, %p115
      %p117 = scmp.ne.s32.totalorder %s106, %s107
      %p118 = scmp.eq.s32.totalorder %s28, 0
      %p119 = por %p117, %p118
      %p120 = scmp.ne.s32.totalorder %s106, %s107
      %p121 = scmp.eq.s32.totalorder %s29, 3
      %p122 = por %p120, %p121
      %p124 = scmp.ne.s32.totalorder %s107, %s123
      %p125 = scmp.eq.s32.totalorder %s29, 0
      %p126 = por %p124, %p125
      %s128 = sadd.s32 %s127, 1
      %p131 = scmp.eq.s32.totalorder %s23, 3
      %p132 = scmp.ne.s32.totalorder %s127, %s129
      %p133 = scmp.eq.s32.totalorder %s23, 0
      %p134 = por %p132, %p133
      %p135 = scmp.ne.s32.totalorder %s127, %s129
      %p136 = scmp.eq.s32.totalorder %s28, 3
      %p137 = por %p135, %p136
      %p138 = scmp.ne.s32.totalorder %s129, %s130
      %p139 = scmp.eq.s32.totalorder %s28, 0
      %p140 = por %p138, %p139
      %p141 = scmp.ne.s32.totalorder %s129, %s130
      %p142 = scmp.eq.s32.totalorder %s29, 3
      %p143 = por %p141, %p142
      %p145 = scmp.ne.s32.totalorder %s130, %s144
      %p146 = scmp.eq.s32.totalorder %s29, 0
      %p147 = por %p145, %p146
      %s149 = sadd.s32 %s148, 1
      %p152 = scmp.eq.s32.totalorder %s23, 3
      %p153 = scmp.ne.s32.totalorder %s148, %s150
      %p154 = scmp.eq.s32.totalorder %s23, 0
      %p155 = por %p153, %p154
      %p156 = scmp.ne.s32.totalorder %s148, %s150
      %p157 = scmp.eq.s32.totalorder %s28, 3
      %p158 = por %p156, %p157
      %p159 = scmp.ne.s32.totalorder %s150, %s151
      %p160 = scmp.eq.s32.totalorder %s28, 0
      %p161 = por %p159, %p160
      %p162 = scmp.ne.s32.totalorder %s150, %s151
      %p163 = scmp.eq.s32.totalorder %s29, 3
      %p164 = por %p162, %p163
      %p166 = scmp.ne.s32.totalorder %s151, %s165
      %p167 = scmp.eq.s32.totalorder %s29, 0
      %p168 = por %p166, %p167
      %s170 = sadd.s32 %s169, 1
      %p173 = scmp.eq.s32.totalorder %s23, 3
      %p174 = scmp.ne.s32.totalorder %s169, %s171
      %p175 = scmp.eq.s32.totalorder %s23, 0
      %p176 = por %p174, %p175
      %p177 = scmp.ne.s32.totalorder %s169, %s171
      %p178 = scmp.eq.s32.totalorder %s28, 3
      %p179 = por %p177, %p178
      %p180 = scmp.ne.s32.totalorder %s171, %s172
      %p181 = scmp.eq.s32.totalorder %s28, 0
      %p182 = por %p180, %p181
      %p183 = scmp.ne.s32.totalorder %s171, %s172
      %p184 = scmp.eq.s32.totalorder %s29, 3
      %p185 = por %p183, %p184
      %p187 = scmp.ne.s32.totalorder %s172, %s186
      %p188 = scmp.eq.s32.totalorder %s29, 0
      %p189 = por %p187, %p188
      %s191 = sadd.s32 %s190, 1
      %p194 = scmp.eq.s32.totalorder %s23, 3
      %p195 = scmp.ne.s32.totalorder %s190, %s192
      %p196 = scmp.eq.s32.totalorder %s23, 0
      %p197 = por %p195, %p196
      %p198 = scmp.ne.s32.totalorder %s190, %s192
      %p199 = scmp.eq.s32.totalorder %s28, 3
      %p200 = por %p198, %p199
      %p201 = scmp.ne.s32.totalorder %s192, %s193
      %p202 = scmp.eq.s32.totalorder %s28, 0
      %p203 = por %p201, %p202
      %p204 = scmp.ne.s32.totalorder %s192, %s193
      %p205 = scmp.eq.s32.totalorder %s29, 3
      %p206 = por %p204, %p205
      %p208 = scmp.ne.s32.totalorder %s193, %s207
      %p209 = scmp.eq.s32.totalorder %s29, 0
      %p210 = por %p208, %p209
      %s211 = ssub.s32 %s30, %s42
      %p212 = scmp.eq.s32.totalorder %s211, 0
      %s214 = sadd.s32 %s213, 1
      %s215 = scalar_select %p212, %s213, %s214
      %p218 = pneg %p212
      %p219 = scmp.eq.s32.totalorder %s23, 3
      %p220 = por %p218, %p219
      %p221 = scmp.ne.s32.totalorder %s213, %s216
      %p222 = scmp.eq.s32.totalorder %s23, 0
      %p223 = por %p221, %p222
      %p224 = scmp.ne.s32.totalorder %s213, %s216
      %p225 = scmp.eq.s32.totalorder %s28, 3
      %p226 = por %p224, %p225
      %p227 = scmp.ne.s32.totalorder %s216, %s217
      %p228 = scmp.eq.s32.totalorder %s28, 0
      %p229 = por %p227, %p228
      %p230 = scmp.ne.s32.totalorder %s216, %s217
      %p231 = scmp.eq.s32.totalorder %s29, 3
      %p232 = por %p230, %p231
      %p234 = scmp.ne.s32.totalorder %s217, %s233
      %p235 = scmp.eq.s32.totalorder %s29, 0
      %p236 = por %p234, %p235
      %p237 = scmp.le.s32.totalorder 1, %s23
      %p238 = scmp.lt.s32.totalorder %s23, 5
      %p239 = pnand %p237, %p238
      %p240 = pneg %p239
      // Predicated region
      $region9: #{gcn_sortk_pool_encoder.11} parent=5 // pred_check
        _
      $region10: #{gcn_sortk_pool_encoder.11} parent=5 // pred_check_branch
        %242 = sbr.rel (%p239) target = $region12
      $region11: #{gcn_sortk_pool_encoder.11} parent=5 // pred_region
        %s243 = ssub.s32 %s23, 1
        // Predicated region
        $region13: #{gcn_sortk_pool_encoder.11} parent=11 // pred_check
          %p244 = pneg %p140
        $region14: #{gcn_sortk_pool_encoder.11} parent=11 // pred_check_branch
          %246 = sbr.rel (%p244) target = $region16
        $region15: #{gcn_sortk_pool_encoder.11} parent=11 // pred_region
          _
        $region16: #{gcn_sortk_pool_encoder.11} parent=11 // pred_fallthru
          _
        // Predicated region
        $region17: #{gcn_sortk_pool_encoder.11} parent=11 // pred_check
          %p247 = pneg %p161
        $region18: #{gcn_sortk_pool_encoder.11} parent=11 // pred_check_branch
          %249 = sbr.rel (%p247) target = $region20
        $region19: #{gcn_sortk_pool_encoder.11} parent=11 // pred_region
          _
        $region20: #{gcn_sortk_pool_encoder.11} parent=11 // pred_fallthru
          _
        // Predicated region
        $region21: #{gcn_sortk_pool_encoder.11} parent=11 // pred_check
          %p250 = pneg %p182
        $region22: #{gcn_sortk_pool_encoder.11} parent=11 // pred_check_branch
          %252 = sbr.rel (%p250) target = $region24
        $region23: #{gcn_sortk_pool_encoder.11} parent=11 // pred_region
          _
        $region24: #{gcn_sortk_pool_encoder.11} parent=11 // pred_fallthru
          _
        // Predicated region
        $region25: #{gcn_sortk_pool_encoder.11} parent=11 // pred_check
          %p253 = pneg %p203
        $region26: #{gcn_sortk_pool_encoder.11} parent=11 // pred_check_branch
          %255 = sbr.rel (%p253) target = $region28
        $region27: #{gcn_sortk_pool_encoder.11} parent=11 // pred_region
          _
        $region28: #{gcn_sortk_pool_encoder.11} parent=11 // pred_fallthru
          _
      $region12: #{gcn_sortk_pool_encoder.11} parent=5 // pred_fallthru
        _
      %p256 = scmp.lt.s32.totalorder %s23, 4
      // Predicated region
      $region29: #{gcn_sortk_pool_encoder.11} parent=5 // pred_check
        %p257 = pneg %p256
      $region30: #{gcn_sortk_pool_encoder.11} parent=5 // pred_check_branch
        %259 = sbr.rel (%p257) target = $region32
      $region31: #{gcn_sortk_pool_encoder.11} parent=5 // pred_region
        // Predicated region
        $region33: #{gcn_sortk_pool_encoder.11} parent=31 // pred_check
          %p260 = pneg %p57
        $region34: #{gcn_sortk_pool_encoder.11} parent=31 // pred_check_branch
          %262 = sbr.rel (%p260) target = $region36
        $region35: #{gcn_sortk_pool_encoder.11} parent=31 // pred_region
          %p263 = scmp.lt.s32.totalorder %s30, 1
          %s264 = scalar_select %p263, %s30, 1
          %p265 = scmp.lt.s32.totalorder %s31, 1
          %s266 = scalar_select %p265, %s31, 1
          %s267 = smul.addr %s264, 2
          %s268 = sadd.s32 %s266, %s267
          %s269 = smul.addr %s268, 8
          %s270 = scalar_lea.vmem %s1, %s269
        $region36: #{gcn_sortk_pool_encoder.11} parent=31 // pred_fallthru
          _
        // Predicated region
        $region37: #{gcn_sortk_pool_encoder.11} parent=31 // pred_check
          %p271 = pneg %p85
        $region38: #{gcn_sortk_pool_encoder.11} parent=31 // pred_check_branch
          %273 = sbr.rel (%p271) target = $region40
        $region39: #{gcn_sortk_pool_encoder.11} parent=31 // pred_region
          %p274 = scmp.lt.s32.totalorder %s30, 1
          %s275 = scalar_select %p274, %s30, 1
          %p276 = scmp.lt.s32.totalorder %s31, 1
          %s277 = scalar_select %p276, %s31, 1
          %s278 = smul.addr %s275, 2
          %s279 = sadd.s32 %s277, %s278
          %s280 = smul.addr %s279, 8
          %s281 = scalar_lea.vmem %s2, %s280
        $region40: #{gcn_sortk_pool_encoder.11} parent=31 // pred_fallthru
          _
        // Predicated region
        $region41: #{gcn_sortk_pool_encoder.11} parent=31 // pred_check
          %p282 = pneg %p113
        $region42: #{gcn_sortk_pool_encoder.11} parent=31 // pred_check_branch
          %284 = sbr.rel (%p282) target = $region44
        $region43: #{gcn_sortk_pool_encoder.11} parent=31 // pred_region
          %p285 = scmp.lt.s32.totalorder %s30, 1
          %s286 = scalar_select %p285, %s30, 1
          %p287 = scmp.lt.s32.totalorder %s31, 1
          %s288 = scalar_select %p287, %s31, 1
          %s289 = smul.addr %s286, 2
          %s290 = sadd.s32 %s288, %s289
          %s291 = smul.addr %s290, 8
          %s292 = scalar_lea.vmem %s3, %s291
        $region44: #{gcn_sortk_pool_encoder.11} parent=31 // pred_fallthru
          _
      $region32: #{gcn_sortk_pool_encoder.11} parent=5 // pred_fallthru
        _
      %p293 = scmp.le.s32.totalorder 1, %s23
      %p294 = scmp.lt.s32.totalorder %s23, 5
      %p295 = pnand %p293, %p294
      %p296 = pneg %p295
      // Predicated region
      $region45: #{gcn_sortk_pool_encoder.11} parent=5 // pred_check
        _
      $region46: #{gcn_sortk_pool_encoder.11} parent=5 // pred_check_branch
        %298 = sbr.rel (%p295) target = $region48
      $region47: #{gcn_sortk_pool_encoder.11} parent=5 // pred_region
        %s299 = ssub.s32 %s23, 1
        %p300 = scmp.lt.s32.totalorder %s32, 1
        %s301 = scalar_select %p300, %s32, 1
        %p302 = scmp.lt.s32.totalorder %s33, 1
        %s303 = scalar_select %p302, %s33, 1
        %s304 = smul.addr %s301, 2
        %s305 = sadd.s32 %s303, %s304
        %s306 = smul.addr %s305, 8
        %s307 = scalar_lea.vmem %s1, %s306
        %p308 = pneg %p63
        %p309 = pneg %p60
        %p310 = scmp.lt.s32.totalorder %s32, 1
        %s311 = scalar_select %p310, %s32, 1
        %p312 = scmp.lt.s32.totalorder %s33, 1
        %s313 = scalar_select %p312, %s33, 1
        %s314 = smul.addr %s311, 2
        %s315 = sadd.s32 %s313, %s314
        %s316 = smul.addr %s315, 8
        %s317 = scalar_lea.vmem %s2, %s316
        %p318 = pneg %p91
        %p319 = pneg %p88
        %p320 = scmp.lt.s32.totalorder %s32, 1
        %s321 = scalar_select %p320, %s32, 1
        %p322 = scmp.lt.s32.totalorder %s33, 1
        %s323 = scalar_select %p322, %s33, 1
        %s324 = smul.addr %s321, 2
        %s325 = sadd.s32 %s323, %s324
        %s326 = smul.addr %s325, 8
        %s327 = scalar_lea.vmem %s3, %s326
        %p328 = pneg %p119
        %p329 = pneg %p116
        %p330 = pneg %p140
        %p331 = pneg %p137
        %p332 = pneg %p161
        %p333 = pneg %p158
        %p334 = pneg %p182
        %p335 = pneg %p179
        %p336 = pneg %p203
        %p337 = pneg %p200
        %p338 = pneg %p229
        %p339 = pneg %p226
        %s340 = sand.u32 %s216, 1
        %s341 = scalar_lea.sflag [#allocation8], %s340
        %s342 = sand.u32 %s216, 1
        %s343 = scalar_lea.vmem [#allocation7], %s342
        %p344 = scmp.lt.s32.totalorder %s32, 1
        %s345 = scalar_select %p344, %s32, 1
        %p346 = scmp.lt.s32.totalorder %s33, 1
        %s347 = scalar_select %p346, %s33, 1
        %s348 = smul.addr %s345, 2
        %s349 = sadd.s32 %s347, %s348
        %s350 = smul.addr %s349, 8
        %s351 = scalar_lea.vmem %s1, %s350
        %p352 = scmp.lt.s32.totalorder %s32, 1
        %s353 = scalar_select %p352, %s32, 1
        %p354 = scmp.lt.s32.totalorder %s33, 1
        %s355 = scalar_select %p354, %s33, 1
        %s356 = smul.addr %s353, 2
        %s357 = sadd.s32 %s355, %s356
        %s358 = smul.addr %s357, 8
        %s359 = scalar_lea.vmem %s2, %s358
        %p360 = scmp.lt.s32.totalorder %s32, 1
        %s361 = scalar_select %p360, %s32, 1
        %p362 = scmp.lt.s32.totalorder %s33, 1
        %s363 = scalar_select %p362, %s33, 1
        %s364 = smul.addr %s361, 2
        %s365 = sadd.s32 %s363, %s364
        %s366 = smul.addr %s365, 8
        %s367 = scalar_lea.vmem %s3, %s366
        %p368 = scmp.eq.s32.totalorder %s33, 0
        // Predicated region
        $region49: #{gcn_sortk_pool_encoder.11} parent=47 // pred_check
          %p369 = pneg %p368
        $region50: #{gcn_sortk_pool_encoder.11} parent=47 // pred_check_branch
          %371 = sbr.rel (%p369) target = $region52
        $region51: #{gcn_sortk_pool_encoder.11} parent=47 // pred_region
          %vm372 = vcmask 2048
          %373 = vst.msk [vmem:[#allocation2] sm:$0x7] %vm372, -inf
          %v374 = vlaneseq
          %v375 = vshrl.u32 %v374, 7
          %v376 = vadd.s32 %v375, 1073741824
          %377 = vst.msk [vmem:[#allocation3] sm:$0x7] %vm372, %v376
          %vm378 = vcmask 92160
          %379 = vst.msk [vmem:[#allocation4] sm:$0x7] %vm378, 0.0
        $region52: #{gcn_sortk_pool_encoder.11} parent=47 // pred_fallthru
          _
        %s380 = smul.u32 %s33, 8
        %v381 = vlaneseq
        %v382 = vshrl.u32 %v381, 7
        %v383 = vstv %s380
        %v384 = vadd.s32 %v383, %v382
        %s385 = sld [smem:[#allocation6 + %s32]]
        %v386 = vstv %s385
        %vm387 = vcmp.lt.s32.totalorder %v384, %v386
        %v388 = vsel %vm387, 1, 0
        %v389 = vcvt.s32.f32 %v388
        %v390 = vld [vmem:[%s351] sm:$0xff]
        %v391 = vld [vmem:[%s4] sm:$0xff]
        %v392 = vld [vmem:[%s4 + $0x8] sm:$0xff]
        %v393 = vld [vmem:[%s359] sm:$0xff]
        %v394 = vld [vmem:[%s5] sm:$0xff]
        %v395 = vld [vmem:[%s5 + $0x8] sm:$0xff]
        %vm396 = vcmask 130048
        %v398 = vsel %vm396, %v393, 0
        %400 = vmatprep.subr.mxu0 0.0
        %401 = vmatpush1.msra.mxu0 0.0
        %402 = vmatprep.subr.mxu0 0.0
        %403 = vmatpush1.msra.mxu0 0.0
        %404 = vmatprep.subr.mxu0 0.0
        %405 = vmatpush1.msra.mxu0 0.0
        %406 = vmatprep.subr.mxu0 0.0
        %407 = vmatpush1.msra.mxu0 0.0
        %408 = vmatprep.subr.mxu0 0.0
        %409 = vmatpush1.msra.mxu0 0.0
        %410 = vmatprep.subr.mxu0 0.0
        %411 = vmatpush1.msra.mxu0 0.0
        %412 = vmatprep.subr.mxu0 0.0
        %413 = vmatpush1.msra.mxu0 0.0
        %414 = vmatprep.subr.mxu0 0.0
        %415 = vmatpush1.msra.mxu0 0.0
        %416 = vmatprep.subr.mxu0 0.0
        %417 = vmatpush1.msra.mxu0 0.0
        %418 = vmatprep.subr.mxu0 0.0
        %419 = vmatpush1.msra.mxu0 0.0
        %420 = vmatprep.subr.mxu0 0.0
        %421 = vmatpush1.msra.mxu0 0.0
        %422 = vmatprep.subr.mxu0 0.0
        %423 = vmatpush1.msra.mxu0 0.0
        %424 = vmatprep.subr.mxu0 0.0
        %425 = vmatpush1.msra.mxu0 0.0
        %426 = vmatprep.subr.mxu0 0.0
        %427 = vmatpush1.msra.mxu0 0.0
        %428 = vmatprep.subr.mxu0 0.0
        %v429 = vand.u32 %v395, 4294901760
        %430 = vmatpush1.msra.mxu0 %v429
        %431 = vmatprep.subr.mxu0 0.0
        %v432 = vand.u32 %v394, 4294901760
        %433 = vmatpush1.msra.mxu0 %v432
        %434 = vmatprep.subr.mxu0 0.0
        %435 = vmatpush2.msra.mxu0 0.0
        %436 = vmatprep.subr.mxu0 0.0
        %437 = vmatpush2.msra.mxu0 0.0
        %438 = vmatprep.subr.mxu0 0.0
        %439 = vmatpush2.msra.mxu0 0.0
        %440 = vmatprep.subr.mxu0 0.0
        %441 = vmatpush2.msra.mxu0 0.0
        %442 = vmatprep.subr.mxu0 0.0
        %443 = vmatpush2.msra.mxu0 0.0
        %444 = vmatprep.subr.mxu0 0.0
        %445 = vmatpush2.msra.mxu0 0.0
        %446 = vmatprep.subr.mxu0 0.0
        %447 = vmatpush2.msra.mxu0 0.0
        %448 = vmatprep.subr.mxu0 0.0
        %449 = vmatpush2.msra.mxu0 0.0
        %450 = vmatprep.subr.mxu0 0.0
        %451 = vmatpush2.msra.mxu0 0.0
        %452 = vmatprep.subr.mxu0 0.0
        %453 = vmatpush2.msra.mxu0 0.0
        %454 = vmatprep.subr.mxu0 0.0
        %455 = vmatpush2.msra.mxu0 0.0
        %456 = vmatprep.subr.mxu0 0.0
        %457 = vmatpush2.msra.mxu0 0.0
        %458 = vmatprep.subr.mxu0 0.0
        %459 = vmatpush2.msra.mxu0 0.0
        %460 = vmatprep.subr.mxu0 0.0
        %461 = vmatpush2.msra.mxu0 0.0
        %462 = vmatprep.subr.mxu0 0.0
        %463 = vmatpush2.msra.mxu0 0.0
        %464 = vmatprep.subr.mxu0 0.0
        %465 = vmatpush2.msra.mxu0 0.0
        %466 = vmatprep.mubr.f32.mxu0 0.0
        %v467 = vand.u32 %v398, 4294901760
        %v468 = vsub.f32 %v398, %v467
        %v469 = vand.u32 %v468, 4294901760
        %v470 = vsub.f32 %v468, %v469
        %v471 = vand.u32 %v470, 4294901760
        %472 = vmatmul.mubr.f32.gmra.mxu0 %v471
        %v473 = vpop.f32.mrf.mxu0
        %v474 = vadd.f32 0.0, %v473
        %v475 = vpop.f32.mrf.mxu0
        %476 = vdwg.mxu0
        %477 = vmatprep.subr.mxu0 0.0
        %478 = vmatpush1.msra.mxu0 0.0
        %479 = vmatprep.subr.mxu0 0.0
        %480 = vmatpush1.msra.mxu0 0.0
        %481 = vmatprep.subr.mxu0 0.0
        %482 = vmatpush1.msra.mxu0 0.0
        %483 = vmatprep.subr.mxu0 0.0
        %484 = vmatpush1.msra.mxu0 0.0
        %485 = vmatprep.subr.mxu0 0.0
        %486 = vmatpush1.msra.mxu0 0.0
        %487 = vmatprep.subr.mxu0 0.0
        %488 = vmatpush1.msra.mxu0 0.0
        %489 = vmatprep.subr.mxu0 0.0
        %490 = vmatpush1.msra.mxu0 0.0
        %491 = vmatprep.subr.mxu0 0.0
        %492 = vmatpush1.msra.mxu0 0.0
        %493 = vmatprep.subr.mxu0 0.0
        %494 = vmatpush1.msra.mxu0 0.0
        %495 = vmatprep.subr.mxu0 0.0
        %496 = vmatpush1.msra.mxu0 0.0
        %497 = vmatprep.subr.mxu0 0.0
        %498 = vmatpush1.msra.mxu0 0.0
        %499 = vmatprep.subr.mxu0 0.0
        %500 = vmatpush1.msra.mxu0 0.0
        %501 = vmatprep.subr.mxu0 0.0
        %502 = vmatpush1.msra.mxu0 0.0
        %503 = vmatprep.subr.mxu0 0.0
        %504 = vmatpush1.msra.mxu0 0.0
        %505 = vmatprep.subr.mxu0 0.0
        %v506 = vand.u32 %v395, 4294901760
        %v507 = vsub.f32 %v395, %v506
        %v508 = vand.u32 %v507, 4294901760
        %v509 = vsub.f32 %v507, %v508
        %v510 = vand.u32 %v509, 4294901760
        %511 = vmatpush1.msra.mxu0 %v510
        %512 = vmatprep.subr.mxu0 0.0
        %v513 = vand.u32 %v394, 4294901760
        %v514 = vsub.f32 %v394, %v513
        %v515 = vand.u32 %v514, 4294901760
        %v516 = vsub.f32 %v514, %v515
        %v517 = vand.u32 %v516, 4294901760
        %518 = vmatpush1.msra.mxu0 %v517
        %519 = vmatprep.subr.mxu0 0.0
        %520 = vmatpush2.msra.mxu0 0.0
        %521 = vmatprep.subr.mxu0 0.0
        %522 = vmatpush2.msra.mxu0 0.0
        %523 = vmatprep.subr.mxu0 0.0
        %524 = vmatpush2.msra.mxu0 0.0
        %525 = vmatprep.subr.mxu0 0.0
        %526 = vmatpush2.msra.mxu0 0.0
        %527 = vmatprep.subr.mxu0 0.0
        %528 = vmatpush2.msra.mxu0 0.0
        %529 = vmatprep.subr.mxu0 0.0
        %530 = vmatpush2.msra.mxu0 0.0
        %531 = vmatprep.subr.mxu0 0.0
        %532 = vmatpush2.msra.mxu0 0.0
        %533 = vmatprep.subr.mxu0 0.0
        %534 = vmatpush2.msra.mxu0 0.0
        %535 = vmatprep.subr.mxu0 0.0
        %536 = vmatpush2.msra.mxu0 0.0
        %537 = vmatprep.subr.mxu0 0.0
        %538 = vmatpush2.msra.mxu0 0.0
        %539 = vmatprep.subr.mxu0 0.0
        %540 = vmatpush2.msra.mxu0 0.0
        %541 = vmatprep.subr.mxu0 0.0
        %542 = vmatpush2.msra.mxu0 0.0
        %543 = vmatprep.subr.mxu0 0.0
        %544 = vmatpush2.msra.mxu0 0.0
        %545 = vmatprep.subr.mxu0 0.0
        %546 = vmatpush2.msra.mxu0 0.0
        %547 = vmatprep.subr.mxu0 0.0
        %548 = vmatpush2.msra.mxu0 0.0
        %549 = vmatprep.subr.mxu0 0.0
        %550 = vmatpush2.msra.mxu0 0.0
        %551 = vmatprep.mubr.f32.mxu0 0.0
        %v552 = vand.u32 %v398, 4294901760
        %553 = vmatmul.mubr.f32.gmra.mxu0 %v552
        %v554 = vpop.f32.mrf.mxu0
        %v555 = vadd.f32 %v474, %v554
        %v556 = vpop.f32.mrf.mxu0
        %557 = vdwg.mxu0
        %558 = vmatprep.subr.mxu0 0.0
        %559 = vmatpush1.msra.mxu0 0.0
        %560 = vmatprep.subr.mxu0 0.0
        %561 = vmatpush1.msra.mxu0 0.0
        %562 = vmatprep.subr.mxu0 0.0
        %563 = vmatpush1.msra.mxu0 0.0
        %564 = vmatprep.subr.mxu0 0.0
        %565 = vmatpush1.msra.mxu0 0.0
        %566 = vmatprep.subr.mxu0 0.0
        %567 = vmatpush1.msra.mxu0 0.0
        %568 = vmatprep.subr.mxu0 0.0
        %569 = vmatpush1.msra.mxu0 0.0
        %570 = vmatprep.subr.mxu0 0.0
        %571 = vmatpush1.msra.mxu0 0.0
        %572 = vmatprep.subr.mxu0 0.0
        %573 = vmatpush1.msra.mxu0 0.0
        %574 = vmatprep.subr.mxu0 0.0
        %575 = vmatpush1.msra.mxu0 0.0
        %576 = vmatprep.subr.mxu0 0.0
        %577 = vmatpush1.msra.mxu0 0.0
        %578 = vmatprep.subr.mxu0 0.0
        %579 = vmatpush1.msra.mxu0 0.0
        %580 = vmatprep.subr.mxu0 0.0
        %581 = vmatpush1.msra.mxu0 0.0
        %582 = vmatprep.subr.mxu0 0.0
        %583 = vmatpush1.msra.mxu0 0.0
        %584 = vmatprep.subr.mxu0 0.0
        %585 = vmatpush1.msra.mxu0 0.0
        %586 = vmatprep.subr.mxu0 0.0
        %v587 = vand.u32 %v395, 4294901760
        %v588 = vsub.f32 %v395, %v587
        %589 = vmatpush1.msra.mxu0 %v588
        %590 = vmatprep.subr.mxu0 0.0
        %v591 = vand.u32 %v394, 4294901760
        %v592 = vsub.f32 %v394, %v591
        %593 = vmatpush1.msra.mxu0 %v592
        %594 = vmatprep.subr.mxu0 0.0
        %595 = vmatpush2.msra.mxu0 0.0
        %596 = vmatprep.subr.mxu0 0.0
        %597 = vmatpush2.msra.mxu0 0.0
        %598 = vmatprep.subr.mxu0 0.0
        %599 = vmatpush2.msra.mxu0 0.0
        %600 = vmatprep.subr.mxu0 0.0
        %601 = vmatpush2.msra.mxu0 0.0
        %602 = vmatprep.subr.mxu0 0.0
        %603 = vmatpush2.msra.mxu0 0.0
        %604 = vmatprep.subr.mxu0 0.0
        %605 = vmatpush2.msra.mxu0 0.0
        %606 = vmatprep.subr.mxu0 0.0
        %607 = vmatpush2.msra.mxu0 0.0
        %608 = vmatprep.subr.mxu0 0.0
        %609 = vmatpush2.msra.mxu0 0.0
        %610 = vmatprep.subr.mxu0 0.0
        %611 = vmatpush2.msra.mxu0 0.0
        %612 = vmatprep.subr.mxu0 0.0
        %613 = vmatpush2.msra.mxu0 0.0
        %614 = vmatprep.subr.mxu0 0.0
        %615 = vmatpush2.msra.mxu0 0.0
        %616 = vmatprep.subr.mxu0 0.0
        %617 = vmatpush2.msra.mxu0 0.0
        %618 = vmatprep.subr.mxu0 0.0
        %619 = vmatpush2.msra.mxu0 0.0
        %620 = vmatprep.subr.mxu0 0.0
        %621 = vmatpush2.msra.mxu0 0.0
        %622 = vmatprep.subr.mxu0 0.0
        %623 = vmatpush2.msra.mxu0 0.0
        %624 = vmatprep.subr.mxu0 0.0
        %625 = vmatpush2.msra.mxu0 0.0
        %626 = vmatprep.mubr.f32.mxu0 0.0
        %v627 = vand.u32 %v398, 4294901760
        %v628 = vsub.f32 %v398, %v627
        %629 = vmatmul.mubr.f32.gmra.mxu0 %v628
        %v630 = vpop.f32.mrf.mxu0
        %v631 = vadd.f32 %v555, %v630
        %v632 = vpop.f32.mrf.mxu0
        %633 = vdwg.mxu0
        %634 = vmatprep.subr.mxu0 0.0
        %635 = vmatpush1.msra.mxu0 0.0
        %636 = vmatprep.subr.mxu0 0.0
        %637 = vmatpush1.msra.mxu0 0.0
        %638 = vmatprep.subr.mxu0 0.0
        %639 = vmatpush1.msra.mxu0 0.0
        %640 = vmatprep.subr.mxu0 0.0
        %641 = vmatpush1.msra.mxu0 0.0
        %642 = vmatprep.subr.mxu0 0.0
        %643 = vmatpush1.msra.mxu0 0.0
        %644 = vmatprep.subr.mxu0 0.0
        %645 = vmatpush1.msra.mxu0 0.0
        %646 = vmatprep.subr.mxu0 0.0
        %647 = vmatpush1.msra.mxu0 0.0
        %648 = vmatprep.subr.mxu0 0.0
        %649 = vmatpush1.msra.mxu0 0.0
        %650 = vmatprep.subr.mxu0 0.0
        %651 = vmatpush1.msra.mxu0 0.0
        %652 = vmatprep.subr.mxu0 0.0
        %653 = vmatpush1.msra.mxu0 0.0
        %654 = vmatprep.subr.mxu0 0.0
        %655 = vmatpush1.msra.mxu0 0.0
        %656 = vmatprep.subr.mxu0 0.0
        %657 = vmatpush1.msra.mxu0 0.0
        %658 = vmatprep.subr.mxu0 0.0
        %659 = vmatpush1.msra.mxu0 0.0
        %660 = vmatprep.subr.mxu0 0.0
        %661 = vmatpush1.msra.mxu0 0.0
        %662 = vmatprep.subr.mxu0 0.0
        %v663 = vand.u32 %v395, 4294901760
        %664 = vmatpush1.msra.mxu0 %v663
        %665 = vmatprep.subr.mxu0 0.0
        %v666 = vand.u32 %v394, 4294901760
        %667 = vmatpush1.msra.mxu0 %v666
        %668 = vmatprep.subr.mxu0 0.0
        %669 = vmatpush2.msra.mxu0 0.0
        %670 = vmatprep.subr.mxu0 0.0
        %671 = vmatpush2.msra.mxu0 0.0
        %672 = vmatprep.subr.mxu0 0.0
        %673 = vmatpush2.msra.mxu0 0.0
        %674 = vmatprep.subr.mxu0 0.0
        %675 = vmatpush2.msra.mxu0 0.0
        %676 = vmatprep.subr.mxu0 0.0
        %677 = vmatpush2.msra.mxu0 0.0
        %678 = vmatprep.subr.mxu0 0.0
        %679 = vmatpush2.msra.mxu0 0.0
        %680 = vmatprep.subr.mxu0 0.0
        %681 = vmatpush2.msra.mxu0 0.0
        %682 = vmatprep.subr.mxu0 0.0
        %683 = vmatpush2.msra.mxu0 0.0
        %684 = vmatprep.subr.mxu0 0.0
        %685 = vmatpush2.msra.mxu0 0.0
        %686 = vmatprep.subr.mxu0 0.0
        %687 = vmatpush2.msra.mxu0 0.0
        %688 = vmatprep.subr.mxu0 0.0
        %689 = vmatpush2.msra.mxu0 0.0
        %690 = vmatprep.subr.mxu0 0.0
        %691 = vmatpush2.msra.mxu0 0.0
        %692 = vmatprep.subr.mxu0 0.0
        %693 = vmatpush2.msra.mxu0 0.0
        %694 = vmatprep.subr.mxu0 0.0
        %695 = vmatpush2.msra.mxu0 0.0
        %696 = vmatprep.subr.mxu0 0.0
        %697 = vmatpush2.msra.mxu0 0.0
        %698 = vmatprep.subr.mxu0 0.0
        %699 = vmatpush2.msra.mxu0 0.0
        %700 = vmatprep.mubr.f32.mxu0 0.0
        %v701 = vand.u32 %v398, 4294901760
        %v702 = vsub.f32 %v398, %v701
        %v703 = vand.u32 %v702, 4294901760
        %704 = vmatmul.mubr.f32.gmra.mxu0 %v703
        %v705 = vpop.f32.mrf.mxu0
        %v706 = vadd.f32 %v631, %v705
        %v707 = vpop.f32.mrf.mxu0
        %708 = vdwg.mxu0
        %709 = vmatprep.subr.mxu0 0.0
        %710 = vmatpush1.msra.mxu0 0.0
        %711 = vmatprep.subr.mxu0 0.0
        %712 = vmatpush1.msra.mxu0 0.0
        %713 = vmatprep.subr.mxu0 0.0
        %714 = vmatpush1.msra.mxu0 0.0
        %715 = vmatprep.subr.mxu0 0.0
        %716 = vmatpush1.msra.mxu0 0.0
        %717 = vmatprep.subr.mxu0 0.0
        %718 = vmatpush1.msra.mxu0 0.0
        %719 = vmatprep.subr.mxu0 0.0
        %720 = vmatpush1.msra.mxu0 0.0
        %721 = vmatprep.subr.mxu0 0.0
        %722 = vmatpush1.msra.mxu0 0.0
        %723 = vmatprep.subr.mxu0 0.0
        %724 = vmatpush1.msra.mxu0 0.0
        %725 = vmatprep.subr.mxu0 0.0
        %726 = vmatpush1.msra.mxu0 0.0
        %727 = vmatprep.subr.mxu0 0.0
        %728 = vmatpush1.msra.mxu0 0.0
        %729 = vmatprep.subr.mxu0 0.0
        %730 = vmatpush1.msra.mxu0 0.0
        %731 = vmatprep.subr.mxu0 0.0
        %732 = vmatpush1.msra.mxu0 0.0
        %733 = vmatprep.subr.mxu0 0.0
        %734 = vmatpush1.msra.mxu0 0.0
        %735 = vmatprep.subr.mxu0 0.0
        %736 = vmatpush1.msra.mxu0 0.0
        %737 = vmatprep.subr.mxu0 0.0
        %v738 = vand.u32 %v395, 4294901760
        %v739 = vsub.f32 %v395, %v738
        %v740 = vand.u32 %v739, 4294901760
        %741 = vmatpush1.msra.mxu0 %v740
        %742 = vmatprep.subr.mxu0 0.0
        %v743 = vand.u32 %v394, 4294901760
        %v744 = vsub.f32 %v394, %v743
        %v745 = vand.u32 %v744, 4294901760
        %746 = vmatpush1.msra.mxu0 %v745
        %747 = vmatprep.subr.mxu0 0.0
        %748 = vmatpush2.msra.mxu0 0.0
        %749 = vmatprep.subr.mxu0 0.0
        %750 = vmatpush2.msra.mxu0 0.0
        %751 = vmatprep.subr.mxu0 0.0
        %752 = vmatpush2.msra.mxu0 0.0
        %753 = vmatprep.subr.mxu0 0.0
        %754 = vmatpush2.msra.mxu0 0.0
        %755 = vmatprep.subr.mxu0 0.0
        %756 = vmatpush2.msra.mxu0 0.0
        %757 = vmatprep.subr.mxu0 0.0
        %758 = vmatpush2.msra.mxu0 0.0
        %759 = vmatprep.subr.mxu0 0.0
        %760 = vmatpush2.msra.mxu0 0.0
        %761 = vmatprep.subr.mxu0 0.0
        %762 = vmatpush2.msra.mxu0 0.0
        %763 = vmatprep.subr.mxu0 0.0
        %764 = vmatpush2.msra.mxu0 0.0
        %765 = vmatprep.subr.mxu0 0.0
        %766 = vmatpush2.msra.mxu0 0.0
        %767 = vmatprep.subr.mxu0 0.0
        %768 = vmatpush2.msra.mxu0 0.0
        %769 = vmatprep.subr.mxu0 0.0
        %770 = vmatpush2.msra.mxu0 0.0
        %771 = vmatprep.subr.mxu0 0.0
        %772 = vmatpush2.msra.mxu0 0.0
        %773 = vmatprep.subr.mxu0 0.0
        %774 = vmatpush2.msra.mxu0 0.0
        %775 = vmatprep.subr.mxu0 0.0
        %776 = vmatpush2.msra.mxu0 0.0
        %777 = vmatprep.subr.mxu0 0.0
        %778 = vmatpush2.msra.mxu0 0.0
        %779 = vmatprep.mubr.f32.mxu0 0.0
        %v780 = vand.u32 %v398, 4294901760
        %781 = vmatmul.mubr.f32.gmra.mxu0 %v780
        %v782 = vpop.f32.mrf.mxu0
        %v783 = vadd.f32 %v706, %v782
        %v784 = vpop.f32.mrf.mxu0
        %785 = vdwg.mxu0
        %786 = vmatprep.subr.mxu0 0.0
        %787 = vmatpush1.msra.mxu0 0.0
        %788 = vmatprep.subr.mxu0 0.0
        %789 = vmatpush1.msra.mxu0 0.0
        %790 = vmatprep.subr.mxu0 0.0
        %791 = vmatpush1.msra.mxu0 0.0
        %792 = vmatprep.subr.mxu0 0.0
        %793 = vmatpush1.msra.mxu0 0.0
        %794 = vmatprep.subr.mxu0 0.0
        %795 = vmatpush1.msra.mxu0 0.0
        %796 = vmatprep.subr.mxu0 0.0
        %797 = vmatpush1.msra.mxu0 0.0
        %798 = vmatprep.subr.mxu0 0.0
        %799 = vmatpush1.msra.mxu0 0.0
        %800 = vmatprep.subr.mxu0 0.0
        %801 = vmatpush1.msra.mxu0 0.0
        %802 = vmatprep.subr.mxu0 0.0
        %803 = vmatpush1.msra.mxu0 0.0
        %804 = vmatprep.subr.mxu0 0.0
        %805 = vmatpush1.msra.mxu0 0.0
        %806 = vmatprep.subr.mxu0 0.0
        %807 = vmatpush1.msra.mxu0 0.0
        %808 = vmatprep.subr.mxu0 0.0
        %809 = vmatpush1.msra.mxu0 0.0
        %810 = vmatprep.subr.mxu0 0.0
        %811 = vmatpush1.msra.mxu0 0.0
        %812 = vmatprep.subr.mxu0 0.0
        %813 = vmatpush1.msra.mxu0 0.0
        %814 = vmatprep.subr.mxu0 0.0
        %v815 = vand.u32 %v395, 4294901760
        %816 = vmatpush1.msra.mxu0 %v815
        %817 = vmatprep.subr.mxu0 0.0
        %v818 = vand.u32 %v394, 4294901760
        %819 = vmatpush1.msra.mxu0 %v818
        %820 = vmatprep.subr.mxu0 0.0
        %821 = vmatpush2.msra.mxu0 0.0
        %822 = vmatprep.subr.mxu0 0.0
        %823 = vmatpush2.msra.mxu0 0.0
        %824 = vmatprep.subr.mxu0 0.0
        %825 = vmatpush2.msra.mxu0 0.0
        %826 = vmatprep.subr.mxu0 0.0
        %827 = vmatpush2.msra.mxu0 0.0
        %828 = vmatprep.subr.mxu0 0.0
        %829 = vmatpush2.msra.mxu0 0.0
        %830 = vmatprep.subr.mxu0 0.0
        %831 = vmatpush2.msra.mxu0 0.0
        %832 = vmatprep.subr.mxu0 0.0
        %833 = vmatpush2.msra.mxu0 0.0
        %834 = vmatprep.subr.mxu0 0.0
        %835 = vmatpush2.msra.mxu0 0.0
        %836 = vmatprep.subr.mxu0 0.0
        %837 = vmatpush2.msra.mxu0 0.0
        %838 = vmatprep.subr.mxu0 0.0
        %839 = vmatpush2.msra.mxu0 0.0
        %840 = vmatprep.subr.mxu0 0.0
        %841 = vmatpush2.msra.mxu0 0.0
        %842 = vmatprep.subr.mxu0 0.0
        %843 = vmatpush2.msra.mxu0 0.0
        %844 = vmatprep.subr.mxu0 0.0
        %845 = vmatpush2.msra.mxu0 0.0
        %846 = vmatprep.subr.mxu0 0.0
        %847 = vmatpush2.msra.mxu0 0.0
        %848 = vmatprep.subr.mxu0 0.0
        %849 = vmatpush2.msra.mxu0 0.0
        %850 = vmatprep.subr.mxu0 0.0
        %851 = vmatpush2.msra.mxu0 0.0
        %852 = vmatprep.mubr.f32.mxu0 0.0
        %v853 = vand.u32 %v398, 4294901760
        %854 = vmatmul.mubr.f32.gmra.mxu0 %v853
        %v855 = vpop.f32.mrf.mxu0
        %v856 = vadd.f32 %v783, %v855
        %v857 = vpop.f32.mrf.mxu0
        %858 = vdwg.mxu0
        %v860 = vsel %vm396, %v390, 0
        %862 = vmatprep.subr.mxu0 0.0
        %863 = vmatpush1.msra.mxu0 0.0
        %864 = vmatprep.subr.mxu0 0.0
        %865 = vmatpush1.msra.mxu0 0.0
        %866 = vmatprep.subr.mxu0 0.0
        %867 = vmatpush1.msra.mxu0 0.0
        %868 = vmatprep.subr.mxu0 0.0
        %869 = vmatpush1.msra.mxu0 0.0
        %870 = vmatprep.subr.mxu0 0.0
        %871 = vmatpush1.msra.mxu0 0.0
        %872 = vmatprep.subr.mxu0 0.0
        %873 = vmatpush1.msra.mxu0 0.0
        %874 = vmatprep.subr.mxu0 0.0
        %875 = vmatpush1.msra.mxu0 0.0
        %876 = vmatprep.subr.mxu0 0.0
        %877 = vmatpush1.msra.mxu0 0.0
        %878 = vmatprep.subr.mxu0 0.0
        %879 = vmatpush1.msra.mxu0 0.0
        %880 = vmatprep.subr.mxu0 0.0
        %881 = vmatpush1.msra.mxu0 0.0
        %882 = vmatprep.subr.mxu0 0.0
        %883 = vmatpush1.msra.mxu0 0.0
        %884 = vmatprep.subr.mxu0 0.0
        %885 = vmatpush1.msra.mxu0 0.0
        %886 = vmatprep.subr.mxu0 0.0
        %887 = vmatpush1.msra.mxu0 0.0
        %888 = vmatprep.subr.mxu0 0.0
        %889 = vmatpush1.msra.mxu0 0.0
        %890 = vmatprep.subr.mxu0 0.0
        %v891 = vand.u32 %v392, 4294901760
        %892 = vmatpush1.msra.mxu0 %v891
        %893 = vmatprep.subr.mxu0 0.0
        %v894 = vand.u32 %v391, 4294901760
        %895 = vmatpush1.msra.mxu0 %v894
        %896 = vmatprep.subr.mxu0 0.0
        %897 = vmatpush2.msra.mxu0 0.0
        %898 = vmatprep.subr.mxu0 0.0
        %899 = vmatpush2.msra.mxu0 0.0
        %900 = vmatprep.subr.mxu0 0.0
        %901 = vmatpush2.msra.mxu0 0.0
        %902 = vmatprep.subr.mxu0 0.0
        %903 = vmatpush2.msra.mxu0 0.0
        %904 = vmatprep.subr.mxu0 0.0
        %905 = vmatpush2.msra.mxu0 0.0
        %906 = vmatprep.subr.mxu0 0.0
        %907 = vmatpush2.msra.mxu0 0.0
        %908 = vmatprep.subr.mxu0 0.0
        %909 = vmatpush2.msra.mxu0 0.0
        %910 = vmatprep.subr.mxu0 0.0
        %911 = vmatpush2.msra.mxu0 0.0
        %912 = vmatprep.subr.mxu0 0.0
        %913 = vmatpush2.msra.mxu0 0.0
        %914 = vmatprep.subr.mxu0 0.0
        %915 = vmatpush2.msra.mxu0 0.0
        %916 = vmatprep.subr.mxu0 0.0
        %917 = vmatpush2.msra.mxu0 0.0
        %918 = vmatprep.subr.mxu0 0.0
        %919 = vmatpush2.msra.mxu0 0.0
        %920 = vmatprep.subr.mxu0 0.0
        %921 = vmatpush2.msra.mxu0 0.0
        %922 = vmatprep.subr.mxu0 0.0
        %923 = vmatpush2.msra.mxu0 0.0
        %924 = vmatprep.subr.mxu0 0.0
        %925 = vmatpush2.msra.mxu0 0.0
        %926 = vmatprep.subr.mxu0 0.0
        %927 = vmatpush2.msra.mxu0 0.0
        %928 = vmatprep.mubr.f32.mxu0 0.0
        %v929 = vand.u32 %v860, 4294901760
        %v930 = vsub.f32 %v860, %v929
        %v931 = vand.u32 %v930, 4294901760
        %v932 = vsub.f32 %v930, %v931
        %v933 = vand.u32 %v932, 4294901760
        %934 = vmatmul.mubr.f32.gmra.mxu0 %v933
        %v935 = vpop.f32.mrf.mxu0
        %v936 = vadd.f32 %v856, %v935
        %v937 = vpop.f32.mrf.mxu0
        %938 = vdwg.mxu0
        %939 = vmatprep.subr.mxu0 0.0
        %940 = vmatpush1.msra.mxu0 0.0
        %941 = vmatprep.subr.mxu0 0.0
        %942 = vmatpush1.msra.mxu0 0.0
        %943 = vmatprep.subr.mxu0 0.0
        %944 = vmatpush1.msra.mxu0 0.0
        %945 = vmatprep.subr.mxu0 0.0
        %946 = vmatpush1.msra.mxu0 0.0
        %947 = vmatprep.subr.mxu0 0.0
        %948 = vmatpush1.msra.mxu0 0.0
        %949 = vmatprep.subr.mxu0 0.0
        %950 = vmatpush1.msra.mxu0 0.0
        %951 = vmatprep.subr.mxu0 0.0
        %952 = vmatpush1.msra.mxu0 0.0
        %953 = vmatprep.subr.mxu0 0.0
        %954 = vmatpush1.msra.mxu0 0.0
        %955 = vmatprep.subr.mxu0 0.0
        %956 = vmatpush1.msra.mxu0 0.0
        %957 = vmatprep.subr.mxu0 0.0
        %958 = vmatpush1.msra.mxu0 0.0
        %959 = vmatprep.subr.mxu0 0.0
        %960 = vmatpush1.msra.mxu0 0.0
        %961 = vmatprep.subr.mxu0 0.0
        %962 = vmatpush1.msra.mxu0 0.0
        %963 = vmatprep.subr.mxu0 0.0
        %964 = vmatpush1.msra.mxu0 0.0
        %965 = vmatprep.subr.mxu0 0.0
        %966 = vmatpush1.msra.mxu0 0.0
        %967 = vmatprep.subr.mxu0 0.0
        %v968 = vand.u32 %v392, 4294901760
        %v969 = vsub.f32 %v392, %v968
        %v970 = vand.u32 %v969, 4294901760
        %v971 = vsub.f32 %v969, %v970
        %v972 = vand.u32 %v971, 4294901760
        %973 = vmatpush1.msra.mxu0 %v972
        %974 = vmatprep.subr.mxu0 0.0
        %v975 = vand.u32 %v391, 4294901760
        %v976 = vsub.f32 %v391, %v975
        %v977 = vand.u32 %v976, 4294901760
        %v978 = vsub.f32 %v976, %v977
        %v979 = vand.u32 %v978, 4294901760
        %980 = vmatpush1.msra.mxu0 %v979
        %981 = vmatprep.subr.mxu0 0.0
        %982 = vmatpush2.msra.mxu0 0.0
        %983 = vmatprep.subr.mxu0 0.0
        %984 = vmatpush2.msra.mxu0 0.0
        %985 = vmatprep.subr.mxu0 0.0
        %986 = vmatpush2.msra.mxu0 0.0
        %987 = vmatprep.subr.mxu0 0.0
        %988 = vmatpush2.msra.mxu0 0.0
        %989 = vmatprep.subr.mxu0 0.0
        %990 = vmatpush2.msra.mxu0 0.0
        %991 = vmatprep.subr.mxu0 0.0
        %992 = vmatpush2.msra.mxu0 0.0
        %993 = vmatprep.subr.mxu0 0.0
        %994 = vmatpush2.msra.mxu0 0.0
        %995 = vmatprep.subr.mxu0 0.0
        %996 = vmatpush2.msra.mxu0 0.0
        %997 = vmatprep.subr.mxu0 0.0
        %998 = vmatpush2.msra.mxu0 0.0
        %999 = vmatprep.subr.mxu0 0.0
        %1000 = vmatpush2.msra.mxu0 0.0
        %1001 = vmatprep.subr.mxu0 0.0
        %1002 = vmatpush2.msra.mxu0 0.0
        %1003 = vmatprep.subr.mxu0 0.0
        %1004 = vmatpush2.msra.mxu0 0.0
        %1005 = vmatprep.subr.mxu0 0.0
        %1006 = vmatpush2.msra.mxu0 0.0
        %1007 = vmatprep.subr.mxu0 0.0
        %1008 = vmatpush2.msra.mxu0 0.0
        %1009 = vmatprep.subr.mxu0 0.0
        %1010 = vmatpush2.msra.mxu0 0.0
        %1011 = vmatprep.subr.mxu0 0.0
        %1012 = vmatpush2.msra.mxu0 0.0
        %1013 = vmatprep.mubr.f32.mxu0 0.0
        %v1014 = vand.u32 %v860, 4294901760
        %1015 = vmatmul.mubr.f32.gmra.mxu0 %v1014
        %v1016 = vpop.f32.mrf.mxu0
        %v1017 = vadd.f32 %v936, %v1016
        %v1018 = vpop.f32.mrf.mxu0
        %1019 = vdwg.mxu0
        %1020 = vmatprep.subr.mxu0 0.0
        %1021 = vmatpush1.msra.mxu0 0.0
        %1022 = vmatprep.subr.mxu0 0.0
        %1023 = vmatpush1.msra.mxu0 0.0
        %1024 = vmatprep.subr.mxu0 0.0
        %1025 = vmatpush1.msra.mxu0 0.0
        %1026 = vmatprep.subr.mxu0 0.0
        %1027 = vmatpush1.msra.mxu0 0.0
        %1028 = vmatprep.subr.mxu0 0.0
        %1029 = vmatpush1.msra.mxu0 0.0
        %1030 = vmatprep.subr.mxu0 0.0
        %1031 = vmatpush1.msra.mxu0 0.0
        %1032 = vmatprep.subr.mxu0 0.0
        %1033 = vmatpush1.msra.mxu0 0.0
        %1034 = vmatprep.subr.mxu0 0.0
        %1035 = vmatpush1.msra.mxu0 0.0
        %1036 = vmatprep.subr.mxu0 0.0
        %1037 = vmatpush1.msra.mxu0 0.0
        %1038 = vmatprep.subr.mxu0 0.0
        %1039 = vmatpush1.msra.mxu0 0.0
        %1040 = vmatprep.subr.mxu0 0.0
        %1041 = vmatpush1.msra.mxu0 0.0
        %1042 = vmatprep.subr.mxu0 0.0
        %1043 = vmatpush1.msra.mxu0 0.0
        %1044 = vmatprep.subr.mxu0 0.0
        %1045 = vmatpush1.msra.mxu0 0.0
        %1046 = vmatprep.subr.mxu0 0.0
        %1047 = vmatpush1.msra.mxu0 0.0
        %1048 = vmatprep.subr.mxu0 0.0
        %v1049 = vand.u32 %v392, 4294901760
        %v1050 = vsub.f32 %v392, %v1049
        %1051 = vmatpush1.msra.mxu0 %v1050
        %1052 = vmatprep.subr.mxu0 0.0
        %v1053 = vand.u32 %v391, 4294901760
        %v1054 = vsub.f32 %v391, %v1053
        %1055 = vmatpush1.msra.mxu0 %v1054
        %1056 = vmatprep.subr.mxu0 0.0
        %1057 = vmatpush2.msra.mxu0 0.0
        %1058 = vmatprep.subr.mxu0 0.0
        %1059 = vmatpush2.msra.mxu0 0.0
        %1060 = vmatprep.subr.mxu0 0.0
        %1061 = vmatpush2.msra.mxu0 0.0
        %1062 = vmatprep.subr.mxu0 0.0
        %1063 = vmatpush2.msra.mxu0 0.0
        %1064 = vmatprep.subr.mxu0 0.0
        %1065 = vmatpush2.msra.mxu0 0.0
        %1066 = vmatprep.subr.mxu0 0.0
        %1067 = vmatpush2.msra.mxu0 0.0
        %1068 = vmatprep.subr.mxu0 0.0
        %1069 = vmatpush2.msra.mxu0 0.0
        %1070 = vmatprep.subr.mxu0 0.0
        %1071 = vmatpush2.msra.mxu0 0.0
        %1072 = vmatprep.subr.mxu0 0.0
        %1073 = vmatpush2.msra.mxu0 0.0
        %1074 = vmatprep.subr.mxu0 0.0
        %1075 = vmatpush2.msra.mxu0 0.0
        %1076 = vmatprep.subr.mxu0 0.0
        %1077 = vmatpush2.msra.mxu0 0.0
        %1078 = vmatprep.subr.mxu0 0.0
        %1079 = vmatpush2.msra.mxu0 0.0
        %1080 = vmatprep.subr.mxu0 0.0
        %1081 = vmatpush2.msra.mxu0 0.0
        %1082 = vmatprep.subr.mxu0 0.0
        %1083 = vmatpush2.msra.mxu0 0.0
        %1084 = vmatprep.subr.mxu0 0.0
        %1085 = vmatpush2.msra.mxu0 0.0
        %1086 = vmatprep.subr.mxu0 0.0
        %1087 = vmatpush2.msra.mxu0 0.0
        %1088 = vmatprep.mubr.f32.mxu0 0.0
        %v1089 = vand.u32 %v860, 4294901760
        %v1090 = vsub.f32 %v860, %v1089
        %1091 = vmatmul.mubr.f32.gmra.mxu0 %v1090
        %v1092 = vpop.f32.mrf.mxu0
        %v1093 = vadd.f32 %v1017, %v1092
        %v1094 = vpop.f32.mrf.mxu0
        %1095 = vdwg.mxu0
        %1096 = vmatprep.subr.mxu0 0.0
        %1097 = vmatpush1.msra.mxu0 0.0
        %1098 = vmatprep.subr.mxu0 0.0
        %1099 = vmatpush1.msra.mxu0 0.0
        %1100 = vmatprep.subr.mxu0 0.0
        %1101 = vmatpush1.msra.mxu0 0.0
        %1102 = vmatprep.subr.mxu0 0.0
        %1103 = vmatpush1.msra.mxu0 0.0
        %1104 = vmatprep.subr.mxu0 0.0
        %1105 = vmatpush1.msra.mxu0 0.0
        %1106 = vmatprep.subr.mxu0 0.0
        %1107 = vmatpush1.msra.mxu0 0.0
        %1108 = vmatprep.subr.mxu0 0.0
        %1109 = vmatpush1.msra.mxu0 0.0
        %1110 = vmatprep.subr.mxu0 0.0
        %1111 = vmatpush1.msra.mxu0 0.0
        %1112 = vmatprep.subr.mxu0 0.0
        %1113 = vmatpush1.msra.mxu0 0.0
        %1114 = vmatprep.subr.mxu0 0.0
        %1115 = vmatpush1.msra.mxu0 0.0
        %1116 = vmatprep.subr.mxu0 0.0
        %1117 = vmatpush1.msra.mxu0 0.0
        %1118 = vmatprep.subr.mxu0 0.0
        %1119 = vmatpush1.msra.mxu0 0.0
        %1120 = vmatprep.subr.mxu0 0.0
        %1121 = vmatpush1.msra.mxu0 0.0
        %1122 = vmatprep.subr.mxu0 0.0
        %1123 = vmatpush1.msra.mxu0 0.0
        %1124 = vmatprep.subr.mxu0 0.0
        %v1125 = vand.u32 %v392, 4294901760
        %1126 = vmatpush1.msra.mxu0 %v1125
        %1127 = vmatprep.subr.mxu0 0.0
        %v1128 = vand.u32 %v391, 4294901760
        %1129 = vmatpush1.msra.mxu0 %v1128
        %1130 = vmatprep.subr.mxu0 0.0
        %1131 = vmatpush2.msra.mxu0 0.0
        %1132 = vmatprep.subr.mxu0 0.0
        %1133 = vmatpush2.msra.mxu0 0.0
        %1134 = vmatprep.subr.mxu0 0.0
        %1135 = vmatpush2.msra.mxu0 0.0
        %1136 = vmatprep.subr.mxu0 0.0
        %1137 = vmatpush2.msra.mxu0 0.0
        %1138 = vmatprep.subr.mxu0 0.0
        %1139 = vmatpush2.msra.mxu0 0.0
        %1140 = vmatprep.subr.mxu0 0.0
        %1141 = vmatpush2.msra.mxu0 0.0
        %1142 = vmatprep.subr.mxu0 0.0
        %1143 = vmatpush2.msra.mxu0 0.0
        %1144 = vmatprep.subr.mxu0 0.0
        %1145 = vmatpush2.msra.mxu0 0.0
        %1146 = vmatprep.subr.mxu0 0.0
        %1147 = vmatpush2.msra.mxu0 0.0
        %1148 = vmatprep.subr.mxu0 0.0
        %1149 = vmatpush2.msra.mxu0 0.0
        %1150 = vmatprep.subr.mxu0 0.0
        %1151 = vmatpush2.msra.mxu0 0.0
        %1152 = vmatprep.subr.mxu0 0.0
        %1153 = vmatpush2.msra.mxu0 0.0
        %1154 = vmatprep.subr.mxu0 0.0
        %1155 = vmatpush2.msra.mxu0 0.0
        %1156 = vmatprep.subr.mxu0 0.0
        %1157 = vmatpush2.msra.mxu0 0.0
        %1158 = vmatprep.subr.mxu0 0.0
        %1159 = vmatpush2.msra.mxu0 0.0
        %1160 = vmatprep.subr.mxu0 0.0
        %1161 = vmatpush2.msra.mxu0 0.0
        %1162 = vmatprep.mubr.f32.mxu0 0.0
        %v1163 = vand.u32 %v860, 4294901760
        %v1164 = vsub.f32 %v860, %v1163
        %v1165 = vand.u32 %v1164, 4294901760
        %1166 = vmatmul.mubr.f32.gmra.mxu0 %v1165
        %v1167 = vpop.f32.mrf.mxu0
        %v1168 = vadd.f32 %v1093, %v1167
        %v1169 = vpop.f32.mrf.mxu0
        %1170 = vdwg.mxu0
        %1171 = vmatprep.subr.mxu0 0.0
        %1172 = vmatpush1.msra.mxu0 0.0
        %1173 = vmatprep.subr.mxu0 0.0
        %1174 = vmatpush1.msra.mxu0 0.0
        %1175 = vmatprep.subr.mxu0 0.0
        %1176 = vmatpush1.msra.mxu0 0.0
        %1177 = vmatprep.subr.mxu0 0.0
        %1178 = vmatpush1.msra.mxu0 0.0
        %1179 = vmatprep.subr.mxu0 0.0
        %1180 = vmatpush1.msra.mxu0 0.0
        %1181 = vmatprep.subr.mxu0 0.0
        %1182 = vmatpush1.msra.mxu0 0.0
        %1183 = vmatprep.subr.mxu0 0.0
        %1184 = vmatpush1.msra.mxu0 0.0
        %1185 = vmatprep.subr.mxu0 0.0
        %1186 = vmatpush1.msra.mxu0 0.0
        %1187 = vmatprep.subr.mxu0 0.0
        %1188 = vmatpush1.msra.mxu0 0.0
        %1189 = vmatprep.subr.mxu0 0.0
        %1190 = vmatpush1.msra.mxu0 0.0
        %1191 = vmatprep.subr.mxu0 0.0
        %1192 = vmatpush1.msra.mxu0 0.0
        %1193 = vmatprep.subr.mxu0 0.0
        %1194 = vmatpush1.msra.mxu0 0.0
        %1195 = vmatprep.subr.mxu0 0.0
        %1196 = vmatpush1.msra.mxu0 0.0
        %1197 = vmatprep.subr.mxu0 0.0
        %1198 = vmatpush1.msra.mxu0 0.0
        %1199 = vmatprep.subr.mxu0 0.0
        %v1200 = vand.u32 %v392, 4294901760
        %v1201 = vsub.f32 %v392, %v1200
        %v1202 = vand.u32 %v1201, 4294901760
        %1203 = vmatpush1.msra.mxu0 %v1202
        %1204 = vmatprep.subr.mxu0 0.0
        %v1205 = vand.u32 %v391, 4294901760
        %v1206 = vsub.f32 %v391, %v1205
        %v1207 = vand.u32 %v1206, 4294901760
        %1208 = vmatpush1.msra.mxu0 %v1207
        %1209 = vmatprep.subr.mxu0 0.0
        %1210 = vmatpush2.msra.mxu0 0.0
        %1211 = vmatprep.subr.mxu0 0.0
        %1212 = vmatpush2.msra.mxu0 0.0
        %1213 = vmatprep.subr.mxu0 0.0
        %1214 = vmatpush2.msra.mxu0 0.0
        %1215 = vmatprep.subr.mxu0 0.0
        %1216 = vmatpush2.msra.mxu0 0.0
        %1217 = vmatprep.subr.mxu0 0.0
        %1218 = vmatpush2.msra.mxu0 0.0
        %1219 = vmatprep.subr.mxu0 0.0
        %1220 = vmatpush2.msra.mxu0 0.0
        %1221 = vmatprep.subr.mxu0 0.0
        %1222 = vmatpush2.msra.mxu0 0.0
        %1223 = vmatprep.subr.mxu0 0.0
        %1224 = vmatpush2.msra.mxu0 0.0
        %1225 = vmatprep.subr.mxu0 0.0
        %1226 = vmatpush2.msra.mxu0 0.0
        %1227 = vmatprep.subr.mxu0 0.0
        %1228 = vmatpush2.msra.mxu0 0.0
        %1229 = vmatprep.subr.mxu0 0.0
        %1230 = vmatpush2.msra.mxu0 0.0
        %1231 = vmatprep.subr.mxu0 0.0
        %1232 = vmatpush2.msra.mxu0 0.0
        %1233 = vmatprep.subr.mxu0 0.0
        %1234 = vmatpush2.msra.mxu0 0.0
        %1235 = vmatprep.subr.mxu0 0.0
        %1236 = vmatpush2.msra.mxu0 0.0
        %1237 = vmatprep.subr.mxu0 0.0
        %1238 = vmatpush2.msra.mxu0 0.0
        %1239 = vmatprep.subr.mxu0 0.0
        %1240 = vmatpush2.msra.mxu0 0.0
        %1241 = vmatprep.mubr.f32.mxu0 0.0
        %v1242 = vand.u32 %v860, 4294901760
        %1243 = vmatmul.mubr.f32.gmra.mxu0 %v1242
        %v1244 = vpop.f32.mrf.mxu0
        %v1245 = vadd.f32 %v1168, %v1244
        %v1246 = vpop.f32.mrf.mxu0
        %1247 = vdwg.mxu0
        %1248 = vmatprep.subr.mxu0 0.0
        %1249 = vmatpush1.msra.mxu0 0.0
        %1250 = vmatprep.subr.mxu0 0.0
        %1251 = vmatpush1.msra.mxu0 0.0
        %1252 = vmatprep.subr.mxu0 0.0
        %1253 = vmatpush1.msra.mxu0 0.0
        %1254 = vmatprep.subr.mxu0 0.0
        %1255 = vmatpush1.msra.mxu0 0.0
        %1256 = vmatprep.subr.mxu0 0.0
        %1257 = vmatpush1.msra.mxu0 0.0
        %1258 = vmatprep.subr.mxu0 0.0
        %1259 = vmatpush1.msra.mxu0 0.0
        %1260 = vmatprep.subr.mxu0 0.0
        %1261 = vmatpush1.msra.mxu0 0.0
        %1262 = vmatprep.subr.mxu0 0.0
        %1263 = vmatpush1.msra.mxu0 0.0
        %1264 = vmatprep.subr.mxu0 0.0
        %1265 = vmatpush1.msra.mxu0 0.0
        %1266 = vmatprep.subr.mxu0 0.0
        %1267 = vmatpush1.msra.mxu0 0.0
        %1268 = vmatprep.subr.mxu0 0.0
        %1269 = vmatpush1.msra.mxu0 0.0
        %1270 = vmatprep.subr.mxu0 0.0
        %1271 = vmatpush1.msra.mxu0 0.0
        %1272 = vmatprep.subr.mxu0 0.0
        %1273 = vmatpush1.msra.mxu0 0.0
        %1274 = vmatprep.subr.mxu0 0.0
        %1275 = vmatpush1.msra.mxu0 0.0
        %1276 = vmatprep.subr.mxu0 0.0
        %v1277 = vand.u32 %v392, 4294901760
        %1278 = vmatpush1.msra.mxu0 %v1277
        %1279 = vmatprep.subr.mxu0 0.0
        %v1280 = vand.u32 %v391, 4294901760
        %1281 = vmatpush1.msra.mxu0 %v1280
        %1282 = vmatprep.subr.mxu0 0.0
        %1283 = vmatpush2.msra.mxu0 0.0
        %1284 = vmatprep.subr.mxu0 0.0
        %1285 = vmatpush2.msra.mxu0 0.0
        %1286 = vmatprep.subr.mxu0 0.0
        %1287 = vmatpush2.msra.mxu0 0.0
        %1288 = vmatprep.subr.mxu0 0.0
        %1289 = vmatpush2.msra.mxu0 0.0
        %1290 = vmatprep.subr.mxu0 0.0
        %1291 = vmatpush2.msra.mxu0 0.0
        %1292 = vmatprep.subr.mxu0 0.0
        %1293 = vmatpush2.msra.mxu0 0.0
        %1294 = vmatprep.subr.mxu0 0.0
        %1295 = vmatpush2.msra.mxu0 0.0
        %1296 = vmatprep.subr.mxu0 0.0
        %1297 = vmatpush2.msra.mxu0 0.0
        %1298 = vmatprep.subr.mxu0 0.0
        %1299 = vmatpush2.msra.mxu0 0.0
        %1300 = vmatprep.subr.mxu0 0.0
        %1301 = vmatpush2.msra.mxu0 0.0
        %1302 = vmatprep.subr.mxu0 0.0
        %1303 = vmatpush2.msra.mxu0 0.0
        %1304 = vmatprep.subr.mxu0 0.0
        %1305 = vmatpush2.msra.mxu0 0.0
        %1306 = vmatprep.subr.mxu0 0.0
        %1307 = vmatpush2.msra.mxu0 0.0
        %1308 = vmatprep.subr.mxu0 0.0
        %1309 = vmatpush2.msra.mxu0 0.0
        %1310 = vmatprep.subr.mxu0 0.0
        %1311 = vmatpush2.msra.mxu0 0.0
        %1312 = vmatprep.subr.mxu0 0.0
        %1313 = vmatpush2.msra.mxu0 0.0
        %1314 = vmatprep.mubr.f32.mxu0 0.0
        %v1315 = vand.u32 %v860, 4294901760
        %1316 = vmatmul.mubr.f32.gmra.mxu0 %v1315
        %v1317 = vpop.f32.mrf.mxu0
        %v1318 = vadd.f32 %v1245, %v1317
        %v1319 = vpop.f32.mrf.mxu0
        %1320 = vdwg.mxu0
        %v1321 = vld [vmem:[%s367] sm:$0xff]
        %v1322 = vld [vmem:[%s6] sm:$0xff]
        %v1323 = vld [vmem:[%s6 + $0x8] sm:$0xff]
        %v1325 = vsel %vm396, %v1321, 0
        %1327 = vmatprep.subr.mxu0 0.0
        %1328 = vmatpush1.msra.mxu0 0.0
        %1329 = vmatprep.subr.mxu0 0.0
        %1330 = vmatpush1.msra.mxu0 0.0
        %1331 = vmatprep.subr.mxu0 0.0
        %1332 = vmatpush1.msra.mxu0 0.0
        %1333 = vmatprep.subr.mxu0 0.0
        %1334 = vmatpush1.msra.mxu0 0.0
        %1335 = vmatprep.subr.mxu0 0.0
        %1336 = vmatpush1.msra.mxu0 0.0
        %1337 = vmatprep.subr.mxu0 0.0
        %1338 = vmatpush1.msra.mxu0 0.0
        %1339 = vmatprep.subr.mxu0 0.0
        %1340 = vmatpush1.msra.mxu0 0.0
        %1341 = vmatprep.subr.mxu0 0.0
        %1342 = vmatpush1.msra.mxu0 0.0
        %1343 = vmatprep.subr.mxu0 0.0
        %1344 = vmatpush1.msra.mxu0 0.0
        %1345 = vmatprep.subr.mxu0 0.0
        %1346 = vmatpush1.msra.mxu0 0.0
        %1347 = vmatprep.subr.mxu0 0.0
        %1348 = vmatpush1.msra.mxu0 0.0
        %1349 = vmatprep.subr.mxu0 0.0
        %1350 = vmatpush1.msra.mxu0 0.0
        %1351 = vmatprep.subr.mxu0 0.0
        %1352 = vmatpush1.msra.mxu0 0.0
        %1353 = vmatprep.subr.mxu0 0.0
        %1354 = vmatpush1.msra.mxu0 0.0
        %1355 = vmatprep.subr.mxu0 0.0
        %v1356 = vand.u32 %v1323, 4294901760
        %1357 = vmatpush1.msra.mxu0 %v1356
        %1358 = vmatprep.subr.mxu0 0.0
        %v1359 = vand.u32 %v1322, 4294901760
        %1360 = vmatpush1.msra.mxu0 %v1359
        %1361 = vmatprep.subr.mxu0 0.0
        %1362 = vmatpush2.msra.mxu0 0.0
        %1363 = vmatprep.subr.mxu0 0.0
        %1364 = vmatpush2.msra.mxu0 0.0
        %1365 = vmatprep.subr.mxu0 0.0
        %1366 = vmatpush2.msra.mxu0 0.0
        %1367 = vmatprep.subr.mxu0 0.0
        %1368 = vmatpush2.msra.mxu0 0.0
        %1369 = vmatprep.subr.mxu0 0.0
        %1370 = vmatpush2.msra.mxu0 0.0
        %1371 = vmatprep.subr.mxu0 0.0
        %1372 = vmatpush2.msra.mxu0 0.0
        %1373 = vmatprep.subr.mxu0 0.0
        %1374 = vmatpush2.msra.mxu0 0.0
        %1375 = vmatprep.subr.mxu0 0.0
        %1376 = vmatpush2.msra.mxu0 0.0
        %1377 = vmatprep.subr.mxu0 0.0
        %1378 = vmatpush2.msra.mxu0 0.0
        %1379 = vmatprep.subr.mxu0 0.0
        %1380 = vmatpush2.msra.mxu0 0.0
        %1381 = vmatprep.subr.mxu0 0.0
        %1382 = vmatpush2.msra.mxu0 0.0
        %1383 = vmatprep.subr.mxu0 0.0
        %1384 = vmatpush2.msra.mxu0 0.0
        %1385 = vmatprep.subr.mxu0 0.0
        %1386 = vmatpush2.msra.mxu0 0.0
        %1387 = vmatprep.subr.mxu0 0.0
        %1388 = vmatpush2.msra.mxu0 0.0
        %1389 = vmatprep.subr.mxu0 0.0
        %1390 = vmatpush2.msra.mxu0 0.0
        %1391 = vmatprep.subr.mxu0 0.0
        %1392 = vmatpush2.msra.mxu0 0.0
        %1393 = vmatprep.mubr.f32.mxu0 0.0
        %v1394 = vand.u32 %v1325, 4294901760
        %v1395 = vsub.f32 %v1325, %v1394
        %v1396 = vand.u32 %v1395, 4294901760
        %v1397 = vsub.f32 %v1395, %v1396
        %v1398 = vand.u32 %v1397, 4294901760
        %1399 = vmatmul.mubr.f32.gmra.mxu0 %v1398
        %v1400 = vpop.f32.mrf.mxu0
        %v1401 = vadd.f32 0.0, %v1400
        %v1402 = vpop.f32.mrf.mxu0
        %1403 = vdwg.mxu0
        %1404 = vmatprep.subr.mxu0 0.0
        %1405 = vmatpush1.msra.mxu0 0.0
        %1406 = vmatprep.subr.mxu0 0.0
        %1407 = vmatpush1.msra.mxu0 0.0
        %1408 = vmatprep.subr.mxu0 0.0
        %1409 = vmatpush1.msra.mxu0 0.0
        %1410 = vmatprep.subr.mxu0 0.0
        %1411 = vmatpush1.msra.mxu0 0.0
        %1412 = vmatprep.subr.mxu0 0.0
        %1413 = vmatpush1.msra.mxu0 0.0
        %1414 = vmatprep.subr.mxu0 0.0
        %1415 = vmatpush1.msra.mxu0 0.0
        %1416 = vmatprep.subr.mxu0 0.0
        %1417 = vmatpush1.msra.mxu0 0.0
        %1418 = vmatprep.subr.mxu0 0.0
        %1419 = vmatpush1.msra.mxu0 0.0
        %1420 = vmatprep.subr.mxu0 0.0
        %1421 = vmatpush1.msra.mxu0 0.0
        %1422 = vmatprep.subr.mxu0 0.0
        %1423 = vmatpush1.msra.mxu0 0.0
        %1424 = vmatprep.subr.mxu0 0.0
        %1425 = vmatpush1.msra.mxu0 0.0
        %1426 = vmatprep.subr.mxu0 0.0
        %1427 = vmatpush1.msra.mxu0 0.0
        %1428 = vmatprep.subr.mxu0 0.0
        %1429 = vmatpush1.msra.mxu0 0.0
        %1430 = vmatprep.subr.mxu0 0.0
        %1431 = vmatpush1.msra.mxu0 0.0
        %1432 = vmatprep.subr.mxu0 0.0
        %v1433 = vand.u32 %v1323, 4294901760
        %v1434 = vsub.f32 %v1323, %v1433
        %v1435 = vand.u32 %v1434, 4294901760
        %v1436 = vsub.f32 %v1434, %v1435
        %v1437 = vand.u32 %v1436, 4294901760
        %1438 = vmatpush1.msra.mxu0 %v1437
        %1439 = vmatprep.subr.mxu0 0.0
        %v1440 = vand.u32 %v1322, 4294901760
        %v1441 = vsub.f32 %v1322, %v1440
        %v1442 = vand.u32 %v1441, 4294901760
        %v1443 = vsub.f32 %v1441, %v1442
        %v1444 = vand.u32 %v1443, 4294901760
        %1445 = vmatpush1.msra.mxu0 %v1444
        %1446 = vmatprep.subr.mxu0 0.0
        %1447 = vmatpush2.msra.mxu0 0.0
        %1448 = vmatprep.subr.mxu0 0.0
        %1449 = vmatpush2.msra.mxu0 0.0
        %1450 = vmatprep.subr.mxu0 0.0
        %1451 = vmatpush2.msra.mxu0 0.0
        %1452 = vmatprep.subr.mxu0 0.0
        %1453 = vmatpush2.msra.mxu0 0.0
        %1454 = vmatprep.subr.mxu0 0.0
        %1455 = vmatpush2.msra.mxu0 0.0
        %1456 = vmatprep.subr.mxu0 0.0
        %1457 = vmatpush2.msra.mxu0 0.0
        %1458 = vmatprep.subr.mxu0 0.0
        %1459 = vmatpush2.msra.mxu0 0.0
        %1460 = vmatprep.subr.mxu0 0.0
        %1461 = vmatpush2.msra.mxu0 0.0
        %1462 = vmatprep.subr.mxu0 0.0
        %1463 = vmatpush2.msra.mxu0 0.0
        %1464 = vmatprep.subr.mxu0 0.0
        %1465 = vmatpush2.msra.mxu0 0.0
        %1466 = vmatprep.subr.mxu0 0.0
        %1467 = vmatpush2.msra.mxu0 0.0
        %1468 = vmatprep.subr.mxu0 0.0
        %1469 = vmatpush2.msra.mxu0 0.0
        %1470 = vmatprep.subr.mxu0 0.0
        %1471 = vmatpush2.msra.mxu0 0.0
        %1472 = vmatprep.subr.mxu0 0.0
        %1473 = vmatpush2.msra.mxu0 0.0
        %1474 = vmatprep.subr.mxu0 0.0
        %1475 = vmatpush2.msra.mxu0 0.0
        %1476 = vmatprep.subr.mxu0 0.0
        %1477 = vmatpush2.msra.mxu0 0.0
        %1478 = vmatprep.mubr.f32.mxu0 0.0
        %v1479 = vand.u32 %v1325, 4294901760
        %1480 = vmatmul.mubr.f32.gmra.mxu0 %v1479
        %v1481 = vpop.f32.mrf.mxu0
        %v1482 = vadd.f32 %v1401, %v1481
        %v1483 = vpop.f32.mrf.mxu0
        %1484 = vdwg.mxu0
        %1485 = vmatprep.subr.mxu0 0.0
        %1486 = vmatpush1.msra.mxu0 0.0
        %1487 = vmatprep.subr.mxu0 0.0
        %1488 = vmatpush1.msra.mxu0 0.0
        %1489 = vmatprep.subr.mxu0 0.0
        %1490 = vmatpush1.msra.mxu0 0.0
        %1491 = vmatprep.subr.mxu0 0.0
        %1492 = vmatpush1.msra.mxu0 0.0
        %1493 = vmatprep.subr.mxu0 0.0
        %1494 = vmatpush1.msra.mxu0 0.0
        %1495 = vmatprep.subr.mxu0 0.0
        %1496 = vmatpush1.msra.mxu0 0.0
        %1497 = vmatprep.subr.mxu0 0.0
        %1498 = vmatpush1.msra.mxu0 0.0
        %1499 = vmatprep.subr.mxu0 0.0
        %1500 = vmatpush1.msra.mxu0 0.0
        %1501 = vmatprep.subr.mxu0 0.0
        %1502 = vmatpush1.msra.mxu0 0.0
        %1503 = vmatprep.subr.mxu0 0.0
        %1504 = vmatpush1.msra.mxu0 0.0
        %1505 = vmatprep.subr.mxu0 0.0
        %1506 = vmatpush1.msra.mxu0 0.0
        %1507 = vmatprep.subr.mxu0 0.0
        %1508 = vmatpush1.msra.mxu0 0.0
        %1509 = vmatprep.subr.mxu0 0.0
        %1510 = vmatpush1.msra.mxu0 0.0
        %1511 = vmatprep.subr.mxu0 0.0
        %1512 = vmatpush1.msra.mxu0 0.0
        %1513 = vmatprep.subr.mxu0 0.0
        %v1514 = vand.u32 %v1323, 4294901760
        %v1515 = vsub.f32 %v1323, %v1514
        %1516 = vmatpush1.msra.mxu0 %v1515
        %1517 = vmatprep.subr.mxu0 0.0
        %v1518 = vand.u32 %v1322, 4294901760
        %v1519 = vsub.f32 %v1322, %v1518
        %1520 = vmatpush1.msra.mxu0 %v1519
        %1521 = vmatprep.subr.mxu0 0.0
        %1522 = vmatpush2.msra.mxu0 0.0
        %1523 = vmatprep.subr.mxu0 0.0
        %1524 = vmatpush2.msra.mxu0 0.0
        %1525 = vmatprep.subr.mxu0 0.0
        %1526 = vmatpush2.msra.mxu0 0.0
        %1527 = vmatprep.subr.mxu0 0.0
        %1528 = vmatpush2.msra.mxu0 0.0
        %1529 = vmatprep.subr.mxu0 0.0
        %1530 = vmatpush2.msra.mxu0 0.0
        %1531 = vmatprep.subr.mxu0 0.0
        %1532 = vmatpush2.msra.mxu0 0.0
        %1533 = vmatprep.subr.mxu0 0.0
        %1534 = vmatpush2.msra.mxu0 0.0
        %1535 = vmatprep.subr.mxu0 0.0
        %1536 = vmatpush2.msra.mxu0 0.0
        %1537 = vmatprep.subr.mxu0 0.0
        %1538 = vmatpush2.msra.mxu0 0.0
        %1539 = vmatprep.subr.mxu0 0.0
        %1540 = vmatpush2.msra.mxu0 0.0
        %1541 = vmatprep.subr.mxu0 0.0
        %1542 = vmatpush2.msra.mxu0 0.0
        %1543 = vmatprep.subr.mxu0 0.0
        %1544 = vmatpush2.msra.mxu0 0.0
        %1545 = vmatprep.subr.mxu0 0.0
        %1546 = vmatpush2.msra.mxu0 0.0
        %1547 = vmatprep.subr.mxu0 0.0
        %1548 = vmatpush2.msra.mxu0 0.0
        %1549 = vmatprep.subr.mxu0 0.0
        %1550 = vmatpush2.msra.mxu0 0.0
        %1551 = vmatprep.subr.mxu0 0.0
        %1552 = vmatpush2.msra.mxu0 0.0
        %1553 = vmatprep.mubr.f32.mxu0 0.0
        %v1554 = vand.u32 %v1325, 4294901760
        %v1555 = vsub.f32 %v1325, %v1554
        %1556 = vmatmul.mubr.f32.gmra.mxu0 %v1555
        %v1557 = vpop.f32.mrf.mxu0
        %v1558 = vadd.f32 %v1482, %v1557
        %v1559 = vpop.f32.mrf.mxu0
        %1560 = vdwg.mxu0
        %1561 = vmatprep.subr.mxu0 0.0
        %1562 = vmatpush1.msra.mxu0 0.0
        %1563 = vmatprep.subr.mxu0 0.0
        %1564 = vmatpush1.msra.mxu0 0.0
        %1565 = vmatprep.subr.mxu0 0.0
        %1566 = vmatpush1.msra.mxu0 0.0
        %1567 = vmatprep.subr.mxu0 0.0
        %1568 = vmatpush1.msra.mxu0 0.0
        %1569 = vmatprep.subr.mxu0 0.0
        %1570 = vmatpush1.msra.mxu0 0.0
        %1571 = vmatprep.subr.mxu0 0.0
        %1572 = vmatpush1.msra.mxu0 0.0
        %1573 = vmatprep.subr.mxu0 0.0
        %1574 = vmatpush1.msra.mxu0 0.0
        %1575 = vmatprep.subr.mxu0 0.0
        %1576 = vmatpush1.msra.mxu0 0.0
        %1577 = vmatprep.subr.mxu0 0.0
        %1578 = vmatpush1.msra.mxu0 0.0
        %1579 = vmatprep.subr.mxu0 0.0
        %1580 = vmatpush1.msra.mxu0 0.0
        %1581 = vmatprep.subr.mxu0 0.0
        %1582 = vmatpush1.msra.mxu0 0.0
        %1583 = vmatprep.subr.mxu0 0.0
        %1584 = vmatpush1.msra.mxu0 0.0
        %1585 = vmatprep.subr.mxu0 0.0
        %1586 = vmatpush1.msra.mxu0 0.0
        %1587 = vmatprep.subr.mxu0 0.0
        %1588 = vmatpush1.msra.mxu0 0.0
        %1589 = vmatprep.subr.mxu0 0.0
        %v1590 = vand.u32 %v1323, 4294901760
        %1591 = vmatpush1.msra.mxu0 %v1590
        %1592 = vmatprep.subr.mxu0 0.0
        %v1593 = vand.u32 %v1322, 4294901760
        %1594 = vmatpush1.msra.mxu0 %v1593
        %1595 = vmatprep.subr.mxu0 0.0
        %1596 = vmatpush2.msra.mxu0 0.0
        %1597 = vmatprep.subr.mxu0 0.0
        %1598 = vmatpush2.msra.mxu0 0.0
        %1599 = vmatprep.subr.mxu0 0.0
        %1600 = vmatpush2.msra.mxu0 0.0
        %1601 = vmatprep.subr.mxu0 0.0
        %1602 = vmatpush2.msra.mxu0 0.0
        %1603 = vmatprep.subr.mxu0 0.0
        %1604 = vmatpush2.msra.mxu0 0.0
        %1605 = vmatprep.subr.mxu0 0.0
        %1606 = vmatpush2.msra.mxu0 0.0
        %1607 = vmatprep.subr.mxu0 0.0
        %1608 = vmatpush2.msra.mxu0 0.0
        %1609 = vmatprep.subr.mxu0 0.0
        %1610 = vmatpush2.msra.mxu0 0.0
        %1611 = vmatprep.subr.mxu0 0.0
        %1612 = vmatpush2.msra.mxu0 0.0
        %1613 = vmatprep.subr.mxu0 0.0
        %1614 = vmatpush2.msra.mxu0 0.0
        %1615 = vmatprep.subr.mxu0 0.0
        %1616 = vmatpush2.msra.mxu0 0.0
        %1617 = vmatprep.subr.mxu0 0.0
        %1618 = vmatpush2.msra.mxu0 0.0
        %1619 = vmatprep.subr.mxu0 0.0
        %1620 = vmatpush2.msra.mxu0 0.0
        %1621 = vmatprep.subr.mxu0 0.0
        %1622 = vmatpush2.msra.mxu0 0.0
        %1623 = vmatprep.subr.mxu0 0.0
        %1624 = vmatpush2.msra.mxu0 0.0
        %1625 = vmatprep.subr.mxu0 0.0
        %1626 = vmatpush2.msra.mxu0 0.0
        %1627 = vmatprep.mubr.f32.mxu0 0.0
        %v1628 = vand.u32 %v1325, 4294901760
        %v1629 = vsub.f32 %v1325, %v1628
        %v1630 = vand.u32 %v1629, 4294901760
        %1631 = vmatmul.mubr.f32.gmra.mxu0 %v1630
        %v1632 = vpop.f32.mrf.mxu0
        %v1633 = vadd.f32 %v1558, %v1632
        %v1634 = vpop.f32.mrf.mxu0
        %1635 = vdwg.mxu0
        %1636 = vmatprep.subr.mxu0 0.0
        %1637 = vmatpush1.msra.mxu0 0.0
        %1638 = vmatprep.subr.mxu0 0.0
        %1639 = vmatpush1.msra.mxu0 0.0
        %1640 = vmatprep.subr.mxu0 0.0
        %1641 = vmatpush1.msra.mxu0 0.0
        %1642 = vmatprep.subr.mxu0 0.0
        %1643 = vmatpush1.msra.mxu0 0.0
        %1644 = vmatprep.subr.mxu0 0.0
        %1645 = vmatpush1.msra.mxu0 0.0
        %1646 = vmatprep.subr.mxu0 0.0
        %1647 = vmatpush1.msra.mxu0 0.0
        %1648 = vmatprep.subr.mxu0 0.0
        %1649 = vmatpush1.msra.mxu0 0.0
        %1650 = vmatprep.subr.mxu0 0.0
        %1651 = vmatpush1.msra.mxu0 0.0
        %1652 = vmatprep.subr.mxu0 0.0
        %1653 = vmatpush1.msra.mxu0 0.0
        %1654 = vmatprep.subr.mxu0 0.0
        %1655 = vmatpush1.msra.mxu0 0.0
        %1656 = vmatprep.subr.mxu0 0.0
        %1657 = vmatpush1.msra.mxu0 0.0
        %1658 = vmatprep.subr.mxu0 0.0
        %1659 = vmatpush1.msra.mxu0 0.0
        %1660 = vmatprep.subr.mxu0 0.0
        %1661 = vmatpush1.msra.mxu0 0.0
        %1662 = vmatprep.subr.mxu0 0.0
        %1663 = vmatpush1.msra.mxu0 0.0
        %1664 = vmatprep.subr.mxu0 0.0
        %v1665 = vand.u32 %v1323, 4294901760
        %v1666 = vsub.f32 %v1323, %v1665
        %v1667 = vand.u32 %v1666, 4294901760
        %1668 = vmatpush1.msra.mxu0 %v1667
        %1669 = vmatprep.subr.mxu0 0.0
        %v1670 = vand.u32 %v1322, 4294901760
        %v1671 = vsub.f32 %v1322, %v1670
        %v1672 = vand.u32 %v1671, 4294901760
        %1673 = vmatpush1.msra.mxu0 %v1672
        %1674 = vmatprep.subr.mxu0 0.0
        %1675 = vmatpush2.msra.mxu0 0.0
        %1676 = vmatprep.subr.mxu0 0.0
        %1677 = vmatpush2.msra.mxu0 0.0
        %1678 = vmatprep.subr.mxu0 0.0
        %1679 = vmatpush2.msra.mxu0 0.0
        %1680 = vmatprep.subr.mxu0 0.0
        %1681 = vmatpush2.msra.mxu0 0.0
        %1682 = vmatprep.subr.mxu0 0.0
        %1683 = vmatpush2.msra.mxu0 0.0
        %1684 = vmatprep.subr.mxu0 0.0
        %1685 = vmatpush2.msra.mxu0 0.0
        %1686 = vmatprep.subr.mxu0 0.0
        %1687 = vmatpush2.msra.mxu0 0.0
        %1688 = vmatprep.subr.mxu0 0.0
        %1689 = vmatpush2.msra.mxu0 0.0
        %1690 = vmatprep.subr.mxu0 0.0
        %1691 = vmatpush2.msra.mxu0 0.0
        %1692 = vmatprep.subr.mxu0 0.0
        %1693 = vmatpush2.msra.mxu0 0.0
        %1694 = vmatprep.subr.mxu0 0.0
        %1695 = vmatpush2.msra.mxu0 0.0
        %1696 = vmatprep.subr.mxu0 0.0
        %1697 = vmatpush2.msra.mxu0 0.0
        %1698 = vmatprep.subr.mxu0 0.0
        %1699 = vmatpush2.msra.mxu0 0.0
        %1700 = vmatprep.subr.mxu0 0.0
        %1701 = vmatpush2.msra.mxu0 0.0
        %1702 = vmatprep.subr.mxu0 0.0
        %1703 = vmatpush2.msra.mxu0 0.0
        %1704 = vmatprep.subr.mxu0 0.0
        %1705 = vmatpush2.msra.mxu0 0.0
        %1706 = vmatprep.mubr.f32.mxu0 0.0
        %v1707 = vand.u32 %v1325, 4294901760
        %1708 = vmatmul.mubr.f32.gmra.mxu0 %v1707
        %v1709 = vpop.f32.mrf.mxu0
        %v1710 = vadd.f32 %v1633, %v1709
        %v1711 = vpop.f32.mrf.mxu0
        %1712 = vdwg.mxu0
        %1713 = vmatprep.subr.mxu0 0.0
        %1714 = vmatpush1.msra.mxu0 0.0
        %1715 = vmatprep.subr.mxu0 0.0
        %1716 = vmatpush1.msra.mxu0 0.0
        %1717 = vmatprep.subr.mxu0 0.0
        %1718 = vmatpush1.msra.mxu0 0.0
        %1719 = vmatprep.subr.mxu0 0.0
        %1720 = vmatpush1.msra.mxu0 0.0
        %1721 = vmatprep.subr.mxu0 0.0
        %1722 = vmatpush1.msra.mxu0 0.0
        %1723 = vmatprep.subr.mxu0 0.0
        %1724 = vmatpush1.msra.mxu0 0.0
        %1725 = vmatprep.subr.mxu0 0.0
        %1726 = vmatpush1.msra.mxu0 0.0
        %1727 = vmatprep.subr.mxu0 0.0
        %1728 = vmatpush1.msra.mxu0 0.0
        %1729 = vmatprep.subr.mxu0 0.0
        %1730 = vmatpush1.msra.mxu0 0.0
        %1731 = vmatprep.subr.mxu0 0.0
        %1732 = vmatpush1.msra.mxu0 0.0
        %1733 = vmatprep.subr.mxu0 0.0
        %1734 = vmatpush1.msra.mxu0 0.0
        %1735 = vmatprep.subr.mxu0 0.0
        %1736 = vmatpush1.msra.mxu0 0.0
        %1737 = vmatprep.subr.mxu0 0.0
        %1738 = vmatpush1.msra.mxu0 0.0
        %1739 = vmatprep.subr.mxu0 0.0
        %1740 = vmatpush1.msra.mxu0 0.0
        %1741 = vmatprep.subr.mxu0 0.0
        %v1742 = vand.u32 %v1323, 4294901760
        %1743 = vmatpush1.msra.mxu0 %v1742
        %1744 = vmatprep.subr.mxu0 0.0
        %v1745 = vand.u32 %v1322, 4294901760
        %1746 = vmatpush1.msra.mxu0 %v1745
        %1747 = vmatprep.subr.mxu0 0.0
        %1748 = vmatpush2.msra.mxu0 0.0
        %1749 = vmatprep.subr.mxu0 0.0
        %1750 = vmatpush2.msra.mxu0 0.0
        %1751 = vmatprep.subr.mxu0 0.0
        %1752 = vmatpush2.msra.mxu0 0.0
        %1753 = vmatprep.subr.mxu0 0.0
        %1754 = vmatpush2.msra.mxu0 0.0
        %1755 = vmatprep.subr.mxu0 0.0
        %1756 = vmatpush2.msra.mxu0 0.0
        %1757 = vmatprep.subr.mxu0 0.0
        %1758 = vmatpush2.msra.mxu0 0.0
        %1759 = vmatprep.subr.mxu0 0.0
        %1760 = vmatpush2.msra.mxu0 0.0
        %1761 = vmatprep.subr.mxu0 0.0
        %1762 = vmatpush2.msra.mxu0 0.0
        %1763 = vmatprep.subr.mxu0 0.0
        %1764 = vmatpush2.msra.mxu0 0.0
        %1765 = vmatprep.subr.mxu0 0.0
        %1766 = vmatpush2.msra.mxu0 0.0
        %1767 = vmatprep.subr.mxu0 0.0
        %1768 = vmatpush2.msra.mxu0 0.0
        %1769 = vmatprep.subr.mxu0 0.0
        %1770 = vmatpush2.msra.mxu0 0.0
        %1771 = vmatprep.subr.mxu0 0.0
        %1772 = vmatpush2.msra.mxu0 0.0
        %1773 = vmatprep.subr.mxu0 0.0
        %1774 = vmatpush2.msra.mxu0 0.0
        %1775 = vmatprep.subr.mxu0 0.0
        %1776 = vmatpush2.msra.mxu0 0.0
        %1777 = vmatprep.subr.mxu0 0.0
        %1778 = vmatpush2.msra.mxu0 0.0
        %1779 = vmatprep.mubr.f32.mxu0 0.0
        %v1780 = vand.u32 %v1325, 4294901760
        %1781 = vmatmul.mubr.f32.gmra.mxu0 %v1780
        %v1782 = vpop.f32.mrf.mxu0
        %v1783 = vadd.f32 %v1710, %v1782
        %v1784 = vpop.f32.mrf.mxu0
        %1785 = vdwg.mxu0
        %v1786 = vadd.f32 %v1318, %v1783
        %v1787 = vmul.f32 %v1786, %v389
        %v1788 = vmul.f32 %v1321, %v389
        %vm1789 = vcmask 130168
        %v1790 = vsel %vm1789, %v1788, -inf
        %v1791 = vrot.slane %v1790, 4
        %v1792 = vmax.f32 %v1790, %v1791
        %v1793 = vrot.slane %v1792, 2
        %v1794 = vmax.f32 %v1792, %v1793
        %v1795 = vrot.slane %v1794, 1
        %v1796 = vmax.f32 %v1794, %v1795
        %vm1797 = vcmp.eq.f32.partialorder %v1788, %v1796
        %v1798 = vsel %vm1797, %v384, 1073741824
        %v1799 = vsel %vm1789, %v1798, 2147483647
        %v1800 = vrot.slane %v1799, 4
        %vm1801 = vcmp.lt.s32.totalorder %v1799, %v1800
        %v1802 = vsel %vm1801, %v1799, %v1800
        %v1803 = vrot.slane %v1802, 2
        %vm1804 = vcmp.lt.s32.totalorder %v1802, %v1803
        %v1805 = vsel %vm1804, %v1802, %v1803
        %v1806 = vrot.slane %v1805, 1
        %vm1807 = vcmp.lt.s32.totalorder %v1805, %v1806
        %v1808 = vsel %vm1807, %v1805, %v1806
        %vm1809 = vcmp.eq.s32.totalorder %v384, %v1808
        %v1810 = vsel %vm1809, 1, 0
        %1811 = vset.pattern.permute.xlu0 15
        %1812 = vperm.xlu0 %1811, %v1810
        %v1813 = vpop.permute.xlu0 %1812
        %vm1814 = vcmp.eq.s32.totalorder %v1813, 1
        %v1815 = vsel %vm1814, %v1787, 0.0
        %vm1816 = vcmask 97280
        %v1817 = vsel %vm1816, %v1815, 0.0
        %v1818 = vrot.slane %v1817, 4
        %v1819 = vadd.f32 %v1817, %v1818
        %v1820 = vrot.slane %v1819, 2
        %v1821 = vadd.f32 %v1819, %v1820
        %v1822 = vrot.slane %v1821, 1
        %v1823 = vadd.f32 %v1821, %v1822
        %v1824 = vsel %vm1809, -inf, %v1788
        %v1825 = vsel %vm1789, %v1824, -inf
        %v1826 = vrot.slane %v1825, 4
        %v1827 = vmax.f32 %v1825, %v1826
        %v1828 = vrot.slane %v1827, 2
        %v1829 = vmax.f32 %v1827, %v1828
        %v1830 = vrot.slane %v1829, 1
        %v1831 = vmax.f32 %v1829, %v1830
        %vm1832 = vcmp.eq.f32.partialorder %v1824, %v1831
        %v1833 = vsel %vm1832, %v384, 1073741824
        %v1834 = vsel %vm1789, %v1833, 2147483647
        %v1835 = vrot.slane %v1834, 4
        %vm1836 = vcmp.lt.s32.totalorder %v1834, %v1835
        %v1837 = vsel %vm1836, %v1834, %v1835
        %v1838 = vrot.slane %v1837, 2
        %vm1839 = vcmp.lt.s32.totalorder %v1837, %v1838
        %v1840 = vsel %vm1839, %v1837, %v1838
        %v1841 = vrot.slane %v1840, 1
        %vm1842 = vcmp.lt.s32.totalorder %v1840, %v1841
        %v1843 = vsel %vm1842, %v1840, %v1841
        %vm1844 = vcmp.eq.s32.totalorder %v384, %v1843
        %v1845 = vsel %vm1844, 1, 0
        %1846 = vset.pattern.permute.xlu0 15
        %1847 = vperm.xlu0 %1846, %v1845
        %v1848 = vpop.permute.xlu0 %1847
        %vm1849 = vcmp.eq.s32.totalorder %v1848, 1
        %v1850 = vsel %vm1849, %v1787, 0.0
        %v1851 = vsel %vm1816, %v1850, 0.0
        %v1852 = vrot.slane %v1851, 4
        %v1853 = vadd.f32 %v1851, %v1852
        %v1854 = vrot.slane %v1853, 2
        %v1855 = vadd.f32 %v1853, %v1854
        %v1856 = vrot.slane %v1855, 1
        %v1857 = vadd.f32 %v1855, %v1856
        %v1858 = vsel %vm1844, -inf, %v1824
        %v1859 = vsel %vm1789, %v1858, -inf
        %v1860 = vrot.slane %v1859, 4
        %v1861 = vmax.f32 %v1859, %v1860
        %v1862 = vrot.slane %v1861, 2
        %v1863 = vmax.f32 %v1861, %v1862
        %v1864 = vrot.slane %v1863, 1
        %v1865 = vmax.f32 %v1863, %v1864
        %vm1866 = vcmp.eq.f32.partialorder %v1858, %v1865
        %v1867 = vsel %vm1866, %v384, 1073741824
        %v1868 = vsel %vm1789, %v1867, 2147483647
        %v1869 = vrot.slane %v1868, 4
        %vm1870 = vcmp.lt.s32.totalorder %v1868, %v1869
        %v1871 = vsel %vm1870, %v1868, %v1869
        %v1872 = vrot.slane %v1871, 2
        %vm1873 = vcmp.lt.s32.totalorder %v1871, %v1872
        %v1874 = vsel %vm1873, %v1871, %v1872
        %v1875 = vrot.slane %v1874, 1
        %vm1876 = vcmp.lt.s32.totalorder %v1874, %v1875
        %v1877 = vsel %vm1876, %v1874, %v1875
        %vm1878 = vcmp.eq.s32.totalorder %v384, %v1877
        %v1879 = vsel %vm1878, 1, 0
        %1880 = vset.pattern.permute.xlu0 15
        %1881 = vperm.xlu0 %1880, %v1879
        %v1882 = vpop.permute.xlu0 %1881
        %vm1883 = vcmp.eq.s32.totalorder %v1882, 1
        %v1884 = vsel %vm1883, %v1787, 0.0
        %v1885 = vsel %vm1816, %v1884, 0.0
        %v1886 = vrot.slane %v1885, 4
        %v1887 = vadd.f32 %v1885, %v1886
        %v1888 = vrot.slane %v1887, 2
        %v1889 = vadd.f32 %v1887, %v1888
        %v1890 = vrot.slane %v1889, 1
        %v1891 = vadd.f32 %v1889, %v1890
        %v1892 = vld [vmem:[#allocation2] sm:$0x7]
        %1894 = vrot.lane.b32.xlu0 %v1796, 113
        %v1895 = vpop.permute.xlu0 %1894
        %1898 = vrot.lane.b32.xlu0 %v1831, 113
        %v1899 = vpop.permute.xlu0 %1898
        %1902 = vrot.lane.b32.xlu0 %v1865, 113
        %v1903 = vpop.permute.xlu0 %1902
        %vm1905 = vcmask 1042432
        %v1906 = vsel %vm1905, %v1892, %v1895
        %vm1907 = vcmask 1043456
        %v1908 = vsel %vm1907, %v1906, %v1899
        %vm1909 = vcmask 1044480
        %v1910 = vsel %vm1909, %v1908, %v1903
        %v1911 = vld [vmem:[#allocation3] sm:$0x7]
        %1912 = vrot.lane.b32.xlu0 %v1808, 113
        %v1913 = vpop.permute.xlu0 %1912
        %1914 = vrot.lane.b32.xlu0 %v1843, 113
        %v1915 = vpop.permute.xlu0 %1914
        %1916 = vrot.lane.b32.xlu0 %v1877, 113
        %v1917 = vpop.permute.xlu0 %1916
        %v1918 = vsel %vm1905, %v1911, %v1913
        %v1919 = vsel %vm1907, %v1918, %v1915
        %v1920 = vsel %vm1909, %v1919, %v1917
        %v1921 = vld [vmem:[#allocation4] sm:$0x7]
        %v1922 = vsel %vm1905, %v1921, %v1823
        %v1923 = vsel %vm1907, %v1922, %v1857
        %v1924 = vsel %vm1909, %v1923, %v1891
        %vm1925 = vcmask 5120
        %v1926 = vsel %vm1925, %v1910, -inf
        %v1927 = vrot.slane %v1926, 4
        %v1928 = vmax.f32 %v1926, %v1927
        %v1929 = vrot.slane %v1928, 2
        %v1930 = vmax.f32 %v1928, %v1929
        %v1931 = vrot.slane %v1930, 1
        %v1932 = vmax.f32 %v1930, %v1931
        %vm1933 = vcmp.eq.f32.partialorder %v1910, %v1932
        %v1934 = vsel %vm1933, %v1920, 2147483647
        %v1935 = vsel %vm1925, %v1934, 2147483647
        %v1936 = vrot.slane %v1935, 4
        %vm1937 = vcmp.lt.s32.totalorder %v1935, %v1936
        %v1938 = vsel %vm1937, %v1935, %v1936
        %v1939 = vrot.slane %v1938, 2
        %vm1940 = vcmp.lt.s32.totalorder %v1938, %v1939
        %v1941 = vsel %vm1940, %v1938, %v1939
        %v1942 = vrot.slane %v1941, 1
        %vm1943 = vcmp.lt.s32.totalorder %v1941, %v1942
        %v1944 = vsel %vm1943, %v1941, %v1942
        %vm1945 = vcmp.eq.s32.totalorder %v1920, %v1944
        %vm1946 = vmand %vm1933, %vm1945
        %v1947 = vsel %vm1946, %v382, 6
        %v1948 = vsel %vm1925, %v1947, 2147483647
        %v1949 = vrot.slane %v1948, 4
        %vm1950 = vcmp.lt.s32.totalorder %v1948, %v1949
        %v1951 = vsel %vm1950, %v1948, %v1949
        %v1952 = vrot.slane %v1951, 2
        %vm1953 = vcmp.lt.s32.totalorder %v1951, %v1952
        %v1954 = vsel %vm1953, %v1951, %v1952
        %v1955 = vrot.slane %v1954, 1
        %vm1956 = vcmp.lt.s32.totalorder %v1954, %v1955
        %v1957 = vsel %vm1956, %v1954, %v1955
        %vm1958 = vcmp.eq.s32.totalorder %v382, %v1957
        %v1959 = vsel %vm1958, 1, 0
        %1960 = vset.pattern.permute.xlu0 0
        %1961 = vperm.xlu0 %1960, %v1959
        %v1962 = vpop.permute.xlu0 %1961
        %vm1963 = vcmp.eq.s32.totalorder %v1962, 1
        %v1964 = vsel %vm1963, %v1924, 0.0
        %vm1965 = vcmask 95232
        %v1966 = vsel %vm1965, %v1964, 0.0
        %v1967 = vrot.slane %v1966, 4
        %v1968 = vadd.f32 %v1966, %v1967
        %v1969 = vrot.slane %v1968, 2
        %v1970 = vadd.f32 %v1968, %v1969
        %v1971 = vrot.slane %v1970, 1
        %v1972 = vadd.f32 %v1970, %v1971
        %v1973 = vsel %vm1958, -inf, %v1910
        %v1974 = vsel %vm1925, %v1973, -inf
        %v1975 = vrot.slane %v1974, 4
        %v1976 = vmax.f32 %v1974, %v1975
        %v1977 = vrot.slane %v1976, 2
        %v1978 = vmax.f32 %v1976, %v1977
        %v1979 = vrot.slane %v1978, 1
        %v1980 = vmax.f32 %v1978, %v1979
        %vm1981 = vcmp.eq.f32.partialorder %v1973, %v1980
        %v1982 = vsel %vm1981, %v1920, 2147483647
        %v1983 = vsel %vm1925, %v1982, 2147483647
        %v1984 = vrot.slane %v1983, 4
        %vm1985 = vcmp.lt.s32.totalorder %v1983, %v1984
        %v1986 = vsel %vm1985, %v1983, %v1984
        %v1987 = vrot.slane %v1986, 2
        %vm1988 = vcmp.lt.s32.totalorder %v1986, %v1987
        %v1989 = vsel %vm1988, %v1986, %v1987
        %v1990 = vrot.slane %v1989, 1
        %vm1991 = vcmp.lt.s32.totalorder %v1989, %v1990
        %v1992 = vsel %vm1991, %v1989, %v1990
        %vm1993 = vcmp.eq.s32.totalorder %v1920, %v1992
        %vm1994 = vmand %vm1981, %vm1993
        %v1995 = vsel %vm1994, %v382, 6
        %v1996 = vsel %vm1925, %v1995, 2147483647
        %v1997 = vrot.slane %v1996, 4
        %vm1998 = vcmp.lt.s32.totalorder %v1996, %v1997
        %v1999 = vsel %vm1998, %v1996, %v1997
        %v2000 = vrot.slane %v1999, 2
        %vm2001 = vcmp.lt.s32.totalorder %v1999, %v2000
        %v2002 = vsel %vm2001, %v1999, %v2000
        %v2003 = vrot.slane %v2002, 1
        %vm2004 = vcmp.lt.s32.totalorder %v2002, %v2003
        %v2005 = vsel %vm2004, %v2002, %v2003
        %vm2006 = vcmp.eq.s32.totalorder %v382, %v2005
        %v2007 = vsel %vm2006, 1, 0
        %2008 = vset.pattern.permute.xlu0 0
        %2009 = vperm.xlu0 %2008, %v2007
        %v2010 = vpop.permute.xlu0 %2009
        %vm2011 = vcmp.eq.s32.totalorder %v2010, 1
        %v2012 = vsel %vm2011, %v1924, 0.0
        %v2013 = vsel %vm1965, %v2012, 0.0
        %v2014 = vrot.slane %v2013, 4
        %v2015 = vadd.f32 %v2013, %v2014
        %v2016 = vrot.slane %v2015, 2
        %v2017 = vadd.f32 %v2015, %v2016
        %v2018 = vrot.slane %v2017, 1
        %v2019 = vadd.f32 %v2017, %v2018
        %v2020 = vsel %vm2006, -inf, %v1973
        %v2021 = vsel %vm1925, %v2020, -inf
        %v2022 = vrot.slane %v2021, 4
        %v2023 = vmax.f32 %v2021, %v2022
        %v2024 = vrot.slane %v2023, 2
        %v2025 = vmax.f32 %v2023, %v2024
        %v2026 = vrot.slane %v2025, 1
        %v2027 = vmax.f32 %v2025, %v2026
        %vm2028 = vcmp.eq.f32.partialorder %v2020, %v2027
        %v2029 = vsel %vm2028, %v1920, 2147483647
        %v2030 = vsel %vm1925, %v2029, 2147483647
        %v2031 = vrot.slane %v2030, 4
        %vm2032 = vcmp.lt.s32.totalorder %v2030, %v2031
        %v2033 = vsel %vm2032, %v2030, %v2031
        %v2034 = vrot.slane %v2033, 2
        %vm2035 = vcmp.lt.s32.totalorder %v2033, %v2034
        %v2036 = vsel %vm2035, %v2033, %v2034
        %v2037 = vrot.slane %v2036, 1
        %vm2038 = vcmp.lt.s32.totalorder %v2036, %v2037
        %v2039 = vsel %vm2038, %v2036, %v2037
        %vm2040 = vcmp.eq.s32.totalorder %v1920, %v2039
        %vm2041 = vmand %vm2028, %vm2040
        %v2042 = vsel %vm2041, %v382, 6
        %v2043 = vsel %vm1925, %v2042, 2147483647
        %v2044 = vrot.slane %v2043, 4
        %vm2045 = vcmp.lt.s32.totalorder %v2043, %v2044
        %v2046 = vsel %vm2045, %v2043, %v2044
        %v2047 = vrot.slane %v2046, 2
        %vm2048 = vcmp.lt.s32.totalorder %v2046, %v2047
        %v2049 = vsel %vm2048, %v2046, %v2047
        %v2050 = vrot.slane %v2049, 1
        %vm2051 = vcmp.lt.s32.totalorder %v2049, %v2050
        %v2052 = vsel %vm2051, %v2049, %v2050
        %vm2053 = vcmp.eq.s32.totalorder %v382, %v2052
        %v2054 = vsel %vm2053, 1, 0
        %2055 = vset.pattern.permute.xlu0 0
        %2056 = vperm.xlu0 %2055, %v2054
        %v2057 = vpop.permute.xlu0 %2056
        %vm2058 = vcmp.eq.s32.totalorder %v2057, 1
        %v2059 = vsel %vm2058, %v1924, 0.0
        %v2060 = vsel %vm1965, %v2059, 0.0
        %v2061 = vrot.slane %v2060, 4
        %v2062 = vadd.f32 %v2060, %v2061
        %v2063 = vrot.slane %v2062, 2
        %v2064 = vadd.f32 %v2062, %v2063
        %v2065 = vrot.slane %v2064, 1
        %v2066 = vadd.f32 %v2064, %v2065
        %vm2067 = vcmask 1040384
        %v2068 = vsel %vm2067, %v1932, %v1980
        %vm2069 = vcmask 1041408
        %v2070 = vsel %vm2069, %v2068, %v2027
        %vm2071 = vcmask 2048
        %2072 = vst.msk [vmem:[#allocation2] sm:$0x7] %vm2071, %v2070
        %v2073 = vsel %vm2067, %v1944, %v1992
        %v2074 = vsel %vm2069, %v2073, %v2039
        %2075 = vst.msk [vmem:[#allocation3] sm:$0x7] %vm2071, %v2074
        %v2076 = vsel %vm2067, %v1972, %v2019
        %v2077 = vsel %vm2069, %v2076, %v2066
        %vm2078 = vcmask 92160
        %2079 = vst.msk [vmem:[#allocation4] sm:$0x7] %vm2078, %v2077
        %p2080 = scmp.eq.s32.totalorder %s33, 1
        // Predicated region
        $region53: #{gcn_sortk_pool_encoder.11} parent=47 // pred_check
          %p2081 = pneg %p2080
        $region54: #{gcn_sortk_pool_encoder.11} parent=47 // pred_check_branch
          %2083 = sbr.rel (%p2081) target = $region56
        $region55: #{gcn_sortk_pool_encoder.11} parent=47 // pred_region
          %v2084 = vld [vmem:[#allocation4] sm:$0x7]
          %v2085 = vld [vmem:[%s7] sm:$0x1]
          %v2086 = vadd.f32 %v2085, %v2084
          %v2089 = vunpack.c.l.s4 1966171168
          %v2090 = vunpack.c.0.s8 %v2089
          %v2091 = vlaneseq
          %v2092 = vshrl.u32 %v2091, 7
          %v2093 = vsub.s32 %v2090, %v2092
          %v2094 = vrot.slane %v2084, %v2093
          %v2095 = vcombine.high %v2094, %v2094
          %v2097 = vunpack.c.l.s4 1966171168
          %v2098 = vunpack.c.0.s8 %v2097
          %v2099 = vlaneseq
          %v2100 = vshrl.u32 %v2099, 7
          %v2101 = vsub.s32 %v2098, %v2100
          %v2102 = vrot.slane %v2094, %v2101
          %v2104 = vunpack.c.l.s4 1966171168
          %v2105 = vunpack.c.0.s8 %v2104
          %v2106 = vlaneseq
          %v2107 = vshrl.u32 %v2106, 7
          %v2108 = vsub.s32 %v2105, %v2107
          %v2109 = vrot.slane %v2095, %v2108
          %2110 = vrot.lane.b32.xlu0 %v2109, 124
          %v2111 = vpop.permute.xlu0 %2110
          %v2113 = vadd.f32 %v2086, %v2111
          %v2114 = vcombine.high %v2102, %v2102
          %2115 = vrot.lane.b32.xlu0 %v2114, 120
          %v2116 = vpop.permute.xlu0 %2115
          %v2118 = vadd.f32 %v2113, %v2116
          %vm2119 = vcmask 24576
          %2120 = vst.msk [vmem:[%s343] sm:$0x1] %vm2119, %v2118
        $region56: #{gcn_sortk_pool_encoder.11} parent=47 // pred_fallthru
          _
        %s2121 = sand.u32 %s216, 1
        %s2122 = scalar_lea.sflag [#allocation8], %s2121
        %s2123 = sand.u32 %s216, 1
        %s2124 = scalar_lea.vmem [#allocation7], %s2123
        // Predicated region
        $region57: #{gcn_sortk_pool_encoder.11} parent=47 // pred_check
          %p2125 = pneg %p226
        $region58: #{gcn_sortk_pool_encoder.11} parent=47 // pred_check_branch
          %2127 = sbr.rel (%p2125) target = $region60
        $region59: #{gcn_sortk_pool_encoder.11} parent=47 // pred_region
          %s2129 = ssub.s32 16, 16
          %2130 = vsyncadd %s2122, %s2129
          %s2131 = smul.addr %s32, 16
          %s2132 = scalar_lea.hbm %s8, %s2131
          %s2134 = sshll.u32 %s2124, 4
          %s2135 = int_to_ptr.vmem [resolvable:$true] %s2134
          %2137 = dma.vmem_to_hbm [thread:$0]  %s2135, 16, %s2132, %s2122
        $region60: #{gcn_sortk_pool_encoder.11} parent=47 // pred_fallthru
          _
      $region48: #{gcn_sortk_pool_encoder.11} parent=5 // pred_fallthru
        _
      %p2138 = scmp.le.s32.totalorder 2, %s23
      // Predicated region
      $region61: #{gcn_sortk_pool_encoder.11} parent=5 // pred_check
        %p2139 = pneg %p2138
      $region62: #{gcn_sortk_pool_encoder.11} parent=5 // pred_check_branch
        %2141 = sbr.rel (%p2139) target = $region64
      $region63: #{gcn_sortk_pool_encoder.11} parent=5 // pred_region
        %s2142 = ssub.s32 %s23, 2
        // Predicated region
        $region65: #{gcn_sortk_pool_encoder.11} parent=63 // pred_check
          %p2143 = pneg %p232
        $region66: #{gcn_sortk_pool_encoder.11} parent=63 // pred_check_branch
          %2145 = sbr.rel (%p2143) target = $region68
        $region67: #{gcn_sortk_pool_encoder.11} parent=63 // pred_region
          %s2146 = sand.u32 %s217, 1
          %s2147 = scalar_lea.sflag [#allocation8], %s2146
          %s2148 = sand.u32 %s217, 1
          %s2149 = scalar_lea.vmem [#allocation7], %s2148
          %2150 = dma.done %s2147, 16
        $region68: #{gcn_sortk_pool_encoder.11} parent=63 // pred_fallthru
          _
      $region64: #{gcn_sortk_pool_encoder.11} parent=5 // pred_fallthru
        _
    $region6: #{gcn_sortk_pool_encoder.11} parent=1 // loop_footer
      %s27 = sadd.s32 1, %s23
    $region7: #{gcn_sortk_pool_encoder.11} parent=1 // loop_footer_branch
      %22 = sbr.rel target = $region3
    $region8: #{gcn_sortk_pool_encoder.11} parent=1 // loop_exit
      _
    %2151 = vsyncpa [#allocation8], 1
    %s2152 = scalar_lea.sflag [#allocation8], 1
    %2153 = vsyncpa %s2152, 1

</llo_original>
